<compile_context>
chip_gen: v5e
topology: v5e:2x2
jax: 0.10.0
libtpu: 0.0.40
codegen_flags: <defaults>
</compile_context>

<pallas_src>
import functools

import jax
import jax.numpy as jnp
from jax import lax
from jax.experimental import pallas as pl
from jax.experimental.pallas import tpu as pltpu

EPS = 1e-5   # PyTorch InstanceNorm2d default (affine=False, biased variance)
CP = 128     # lane-dense channel padding


# ----------------------------------------------------------------------------
# small helpers
# ----------------------------------------------------------------------------
def _round_up(x, m):
    return (x + m - 1) // m * m


def _pad_to(x, axis, target):
    d = target - x.shape[axis]
    if d == 0:
        return x
    pads = [(0, 0)] * x.ndim
    pads[axis] = (0, d)
    return jnp.pad(x, pads)


def _im2col(x, k, stride=1):
    # x: (N, H, W, C), already padded; "valid" patch extraction.
    N, H, W, C = x.shape
    Ho = (H - k) // stride + 1
    Wo = (W - k) // stride + 1
    patches = []
    for di in range(k):
        for dj in range(k):
            patches.append(
                x[:, di:di + stride * (Ho - 1) + 1:stride,
                     dj:dj + stride * (Wo - 1) + 1:stride, :])
    p = jnp.stack(patches, axis=3)                      # (N, Ho, Wo, k*k, C)
    return p.reshape(N, Ho * Wo, k * k * C), (N, Ho, Wo)


# ----------------------------------------------------------------------------
# fused Pallas kernels
# ----------------------------------------------------------------------------
def _conv_fused_kernel(*refs, mode, inv_hw):
    # refs: x (HW, Kp) bf16, w (Kp, Cp) bf16, b (1, Cp) f32,
    #       [r (HW, Cp) f32 for mode=="in_res"], o (HW, Cp) f32
    if mode == "in_res":
        x_ref, w_ref, b_ref, r_ref, o_ref = refs
    else:
        x_ref, w_ref, b_ref, o_ref = refs

    y = jnp.dot(x_ref[...], w_ref[...], preferred_element_type=jnp.float32)
    y = y + b_ref[...]

    if mode == "tanh":
        o_ref[...] = jnp.tanh(y)
        return

    # InstanceNorm over the spatial (row) axis, one pass: sum + sum-of-squares.
    s1 = jnp.sum(y, axis=0, keepdims=True)
    s2 = jnp.sum(y * y, axis=0, keepdims=True)
    mean = s1 * inv_hw
    var = jnp.maximum(s2 * inv_hw - mean * mean, 0.0)
    yn = (y - mean) * lax.rsqrt(var + EPS)

    if mode == "in_relu":
        o_ref[...] = jnp.maximum(yn, 0.0)
    else:  # "in_res": residual add (no ReLU), all f32
        o_ref[...] = r_ref[...] + yn


def conv_fused(cols, w2, b2, *, mode, residual=None):
    # cols: (N, HW, Kp) bf16 ; w2: (Kp, Cp) bf16 ; b2: (1, Cp) f32
    N, HW, Kp = cols.shape
    Cp = w2.shape[1]
    kern = functools.partial(_conv_fused_kernel, mode=mode, inv_hw=1.0 / HW)

    in_specs = [
        pl.BlockSpec((None, HW, Kp), lambda n: (n, 0, 0)),
        pl.BlockSpec((Kp, Cp), lambda n: (0, 0)),
        pl.BlockSpec((1, Cp), lambda n: (0, 0)),
    ]
    args = [cols, w2, b2]
    bytes_accessed = cols.size * 2 + w2.size * 2 + b2.size * 4 + N * HW * Cp * 4
    if residual is not None:
        in_specs.append(pl.BlockSpec((None, HW, Cp), lambda n: (n, 0, 0)))
        args.append(residual)
        bytes_accessed += residual.size * 4

    return pl.pallas_call(
        kern,
        out_shape=jax.ShapeDtypeStruct((N, HW, Cp), jnp.float32),
        grid=(N,),
        in_specs=in_specs,
        out_specs=pl.BlockSpec((None, HW, Cp), lambda n: (n, 0, 0)),
        compiler_params=pltpu.CompilerParams(
            dimension_semantics=("parallel",)),
        cost_estimate=pl.CostEstimate(
            flops=2 * N * HW * Kp * Cp,
            transcendentals=(N * HW * Cp) if mode == "tanh" else (N * Cp),
            bytes_accessed=bytes_accessed),
    )(*args)


def _convt_fused_kernel(x_ref, w_ref, b_ref, o_ref, *, inv_hw):
    # Sub-pixel ConvTranspose: 4 phase GEMMs on 2x2 input patches, fused
    # phase-aware InstanceNorm + ReLU.
    # x: (HWp, Kp) bf16 ; w: (4, Kp, Cp) bf16 ; b: (1, Cp) f32 ; o: (4, HWp, Cp) f32
    x = x_ref[...]
    b = b_ref[...]
    s1 = jnp.zeros_like(b)
    s2 = jnp.zeros_like(b)
    for p in range(4):                                   # static unroll
        y = jnp.dot(x, w_ref[p], preferred_element_type=jnp.float32) + b
        o_ref[p] = y                                     # stage phase in VMEM
        s1 = s1 + jnp.sum(y, axis=0, keepdims=True)
        s2 = s2 + jnp.sum(y * y, axis=0, keepdims=True)
    # IN statistics over all 4 phases = full output spatial extent.
    mean = s1 * inv_hw
    var = jnp.maximum(s2 * inv_hw - mean * mean, 0.0)
    inv_std = lax.rsqrt(var + EPS)
    for p in range(4):
        o_ref[p] = jnp.maximum((o_ref[p] - mean) * inv_std, 0.0)


def convt_fused(cols, w3, b2):
    N, HWp, Kp = cols.shape
    Cp = w3.shape[2]
    kern = functools.partial(_convt_fused_kernel, inv_hw=1.0 / (4 * HWp))
    return pl.pallas_call(
        kern,
        out_shape=jax.ShapeDtypeStruct((N, 4, HWp, Cp), jnp.float32),
        grid=(N,),
        in_specs=[
            pl.BlockSpec((None, HWp, Kp), lambda n: (n, 0, 0)),
            pl.BlockSpec((4, Kp, Cp), lambda n: (0, 0, 0)),
            pl.BlockSpec((1, Cp), lambda n: (0, 0)),
        ],
        out_specs=pl.BlockSpec((None, 4, HWp, Cp), lambda n: (n, 0, 0, 0)),
        compiler_params=pltpu.CompilerParams(
            dimension_semantics=("parallel",)),
        cost_estimate=pl.CostEstimate(
            flops=2 * N * 4 * HWp * Kp * Cp,
            transcendentals=N * Cp,
            bytes_accessed=cols.size * 2 + w3.size * 2 + N * 4 * HWp * Cp * 4),
    )(cols, w3, b2)


# ----------------------------------------------------------------------------
# one-time weight preparation (hoisted out of the jitted forward)
# ----------------------------------------------------------------------------
def prep_conv(w, b):
    # w: PyTorch Conv2d layout (Cout, Cin, k, k) -> (Kp, CP) bf16, (1, CP) f32.
    cout, cin, k, _ = w.shape
    w2 = jnp.transpose(w, (2, 3, 1, 0)).reshape(k * k * cin, cout)
    kp = _round_up(k * k * cin, 128)
    w2 = _pad_to(_pad_to(w2, 1, CP), 0, kp).astype(jnp.bfloat16)
    b2 = _pad_to(b.reshape(1, cout).astype(jnp.float32), 1, CP)
    return w2, b2


def prep_convt(w, b):
    # PyTorch ConvTranspose2d (Cin, Cout, 3, 3), stride=2, pad=1, output_pad=1.
    # Sub-pixel decomposition: output parity (a, b) at input offset (dh, dw)
    # uses kernel tap (S[a,dh], S[b,dw]); None => no contribution.
    cin, cout, k, _ = w.shape
    assert k == 3
    S = {(0, 0): 1, (0, 1): None, (1, 0): 2, (1, 1): 0}
    phases = []
    for a in (0, 1):
        for bb in (0, 1):
            taps = []
            for dh in (0, 1):
                for dw in (0, 1):
                    kh, kw = S[(a, dh)], S[(bb, dw)]
                    if kh is None or kw is None:
                        taps.append(jnp.zeros((cin, cout), w.dtype))
                    else:
                        taps.append(w[:, :, kh, kw])
            phases.append(jnp.concatenate(taps, axis=0))     # (4*cin, cout)
    w3 = jnp.stack(phases, axis=0)                            # (4, 4*cin, cout)
    kp = _round_up(4 * cin, 128)
    w3 = _pad_to(_pad_to(w3, 2, CP), 1, kp).astype(jnp.bfloat16)
    b2 = _pad_to(b.reshape(1, cout).astype(jnp.float32), 1, CP)
    return w3, b2


def prepare_generator_params(p):
    gp = {
        "c1": prep_conv(p["c1_w"], p["c1_b"]),
        "c2": prep_conv(p["c2_w"], p["c2_b"]),
        "dT": prep_convt(p["d_w"], p["d_b"]),
        "co": prep_conv(p["co_w"], p["co_b"]),
    }
    for r in range(3):
        gp[f"r{r}a"] = prep_conv(p[f"r{r}_w1"], p[f"r{r}_b1"])
        gp[f"r{r}b"] = prep_conv(p[f"r{r}_w2"], p[f"r{r}_b2"])
    return gp


# ----------------------------------------------------------------------------
# layer wrappers (plain-JAX layout glue around the fused kernels)
# ----------------------------------------------------------------------------
def conv_block(x, w2, b2, *, cin, k, stride=1, pad=0, reflect=0,
               mode, residual=None):
    # x: (N, H, W, C_stored) f32 (channel-padded to CP, or the raw input).
    xs = x[..., :cin].astype(jnp.bfloat16)
    if reflect:
        xs = jnp.pad(xs, ((0, 0), (reflect, reflect), (reflect, reflect), (0, 0)),
                     mode="reflect")
    if pad:
        xs = jnp.pad(xs, ((0, 0), (pad, pad), (pad, pad), (0, 0)))
    cols, (N, Ho, Wo) = _im2col(xs, k, stride)
    cols = _pad_to(cols, 2, w2.shape[0])
    if residual is not None:
        residual = residual.reshape(N, Ho * Wo, CP)
    out = conv_fused(cols, w2, b2, mode=mode, residual=residual)
    return out.reshape(N, Ho, Wo, CP)


def convt_block(x, w3, b2, *, cin):
    # ConvTranspose2d(cin -> cin//2, k=3, s=2, p=1, op=1) + IN + ReLU.
    xs = x[..., :cin].astype(jnp.bfloat16)
    N, H, W, _ = xs.shape
    xp = jnp.pad(xs, ((0, 0), (0, 1), (0, 1), (0, 0)))        # zero pad bottom/right
    taps = [xp[:, dh:dh + H, dw:dw + W, :] for dh in (0, 1) for dw in (0, 1)]
    cols = jnp.stack(taps, axis=3).reshape(N, H * W, 4 * cin)
    cols = _pad_to(cols, 2, w3.shape[1])
    out = convt_fused(cols, w3, b2)                           # (N, 4, H*W, CP)
    # pixel shuffle: phase = a*2 + b -> output (2i+a, 2j+b)
    out = out.reshape(N, 2, 2, H, W, CP)
    out = jnp.transpose(out, (0, 3, 1, 4, 2, 5)).reshape(N, 2 * H, 2 * W, CP)
    return out


# ----------------------------------------------------------------------------
# Generator parameters + forward
# ----------------------------------------------------------------------------
def init_params(key):
    def w_init(k, shape, scale=0.05):
        return scale * jax.random.normal(k, shape, jnp.float32)

    keys = jax.random.split(key, 20)
    p = {}
    p["c1_w"] = w_init(keys[0], (32, 1, 7, 7));  p["c1_b"] = w_init(keys[1], (32,), 0.01)
    p["c2_w"] = w_init(keys[2], (64, 32, 3, 3)); p["c2_b"] = w_init(keys[3], (64,), 0.01)
    for r in range(3):
        p[f"r{r}_w1"] = w_init(keys[4 + 4 * r], (64, 64, 3, 3))
        p[f"r{r}_b1"] = w_init(keys[5 + 4 * r], (64,), 0.01)
        p[f"r{r}_w2"] = w_init(keys[6 + 4 * r], (64, 64, 3, 3))
        p[f"r{r}_b2"] = w_init(keys[7 + 4 * r], (64,), 0.01)
    p["d_w"] = w_init(keys[16], (64, 32, 3, 3));  p["d_b"] = w_init(keys[17], (32,), 0.01)
    p["co_w"] = w_init(keys[18], (1, 32, 7, 7));  p["co_b"] = w_init(keys[19], (1,), 0.01)
    return p


def generator_forward(x_nchw, gp):
    # NCHW in / NCHW out (matches the PyTorch module); NHWC + 128-lane padded inside.
    x = jnp.transpose(x_nchw, (0, 2, 3, 1)).astype(jnp.float32)

    # ReflectionPad(3) + Conv(1->32, k7) + IN + ReLU
    y = conv_block(x, *gp["c1"], cin=1, k=7, reflect=3, mode="in_relu")
    # Conv(32->64, k3, s2, pad1) + IN + ReLU
    y = conv_block(y, *gp["c2"], cin=32, k=3, stride=2, pad=1, mode="in_relu")

    # 3 residual blocks (64 channels): conv+IN+ReLU, conv+IN+residual-add
    for r in range(3):
        z = conv_block(y, *gp[f"r{r}a"], cin=64, k=3, reflect=1, mode="in_relu")
        y = conv_block(z, *gp[f"r{r}b"], cin=64, k=3, reflect=1,
                       mode="in_res", residual=y)

    # ConvTranspose(64->32, k3, s2, p1, op1) + IN + ReLU (sub-pixel, one GEMM/sample)
    y = convt_block(y, *gp["dT"], cin=64)

    # ReflectionPad(3) + Conv(32->1, k7) + Tanh
    y = conv_block(y, *gp["co"], cin=32, k=7, reflect=3, mode="tanh")

    return jnp.transpose(y[..., :1], (0, 3, 1, 2))


if __name__ == "__main__":
    key = jax.random.PRNGKey(0)
    pkey, xkey = jax.random.split(key)
    params = init_params(pkey)
    gp = prepare_generator_params(params)     # one-time weight re-layout (hoisted)
    x = jax.random.normal(xkey, (2, 1, 16, 16), jnp.float32)   # NCHW, like PyTorch

    fwd = jax.jit(generator_forward)
    out = jax.block_until_ready(fwd(x, gp))

    assert out.shape == (2, 1, 16, 16), out.shape
    assert bool(jnp.all(jnp.isfinite(out)))
    assert bool(jnp.all(jnp.abs(out) <= 1.0 + 1e-6))   # tanh range
    print("KERNEL_OK")
</pallas_src>

<mosaic_0001>
module attributes {stable_mosaic.version = 11 : i64} {
  func.func @_conv_fused_kernel(%arg0: i32, %arg1: memref<1x256x128xbf16, #tpu.memory_space<vmem>>, %arg2: memref<128x128xbf16, #tpu.memory_space<vmem>>, %arg3: memref<1x128xf32, #tpu.memory_space<vmem>>, %arg4: memref<1x256x128xf32, #tpu.memory_space<vmem>>) attributes {dimension_semantics = [#tpu.dimension_semantics<parallel>], iteration_bounds = array<i64: 2>, scalar_prefetch = 0 : i64, scratch_operands = 0 : i64, tpu.core_type = #tpu.core_type<tc>, window_params = [{transform_indices = @transform_0, window_bounds = array<i64: 1, 256, 128>}, {pipeline_mode = #tpu.pipeline_mode<synchronous>, transform_indices = @transform_1, window_bounds = array<i64: 128, 128>}, {pipeline_mode = #tpu.pipeline_mode<synchronous>, transform_indices = @transform_2, window_bounds = array<i64: 1, 128>}, {transform_indices = @transform_3, window_bounds = array<i64: 1, 256, 128>}]} {
    %c0 = arith.constant 0 : index
    %c0_0 = arith.constant 0 : index
    %c0_1 = arith.constant 0 : index
    %0 = vector.load %arg1[%c0, %c0_0, %c0_1] : memref<1x256x128xbf16, #tpu.memory_space<vmem>>, vector<1x256x128xbf16>
    %1 = vector.shape_cast %0 : vector<1x256x128xbf16> to vector<256x128xbf16>
    %c0_2 = arith.constant 0 : index
    %c0_3 = arith.constant 0 : index
    %2 = vector.load %arg2[%c0_2, %c0_3] : memref<128x128xbf16, #tpu.memory_space<vmem>>, vector<128x128xbf16>
    %cst = arith.constant dense<0.000000e+00> : vector<256x128xf32>
    %3 = tpu.matmul %1, %2, %cst {dimension_numbers = #tpu.dot_dimension_numbers<[1], [0], [0], [1], [0, 0, 1, 1], [], []>} : vector<256x128xbf16>, vector<128x128xbf16>, vector<256x128xf32> -> vector<256x128xf32>
    %c0_4 = arith.constant 0 : index
    %c0_5 = arith.constant 0 : index
    %4 = vector.load %arg3[%c0_4, %c0_5] : memref<1x128xf32, #tpu.memory_space<vmem>>, vector<1x128xf32>
    %5 = vector.broadcast %4 : vector<1x128xf32> to vector<256x128xf32>
    %6 = arith.addf %3, %5 : vector<256x128xf32>
    %cst_6 = arith.constant dense<0.000000e+00> : vector<128xf32>
    %7 = vector.multi_reduction <add>, %6, %cst_6 [0] : vector<256x128xf32> to vector<128xf32>
    %8 = vector.shape_cast %7 : vector<128xf32> to vector<1x128xf32>
    %9 = arith.mulf %6, %6 : vector<256x128xf32>
    %cst_7 = arith.constant dense<0.000000e+00> : vector<128xf32>
    %10 = vector.multi_reduction <add>, %9, %cst_7 [0] : vector<256x128xf32> to vector<128xf32>
    %11 = vector.shape_cast %10 : vector<128xf32> to vector<1x128xf32>
    %cst_8 = arith.constant 3.906250e-03 : f32
    %12 = vector.broadcast %cst_8 : f32 to vector<1x128xf32>
    %13 = arith.mulf %8, %12 : vector<1x128xf32>
    %cst_9 = arith.constant 3.906250e-03 : f32
    %14 = vector.broadcast %cst_9 : f32 to vector<1x128xf32>
    %15 = arith.mulf %11, %14 : vector<1x128xf32>
    %16 = arith.mulf %13, %13 : vector<1x128xf32>
    %17 = arith.subf %15, %16 : vector<1x128xf32>
    %cst_10 = arith.constant 0.000000e+00 : f32
    %18 = vector.broadcast %cst_10 : f32 to vector<1x128xf32>
    %19 = arith.maximumf %17, %18 : vector<1x128xf32>
    %20 = vector.broadcast %13 : vector<1x128xf32> to vector<256x128xf32>
    %21 = arith.subf %6, %20 : vector<256x128xf32>
    %cst_11 = arith.constant 9.99999974E-6 : f32
    %22 = vector.broadcast %cst_11 : f32 to vector<1x128xf32>
    %23 = arith.addf %19, %22 : vector<1x128xf32>
    %24 = math.rsqrt %23 : vector<1x128xf32>
    %25 = vector.broadcast %24 : vector<1x128xf32> to vector<256x128xf32>
    %26 = arith.mulf %21, %25 : vector<256x128xf32>
    %cst_12 = arith.constant 0.000000e+00 : f32
    %27 = vector.broadcast %cst_12 : f32 to vector<256x128xf32>
    %28 = arith.maximumf %26, %27 : vector<256x128xf32>
    %c0_13 = arith.constant 0 : index
    %c0_14 = arith.constant 0 : index
    %c0_15 = arith.constant 0 : index
    %29 = vector.load %arg4[%c0_13, %c0_14, %c0_15] : memref<1x256x128xf32, #tpu.memory_space<vmem>>, vector<1x256x128xf32>
    %30 = vector.shape_cast %29 : vector<1x256x128xf32> to vector<256x128xf32>
    %31 = vector.shape_cast %28 : vector<256x128xf32> to vector<1x256x128xf32>
    tpu.vector_store %arg4[%c0_13, %c0_14, %c0_15], %31 {strides = array<i32>} : memref<1x256x128xf32, #tpu.memory_space<vmem>>, vector<1x256x128xf32>,
    return
  }
  func.func @transform_0(%arg0: i32) -> (i32, i32, i32) {
    %c0_i32 = arith.constant 0 : i32
    %c0_i32_0 = arith.constant 0 : i32
    %c0_i32_1 = arith.constant 0 : i32
    return %arg0, %c0_i32, %c0_i32_0 : i32, i32, i32
  }
  func.func @transform_1(%arg0: i32) -> (i32, i32) {
    %c0_i32 = arith.constant 0 : i32
    %c0_i32_0 = arith.constant 0 : i32
    %c0_i32_1 = arith.constant 0 : i32
    return %c0_i32, %c0_i32_0 : i32, i32
  }
  func.func @transform_2(%arg0: i32) -> (i32, i32) {
    %c0_i32 = arith.constant 0 : i32
    %c0_i32_0 = arith.constant 0 : i32
    %c0_i32_1 = arith.constant 0 : i32
    return %c0_i32, %c0_i32_0 : i32, i32
  }
  func.func @transform_3(%arg0: i32) -> (i32, i32, i32) {
    %c0_i32 = arith.constant 0 : i32
    %c0_i32_0 = arith.constant 0 : i32
    %c0_i32_1 = arith.constant 0 : i32
    return %arg0, %c0_i32, %c0_i32_0 : i32, i32, i32
  }
}

module attributes {stable_mosaic.version = 11 : i64} {
  func.func @_conv_fused_kernel(%arg0: i32, %arg1: memref<1x64x384xbf16, #tpu.memory_space<vmem>>, %arg2: memref<384x128xbf16, #tpu.memory_space<vmem>>, %arg3: memref<1x128xf32, #tpu.memory_space<vmem>>, %arg4: memref<1x64x128xf32, #tpu.memory_space<vmem>>) attributes {dimension_semantics = [#tpu.dimension_semantics<parallel>], iteration_bounds = array<i64: 2>, scalar_prefetch = 0 : i64, scratch_operands = 0 : i64, tpu.core_type = #tpu.core_type<tc>, window_params = [{transform_indices = @transform_0, window_bounds = array<i64: 1, 64, 384>}, {pipeline_mode = #tpu.pipeline_mode<synchronous>, transform_indices = @transform_1, window_bounds = array<i64: 384, 128>}, {pipeline_mode = #tpu.pipeline_mode<synchronous>, transform_indices = @transform_2, window_bounds = array<i64: 1, 128>}, {transform_indices = @transform_3, window_bounds = array<i64: 1, 64, 128>}]} {
    %c0 = arith.constant 0 : index
    %c0_0 = arith.constant 0 : index
    %c0_1 = arith.constant 0 : index
    %0 = vector.load %arg1[%c0, %c0_0, %c0_1] : memref<1x64x384xbf16, #tpu.memory_space<vmem>>, vector<1x64x384xbf16>
    %1 = vector.shape_cast %0 : vector<1x64x384xbf16> to vector<64x384xbf16>
    %c0_2 = arith.constant 0 : index
    %c0_3 = arith.constant 0 : index
    %2 = vector.load %arg2[%c0_2, %c0_3] : memref<384x128xbf16, #tpu.memory_space<vmem>>, vector<384x128xbf16>
    %cst = arith.constant dense<0.000000e+00> : vector<64x128xf32>
    %3 = tpu.matmul %1, %2, %cst {dimension_numbers = #tpu.dot_dimension_numbers<[1], [0], [0], [1], [0, 0, 1, 1], [], []>} : vector<64x384xbf16>, vector<384x128xbf16>, vector<64x128xf32> -> vector<64x128xf32>
    %c0_4 = arith.constant 0 : index
    %c0_5 = arith.constant 0 : index
    %4 = vector.load %arg3[%c0_4, %c0_5] : memref<1x128xf32, #tpu.memory_space<vmem>>, vector<1x128xf32>
    %5 = vector.broadcast %4 : vector<1x128xf32> to vector<64x128xf32>
    %6 = arith.addf %3, %5 : vector<64x128xf32>
    %cst_6 = arith.constant dense<0.000000e+00> : vector<128xf32>
    %7 = vector.multi_reduction <add>, %6, %cst_6 [0] : vector<64x128xf32> to vector<128xf32>
    %8 = vector.shape_cast %7 : vector<128xf32> to vector<1x128xf32>
    %9 = arith.mulf %6, %6 : vector<64x128xf32>
    %cst_7 = arith.constant dense<0.000000e+00> : vector<128xf32>
    %10 = vector.multi_reduction <add>, %9, %cst_7 [0] : vector<64x128xf32> to vector<128xf32>
    %11 = vector.shape_cast %10 : vector<128xf32> to vector<1x128xf32>
    %cst_8 = arith.constant 1.562500e-02 : f32
    %12 = vector.broadcast %cst_8 : f32 to vector<1x128xf32>
    %13 = arith.mulf %8, %12 : vector<1x128xf32>
    %cst_9 = arith.constant 1.562500e-02 : f32
    %14 = vector.broadcast %cst_9 : f32 to vector<1x128xf32>
    %15 = arith.mulf %11, %14 : vector<1x128xf32>
    %16 = arith.mulf %13, %13 : vector<1x128xf32>
    %17 = arith.subf %15, %16 : vector<1x128xf32>
    %cst_10 = arith.constant 0.000000e+00 : f32
    %18 = vector.broadcast %cst_10 : f32 to vector<1x128xf32>
    %19 = arith.maximumf %17, %18 : vector<1x128xf32>
    %20 = vector.broadcast %13 : vector<1x128xf32> to vector<64x128xf32>
    %21 = arith.subf %6, %20 : vector<64x128xf32>
    %cst_11 = arith.constant 9.99999974E-6 : f32
    %22 = vector.broadcast %cst_11 : f32 to vector<1x128xf32>
    %23 = arith.addf %19, %22 : vector<1x128xf32>
    %24 = math.rsqrt %23 : vector<1x128xf32>
    %25 = vector.broadcast %24 : vector<1x128xf32> to vector<64x128xf32>
    %26 = arith.mulf %21, %25 : vector<64x128xf32>
    %cst_12 = arith.constant 0.000000e+00 : f32
    %27 = vector.broadcast %cst_12 : f32 to vector<64x128xf32>
    %28 = arith.maximumf %26, %27 : vector<64x128xf32>
    %c0_13 = arith.constant 0 : index
    %c0_14 = arith.constant 0 : index
    %c0_15 = arith.constant 0 : index
    %29 = vector.load %arg4[%c0_13, %c0_14, %c0_15] : memref<1x64x128xf32, #tpu.memory_space<vmem>>, vector<1x64x128xf32>
    %30 = vector.shape_cast %29 : vector<1x64x128xf32> to vector<64x128xf32>
    %31 = vector.shape_cast %28 : vector<64x128xf32> to vector<1x64x128xf32>
    tpu.vector_store %arg4[%c0_13, %c0_14, %c0_15], %31 {strides = array<i32>} : memref<1x64x128xf32, #tpu.memory_space<vmem>>, vector<1x64x128xf32>,
    return
  }
  func.func @transform_0(%arg0: i32) -> (i32, i32, i32) {
    %c0_i32 = arith.constant 0 : i32
    %c0_i32_0 = arith.constant 0 : i32
    %c0_i32_1 = arith.constant 0 : i32
    return %arg0, %c0_i32, %c0_i32_0 : i32, i32, i32
  }
  func.func @transform_1(%arg0: i32) -> (i32, i32) {
    %c0_i32 = arith.constant 0 : i32
    %c0_i32_0 = arith.constant 0 : i32
    %c0_i32_1 = arith.constant 0 : i32
    return %c0_i32, %c0_i32_0 : i32, i32
  }
  func.func @transform_2(%arg0: i32) -> (i32, i32) {
    %c0_i32 = arith.constant 0 : i32
    %c0_i32_0 = arith.constant 0 : i32
    %c0_i32_1 = arith.constant 0 : i32
    return %c0_i32, %c0_i32_0 : i32, i32
  }
  func.func @transform_3(%arg0: i32) -> (i32, i32, i32) {
    %c0_i32 = arith.constant 0 : i32
    %c0_i32_0 = arith.constant 0 : i32
    %c0_i32_1 = arith.constant 0 : i32
    return %arg0, %c0_i32, %c0_i32_0 : i32, i32, i32
  }
}

module attributes {stable_mosaic.version = 11 : i64} {
  func.func @_conv_fused_kernel(%arg0: i32, %arg1: memref<1x64x640xbf16, #tpu.memory_space<vmem>>, %arg2: memref<640x128xbf16, #tpu.memory_space<vmem>>, %arg3: memref<1x128xf32, #tpu.memory_space<vmem>>, %arg4: memref<1x64x128xf32, #tpu.memory_space<vmem>>) attributes {dimension_semantics = [#tpu.dimension_semantics<parallel>], iteration_bounds = array<i64: 2>, scalar_prefetch = 0 : i64, scratch_operands = 0 : i64, tpu.core_type = #tpu.core_type<tc>, window_params = [{transform_indices = @transform_0, window_bounds = array<i64: 1, 64, 640>}, {pipeline_mode = #tpu.pipeline_mode<synchronous>, transform_indices = @transform_1, window_bounds = array<i64: 640, 128>}, {pipeline_mode = #tpu.pipeline_mode<synchronous>, transform_indices = @transform_2, window_bounds = array<i64: 1, 128>}, {transform_indices = @transform_3, window_bounds = array<i64: 1, 64, 128>}]} {
    %c0 = arith.constant 0 : index
    %c0_0 = arith.constant 0 : index
    %c0_1 = arith.constant 0 : index
    %0 = vector.load %arg1[%c0, %c0_0, %c0_1] : memref<1x64x640xbf16, #tpu.memory_space<vmem>>, vector<1x64x640xbf16>
    %1 = vector.shape_cast %0 : vector<1x64x640xbf16> to vector<64x640xbf16>
    %c0_2 = arith.constant 0 : index
    %c0_3 = arith.constant 0 : index
    %2 = vector.load %arg2[%c0_2, %c0_3] : memref<640x128xbf16, #tpu.memory_space<vmem>>, vector<640x128xbf16>
    %cst = arith.constant dense<0.000000e+00> : vector<64x128xf32>
    %3 = tpu.matmul %1, %2, %cst {dimension_numbers = #tpu.dot_dimension_numbers<[1], [0], [0], [1], [0, 0, 1, 1], [], []>} : vector<64x640xbf16>, vector<640x128xbf16>, vector<64x128xf32> -> vector<64x128xf32>
    %c0_4 = arith.constant 0 : index
    %c0_5 = arith.constant 0 : index
    %4 = vector.load %arg3[%c0_4, %c0_5] : memref<1x128xf32, #tpu.memory_space<vmem>>, vector<1x128xf32>
    %5 = vector.broadcast %4 : vector<1x128xf32> to vector<64x128xf32>
    %6 = arith.addf %3, %5 : vector<64x128xf32>
    %cst_6 = arith.constant dense<0.000000e+00> : vector<128xf32>
    %7 = vector.multi_reduction <add>, %6, %cst_6 [0] : vector<64x128xf32> to vector<128xf32>
    %8 = vector.shape_cast %7 : vector<128xf32> to vector<1x128xf32>
    %9 = arith.mulf %6, %6 : vector<64x128xf32>
    %cst_7 = arith.constant dense<0.000000e+00> : vector<128xf32>
    %10 = vector.multi_reduction <add>, %9, %cst_7 [0] : vector<64x128xf32> to vector<128xf32>
    %11 = vector.shape_cast %10 : vector<128xf32> to vector<1x128xf32>
    %cst_8 = arith.constant 1.562500e-02 : f32
    %12 = vector.broadcast %cst_8 : f32 to vector<1x128xf32>
    %13 = arith.mulf %8, %12 : vector<1x128xf32>
    %cst_9 = arith.constant 1.562500e-02 : f32
    %14 = vector.broadcast %cst_9 : f32 to vector<1x128xf32>
    %15 = arith.mulf %11, %14 : vector<1x128xf32>
    %16 = arith.mulf %13, %13 : vector<1x128xf32>
    %17 = arith.subf %15, %16 : vector<1x128xf32>
    %cst_10 = arith.constant 0.000000e+00 : f32
    %18 = vector.broadcast %cst_10 : f32 to vector<1x128xf32>
    %19 = arith.maximumf %17, %18 : vector<1x128xf32>
    %20 = vector.broadcast %13 : vector<1x128xf32> to vector<64x128xf32>
    %21 = arith.subf %6, %20 : vector<64x128xf32>
    %cst_11 = arith.constant 9.99999974E-6 : f32
    %22 = vector.broadcast %cst_11 : f32 to vector<1x128xf32>
    %23 = arith.addf %19, %22 : vector<1x128xf32>
    %24 = math.rsqrt %23 : vector<1x128xf32>
    %25 = vector.broadcast %24 : vector<1x128xf32> to vector<64x128xf32>
    %26 = arith.mulf %21, %25 : vector<64x128xf32>
    %cst_12 = arith.constant 0.000000e+00 : f32
    %27 = vector.broadcast %cst_12 : f32 to vector<64x128xf32>
    %28 = arith.maximumf %26, %27 : vector<64x128xf32>
    %c0_13 = arith.constant 0 : index
    %c0_14 = arith.constant 0 : index
    %c0_15 = arith.constant 0 : index
    %29 = vector.load %arg4[%c0_13, %c0_14, %c0_15] : memref<1x64x128xf32, #tpu.memory_space<vmem>>, vector<1x64x128xf32>
    %30 = vector.shape_cast %29 : vector<1x64x128xf32> to vector<64x128xf32>
    %31 = vector.shape_cast %28 : vector<64x128xf32> to vector<1x64x128xf32>
    tpu.vector_store %arg4[%c0_13, %c0_14, %c0_15], %31 {strides = array<i32>} : memref<1x64x128xf32, #tpu.memory_space<vmem>>, vector<1x64x128xf32>,
    return
  }
  func.func @transform_0(%arg0: i32) -> (i32, i32, i32) {
    %c0_i32 = arith.constant 0 : i32
    %c0_i32_0 = arith.constant 0 : i32
    %c0_i32_1 = arith.constant 0 : i32
    return %arg0, %c0_i32, %c0_i32_0 : i32, i32, i32
  }
  func.func @transform_1(%arg0: i32) -> (i32, i32) {
    %c0_i32 = arith.constant 0 : i32
    %c0_i32_0 = arith.constant 0 : i32
    %c0_i32_1 = arith.constant 0 : i32
    return %c0_i32, %c0_i32_0 : i32, i32
  }
  func.func @transform_2(%arg0: i32) -> (i32, i32) {
    %c0_i32 = arith.constant 0 : i32
    %c0_i32_0 = arith.constant 0 : i32
    %c0_i32_1 = arith.constant 0 : i32
    return %c0_i32, %c0_i32_0 : i32, i32
  }
  func.func @transform_3(%arg0: i32) -> (i32, i32, i32) {
    %c0_i32 = arith.constant 0 : i32
    %c0_i32_0 = arith.constant 0 : i32
    %c0_i32_1 = arith.constant 0 : i32
    return %arg0, %c0_i32, %c0_i32_0 : i32, i32, i32
  }
}

module attributes {stable_mosaic.version = 11 : i64} {
  func.func @_conv_fused_kernel(%arg0: i32, %arg1: memref<1x64x640xbf16, #tpu.memory_space<vmem>>, %arg2: memref<640x128xbf16, #tpu.memory_space<vmem>>, %arg3: memref<1x128xf32, #tpu.memory_space<vmem>>, %arg4: memref<1x64x128xf32, #tpu.memory_space<vmem>>, %arg5: memref<1x64x128xf32, #tpu.memory_space<vmem>>) attributes {dimension_semantics = [#tpu.dimension_semantics<parallel>], iteration_bounds = array<i64: 2>, scalar_prefetch = 0 : i64, scratch_operands = 0 : i64, tpu.core_type = #tpu.core_type<tc>, window_params = [{transform_indices = @transform_0, window_bounds = array<i64: 1, 64, 640>}, {pipeline_mode = #tpu.pipeline_mode<synchronous>, transform_indices = @transform_1, window_bounds = array<i64: 640, 128>}, {pipeline_mode = #tpu.pipeline_mode<synchronous>, transform_indices = @transform_2, window_bounds = array<i64: 1, 128>}, {transform_indices = @transform_3, window_bounds = array<i64: 1, 64, 128>}, {transform_indices = @transform_4, window_bounds = array<i64: 1, 64, 128>}]} {
    %c0 = arith.constant 0 : index
    %c0_0 = arith.constant 0 : index
    %c0_1 = arith.constant 0 : index
    %0 = vector.load %arg1[%c0, %c0_0, %c0_1] : memref<1x64x640xbf16, #tpu.memory_space<vmem>>, vector<1x64x640xbf16>
    %1 = vector.shape_cast %0 : vector<1x64x640xbf16> to vector<64x640xbf16>
    %c0_2 = arith.constant 0 : index
    %c0_3 = arith.constant 0 : index
    %2 = vector.load %arg2[%c0_2, %c0_3] : memref<640x128xbf16, #tpu.memory_space<vmem>>, vector<640x128xbf16>
    %cst = arith.constant dense<0.000000e+00> : vector<64x128xf32>
    %3 = tpu.matmul %1, %2, %cst {dimension_numbers = #tpu.dot_dimension_numbers<[1], [0], [0], [1], [0, 0, 1, 1], [], []>} : vector<64x640xbf16>, vector<640x128xbf16>, vector<64x128xf32> -> vector<64x128xf32>
    %c0_4 = arith.constant 0 : index
    %c0_5 = arith.constant 0 : index
    %4 = vector.load %arg3[%c0_4, %c0_5] : memref<1x128xf32, #tpu.memory_space<vmem>>, vector<1x128xf32>
    %5 = vector.broadcast %4 : vector<1x128xf32> to vector<64x128xf32>
    %6 = arith.addf %3, %5 : vector<64x128xf32>
    %cst_6 = arith.constant dense<0.000000e+00> : vector<128xf32>
    %7 = vector.multi_reduction <add>, %6, %cst_6 [0] : vector<64x128xf32> to vector<128xf32>
    %8 = vector.shape_cast %7 : vector<128xf32> to vector<1x128xf32>
    %9 = arith.mulf %6, %6 : vector<64x128xf32>
    %cst_7 = arith.constant dense<0.000000e+00> : vector<128xf32>
    %10 = vector.multi_reduction <add>, %9, %cst_7 [0] : vector<64x128xf32> to vector<128xf32>
    %11 = vector.shape_cast %10 : vector<128xf32> to vector<1x128xf32>
    %cst_8 = arith.constant 1.562500e-02 : f32
    %12 = vector.broadcast %cst_8 : f32 to vector<1x128xf32>
    %13 = arith.mulf %8, %12 : vector<1x128xf32>
    %cst_9 = arith.constant 1.562500e-02 : f32
    %14 = vector.broadcast %cst_9 : f32 to vector<1x128xf32>
    %15 = arith.mulf %11, %14 : vector<1x128xf32>
    %16 = arith.mulf %13, %13 : vector<1x128xf32>
    %17 = arith.subf %15, %16 : vector<1x128xf32>
    %cst_10 = arith.constant 0.000000e+00 : f32
    %18 = vector.broadcast %cst_10 : f32 to vector<1x128xf32>
    %19 = arith.maximumf %17, %18 : vector<1x128xf32>
    %20 = vector.broadcast %13 : vector<1x128xf32> to vector<64x128xf32>
    %21 = arith.subf %6, %20 : vector<64x128xf32>
    %cst_11 = arith.constant 9.99999974E-6 : f32
    %22 = vector.broadcast %cst_11 : f32 to vector<1x128xf32>
    %23 = arith.addf %19, %22 : vector<1x128xf32>
    %24 = math.rsqrt %23 : vector<1x128xf32>
    %25 = vector.broadcast %24 : vector<1x128xf32> to vector<64x128xf32>
    %26 = arith.mulf %21, %25 : vector<64x128xf32>
    %c0_12 = arith.constant 0 : index
    %c0_13 = arith.constant 0 : index
    %c0_14 = arith.constant 0 : index
    %27 = vector.load %arg4[%c0_12, %c0_13, %c0_14] : memref<1x64x128xf32, #tpu.memory_space<vmem>>, vector<1x64x128xf32>
    %28 = vector.shape_cast %27 : vector<1x64x128xf32> to vector<64x128xf32>
    %29 = arith.addf %28, %26 : vector<64x128xf32>
    %c0_15 = arith.constant 0 : index
    %c0_16 = arith.constant 0 : index
    %c0_17 = arith.constant 0 : index
    %30 = vector.load %arg5[%c0_15, %c0_16, %c0_17] : memref<1x64x128xf32, #tpu.memory_space<vmem>>, vector<1x64x128xf32>
    %31 = vector.shape_cast %30 : vector<1x64x128xf32> to vector<64x128xf32>
    %32 = vector.shape_cast %29 : vector<64x128xf32> to vector<1x64x128xf32>
    tpu.vector_store %arg5[%c0_15, %c0_16, %c0_17], %32 {strides = array<i32>} : memref<1x64x128xf32, #tpu.memory_space<vmem>>, vector<1x64x128xf32>,
    return
  }
  func.func @transform_0(%arg0: i32) -> (i32, i32, i32) {
    %c0_i32 = arith.constant 0 : i32
    %c0_i32_0 = arith.constant 0 : i32
    %c0_i32_1 = arith.constant 0 : i32
    return %arg0, %c0_i32, %c0_i32_0 : i32, i32, i32
  }
  func.func @transform_1(%arg0: i32) -> (i32, i32) {
    %c0_i32 = arith.constant 0 : i32
    %c0_i32_0 = arith.constant 0 : i32
    %c0_i32_1 = arith.constant 0 : i32
    return %c0_i32, %c0_i32_0 : i32, i32
  }
  func.func @transform_2(%arg0: i32) -> (i32, i32) {
    %c0_i32 = arith.constant 0 : i32
    %c0_i32_0 = arith.constant 0 : i32
    %c0_i32_1 = arith.constant 0 : i32
    return %c0_i32, %c0_i32_0 : i32, i32
  }
  func.func @transform_3(%arg0: i32) -> (i32, i32, i32) {
    %c0_i32 = arith.constant 0 : i32
    %c0_i32_0 = arith.constant 0 : i32
    %c0_i32_1 = arith.constant 0 : i32
    return %arg0, %c0_i32, %c0_i32_0 : i32, i32, i32
  }
  func.func @transform_4(%arg0: i32) -> (i32, i32, i32) {
    %c0_i32 = arith.constant 0 : i32
    %c0_i32_0 = arith.constant 0 : i32
    %c0_i32_1 = arith.constant 0 : i32
    return %arg0, %c0_i32, %c0_i32_0 : i32, i32, i32
  }
}

module attributes {stable_mosaic.version = 11 : i64} {
  func.func @_convt_fused_kernel(%arg0: i32, %arg1: memref<1x64x256xbf16, #tpu.memory_space<vmem>>, %arg2: memref<4x256x128xbf16, #tpu.memory_space<vmem>>, %arg3: memref<1x128xf32, #tpu.memory_space<vmem>>, %arg4: memref<1x4x64x128xf32, #tpu.memory_space<vmem>>) attributes {dimension_semantics = [#tpu.dimension_semantics<parallel>], iteration_bounds = array<i64: 2>, scalar_prefetch = 0 : i64, scratch_operands = 0 : i64, tpu.core_type = #tpu.core_type<tc>, window_params = [{transform_indices = @transform_0, window_bounds = array<i64: 1, 64, 256>}, {pipeline_mode = #tpu.pipeline_mode<synchronous>, transform_indices = @transform_1, window_bounds = array<i64: 4, 256, 128>}, {pipeline_mode = #tpu.pipeline_mode<synchronous>, transform_indices = @transform_2, window_bounds = array<i64: 1, 128>}, {transform_indices = @transform_3, window_bounds = array<i64: 1, 4, 64, 128>}]} {
    %c0 = arith.constant 0 : index
    %c0_0 = arith.constant 0 : index
    %c0_1 = arith.constant 0 : index
    %0 = vector.load %arg1[%c0, %c0_0, %c0_1] : memref<1x64x256xbf16, #tpu.memory_space<vmem>>, vector<1x64x256xbf16>
    %1 = vector.shape_cast %0 : vector<1x64x256xbf16> to vector<64x256xbf16>
    %c0_2 = arith.constant 0 : index
    %c0_3 = arith.constant 0 : index
    %2 = vector.load %arg3[%c0_2, %c0_3] : memref<1x128xf32, #tpu.memory_space<vmem>>, vector<1x128xf32>
    %cst = arith.constant 0.000000e+00 : f32
    %3 = vector.broadcast %cst : f32 to vector<1x128xf32>
    %cst_4 = arith.constant 0.000000e+00 : f32
    %4 = vector.broadcast %cst_4 : f32 to vector<1x128xf32>
    %c0_5 = arith.constant 0 : index
    %c0_6 = arith.constant 0 : index
    %c0_7 = arith.constant 0 : index
    %5 = vector.load %arg2[%c0_5, %c0_6, %c0_7] : memref<4x256x128xbf16, #tpu.memory_space<vmem>>, vector<1x256x128xbf16>
    %6 = vector.shape_cast %5 : vector<1x256x128xbf16> to vector<256x128xbf16>
    %cst_8 = arith.constant dense<0.000000e+00> : vector<64x128xf32>
    %7 = tpu.matmul %1, %6, %cst_8 {dimension_numbers = #tpu.dot_dimension_numbers<[1], [0], [0], [1], [0, 0, 1, 1], [], []>} : vector<64x256xbf16>, vector<256x128xbf16>, vector<64x128xf32> -> vector<64x128xf32>
    %8 = vector.broadcast %2 : vector<1x128xf32> to vector<64x128xf32>
    %9 = arith.addf %7, %8 : vector<64x128xf32>
    %c0_9 = arith.constant 0 : index
    %c0_10 = arith.constant 0 : index
    %c0_11 = arith.constant 0 : index
    %c0_12 = arith.constant 0 : index
    %10 = vector.load %arg4[%c0_9, %c0_10, %c0_11, %c0_12] : memref<1x4x64x128xf32, #tpu.memory_space<vmem>>, vector<1x1x64x128xf32>
    %11 = vector.shape_cast %10 : vector<1x1x64x128xf32> to vector<64x128xf32>
    %12 = vector.shape_cast %9 : vector<64x128xf32> to vector<1x1x64x128xf32>
    tpu.vector_store %arg4[%c0_9, %c0_10, %c0_11, %c0_12], %12 {strides = array<i32>} : memref<1x4x64x128xf32, #tpu.memory_space<vmem>>, vector<1x1x64x128xf32>,
    %cst_13 = arith.constant dense<0.000000e+00> : vector<128xf32>
    %13 = vector.multi_reduction <add>, %9, %cst_13 [0] : vector<64x128xf32> to vector<128xf32>
    %14 = vector.shape_cast %13 : vector<128xf32> to vector<1x128xf32>
    %15 = arith.addf %3, %14 : vector<1x128xf32>
    %16 = arith.mulf %9, %9 : vector<64x128xf32>
    %cst_14 = arith.constant dense<0.000000e+00> : vector<128xf32>
    %17 = vector.multi_reduction <add>, %16, %cst_14 [0] : vector<64x128xf32> to vector<128xf32>
    %18 = vector.shape_cast %17 : vector<128xf32> to vector<1x128xf32>
    %19 = arith.addf %4, %18 : vector<1x128xf32>
    %c1 = arith.constant 1 : index
    %c0_15 = arith.constant 0 : index
    %c0_16 = arith.constant 0 : index
    %20 = vector.load %arg2[%c1, %c0_15, %c0_16] : memref<4x256x128xbf16, #tpu.memory_space<vmem>>, vector<1x256x128xbf16>
    %21 = vector.shape_cast %20 : vector<1x256x128xbf16> to vector<256x128xbf16>
    %cst_17 = arith.constant dense<0.000000e+00> : vector<64x128xf32>
    %22 = tpu.matmul %1, %21, %cst_17 {dimension_numbers = #tpu.dot_dimension_numbers<[1], [0], [0], [1], [0, 0, 1, 1], [], []>} : vector<64x256xbf16>, vector<256x128xbf16>, vector<64x128xf32> -> vector<64x128xf32>
    %23 = vector.broadcast %2 : vector<1x128xf32> to vector<64x128xf32>
    %24 = arith.addf %22, %23 : vector<64x128xf32>
    %c0_18 = arith.constant 0 : index
    %c1_19 = arith.constant 1 : index
    %c0_20 = arith.constant 0 : index
    %c0_21 = arith.constant 0 : index
    %25 = vector.load %arg4[%c0_18, %c1_19, %c0_20, %c0_21] : memref<1x4x64x128xf32, #tpu.memory_space<vmem>>, vector<1x1x64x128xf32>
    %26 = vector.shape_cast %25 : vector<1x1x64x128xf32> to vector<64x128xf32>
    %27 = vector.shape_cast %24 : vector<64x128xf32> to vector<1x1x64x128xf32>
    tpu.vector_store %arg4[%c0_18, %c1_19, %c0_20, %c0_21], %27 {strides = array<i32>} : memref<1x4x64x128xf32, #tpu.memory_space<vmem>>, vector<1x1x64x128xf32>,
    %cst_22 = arith.constant dense<0.000000e+00> : vector<128xf32>
    %28 = vector.multi_reduction <add>, %24, %cst_22 [0] : vector<64x128xf32> to vector<128xf32>
    %29 = vector.shape_cast %28 : vector<128xf32> to vector<1x128xf32>
    %30 = arith.addf %15, %29 : vector<1x128xf32>
    %31 = arith.mulf %24, %24 : vector<64x128xf32>
    %cst_23 = arith.constant dense<0.000000e+00> : vector<128xf32>
    %32 = vector.multi_reduction <add>, %31, %cst_23 [0] : vector<64x128xf32> to vector<128xf32>
    %33 = vector.shape_cast %32 : vector<128xf32> to vector<1x128xf32>
    %34 = arith.addf %19, %33 : vector<1x128xf32>
    %c2 = arith.constant 2 : index
    %c0_24 = arith.constant 0 : index
    %c0_25 = arith.constant 0 : index
    %35 = vector.load %arg2[%c2, %c0_24, %c0_25] : memref<4x256x128xbf16, #tpu.memory_space<vmem>>, vector<1x256x128xbf16>
    %36 = vector.shape_cast %35 : vector<1x256x128xbf16> to vector<256x128xbf16>
    %cst_26 = arith.constant dense<0.000000e+00> : vector<64x128xf32>
    %37 = tpu.matmul %1, %36, %cst_26 {dimension_numbers = #tpu.dot_dimension_numbers<[1], [0], [0], [1], [0, 0, 1, 1], [], []>} : vector<64x256xbf16>, vector<256x128xbf16>, vector<64x128xf32> -> vector<64x128xf32>
    %38 = vector.broadcast %2 : vector<1x128xf32> to vector<64x128xf32>
    %39 = arith.addf %37, %38 : vector<64x128xf32>
    %c0_27 = arith.constant 0 : index
    %c2_28 = arith.constant 2 : index
    %c0_29 = arith.constant 0 : index
    %c0_30 = arith.constant 0 : index
    %40 = vector.load %arg4[%c0_27, %c2_28, %c0_29, %c0_30] : memref<1x4x64x128xf32, #tpu.memory_space<vmem>>, vector<1x1x64x128xf32>
    %41 = vector.shape_cast %40 : vector<1x1x64x128xf32> to vector<64x128xf32>
    %42 = vector.shape_cast %39 : vector<64x128xf32> to vector<1x1x64x128xf32>
    tpu.vector_store %arg4[%c0_27, %c2_28, %c0_29, %c0_30], %42 {strides = array<i32>} : memref<1x4x64x128xf32, #tpu.memory_space<vmem>>, vector<1x1x64x128xf32>,
    %cst_31 = arith.constant dense<0.000000e+00> : vector<128xf32>
    %43 = vector.multi_reduction <add>, %39, %cst_31 [0] : vector<64x128xf32> to vector<128xf32>
    %44 = vector.shape_cast %43 : vector<128xf32> to vector<1x128xf32>
    %45 = arith.addf %30, %44 : vector<1x128xf32>
    %46 = arith.mulf %39, %39 : vector<64x128xf32>
    %cst_32 = arith.constant dense<0.000000e+00> : vector<128xf32>
    %47 = vector.multi_reduction <add>, %46, %cst_32 [0] : vector<64x128xf32> to vector<128xf32>
    %48 = vector.shape_cast %47 : vector<128xf32> to vector<1x128xf32>
    %49 = arith.addf %34, %48 : vector<1x128xf32>
    %c3 = arith.constant 3 : index
    %c0_33 = arith.constant 0 : index
    %c0_34 = arith.constant 0 : index
    %50 = vector.load %arg2[%c3, %c0_33, %c0_34] : memref<4x256x128xbf16, #tpu.memory_space<vmem>>, vector<1x256x128xbf16>
    %51 = vector.shape_cast %50 : vector<1x256x128xbf16> to vector<256x128xbf16>
    %cst_35 = arith.constant dense<0.000000e+00> : vector<64x128xf32>
    %52 = tpu.matmul %1, %51, %cst_35 {dimension_numbers = #tpu.dot_dimension_numbers<[1], [0], [0], [1], [0, 0, 1, 1], [], []>} : vector<64x256xbf16>, vector<256x128xbf16>, vector<64x128xf32> -> vector<64x128xf32>
    %53 = vector.broadcast %2 : vector<1x128xf32> to vector<64x128xf32>
    %54 = arith.addf %52, %53 : vector<64x128xf32>
    %c0_36 = arith.constant 0 : index
    %c3_37 = arith.constant 3 : index
    %c0_38 = arith.constant 0 : index
    %c0_39 = arith.constant 0 : index
    %55 = vector.load %arg4[%c0_36, %c3_37, %c0_38, %c0_39] : memref<1x4x64x128xf32, #tpu.memory_space<vmem>>, vector<1x1x64x128xf32>
    %56 = vector.shape_cast %55 : vector<1x1x64x128xf32> to vector<64x128xf32>
    %57 = vector.shape_cast %54 : vector<64x128xf32> to vector<1x1x64x128xf32>
    tpu.vector_store %arg4[%c0_36, %c3_37, %c0_38, %c0_39], %57 {strides = array<i32>} : memref<1x4x64x128xf32, #tpu.memory_space<vmem>>, vector<1x1x64x128xf32>,
    %cst_40 = arith.constant dense<0.000000e+00> : vector<128xf32>
    %58 = vector.multi_reduction <add>, %54, %cst_40 [0] : vector<64x128xf32> to vector<128xf32>
    %59 = vector.shape_cast %58 : vector<128xf32> to vector<1x128xf32>
    %60 = arith.addf %45, %59 : vector<1x128xf32>
    %61 = arith.mulf %54, %54 : vector<64x128xf32>
    %cst_41 = arith.constant dense<0.000000e+00> : vector<128xf32>
    %62 = vector.multi_reduction <add>, %61, %cst_41 [0] : vector<64x128xf32> to vector<128xf32>
    %63 = vector.shape_cast %62 : vector<128xf32> to vector<1x128xf32>
    %64 = arith.addf %49, %63 : vector<1x128xf32>
    %cst_42 = arith.constant 3.906250e-03 : f32
    %65 = vector.broadcast %cst_42 : f32 to vector<1x128xf32>
    %66 = arith.mulf %60, %65 : vector<1x128xf32>
    %cst_43 = arith.constant 3.906250e-03 : f32
    %67 = vector.broadcast %cst_43 : f32 to vector<1x128xf32>
    %68 = arith.mulf %64, %67 : vector<1x128xf32>
    %69 = arith.mulf %66, %66 : vector<1x128xf32>
    %70 = arith.subf %68, %69 : vector<1x128xf32>
    %cst_44 = arith.constant 0.000000e+00 : f32
    %71 = vector.broadcast %cst_44 : f32 to vector<1x128xf32>
    %72 = arith.maximumf %70, %71 : vector<1x128xf32>
    %cst_45 = arith.constant 9.99999974E-6 : f32
    %73 = vector.broadcast %cst_45 : f32 to vector<1x128xf32>
    %74 = arith.addf %72, %73 : vector<1x128xf32>
    %75 = math.rsqrt %74 : vector<1x128xf32>
    %c0_46 = arith.constant 0 : index
    %c0_47 = arith.constant 0 : index
    %c0_48 = arith.constant 0 : index
    %c0_49 = arith.constant 0 : index
    %76 = vector.load %arg4[%c0_46, %c0_47, %c0_48, %c0_49] : memref<1x4x64x128xf32, #tpu.memory_space<vmem>>, vector<1x1x64x128xf32>
    %77 = vector.shape_cast %76 : vector<1x1x64x128xf32> to vector<64x128xf32>
    %78 = vector.broadcast %66 : vector<1x128xf32> to vector<64x128xf32>
    %79 = arith.subf %77, %78 : vector<64x128xf32>
    %80 = vector.broadcast %75 : vector<1x128xf32> to vector<64x128xf32>
    %81 = arith.mulf %79, %80 : vector<64x128xf32>
    %cst_50 = arith.constant 0.000000e+00 : f32
    %82 = vector.broadcast %cst_50 : f32 to vector<64x128xf32>
    %83 = arith.maximumf %81, %82 : vector<64x128xf32>
    %c0_51 = arith.constant 0 : index
    %c0_52 = arith.constant 0 : index
    %c0_53 = arith.constant 0 : index
    %c0_54 = arith.constant 0 : index
    %84 = vector.load %arg4[%c0_51, %c0_52, %c0_53, %c0_54] : memref<1x4x64x128xf32, #tpu.memory_space<vmem>>, vector<1x1x64x128xf32>
    %85 = vector.shape_cast %84 : vector<1x1x64x128xf32> to vector<64x128xf32>
    %86 = vector.shape_cast %83 : vector<64x128xf32> to vector<1x1x64x128xf32>
    tpu.vector_store %arg4[%c0_51, %c0_52, %c0_53, %c0_54], %86 {strides = array<i32>} : memref<1x4x64x128xf32, #tpu.memory_space<vmem>>, vector<1x1x64x128xf32>,
    %c0_55 = arith.constant 0 : index
    %c1_56 = arith.constant 1 : index
    %c0_57 = arith.constant 0 : index
    %c0_58 = arith.constant 0 : index
    %87 = vector.load %arg4[%c0_55, %c1_56, %c0_57, %c0_58] : memref<1x4x64x128xf32, #tpu.memory_space<vmem>>, vector<1x1x64x128xf32>
    %88 = vector.shape_cast %87 : vector<1x1x64x128xf32> to vector<64x128xf32>
    %89 = vector.broadcast %66 : vector<1x128xf32> to vector<64x128xf32>
    %90 = arith.subf %88, %89 : vector<64x128xf32>
    %91 = vector.broadcast %75 : vector<1x128xf32> to vector<64x128xf32>
    %92 = arith.mulf %90, %91 : vector<64x128xf32>
    %cst_59 = arith.constant 0.000000e+00 : f32
    %93 = vector.broadcast %cst_59 : f32 to vector<64x128xf32>
    %94 = arith.maximumf %92, %93 : vector<64x128xf32>
    %c0_60 = arith.constant 0 : index
    %c1_61 = arith.constant 1 : index
    %c0_62 = arith.constant 0 : index
    %c0_63 = arith.constant 0 : index
    %95 = vector.load %arg4[%c0_60, %c1_61, %c0_62, %c0_63] : memref<1x4x64x128xf32, #tpu.memory_space<vmem>>, vector<1x1x64x128xf32>
    %96 = vector.shape_cast %95 : vector<1x1x64x128xf32> to vector<64x128xf32>
    %97 = vector.shape_cast %94 : vector<64x128xf32> to vector<1x1x64x128xf32>
    tpu.vector_store %arg4[%c0_60, %c1_61, %c0_62, %c0_63], %97 {strides = array<i32>} : memref<1x4x64x128xf32, #tpu.memory_space<vmem>>, vector<1x1x64x128xf32>,
    %c0_64 = arith.constant 0 : index
    %c2_65 = arith.constant 2 : index
    %c0_66 = arith.constant 0 : index
    %c0_67 = arith.constant 0 : index
    %98 = vector.load %arg4[%c0_64, %c2_65, %c0_66, %c0_67] : memref<1x4x64x128xf32, #tpu.memory_space<vmem>>, vector<1x1x64x128xf32>
    %99 = vector.shape_cast %98 : vector<1x1x64x128xf32> to vector<64x128xf32>
    %100 = vector.broadcast %66 : vector<1x128xf32> to vector<64x128xf32>
    %101 = arith.subf %99, %100 : vector<64x128xf32>
    %102 = vector.broadcast %75 : vector<1x128xf32> to vector<64x128xf32>
    %103 = arith.mulf %101, %102 : vector<64x128xf32>
    %cst_68 = arith.constant 0.000000e+00 : f32
    %104 = vector.broadcast %cst_68 : f32 to vector<64x128xf32>
    %105 = arith.maximumf %103, %104 : vector<64x128xf32>
    %c0_69 = arith.constant 0 : index
    %c2_70 = arith.constant 2 : index
    %c0_71 = arith.constant 0 : index
    %c0_72 = arith.constant 0 : index
    %106 = vector.load %arg4[%c0_69, %c2_70, %c0_71, %c0_72] : memref<1x4x64x128xf32, #tpu.memory_space<vmem>>, vector<1x1x64x128xf32>
    %107 = vector.shape_cast %106 : vector<1x1x64x128xf32> to vector<64x128xf32>
    %108 = vector.shape_cast %105 : vector<64x128xf32> to vector<1x1x64x128xf32>
    tpu.vector_store %arg4[%c0_69, %c2_70, %c0_71, %c0_72], %108 {strides = array<i32>} : memref<1x4x64x128xf32, #tpu.memory_space<vmem>>, vector<1x1x64x128xf32>,
    %c0_73 = arith.constant 0 : index
    %c3_74 = arith.constant 3 : index
    %c0_75 = arith.constant 0 : index
    %c0_76 = arith.constant 0 : index
    %109 = vector.load %arg4[%c0_73, %c3_74, %c0_75, %c0_76] : memref<1x4x64x128xf32, #tpu.memory_space<vmem>>, vector<1x1x64x128xf32>
    %110 = vector.shape_cast %109 : vector<1x1x64x128xf32> to vector<64x128xf32>
    %111 = vector.broadcast %66 : vector<1x128xf32> to vector<64x128xf32>
    %112 = arith.subf %110, %111 : vector<64x128xf32>
    %113 = vector.broadcast %75 : vector<1x128xf32> to vector<64x128xf32>
    %114 = arith.mulf %112, %113 : vector<64x128xf32>
    %cst_77 = arith.constant 0.000000e+00 : f32
    %115 = vector.broadcast %cst_77 : f32 to vector<64x128xf32>
    %116 = arith.maximumf %114, %115 : vector<64x128xf32>
    %c0_78 = arith.constant 0 : index
    %c3_79 = arith.constant 3 : index
    %c0_80 = arith.constant 0 : index
    %c0_81 = arith.constant 0 : index
    %117 = vector.load %arg4[%c0_78, %c3_79, %c0_80, %c0_81] : memref<1x4x64x128xf32, #tpu.memory_space<vmem>>, vector<1x1x64x128xf32>
    %118 = vector.shape_cast %117 : vector<1x1x64x128xf32> to vector<64x128xf32>
    %119 = vector.shape_cast %116 : vector<64x128xf32> to vector<1x1x64x128xf32>
    tpu.vector_store %arg4[%c0_78, %c3_79, %c0_80, %c0_81], %119 {strides = array<i32>} : memref<1x4x64x128xf32, #tpu.memory_space<vmem>>, vector<1x1x64x128xf32>,
    return
  }
  func.func @transform_0(%arg0: i32) -> (i32, i32, i32) {
    %c0_i32 = arith.constant 0 : i32
    %c0_i32_0 = arith.constant 0 : i32
    %c0_i32_1 = arith.constant 0 : i32
    return %arg0, %c0_i32, %c0_i32_0 : i32, i32, i32
  }
  func.func @transform_1(%arg0: i32) -> (i32, i32, i32) {
    %c0_i32 = arith.constant 0 : i32
    %c0_i32_0 = arith.constant 0 : i32
    %c0_i32_1 = arith.constant 0 : i32
    %c0_i32_2 = arith.constant 0 : i32
    return %c0_i32, %c0_i32_0, %c0_i32_1 : i32, i32, i32
  }
  func.func @transform_2(%arg0: i32) -> (i32, i32) {
    %c0_i32 = arith.constant 0 : i32
    %c0_i32_0 = arith.constant 0 : i32
    %c0_i32_1 = arith.constant 0 : i32
    return %c0_i32, %c0_i32_0 : i32, i32
  }
  func.func @transform_3(%arg0: i32) -> (i32, i32, i32, i32) {
    %c0_i32 = arith.constant 0 : i32
    %c0_i32_0 = arith.constant 0 : i32
    %c0_i32_1 = arith.constant 0 : i32
    %c0_i32_2 = arith.constant 0 : i32
    return %arg0, %c0_i32, %c0_i32_0, %c0_i32_1 : i32, i32, i32, i32
  }
}

module attributes {stable_mosaic.version = 11 : i64} {
  func.func @_conv_fused_kernel(%arg0: i32, %arg1: memref<1x256x1664xbf16, #tpu.memory_space<vmem>>, %arg2: memref<1664x128xbf16, #tpu.memory_space<vmem>>, %arg3: memref<1x128xf32, #tpu.memory_space<vmem>>, %arg4: memref<1x256x128xf32, #tpu.memory_space<vmem>>) attributes {dimension_semantics = [#tpu.dimension_semantics<parallel>], iteration_bounds = array<i64: 2>, scalar_prefetch = 0 : i64, scratch_operands = 0 : i64, tpu.core_type = #tpu.core_type<tc>, window_params = [{transform_indices = @transform_0, window_bounds = array<i64: 1, 256, 1664>}, {pipeline_mode = #tpu.pipeline_mode<synchronous>, transform_indices = @transform_1, window_bounds = array<i64: 1664, 128>}, {pipeline_mode = #tpu.pipeline_mode<synchronous>, transform_indices = @transform_2, window_bounds = array<i64: 1, 128>}, {transform_indices = @transform_3, window_bounds = array<i64: 1, 256, 128>}]} {
    %c0 = arith.constant 0 : index
    %c0_0 = arith.constant 0 : index
    %c0_1 = arith.constant 0 : index
    %0 = vector.load %arg1[%c0, %c0_0, %c0_1] : memref<1x256x1664xbf16, #tpu.memory_space<vmem>>, vector<1x256x1664xbf16>
    %1 = vector.shape_cast %0 : vector<1x256x1664xbf16> to vector<256x1664xbf16>
    %c0_2 = arith.constant 0 : index
    %c0_3 = arith.constant 0 : index
    %2 = vector.load %arg2[%c0_2, %c0_3] : memref<1664x128xbf16, #tpu.memory_space<vmem>>, vector<1664x128xbf16>
    %cst = arith.constant dense<0.000000e+00> : vector<256x128xf32>
    %3 = tpu.matmul %1, %2, %cst {dimension_numbers = #tpu.dot_dimension_numbers<[1], [0], [0], [1], [0, 0, 1, 1], [], []>} : vector<256x1664xbf16>, vector<1664x128xbf16>, vector<256x128xf32> -> vector<256x128xf32>
    %c0_4 = arith.constant 0 : index
    %c0_5 = arith.constant 0 : index
    %4 = vector.load %arg3[%c0_4, %c0_5] : memref<1x128xf32, #tpu.memory_space<vmem>>, vector<1x128xf32>
    %5 = vector.broadcast %4 : vector<1x128xf32> to vector<256x128xf32>
    %6 = arith.addf %3, %5 : vector<256x128xf32>
    %7 = math.tanh %6 : vector<256x128xf32>
    %c0_6 = arith.constant 0 : index
    %c0_7 = arith.constant 0 : index
    %c0_8 = arith.constant 0 : index
    %8 = vector.load %arg4[%c0_6, %c0_7, %c0_8] : memref<1x256x128xf32, #tpu.memory_space<vmem>>, vector<1x256x128xf32>
    %9 = vector.shape_cast %8 : vector<1x256x128xf32> to vector<256x128xf32>
    %10 = vector.shape_cast %7 : vector<256x128xf32> to vector<1x256x128xf32>
    tpu.vector_store %arg4[%c0_6, %c0_7, %c0_8], %10 {strides = array<i32>} : memref<1x256x128xf32, #tpu.memory_space<vmem>>, vector<1x256x128xf32>,
    return
  }
  func.func @transform_0(%arg0: i32) -> (i32, i32, i32) {
    %c0_i32 = arith.constant 0 : i32
    %c0_i32_0 = arith.constant 0 : i32
    %c0_i32_1 = arith.constant 0 : i32
    return %arg0, %c0_i32, %c0_i32_0 : i32, i32, i32
  }
  func.func @transform_1(%arg0: i32) -> (i32, i32) {
    %c0_i32 = arith.constant 0 : i32
    %c0_i32_0 = arith.constant 0 : i32
    %c0_i32_1 = arith.constant 0 : i32
    return %c0_i32, %c0_i32_0 : i32, i32
  }
  func.func @transform_2(%arg0: i32) -> (i32, i32) {
    %c0_i32 = arith.constant 0 : i32
    %c0_i32_0 = arith.constant 0 : i32
    %c0_i32_1 = arith.constant 0 : i32
    return %c0_i32, %c0_i32_0 : i32, i32
  }
  func.func @transform_3(%arg0: i32) -> (i32, i32, i32) {
    %c0_i32 = arith.constant 0 : i32
    %c0_i32_0 = arith.constant 0 : i32
    %c0_i32_1 = arith.constant 0 : i32
    return %arg0, %c0_i32, %c0_i32_0 : i32, i32, i32
  }
}

</mosaic_0001>

<llo_original>
// kernel: generator_forward.10
$region0: #{generator_forward.10}
  #allocation0 [shape = 'u32[]', space=smem, size = 0x4, offset = 0x4, fixed_abs, tag = 'smem constant byte address 0x4 - core index']
  #allocation1 [shape = 'u32[72,128]{1,0:T(1,128)}', space=vmem, size = 0x9000, scoped, tag = 'internal scratch']
  %s0 = inlined_call_operand.vmem [shape: bf16[2,256,128], index: 0, kind: input, shape index: {}]
  %s1 = inlined_call_operand.hbm [shape: bf16[128,128], index: 1, kind: input, shape index: {}]
  %s2 = inlined_call_operand.hbm [shape: f32[1,128], index: 2, kind: input, shape index: {}]
  %s3 = inlined_call_operand.vmem [shape: f32[2,256,128], index: 3, kind: output, shape index: {}]
  %s4 = sld [smem:[#allocation0]]
  $region53: #{generator_forward.10} parent=0
    _
  %s6 = ssub.s32 1, %s4
  %s7 = scalar_select 0, %s6, %s4
  $region1: #{generator_forward.10} parent=0
    #allocation2 [shape = 'u8[32768]{0}', space=vmem, size = 0x8000, scoped, tag = 'input window, operand 1, single buffered']
    #allocation3 [shape = 's32[2]{0}', space=sflag, size = 0x8, scoped, tag = 'scoped memory for generator_forward.10']
    #allocation4 [shape = 'u8[512]{0}', space=vmem, size = 0x400, scoped, tag = 'input window, operand 2, single buffered']
    #allocation5 [shape = 's32[1]{0}', space=sflag, size = 0x4, scoped, tag = 'scoped memory for generator_forward.10']
    %8 = vsyncpa [#allocation3], 0
    %9 = vsyncpa [#allocation5], 0
    loop: start=0, step=1, limit=4
    $region2: #{generator_forward.10} parent=1 // loop_pre_header
      _
    $region3: #{generator_forward.10} parent=1 // loop_header
      %s11 = sphi 0, %s15
      %p12 = scmp.ge.s32.totalorder %s11, 4
      %s21 = sphi 0, %s23
      %s24 = sphi 0, %s21
      %s25 = sphi 0, %s24
      %s41 = sphi 0, %s25
      %s45 = sphi 0, %s45
      %s47 = sphi 0, %s45
      %s48 = sphi 0, %s47
      %s62 = sphi 0, %s48
      %s66 = sphi 0, %s66
      %s68 = sphi 0, %s66
      %s69 = sphi 0, %s68
      %s83 = sphi 0, %s69
      %s89 = sphi 0, %s91
      %s92 = sphi 0, %s89
      %s93 = sphi 0, %s92
      %s109 = sphi 0, %s93
    $region4: #{generator_forward.10} parent=1 // loop_header_branch
      %14 = sbr.rel (%p12) target = $region8
    $region5: #{generator_forward.10} parent=1 // loop_body
      %s16 = ssub.s32 %s11, 1
      %s17 = ssub.s32 %s11, 2
      %s18 = sadd.s32 %s11, 1
      %s19 = ssub.s32 %s11, %s18
      %p20 = scmp.eq.s32.totalorder %s19, 0
      %s22 = sadd.s32 %s21, 1
      %s23 = scalar_select %p20, %s21, %s22
      %p26 = pneg %p20
      %p27 = scmp.eq.s32.totalorder %s11, 1
      %p28 = por %p26, %p27
      %p29 = scmp.ne.s32.totalorder %s21, %s24
      %p30 = scmp.eq.s32.totalorder %s11, 0
      %p31 = por %p29, %p30
      %p32 = scmp.ne.s32.totalorder %s21, %s24
      %p33 = scmp.eq.s32.totalorder %s16, 1
      %p34 = por %p32, %p33
      %p35 = scmp.ne.s32.totalorder %s24, %s25
      %p36 = scmp.eq.s32.totalorder %s16, 0
      %p37 = por %p35, %p36
      %p38 = scmp.ne.s32.totalorder %s24, %s25
      %p39 = scmp.eq.s32.totalorder %s17, 1
      %p40 = por %p38, %p39
      %p42 = scmp.ne.s32.totalorder %s25, %s41
      %p43 = scmp.eq.s32.totalorder %s17, 0
      %p44 = por %p42, %p43
      %s46 = sadd.s32 %s45, 1
      %p49 = scmp.eq.s32.totalorder %s11, 1
      %p50 = scmp.ne.s32.totalorder %s45, %s47
      %p51 = scmp.eq.s32.totalorder %s11, 0
      %p52 = por %p50, %p51
      %p53 = scmp.ne.s32.totalorder %s45, %s47
      %p54 = scmp.eq.s32.totalorder %s16, 1
      %p55 = por %p53, %p54
      %p56 = scmp.ne.s32.totalorder %s47, %s48
      %p57 = scmp.eq.s32.totalorder %s16, 0
      %p58 = por %p56, %p57
      %p59 = scmp.ne.s32.totalorder %s47, %s48
      %p60 = scmp.eq.s32.totalorder %s17, 1
      %p61 = por %p59, %p60
      %p63 = scmp.ne.s32.totalorder %s48, %s62
      %p64 = scmp.eq.s32.totalorder %s17, 0
      %p65 = por %p63, %p64
      %s67 = sadd.s32 %s66, 1
      %p70 = scmp.eq.s32.totalorder %s11, 1
      %p71 = scmp.ne.s32.totalorder %s66, %s68
      %p72 = scmp.eq.s32.totalorder %s11, 0
      %p73 = por %p71, %p72
      %p74 = scmp.ne.s32.totalorder %s66, %s68
      %p75 = scmp.eq.s32.totalorder %s16, 1
      %p76 = por %p74, %p75
      %p77 = scmp.ne.s32.totalorder %s68, %s69
      %p78 = scmp.eq.s32.totalorder %s16, 0
      %p79 = por %p77, %p78
      %p80 = scmp.ne.s32.totalorder %s68, %s69
      %p81 = scmp.eq.s32.totalorder %s17, 1
      %p82 = por %p80, %p81
      %p84 = scmp.ne.s32.totalorder %s69, %s83
      %p85 = scmp.eq.s32.totalorder %s17, 0
      %p86 = por %p84, %p85
      %s87 = ssub.s32 %s11, %s18
      %p88 = scmp.eq.s32.totalorder %s87, 0
      %s90 = sadd.s32 %s89, 1
      %s91 = scalar_select %p88, %s89, %s90
      %p94 = pneg %p88
      %p95 = scmp.eq.s32.totalorder %s11, 1
      %p96 = por %p94, %p95
      %p97 = scmp.ne.s32.totalorder %s89, %s92
      %p98 = scmp.eq.s32.totalorder %s11, 0
      %p99 = por %p97, %p98
      %p100 = scmp.ne.s32.totalorder %s89, %s92
      %p101 = scmp.eq.s32.totalorder %s16, 1
      %p102 = por %p100, %p101
      %p103 = scmp.ne.s32.totalorder %s92, %s93
      %p104 = scmp.eq.s32.totalorder %s16, 0
      %p105 = por %p103, %p104
      %p106 = scmp.ne.s32.totalorder %s92, %s93
      %p107 = scmp.eq.s32.totalorder %s17, 1
      %p108 = por %p106, %p107
      %p110 = scmp.ne.s32.totalorder %s93, %s109
      %p111 = scmp.eq.s32.totalorder %s17, 0
      %p112 = por %p110, %p111
      %p113 = scmp.le.s32.totalorder 1, %s11
      %p114 = scmp.lt.s32.totalorder %s11, 3
      %p115 = pnand %p113, %p114
      %p116 = pneg %p115
      // Predicated region
      $region9: #{generator_forward.10} parent=5 // pred_check
        _
      $region10: #{generator_forward.10} parent=5 // pred_check_branch
        %118 = sbr.rel (%p115) target = $region12
      $region11: #{generator_forward.10} parent=5 // pred_region
        %s119 = ssub.s32 %s11, 1
        // Predicated region
        $region13: #{generator_forward.10} parent=11 // pred_check
          %p120 = pneg %p58
        $region14: #{generator_forward.10} parent=11 // pred_check_branch
          %122 = sbr.rel (%p120) target = $region16
        $region15: #{generator_forward.10} parent=11 // pred_region
          %124 = vsyncadd [#allocation3], 0
          %s125 = sshll.u32 %s1, 4
          %s126 = int_to_ptr.hbm [resolvable:$true] %s125
          %s127 = sshll.u32 [#allocation2], 4
          %s128 = int_to_ptr.vmem [resolvable:$true] %s127
          %133 = dma.hbm_to_vmem [thread:$0]  %s126, 1024, %s128, [#allocation3], 64, 64, 4
        $region16: #{generator_forward.10} parent=11 // pred_fallthru
          _
        // Predicated region
        $region17: #{generator_forward.10} parent=11 // pred_check
          %p134 = pneg %p79
        $region18: #{generator_forward.10} parent=11 // pred_check_branch
          %136 = sbr.rel (%p134) target = $region20
        $region19: #{generator_forward.10} parent=11 // pred_region
          %138 = vsyncadd [#allocation5], 0
          %s140 = sshll.u32 %s2, 4
          %s141 = int_to_ptr.hbm [resolvable:$true] %s140
          %s142 = sshll.u32 [#allocation4], 4
          %s143 = int_to_ptr.vmem [resolvable:$true] %s142
          %145 = dma.hbm_to_vmem [thread:$0]  %s141, 16, %s143, [#allocation5]
        $region20: #{generator_forward.10} parent=11 // pred_fallthru
          _
      $region12: #{generator_forward.10} parent=5 // pred_fallthru
        _
      %p146 = scmp.lt.s32.totalorder %s11, 2
      // Predicated region
      $region21: #{generator_forward.10} parent=5 // pred_check
        %p147 = pneg %p146
      $region22: #{generator_forward.10} parent=5 // pred_check_branch
        %149 = sbr.rel (%p147) target = $region24
      $region23: #{generator_forward.10} parent=5 // pred_region
        // Predicated region
        $region25: #{generator_forward.10} parent=23 // pred_check
          %p150 = pneg %p31
        $region26: #{generator_forward.10} parent=23 // pred_check_branch
          %152 = sbr.rel (%p150) target = $region28
        $region27: #{generator_forward.10} parent=23 // pred_region
          %p153 = scmp.lt.s32.totalorder %s11, 1
          %s154 = scalar_select %p153, %s11, 1
          %s155 = smul.addr %s154, 32
          %s156 = smul.addr %s155, 4
          %s157 = scalar_lea.vmem %s0, %s156
        $region28: #{generator_forward.10} parent=23 // pred_fallthru
          _
      $region24: #{generator_forward.10} parent=5 // pred_fallthru
        _
      %p158 = scmp.le.s32.totalorder 1, %s11
      %p159 = scmp.lt.s32.totalorder %s11, 3
      %p160 = pnand %p158, %p159
      %p161 = pneg %p160
      // Predicated region
      $region29: #{generator_forward.10} parent=5 // pred_check
        _
      $region30: #{generator_forward.10} parent=5 // pred_check_branch
        %163 = sbr.rel (%p160) target = $region32
      $region31: #{generator_forward.10} parent=5 // pred_region
        %s164 = ssub.s32 %s11, 1
        // Predicated region
        $region33: #{generator_forward.10} parent=31 // pred_check
          %p165 = pneg %p58
        $region34: #{generator_forward.10} parent=31 // pred_check_branch
          %167 = sbr.rel (%p165) target = $region36
        $region35: #{generator_forward.10} parent=31 // pred_region
          %169 = dma.done [#allocation3], 1024
        $region36: #{generator_forward.10} parent=31 // pred_fallthru
          _
        // Predicated region
        $region37: #{generator_forward.10} parent=31 // pred_check
          %p170 = pneg %p79
        $region38: #{generator_forward.10} parent=31 // pred_check_branch
          %172 = sbr.rel (%p170) target = $region40
        $region39: #{generator_forward.10} parent=31 // pred_region
          %174 = dma.done [#allocation5], 16
        $region40: #{generator_forward.10} parent=31 // pred_fallthru
          _
        %p175 = scmp.lt.s32.totalorder %s16, 1
        %s176 = scalar_select %p175, %s16, 1
        %s177 = smul.addr %s176, 32
        %s178 = smul.addr %s177, 4
        %s179 = scalar_lea.vmem %s0, %s178
        %p180 = pneg %p37
        %p181 = pneg %p34
        %p182 = pneg %p58
        %p183 = pneg %p55
        %p184 = pneg %p79
        %p185 = pneg %p76
        %p186 = pneg %p105
        %p187 = pneg %p102
        %p188 = scmp.lt.s32.totalorder %s16, 1
        %s189 = scalar_select %p188, %s16, 1
        %s190 = smul.addr %s189, 32
        %s191 = smul.addr %s190, 8
        %s192 = scalar_lea.vmem %s3, %s191
        %p193 = scmp.lt.s32.totalorder %s16, 1
        %s194 = scalar_select %p193, %s16, 1
        %s195 = smul.addr %s194, 32
        %s196 = smul.addr %s195, 4
        %s197 = scalar_lea.vmem %s0, %s196
        %p198 = scmp.lt.s32.totalorder %s16, 1
        %s199 = scalar_select %p198, %s16, 1
        %s200 = smul.addr %s199, 32
        %s201 = smul.addr %s200, 8
        %s202 = scalar_lea.vmem %s3, %s201
        %v203 = vld [vmem:[%s197] sm:$0xf]
        %v204 = vld [vmem:[%s197 + $0x4] sm:$0xf]
        %v205 = vld [vmem:[%s197 + $0x8] sm:$0xf]
        %v206 = vld [vmem:[%s197 + $0xc] sm:$0xf]
        %v207 = vld [vmem:[%s197 + $0x10] sm:$0xf]
        %v208 = vld [vmem:[%s197 + $0x14] sm:$0xf]
        %v209 = vld [vmem:[%s197 + $0x18] sm:$0xf]
        %v210 = vld [vmem:[%s197 + $0x1c] sm:$0xf]
        %v211 = vld [vmem:[%s197 + $0x20] sm:$0xf]
        %v212 = vld [vmem:[%s197 + $0x24] sm:$0xf]
        %v213 = vld [vmem:[%s197 + $0x28] sm:$0xf]
        %v214 = vld [vmem:[%s197 + $0x2c] sm:$0xf]
        %v215 = vld [vmem:[%s197 + $0x30] sm:$0xf]
        %v216 = vld [vmem:[%s197 + $0x34] sm:$0xf]
        %v217 = vld [vmem:[%s197 + $0x38] sm:$0xf]
        %v218 = vld [vmem:[%s197 + $0x3c] sm:$0xf]
        %v219 = vld [vmem:[%s197 + $0x40] sm:$0xf]
        %v220 = vld [vmem:[%s197 + $0x44] sm:$0xf]
        %v221 = vld [vmem:[%s197 + $0x48] sm:$0xf]
        %v222 = vld [vmem:[%s197 + $0x4c] sm:$0xf]
        %v223 = vld [vmem:[%s197 + $0x50] sm:$0xf]
        %v224 = vld [vmem:[%s197 + $0x54] sm:$0xf]
        %v225 = vld [vmem:[%s197 + $0x58] sm:$0xf]
        %v226 = vld [vmem:[%s197 + $0x5c] sm:$0xf]
        %v227 = vld [vmem:[%s197 + $0x60] sm:$0xf]
        %v228 = vld [vmem:[%s197 + $0x64] sm:$0xf]
        %v229 = vld [vmem:[%s197 + $0x68] sm:$0xf]
        %v230 = vld [vmem:[%s197 + $0x6c] sm:$0xf]
        %v231 = vld [vmem:[%s197 + $0x70] sm:$0xf]
        %v232 = vld [vmem:[%s197 + $0x74] sm:$0xf]
        %v233 = vld [vmem:[%s197 + $0x78] sm:$0xf]
        %v234 = vld [vmem:[%s197 + $0x7c] sm:$0xf]
        %v235 = vld [vmem:[#allocation2] sm:$0xf]
        %v236 = vld [vmem:[#allocation2 + $0x4] sm:$0xf]
        %v237 = vld [vmem:[#allocation2 + $0x8] sm:$0xf]
        %v238 = vld [vmem:[#allocation2 + $0xc] sm:$0xf]
        %v239 = vld [vmem:[#allocation2 + $0x10] sm:$0xf]
        %v240 = vld [vmem:[#allocation2 + $0x14] sm:$0xf]
        %v241 = vld [vmem:[#allocation2 + $0x18] sm:$0xf]
        %v242 = vld [vmem:[#allocation2 + $0x1c] sm:$0xf]
        %v243 = vld [vmem:[#allocation2 + $0x20] sm:$0xf]
        %v244 = vld [vmem:[#allocation2 + $0x24] sm:$0xf]
        %v245 = vld [vmem:[#allocation2 + $0x28] sm:$0xf]
        %v246 = vld [vmem:[#allocation2 + $0x2c] sm:$0xf]
        %v247 = vld [vmem:[#allocation2 + $0x30] sm:$0xf]
        %v248 = vld [vmem:[#allocation2 + $0x34] sm:$0xf]
        %v249 = vld [vmem:[#allocation2 + $0x38] sm:$0xf]
        %v250 = vld [vmem:[#allocation2 + $0x3c] sm:$0xf]
        %v251 = vld [vmem:[#allocation4] sm:$0x1]
        %v253 = vperm.slane %v251, 0
        %v287 = vunpack.c.l.b16 %v203
        %v288 = vunpack.c.l.b16 %v204
        %v289 = vunpack.c.l.b16 %v205
        %v290 = vunpack.c.l.b16 %v206
        %v291 = vunpack.c.l.b16 %v207
        %v292 = vunpack.c.l.b16 %v208
        %v293 = vunpack.c.l.b16 %v209
        %v294 = vunpack.c.l.b16 %v210
        %v295 = vunpack.c.l.b16 %v211
        %v296 = vunpack.c.l.b16 %v212
        %v297 = vunpack.c.l.b16 %v213
        %v298 = vunpack.c.l.b16 %v214
        %v299 = vunpack.c.l.b16 %v215
        %v300 = vunpack.c.l.b16 %v216
        %v301 = vunpack.c.l.b16 %v217
        %v302 = vunpack.c.l.b16 %v218
        %v303 = vunpack.c.l.b16 %v219
        %v304 = vunpack.c.l.b16 %v220
        %v305 = vunpack.c.l.b16 %v221
        %v306 = vunpack.c.l.b16 %v222
        %v307 = vunpack.c.l.b16 %v223
        %v308 = vunpack.c.l.b16 %v224
        %v309 = vunpack.c.l.b16 %v225
        %v310 = vunpack.c.l.b16 %v226
        %v311 = vunpack.c.l.b16 %v227
        %v312 = vunpack.c.l.b16 %v228
        %v313 = vunpack.c.l.b16 %v229
        %v314 = vunpack.c.l.b16 %v230
        %v315 = vunpack.c.l.b16 %v231
        %v316 = vunpack.c.l.b16 %v232
        %v317 = vunpack.c.l.b16 %v233
        %v318 = vunpack.c.l.b16 %v234
        %v319 = vpack.c.b16 %v288, %v287
        %v320 = vpack.c.b16 %v290, %v289
        %v321 = vpack.c.b16 %v292, %v291
        %v322 = vpack.c.b16 %v294, %v293
        %v323 = vpack.c.b16 %v296, %v295
        %v324 = vpack.c.b16 %v298, %v297
        %v325 = vpack.c.b16 %v300, %v299
        %v326 = vpack.c.b16 %v302, %v301
        %v327 = vpack.c.b16 %v304, %v303
        %v328 = vpack.c.b16 %v306, %v305
        %v329 = vpack.c.b16 %v308, %v307
        %v330 = vpack.c.b16 %v310, %v309
        %v331 = vpack.c.b16 %v312, %v311
        %v332 = vpack.c.b16 %v314, %v313
        %v333 = vpack.c.b16 %v316, %v315
        %v334 = vpack.c.b16 %v318, %v317
        %v367 = vunpack.c.l.b16 %v235
        %v368 = vunpack.c.l.b16 %v236
        %v369 = vunpack.c.l.b16 %v237
        %v370 = vunpack.c.l.b16 %v238
        %v371 = vunpack.c.l.b16 %v239
        %v372 = vunpack.c.l.b16 %v240
        %v373 = vunpack.c.l.b16 %v241
        %v374 = vunpack.c.l.b16 %v242
        %v375 = vunpack.c.l.b16 %v243
        %v376 = vunpack.c.l.b16 %v244
        %v377 = vunpack.c.l.b16 %v245
        %v378 = vunpack.c.l.b16 %v246
        %v379 = vunpack.c.l.b16 %v247
        %v380 = vunpack.c.l.b16 %v248
        %v381 = vunpack.c.l.b16 %v249
        %v382 = vunpack.c.l.b16 %v250
        %v383 = vpack.c.b16 %v368, %v367
        %v384 = vpack.c.b16 %v370, %v369
        %v385 = vpack.c.b16 %v372, %v371
        %v386 = vpack.c.b16 %v374, %v373
        %v387 = vpack.c.b16 %v376, %v375
        %v388 = vpack.c.b16 %v378, %v377
        %v389 = vpack.c.b16 %v380, %v379
        %v390 = vpack.c.b16 %v382, %v381
        %399 = vmatpush.bf16.msra.mxu0 %v390
        %400 = vmatpush.bf16.msra.mxu0 %v389
        %401 = vmatpush.bf16.msra.mxu0 %v388
        %402 = vmatpush.bf16.msra.mxu0 %v387
        %403 = vmatpush.bf16.msra.mxu0 %v386
        %404 = vmatpush.bf16.msra.mxu0 %v385
        %405 = vmatpush.bf16.msra.mxu0 %v384
        %406 = vmatpush.bf16.msra.mxu0 %v383
        %407 = vmatmul.bf16.gmra.mxu0 %v319
        %v408 = vpop.f32.mrf.mxu0
        %v409 = vadd.f32 %v253, %v408
        %v410 = vpop.f32.mrf.mxu0
        %v411 = vadd.f32 %v253, %v410
        %412 = vmatmul.bf16.gmra.mxu0 %v320
        %v413 = vpop.f32.mrf.mxu0
        %v414 = vadd.f32 %v253, %v413
        %v415 = vpop.f32.mrf.mxu0
        %v416 = vadd.f32 %v253, %v415
        %417 = vmatmul.bf16.gmra.mxu0 %v321
        %v418 = vpop.f32.mrf.mxu0
        %v419 = vadd.f32 %v253, %v418
        %v420 = vpop.f32.mrf.mxu0
        %v421 = vadd.f32 %v253, %v420
        %422 = vmatmul.bf16.gmra.mxu0 %v322
        %v423 = vpop.f32.mrf.mxu0
        %v424 = vadd.f32 %v253, %v423
        %v425 = vpop.f32.mrf.mxu0
        %v426 = vadd.f32 %v253, %v425
        %427 = vmatmul.bf16.gmra.mxu0 %v323
        %v428 = vpop.f32.mrf.mxu0
        %v429 = vadd.f32 %v253, %v428
        %v430 = vpop.f32.mrf.mxu0
        %v431 = vadd.f32 %v253, %v430
        %432 = vmatmul.bf16.gmra.mxu0 %v324
        %v433 = vpop.f32.mrf.mxu0
        %v434 = vadd.f32 %v253, %v433
        %v435 = vpop.f32.mrf.mxu0
        %v436 = vadd.f32 %v253, %v435
        %437 = vmatmul.bf16.gmra.mxu0 %v325
        %v438 = vpop.f32.mrf.mxu0
        %v439 = vadd.f32 %v253, %v438
        %v440 = vpop.f32.mrf.mxu0
        %v441 = vadd.f32 %v253, %v440
        %442 = vmatmul.bf16.gmra.mxu0 %v326
        %v443 = vpop.f32.mrf.mxu0
        %v444 = vadd.f32 %v253, %v443
        %v445 = vpop.f32.mrf.mxu0
        %v446 = vadd.f32 %v253, %v445
        %447 = vmatmul.bf16.gmra.mxu0 %v327
        %v448 = vpop.f32.mrf.mxu0
        %v449 = vadd.f32 %v253, %v448
        %v450 = vpop.f32.mrf.mxu0
        %v451 = vadd.f32 %v253, %v450
        %452 = vmatmul.bf16.gmra.mxu0 %v328
        %v453 = vpop.f32.mrf.mxu0
        %v454 = vadd.f32 %v253, %v453
        %v455 = vpop.f32.mrf.mxu0
        %v456 = vadd.f32 %v253, %v455
        %457 = vmatmul.bf16.gmra.mxu0 %v329
        %v458 = vpop.f32.mrf.mxu0
        %v459 = vadd.f32 %v253, %v458
        %v460 = vpop.f32.mrf.mxu0
        %v461 = vadd.f32 %v253, %v460
        %462 = vmatmul.bf16.gmra.mxu0 %v330
        %v463 = vpop.f32.mrf.mxu0
        %v464 = vadd.f32 %v253, %v463
        %v465 = vpop.f32.mrf.mxu0
        %v466 = vadd.f32 %v253, %v465
        %467 = vmatmul.bf16.gmra.mxu0 %v331
        %v468 = vpop.f32.mrf.mxu0
        %v469 = vadd.f32 %v253, %v468
        %v470 = vpop.f32.mrf.mxu0
        %v471 = vadd.f32 %v253, %v470
        %472 = vmatmul.bf16.gmra.mxu0 %v332
        %v473 = vpop.f32.mrf.mxu0
        %v474 = vadd.f32 %v253, %v473
        %v475 = vpop.f32.mrf.mxu0
        %v476 = vadd.f32 %v253, %v475
        %477 = vmatmul.bf16.gmra.mxu0 %v333
        %v478 = vpop.f32.mrf.mxu0
        %v479 = vadd.f32 %v253, %v478
        %v480 = vpop.f32.mrf.mxu0
        %v481 = vadd.f32 %v253, %v480
        %482 = vmatmul.bf16.gmra.mxu0 %v334
        %v483 = vpop.f32.mrf.mxu0
        %v484 = vadd.f32 %v253, %v483
        %v485 = vpop.f32.mrf.mxu0
        %v486 = vadd.f32 %v253, %v485
        %487 = vdwg.mxu0
        %v488 = vadd.f32 %v409, %v411
        %v489 = vadd.f32 %v488, %v414
        %v490 = vadd.f32 %v489, %v416
        %v491 = vadd.f32 %v490, %v419
        %v492 = vadd.f32 %v491, %v421
        %v493 = vadd.f32 %v492, %v424
        %v494 = vadd.f32 %v493, %v426
        %v495 = vadd.f32 %v494, %v429
        %v496 = vadd.f32 %v495, %v431
        %v497 = vadd.f32 %v496, %v434
        %v498 = vadd.f32 %v497, %v436
        %v499 = vadd.f32 %v498, %v439
        %v500 = vadd.f32 %v499, %v441
        %v501 = vadd.f32 %v500, %v444
        %v502 = vadd.f32 %v501, %v446
        %v503 = vadd.f32 %v502, %v449
        %v504 = vadd.f32 %v503, %v451
        %v505 = vadd.f32 %v504, %v454
        %v506 = vadd.f32 %v505, %v456
        %v507 = vadd.f32 %v506, %v459
        %v508 = vadd.f32 %v507, %v461
        %v509 = vadd.f32 %v508, %v464
        %v510 = vadd.f32 %v509, %v466
        %v511 = vadd.f32 %v510, %v469
        %v512 = vadd.f32 %v511, %v471
        %v513 = vadd.f32 %v512, %v474
        %v514 = vadd.f32 %v513, %v476
        %v515 = vadd.f32 %v514, %v479
        %v516 = vadd.f32 %v515, %v481
        %v517 = vadd.f32 %v516, %v484
        %v518 = vadd.f32 %v517, %v486
        %v519 = vrot.slane %v518, 4
        %v520 = vadd.f32 %v518, %v519
        %v521 = vrot.slane %v520, 2
        %v522 = vadd.f32 %v520, %v521
        %v523 = vrot.slane %v522, 1
        %v524 = vadd.f32 %v522, %v523
        %v525 = vmul.f32 %v409, %v409
        %v526 = vmul.f32 %v411, %v411
        %v527 = vmul.f32 %v414, %v414
        %v528 = vmul.f32 %v416, %v416
        %v529 = vmul.f32 %v419, %v419
        %v530 = vmul.f32 %v421, %v421
        %v531 = vmul.f32 %v424, %v424
        %v532 = vmul.f32 %v426, %v426
        %v533 = vmul.f32 %v429, %v429
        %v534 = vmul.f32 %v431, %v431
        %v535 = vmul.f32 %v434, %v434
        %v536 = vmul.f32 %v436, %v436
        %v537 = vmul.f32 %v439, %v439
        %v538 = vmul.f32 %v441, %v441
        %v539 = vmul.f32 %v444, %v444
        %v540 = vmul.f32 %v446, %v446
        %v541 = vmul.f32 %v449, %v449
        %v542 = vmul.f32 %v451, %v451
        %v543 = vmul.f32 %v454, %v454
        %v544 = vmul.f32 %v456, %v456
        %v545 = vmul.f32 %v459, %v459
        %v546 = vmul.f32 %v461, %v461
        %v547 = vmul.f32 %v464, %v464
        %v548 = vmul.f32 %v466, %v466
        %v549 = vmul.f32 %v469, %v469
        %v550 = vmul.f32 %v471, %v471
        %v551 = vmul.f32 %v474, %v474
        %v552 = vmul.f32 %v476, %v476
        %v553 = vmul.f32 %v479, %v479
        %v554 = vmul.f32 %v481, %v481
        %v555 = vmul.f32 %v484, %v484
        %v556 = vmul.f32 %v486, %v486
        %v557 = vadd.f32 %v525, %v526
        %v558 = vadd.f32 %v557, %v527
        %v559 = vadd.f32 %v558, %v528
        %v560 = vadd.f32 %v559, %v529
        %v561 = vadd.f32 %v560, %v530
        %v562 = vadd.f32 %v561, %v531
        %v563 = vadd.f32 %v562, %v532
        %v564 = vadd.f32 %v563, %v533
        %v565 = vadd.f32 %v564, %v534
        %v566 = vadd.f32 %v565, %v535
        %v567 = vadd.f32 %v566, %v536
        %v568 = vadd.f32 %v567, %v537
        %v569 = vadd.f32 %v568, %v538
        %v570 = vadd.f32 %v569, %v539
        %v571 = vadd.f32 %v570, %v540
        %v572 = vadd.f32 %v571, %v541
        %v573 = vadd.f32 %v572, %v542
        %v574 = vadd.f32 %v573, %v543
        %v575 = vadd.f32 %v574, %v544
        %v576 = vadd.f32 %v575, %v545
        %v577 = vadd.f32 %v576, %v546
        %v578 = vadd.f32 %v577, %v547
        %v579 = vadd.f32 %v578, %v548
        %v580 = vadd.f32 %v579, %v549
        %v581 = vadd.f32 %v580, %v550
        %v582 = vadd.f32 %v581, %v551
        %v583 = vadd.f32 %v582, %v552
        %v584 = vadd.f32 %v583, %v553
        %v585 = vadd.f32 %v584, %v554
        %v586 = vadd.f32 %v585, %v555
        %v587 = vadd.f32 %v586, %v556
        %v588 = vrot.slane %v587, 4
        %v589 = vadd.f32 %v587, %v588
        %v590 = vrot.slane %v589, 2
        %v591 = vadd.f32 %v589, %v590
        %v592 = vrot.slane %v591, 1
        %v593 = vadd.f32 %v591, %v592
        %v594 = vmul.f32 %v524, 0.00390625
        %v595 = vmul.f32 %v593, 0.00390625
        %v596 = vmul.f32 %v594, %v594
        %v597 = vsub.f32 %v595, %v596
        %v598 = vmax.f32 %v597, 0.0
        %v599 = vsub.f32 %v409, %v594
        %v600 = vsub.f32 %v411, %v594
        %v601 = vsub.f32 %v414, %v594
        %v602 = vsub.f32 %v416, %v594
        %v603 = vsub.f32 %v419, %v594
        %v604 = vsub.f32 %v421, %v594
        %v605 = vsub.f32 %v424, %v594
        %v606 = vsub.f32 %v426, %v594
        %v607 = vsub.f32 %v429, %v594
        %v608 = vsub.f32 %v431, %v594
        %v609 = vsub.f32 %v434, %v594
        %v610 = vsub.f32 %v436, %v594
        %v611 = vsub.f32 %v439, %v594
        %v612 = vsub.f32 %v441, %v594
        %v613 = vsub.f32 %v444, %v594
        %v614 = vsub.f32 %v446, %v594
        %v615 = vsub.f32 %v449, %v594
        %v616 = vsub.f32 %v451, %v594
        %v617 = vsub.f32 %v454, %v594
        %v618 = vsub.f32 %v456, %v594
        %v619 = vsub.f32 %v459, %v594
        %v620 = vsub.f32 %v461, %v594
        %v621 = vsub.f32 %v464, %v594
        %v622 = vsub.f32 %v466, %v594
        %v623 = vsub.f32 %v469, %v594
        %v624 = vsub.f32 %v471, %v594
        %v625 = vsub.f32 %v474, %v594
        %v626 = vsub.f32 %v476, %v594
        %v627 = vsub.f32 %v479, %v594
        %v628 = vsub.f32 %v481, %v594
        %v629 = vsub.f32 %v484, %v594
        %v630 = vsub.f32 %v486, %v594
        %v631 = vadd.f32 %v598, 1e-05
        %v632 = vrsqrt.pop %v631
        %v633 = vmul.f32 %v632, %v631
        %v634 = vmul.f32 %v633, %v632
        %v635 = vmul.f32 0.5, %v634
        %v636 = vsub.f32 1.5, %v635
        %v637 = vmul.f32 %v632, %v636
        %vm638 = vweird.f32 %v631
        %vm639 = vweird.f32 %v632
        %vm640 = vmor %vm638, %vm639
        %v641 = vsel %vm640, %v632, %v637
        %v642 = vmul.f32 %v599, %v641
        %v643 = vmul.f32 %v600, %v641
        %v644 = vmul.f32 %v601, %v641
        %v645 = vmul.f32 %v602, %v641
        %v646 = vmul.f32 %v603, %v641
        %v647 = vmul.f32 %v604, %v641
        %v648 = vmul.f32 %v605, %v641
        %v649 = vmul.f32 %v606, %v641
        %v650 = vmul.f32 %v607, %v641
        %v651 = vmul.f32 %v608, %v641
        %v652 = vmul.f32 %v609, %v641
        %v653 = vmul.f32 %v610, %v641
        %v654 = vmul.f32 %v611, %v641
        %v655 = vmul.f32 %v612, %v641
        %v656 = vmul.f32 %v613, %v641
        %v657 = vmul.f32 %v614, %v641
        %v658 = vmul.f32 %v615, %v641
        %v659 = vmul.f32 %v616, %v641
        %v660 = vmul.f32 %v617, %v641
        %v661 = vmul.f32 %v618, %v641
        %v662 = vmul.f32 %v619, %v641
        %v663 = vmul.f32 %v620, %v641
        %v664 = vmul.f32 %v621, %v641
        %v665 = vmul.f32 %v622, %v641
        %v666 = vmul.f32 %v623, %v641
        %v667 = vmul.f32 %v624, %v641
        %v668 = vmul.f32 %v625, %v641
        %v669 = vmul.f32 %v626, %v641
        %v670 = vmul.f32 %v627, %v641
        %v671 = vmul.f32 %v628, %v641
        %v672 = vmul.f32 %v629, %v641
        %v673 = vmul.f32 %v630, %v641
        %v674 = vmax.f32 %v642, 0.0
        %v675 = vmax.f32 %v643, 0.0
        %v676 = vmax.f32 %v644, 0.0
        %v677 = vmax.f32 %v645, 0.0
        %v678 = vmax.f32 %v646, 0.0
        %v679 = vmax.f32 %v647, 0.0
        %v680 = vmax.f32 %v648, 0.0
        %v681 = vmax.f32 %v649, 0.0
        %v682 = vmax.f32 %v650, 0.0
        %v683 = vmax.f32 %v651, 0.0
        %v684 = vmax.f32 %v652, 0.0
        %v685 = vmax.f32 %v653, 0.0
        %v686 = vmax.f32 %v654, 0.0
        %v687 = vmax.f32 %v655, 0.0
        %v688 = vmax.f32 %v656, 0.0
        %v689 = vmax.f32 %v657, 0.0
        %v690 = vmax.f32 %v658, 0.0
        %v691 = vmax.f32 %v659, 0.0
        %v692 = vmax.f32 %v660, 0.0
        %v693 = vmax.f32 %v661, 0.0
        %v694 = vmax.f32 %v662, 0.0
        %v695 = vmax.f32 %v663, 0.0
        %v696 = vmax.f32 %v664, 0.0
        %v697 = vmax.f32 %v665, 0.0
        %v698 = vmax.f32 %v666, 0.0
        %v699 = vmax.f32 %v667, 0.0
        %v700 = vmax.f32 %v668, 0.0
        %v701 = vmax.f32 %v669, 0.0
        %v702 = vmax.f32 %v670, 0.0
        %v703 = vmax.f32 %v671, 0.0
        %v704 = vmax.f32 %v672, 0.0
        %v705 = vmax.f32 %v673, 0.0
        %706 = vst [vmem:[%s202] sm:$0xff] %v674
        %707 = vst [vmem:[%s202 + $0x8] sm:$0xff] %v675
        %708 = vst [vmem:[%s202 + $0x10] sm:$0xff] %v676
        %709 = vst [vmem:[%s202 + $0x18] sm:$0xff] %v677
        %710 = vst [vmem:[%s202 + $0x20] sm:$0xff] %v678
        %711 = vst [vmem:[%s202 + $0x28] sm:$0xff] %v679
        %712 = vst [vmem:[%s202 + $0x30] sm:$0xff] %v680
        %713 = vst [vmem:[%s202 + $0x38] sm:$0xff] %v681
        %714 = vst [vmem:[%s202 + $0x40] sm:$0xff] %v682
        %715 = vst [vmem:[%s202 + $0x48] sm:$0xff] %v683
        %716 = vst [vmem:[%s202 + $0x50] sm:$0xff] %v684
        %717 = vst [vmem:[%s202 + $0x58] sm:$0xff] %v685
        %718 = vst [vmem:[%s202 + $0x60] sm:$0xff] %v686
        %719 = vst [vmem:[%s202 + $0x68] sm:$0xff] %v687
        %720 = vst [vmem:[%s202 + $0x70] sm:$0xff] %v688
        %721 = vst [vmem:[%s202 + $0x78] sm:$0xff] %v689
        %722 = vst [vmem:[%s202 + $0x80] sm:$0xff] %v690
        %723 = vst [vmem:[%s202 + $0x88] sm:$0xff] %v691
        %724 = vst [vmem:[%s202 + $0x90] sm:$0xff] %v692
        %725 = vst [vmem:[%s202 + $0x98] sm:$0xff] %v693
        %726 = vst [vmem:[%s202 + $0xa0] sm:$0xff] %v694
        %727 = vst [vmem:[%s202 + $0xa8] sm:$0xff] %v695
        %728 = vst [vmem:[%s202 + $0xb0] sm:$0xff] %v696
        %729 = vst [vmem:[%s202 + $0xb8] sm:$0xff] %v697
        %730 = vst [vmem:[%s202 + $0xc0] sm:$0xff] %v698
        %731 = vst [vmem:[%s202 + $0xc8] sm:$0xff] %v699
        %732 = vst [vmem:[%s202 + $0xd0] sm:$0xff] %v700
        %733 = vst [vmem:[%s202 + $0xd8] sm:$0xff] %v701
        %734 = vst [vmem:[%s202 + $0xe0] sm:$0xff] %v702
        %735 = vst [vmem:[%s202 + $0xe8] sm:$0xff] %v703
        %736 = vst [vmem:[%s202 + $0xf0] sm:$0xff] %v704
        %737 = vst [vmem:[%s202 + $0xf8] sm:$0xff] %v705
        %p738 = scmp.lt.s32.totalorder %s16, 1
        %s739 = scalar_select %p738, %s16, 1
        %s740 = smul.addr %s739, 32
        %s741 = smul.addr %s740, 8
        %s742 = scalar_lea.vmem %s3, %s741
        // Predicated region
        $region41: #{generator_forward.10} parent=31 // pred_check
          %p743 = pneg %p102
        $region42: #{generator_forward.10} parent=31 // pred_check_branch
          %745 = sbr.rel (%p743) target = $region44
        $region43: #{generator_forward.10} parent=31 // pred_region
          _
        $region44: #{generator_forward.10} parent=31 // pred_fallthru
          _
      $region32: #{generator_forward.10} parent=5 // pred_fallthru
        _
      %p746 = scmp.le.s32.totalorder 2, %s11
      // Predicated region
      $region45: #{generator_forward.10} parent=5 // pred_check
        %p747 = pneg %p746
      $region46: #{generator_forward.10} parent=5 // pred_check_branch
        %749 = sbr.rel (%p747) target = $region48
      $region47: #{generator_forward.10} parent=5 // pred_region
        %s750 = ssub.s32 %s11, 2
        // Predicated region
        $region49: #{generator_forward.10} parent=47 // pred_check
          %p751 = pneg %p108
        $region50: #{generator_forward.10} parent=47 // pred_check_branch
          %753 = sbr.rel (%p751) target = $region52
        $region51: #{generator_forward.10} parent=47 // pred_region
          %p754 = scmp.lt.s32.totalorder %s17, 1
          %s755 = scalar_select %p754, %s17, 1
          %s756 = smul.addr %s755, 32
          %s757 = smul.addr %s756, 8
          %s758 = scalar_lea.vmem %s3, %s757
        $region52: #{generator_forward.10} parent=47 // pred_fallthru
          _
      $region48: #{generator_forward.10} parent=5 // pred_fallthru
        _
    $region6: #{generator_forward.10} parent=1 // loop_footer
      %s15 = sadd.s32 1, %s11
    $region7: #{generator_forward.10} parent=1 // loop_footer_branch
      %10 = sbr.rel target = $region3
    $region8: #{generator_forward.10} parent=1 // loop_exit
      _
    %759 = vsyncpa [#allocation3], 1
    %s760 = scalar_lea.sflag [#allocation3], 1
    %761 = vsyncpa %s760, 1
    %762 = vsyncpa [#allocation5], 1

// kernel: generator_forward.11
$region0: #{generator_forward.11}
  #allocation0 [shape = 'u32[]', space=smem, size = 0x4, offset = 0x4, fixed_abs, tag = 'smem constant byte address 0x4 - core index']
  #allocation1 [shape = 'u32[72,128]{1,0:T(1,128)}', space=vmem, size = 0x9000, scoped, tag = 'internal scratch']
  %s0 = inlined_call_operand.vmem [shape: bf16[2,64,384], index: 0, kind: input, shape index: {}]
  %s1 = inlined_call_operand.hbm [shape: bf16[384,128], index: 1, kind: input, shape index: {}]
  %s2 = inlined_call_operand.hbm [shape: f32[1,128], index: 2, kind: input, shape index: {}]
  %s3 = inlined_call_operand.vmem [shape: f32[2,64,128], index: 3, kind: output, shape index: {}]
  %s4 = sld [smem:[#allocation0]]
  $region53: #{generator_forward.11} parent=0
    _
  %s6 = ssub.s32 1, %s4
  %s7 = scalar_select 0, %s6, %s4
  $region1: #{generator_forward.11} parent=0
    #allocation2 [shape = 'u8[98304]{0}', space=vmem, size = 0x18000, scoped, tag = 'input window, operand 1, single buffered']
    #allocation3 [shape = 's32[2]{0}', space=sflag, size = 0x8, scoped, tag = 'scoped memory for generator_forward.11']
    #allocation4 [shape = 'u8[512]{0}', space=vmem, size = 0x400, scoped, tag = 'input window, operand 2, single buffered']
    #allocation5 [shape = 's32[1]{0}', space=sflag, size = 0x4, scoped, tag = 'scoped memory for generator_forward.11']
    %8 = vsyncpa [#allocation3], 0
    %9 = vsyncpa [#allocation5], 0
    loop: start=0, step=1, limit=4
    $region2: #{generator_forward.11} parent=1 // loop_pre_header
      _
    $region3: #{generator_forward.11} parent=1 // loop_header
      %s11 = sphi 0, %s15
      %p12 = scmp.ge.s32.totalorder %s11, 4
      %s21 = sphi 0, %s23
      %s24 = sphi 0, %s21
      %s25 = sphi 0, %s24
      %s41 = sphi 0, %s25
      %s45 = sphi 0, %s45
      %s47 = sphi 0, %s45
      %s48 = sphi 0, %s47
      %s62 = sphi 0, %s48
      %s66 = sphi 0, %s66
      %s68 = sphi 0, %s66
      %s69 = sphi 0, %s68
      %s83 = sphi 0, %s69
      %s89 = sphi 0, %s91
      %s92 = sphi 0, %s89
      %s93 = sphi 0, %s92
      %s109 = sphi 0, %s93
    $region4: #{generator_forward.11} parent=1 // loop_header_branch
      %14 = sbr.rel (%p12) target = $region8
    $region5: #{generator_forward.11} parent=1 // loop_body
      %s16 = ssub.s32 %s11, 1
      %s17 = ssub.s32 %s11, 2
      %s18 = sadd.s32 %s11, 1
      %s19 = ssub.s32 %s11, %s18
      %p20 = scmp.eq.s32.totalorder %s19, 0
      %s22 = sadd.s32 %s21, 1
      %s23 = scalar_select %p20, %s21, %s22
      %p26 = pneg %p20
      %p27 = scmp.eq.s32.totalorder %s11, 1
      %p28 = por %p26, %p27
      %p29 = scmp.ne.s32.totalorder %s21, %s24
      %p30 = scmp.eq.s32.totalorder %s11, 0
      %p31 = por %p29, %p30
      %p32 = scmp.ne.s32.totalorder %s21, %s24
      %p33 = scmp.eq.s32.totalorder %s16, 1
      %p34 = por %p32, %p33
      %p35 = scmp.ne.s32.totalorder %s24, %s25
      %p36 = scmp.eq.s32.totalorder %s16, 0
      %p37 = por %p35, %p36
      %p38 = scmp.ne.s32.totalorder %s24, %s25
      %p39 = scmp.eq.s32.totalorder %s17, 1
      %p40 = por %p38, %p39
      %p42 = scmp.ne.s32.totalorder %s25, %s41
      %p43 = scmp.eq.s32.totalorder %s17, 0
      %p44 = por %p42, %p43
      %s46 = sadd.s32 %s45, 1
      %p49 = scmp.eq.s32.totalorder %s11, 1
      %p50 = scmp.ne.s32.totalorder %s45, %s47
      %p51 = scmp.eq.s32.totalorder %s11, 0
      %p52 = por %p50, %p51
      %p53 = scmp.ne.s32.totalorder %s45, %s47
      %p54 = scmp.eq.s32.totalorder %s16, 1
      %p55 = por %p53, %p54
      %p56 = scmp.ne.s32.totalorder %s47, %s48
      %p57 = scmp.eq.s32.totalorder %s16, 0
      %p58 = por %p56, %p57
      %p59 = scmp.ne.s32.totalorder %s47, %s48
      %p60 = scmp.eq.s32.totalorder %s17, 1
      %p61 = por %p59, %p60
      %p63 = scmp.ne.s32.totalorder %s48, %s62
      %p64 = scmp.eq.s32.totalorder %s17, 0
      %p65 = por %p63, %p64
      %s67 = sadd.s32 %s66, 1
      %p70 = scmp.eq.s32.totalorder %s11, 1
      %p71 = scmp.ne.s32.totalorder %s66, %s68
      %p72 = scmp.eq.s32.totalorder %s11, 0
      %p73 = por %p71, %p72
      %p74 = scmp.ne.s32.totalorder %s66, %s68
      %p75 = scmp.eq.s32.totalorder %s16, 1
      %p76 = por %p74, %p75
      %p77 = scmp.ne.s32.totalorder %s68, %s69
      %p78 = scmp.eq.s32.totalorder %s16, 0
      %p79 = por %p77, %p78
      %p80 = scmp.ne.s32.totalorder %s68, %s69
      %p81 = scmp.eq.s32.totalorder %s17, 1
      %p82 = por %p80, %p81
      %p84 = scmp.ne.s32.totalorder %s69, %s83
      %p85 = scmp.eq.s32.totalorder %s17, 0
      %p86 = por %p84, %p85
      %s87 = ssub.s32 %s11, %s18
      %p88 = scmp.eq.s32.totalorder %s87, 0
      %s90 = sadd.s32 %s89, 1
      %s91 = scalar_select %p88, %s89, %s90
      %p94 = pneg %p88
      %p95 = scmp.eq.s32.totalorder %s11, 1
      %p96 = por %p94, %p95
      %p97 = scmp.ne.s32.totalorder %s89, %s92
      %p98 = scmp.eq.s32.totalorder %s11, 0
      %p99 = por %p97, %p98
      %p100 = scmp.ne.s32.totalorder %s89, %s92
      %p101 = scmp.eq.s32.totalorder %s16, 1
      %p102 = por %p100, %p101
      %p103 = scmp.ne.s32.totalorder %s92, %s93
      %p104 = scmp.eq.s32.totalorder %s16, 0
      %p105 = por %p103, %p104
      %p106 = scmp.ne.s32.totalorder %s92, %s93
      %p107 = scmp.eq.s32.totalorder %s17, 1
      %p108 = por %p106, %p107
      %p110 = scmp.ne.s32.totalorder %s93, %s109
      %p111 = scmp.eq.s32.totalorder %s17, 0
      %p112 = por %p110, %p111
      %p113 = scmp.le.s32.totalorder 1, %s11
      %p114 = scmp.lt.s32.totalorder %s11, 3
      %p115 = pnand %p113, %p114
      %p116 = pneg %p115
      // Predicated region
      $region9: #{generator_forward.11} parent=5 // pred_check
        _
      $region10: #{generator_forward.11} parent=5 // pred_check_branch
        %118 = sbr.rel (%p115) target = $region12
      $region11: #{generator_forward.11} parent=5 // pred_region
        %s119 = ssub.s32 %s11, 1
        // Predicated region
        $region13: #{generator_forward.11} parent=11 // pred_check
          %p120 = pneg %p58
        $region14: #{generator_forward.11} parent=11 // pred_check_branch
          %122 = sbr.rel (%p120) target = $region16
        $region15: #{generator_forward.11} parent=11 // pred_region
          %124 = vsyncadd [#allocation3], 0
          %s125 = sshll.u32 %s1, 4
          %s126 = int_to_ptr.hbm [resolvable:$true] %s125
          %s127 = sshll.u32 [#allocation2], 4
          %s128 = int_to_ptr.vmem [resolvable:$true] %s127
          %133 = dma.hbm_to_vmem [thread:$0]  %s126, 3072, %s128, [#allocation3], 64, 64, 4
        $region16: #{generator_forward.11} parent=11 // pred_fallthru
          _
        // Predicated region
        $region17: #{generator_forward.11} parent=11 // pred_check
          %p134 = pneg %p79
        $region18: #{generator_forward.11} parent=11 // pred_check_branch
          %136 = sbr.rel (%p134) target = $region20
        $region19: #{generator_forward.11} parent=11 // pred_region
          %138 = vsyncadd [#allocation5], 0
          %s140 = sshll.u32 %s2, 4
          %s141 = int_to_ptr.hbm [resolvable:$true] %s140
          %s142 = sshll.u32 [#allocation4], 4
          %s143 = int_to_ptr.vmem [resolvable:$true] %s142
          %145 = dma.hbm_to_vmem [thread:$0]  %s141, 16, %s143, [#allocation5]
        $region20: #{generator_forward.11} parent=11 // pred_fallthru
          _
      $region12: #{generator_forward.11} parent=5 // pred_fallthru
        _
      %p146 = scmp.lt.s32.totalorder %s11, 2
      // Predicated region
      $region21: #{generator_forward.11} parent=5 // pred_check
        %p147 = pneg %p146
      $region22: #{generator_forward.11} parent=5 // pred_check_branch
        %149 = sbr.rel (%p147) target = $region24
      $region23: #{generator_forward.11} parent=5 // pred_region
        // Predicated region
        $region25: #{generator_forward.11} parent=23 // pred_check
          %p150 = pneg %p31
        $region26: #{generator_forward.11} parent=23 // pred_check_branch
          %152 = sbr.rel (%p150) target = $region28
        $region27: #{generator_forward.11} parent=23 // pred_region
          %p153 = scmp.lt.s32.totalorder %s11, 1
          %s154 = scalar_select %p153, %s11, 1
          %s155 = smul.addr %s154, 24
          %s156 = smul.addr %s155, 4
          %s157 = scalar_lea.vmem %s0, %s156
        $region28: #{generator_forward.11} parent=23 // pred_fallthru
          _
      $region24: #{generator_forward.11} parent=5 // pred_fallthru
        _
      %p158 = scmp.le.s32.totalorder 1, %s11
      %p159 = scmp.lt.s32.totalorder %s11, 3
      %p160 = pnand %p158, %p159
      %p161 = pneg %p160
      // Predicated region
      $region29: #{generator_forward.11} parent=5 // pred_check
        _
      $region30: #{generator_forward.11} parent=5 // pred_check_branch
        %163 = sbr.rel (%p160) target = $region32
      $region31: #{generator_forward.11} parent=5 // pred_region
        %s164 = ssub.s32 %s11, 1
        // Predicated region
        $region33: #{generator_forward.11} parent=31 // pred_check
          %p165 = pneg %p58
        $region34: #{generator_forward.11} parent=31 // pred_check_branch
          %167 = sbr.rel (%p165) target = $region36
        $region35: #{generator_forward.11} parent=31 // pred_region
          %169 = dma.done [#allocation3], 3072
        $region36: #{generator_forward.11} parent=31 // pred_fallthru
          _
        // Predicated region
        $region37: #{generator_forward.11} parent=31 // pred_check
          %p170 = pneg %p79
        $region38: #{generator_forward.11} parent=31 // pred_check_branch
          %172 = sbr.rel (%p170) target = $region40
        $region39: #{generator_forward.11} parent=31 // pred_region
          %174 = dma.done [#allocation5], 16
        $region40: #{generator_forward.11} parent=31 // pred_fallthru
          _
        %p175 = scmp.lt.s32.totalorder %s16, 1
        %s176 = scalar_select %p175, %s16, 1
        %s177 = smul.addr %s176, 24
        %s178 = smul.addr %s177, 4
        %s179 = scalar_lea.vmem %s0, %s178
        %p180 = pneg %p37
        %p181 = pneg %p34
        %p182 = pneg %p58
        %p183 = pneg %p55
        %p184 = pneg %p79
        %p185 = pneg %p76
        %p186 = pneg %p105
        %p187 = pneg %p102
        %p188 = scmp.lt.s32.totalorder %s16, 1
        %s189 = scalar_select %p188, %s16, 1
        %s190 = smul.addr %s189, 8
        %s191 = smul.addr %s190, 8
        %s192 = scalar_lea.vmem %s3, %s191
        %p193 = scmp.lt.s32.totalorder %s16, 1
        %s194 = scalar_select %p193, %s16, 1
        %s195 = smul.addr %s194, 24
        %s196 = smul.addr %s195, 4
        %s197 = scalar_lea.vmem %s0, %s196
        %p198 = scmp.lt.s32.totalorder %s16, 1
        %s199 = scalar_select %p198, %s16, 1
        %s200 = smul.addr %s199, 8
        %s201 = smul.addr %s200, 8
        %s202 = scalar_lea.vmem %s3, %s201
        %v203 = vld [vmem:[%s197] sm:$0xff]
        %v204 = vld [vmem:[%s197 + $0x8] sm:$0xf]
        %v205 = vld [vmem:[%s197 + $0xc] sm:$0xff]
        %v206 = vld [vmem:[%s197 + $0x14] sm:$0xf]
        %v207 = vld [vmem:[%s197 + $0x18] sm:$0xff]
        %v208 = vld [vmem:[%s197 + $0x20] sm:$0xf]
        %v209 = vld [vmem:[%s197 + $0x24] sm:$0xff]
        %v210 = vld [vmem:[%s197 + $0x2c] sm:$0xf]
        %v211 = vld [vmem:[%s197 + $0x30] sm:$0xff]
        %v212 = vld [vmem:[%s197 + $0x38] sm:$0xf]
        %v213 = vld [vmem:[%s197 + $0x3c] sm:$0xff]
        %v214 = vld [vmem:[%s197 + $0x44] sm:$0xf]
        %v215 = vld [vmem:[%s197 + $0x48] sm:$0xff]
        %v216 = vld [vmem:[%s197 + $0x50] sm:$0xf]
        %v217 = vld [vmem:[%s197 + $0x54] sm:$0xff]
        %v218 = vld [vmem:[%s197 + $0x5c] sm:$0xf]
        %v219 = vld [vmem:[#allocation2] sm:$0xf]
        %v220 = vld [vmem:[#allocation2 + $0x4] sm:$0xf]
        %v221 = vld [vmem:[#allocation2 + $0x8] sm:$0xf]
        %v222 = vld [vmem:[#allocation2 + $0xc] sm:$0xf]
        %v223 = vld [vmem:[#allocation2 + $0x10] sm:$0xf]
        %v224 = vld [vmem:[#allocation2 + $0x14] sm:$0xf]
        %v225 = vld [vmem:[#allocation2 + $0x18] sm:$0xf]
        %v226 = vld [vmem:[#allocation2 + $0x1c] sm:$0xf]
        %v227 = vld [vmem:[#allocation2 + $0x20] sm:$0xf]
        %v228 = vld [vmem:[#allocation2 + $0x24] sm:$0xf]
        %v229 = vld [vmem:[#allocation2 + $0x28] sm:$0xf]
        %v230 = vld [vmem:[#allocation2 + $0x2c] sm:$0xf]
        %v231 = vld [vmem:[#allocation2 + $0x30] sm:$0xf]
        %v232 = vld [vmem:[#allocation2 + $0x34] sm:$0xf]
        %v233 = vld [vmem:[#allocation2 + $0x38] sm:$0xf]
        %v234 = vld [vmem:[#allocation2 + $0x3c] sm:$0xf]
        %v235 = vld [vmem:[#allocation2 + $0x40] sm:$0xf]
        %v236 = vld [vmem:[#allocation2 + $0x44] sm:$0xf]
        %v237 = vld [vmem:[#allocation2 + $0x48] sm:$0xf]
        %v238 = vld [vmem:[#allocation2 + $0x4c] sm:$0xf]
        %v239 = vld [vmem:[#allocation2 + $0x50] sm:$0xf]
        %v240 = vld [vmem:[#allocation2 + $0x54] sm:$0xf]
        %v241 = vld [vmem:[#allocation2 + $0x58] sm:$0xf]
        %v242 = vld [vmem:[#allocation2 + $0x5c] sm:$0xf]
        %v243 = vld [vmem:[#allocation2 + $0x60] sm:$0xf]
        %v244 = vld [vmem:[#allocation2 + $0x64] sm:$0xf]
        %v245 = vld [vmem:[#allocation2 + $0x68] sm:$0xf]
        %v246 = vld [vmem:[#allocation2 + $0x6c] sm:$0xf]
        %v247 = vld [vmem:[#allocation2 + $0x70] sm:$0xf]
        %v248 = vld [vmem:[#allocation2 + $0x74] sm:$0xf]
        %v249 = vld [vmem:[#allocation2 + $0x78] sm:$0xf]
        %v250 = vld [vmem:[#allocation2 + $0x7c] sm:$0xf]
        %v251 = vld [vmem:[#allocation2 + $0x80] sm:$0xf]
        %v252 = vld [vmem:[#allocation2 + $0x84] sm:$0xf]
        %v253 = vld [vmem:[#allocation2 + $0x88] sm:$0xf]
        %v254 = vld [vmem:[#allocation2 + $0x8c] sm:$0xf]
        %v255 = vld [vmem:[#allocation2 + $0x90] sm:$0xf]
        %v256 = vld [vmem:[#allocation2 + $0x94] sm:$0xf]
        %v257 = vld [vmem:[#allocation2 + $0x98] sm:$0xf]
        %v258 = vld [vmem:[#allocation2 + $0x9c] sm:$0xf]
        %v259 = vld [vmem:[#allocation2 + $0xa0] sm:$0xf]
        %v260 = vld [vmem:[#allocation2 + $0xa4] sm:$0xf]
        %v261 = vld [vmem:[#allocation2 + $0xa8] sm:$0xf]
        %v262 = vld [vmem:[#allocation2 + $0xac] sm:$0xf]
        %v263 = vld [vmem:[#allocation2 + $0xb0] sm:$0xf]
        %v264 = vld [vmem:[#allocation2 + $0xb4] sm:$0xf]
        %v265 = vld [vmem:[#allocation2 + $0xb8] sm:$0xf]
        %v266 = vld [vmem:[#allocation2 + $0xbc] sm:$0xf]
        %v267 = vld [vmem:[#allocation4] sm:$0x1]
        %v269 = vperm.slane %v267, 0
        %v287 = vunpack.c.l.b16 %v203
        %v288 = vunpack.c.h.b16 %v203
        %v289 = vunpack.c.l.b16 %v204
        %v290 = vunpack.c.l.b16 %v205
        %v291 = vunpack.c.h.b16 %v205
        %v292 = vunpack.c.l.b16 %v206
        %v293 = vunpack.c.l.b16 %v207
        %v294 = vunpack.c.h.b16 %v207
        %v295 = vunpack.c.l.b16 %v208
        %v296 = vunpack.c.l.b16 %v209
        %v297 = vunpack.c.h.b16 %v209
        %v298 = vunpack.c.l.b16 %v210
        %v299 = vunpack.c.l.b16 %v211
        %v300 = vunpack.c.h.b16 %v211
        %v301 = vunpack.c.l.b16 %v212
        %v302 = vunpack.c.l.b16 %v213
        %v303 = vunpack.c.h.b16 %v213
        %v304 = vunpack.c.l.b16 %v214
        %v305 = vunpack.c.l.b16 %v215
        %v306 = vunpack.c.h.b16 %v215
        %v307 = vunpack.c.l.b16 %v216
        %v308 = vunpack.c.l.b16 %v217
        %v309 = vunpack.c.h.b16 %v217
        %v310 = vunpack.c.l.b16 %v218
        %v311 = vpack.c.b16 %v290, %v287
        %v312 = vpack.c.b16 %v291, %v288
        %v313 = vpack.c.b16 %v292, %v289
        %v314 = vpack.c.b16 %v296, %v293
        %v315 = vpack.c.b16 %v297, %v294
        %v316 = vpack.c.b16 %v298, %v295
        %v317 = vpack.c.b16 %v302, %v299
        %v318 = vpack.c.b16 %v303, %v300
        %v319 = vpack.c.b16 %v304, %v301
        %v320 = vpack.c.b16 %v308, %v305
        %v321 = vpack.c.b16 %v309, %v306
        %v322 = vpack.c.b16 %v310, %v307
        %v383 = vunpack.c.l.b16 %v219
        %v384 = vunpack.c.l.b16 %v220
        %v385 = vunpack.c.l.b16 %v221
        %v386 = vunpack.c.l.b16 %v222
        %v387 = vunpack.c.l.b16 %v223
        %v388 = vunpack.c.l.b16 %v224
        %v389 = vunpack.c.l.b16 %v225
        %v390 = vunpack.c.l.b16 %v226
        %v391 = vunpack.c.l.b16 %v227
        %v392 = vunpack.c.l.b16 %v228
        %v393 = vunpack.c.l.b16 %v229
        %v394 = vunpack.c.l.b16 %v230
        %v395 = vunpack.c.l.b16 %v231
        %v396 = vunpack.c.l.b16 %v232
        %v397 = vunpack.c.l.b16 %v233
        %v398 = vunpack.c.l.b16 %v234
        %v399 = vunpack.c.l.b16 %v235
        %v400 = vunpack.c.l.b16 %v236
        %v401 = vunpack.c.l.b16 %v237
        %v402 = vunpack.c.l.b16 %v238
        %v403 = vunpack.c.l.b16 %v239
        %v404 = vunpack.c.l.b16 %v240
        %v405 = vunpack.c.l.b16 %v241
        %v406 = vunpack.c.l.b16 %v242
        %v407 = vunpack.c.l.b16 %v243
        %v408 = vunpack.c.l.b16 %v244
        %v409 = vunpack.c.l.b16 %v245
        %v410 = vunpack.c.l.b16 %v246
        %v411 = vunpack.c.l.b16 %v247
        %v412 = vunpack.c.l.b16 %v248
        %v413 = vunpack.c.l.b16 %v249
        %v414 = vunpack.c.l.b16 %v250
        %v415 = vunpack.c.l.b16 %v251
        %v416 = vunpack.c.l.b16 %v252
        %v417 = vunpack.c.l.b16 %v253
        %v418 = vunpack.c.l.b16 %v254
        %v419 = vunpack.c.l.b16 %v255
        %v420 = vunpack.c.l.b16 %v256
        %v421 = vunpack.c.l.b16 %v257
        %v422 = vunpack.c.l.b16 %v258
        %v423 = vunpack.c.l.b16 %v259
        %v424 = vunpack.c.l.b16 %v260
        %v425 = vunpack.c.l.b16 %v261
        %v426 = vunpack.c.l.b16 %v262
        %v427 = vunpack.c.l.b16 %v263
        %v428 = vunpack.c.l.b16 %v264
        %v429 = vunpack.c.l.b16 %v265
        %v430 = vunpack.c.l.b16 %v266
        %v431 = vpack.c.b16 %v384, %v383
        %v432 = vpack.c.b16 %v386, %v385
        %v433 = vpack.c.b16 %v388, %v387
        %v434 = vpack.c.b16 %v390, %v389
        %v435 = vpack.c.b16 %v392, %v391
        %v436 = vpack.c.b16 %v394, %v393
        %v437 = vpack.c.b16 %v396, %v395
        %v438 = vpack.c.b16 %v398, %v397
        %v439 = vpack.c.b16 %v400, %v399
        %v440 = vpack.c.b16 %v402, %v401
        %v441 = vpack.c.b16 %v404, %v403
        %v442 = vpack.c.b16 %v406, %v405
        %v443 = vpack.c.b16 %v408, %v407
        %v444 = vpack.c.b16 %v410, %v409
        %v445 = vpack.c.b16 %v412, %v411
        %v446 = vpack.c.b16 %v414, %v413
        %v447 = vpack.c.b16 %v416, %v415
        %v448 = vpack.c.b16 %v418, %v417
        %v449 = vpack.c.b16 %v420, %v419
        %v450 = vpack.c.b16 %v422, %v421
        %v451 = vpack.c.b16 %v424, %v423
        %v452 = vpack.c.b16 %v426, %v425
        %v453 = vpack.c.b16 %v428, %v427
        %v454 = vpack.c.b16 %v430, %v429
        %479 = vmatpush.bf16.msra.mxu0 %v438
        %480 = vmatpush.bf16.msra.mxu0 %v437
        %481 = vmatpush.bf16.msra.mxu0 %v436
        %482 = vmatpush.bf16.msra.mxu0 %v435
        %483 = vmatpush.bf16.msra.mxu0 %v434
        %484 = vmatpush.bf16.msra.mxu0 %v433
        %485 = vmatpush.bf16.msra.mxu0 %v432
        %486 = vmatpush.bf16.msra.mxu0 %v431
        %487 = vmatmul.bf16.gmra.mxu0 %v311
        %v488 = vpop.f32.mrf.mxu0
        %v489 = vadd.f32 %v269, %v488
        %v490 = vpop.f32.mrf.mxu0
        %v491 = vadd.f32 %v269, %v490
        %492 = vmatmul.bf16.gmra.mxu0 %v314
        %v493 = vpop.f32.mrf.mxu0
        %v494 = vadd.f32 %v269, %v493
        %v495 = vpop.f32.mrf.mxu0
        %v496 = vadd.f32 %v269, %v495
        %497 = vmatmul.bf16.gmra.mxu0 %v317
        %v498 = vpop.f32.mrf.mxu0
        %v499 = vadd.f32 %v269, %v498
        %v500 = vpop.f32.mrf.mxu0
        %v501 = vadd.f32 %v269, %v500
        %502 = vmatmul.bf16.gmra.mxu0 %v320
        %v503 = vpop.f32.mrf.mxu0
        %v504 = vadd.f32 %v269, %v503
        %v505 = vpop.f32.mrf.mxu0
        %v506 = vadd.f32 %v269, %v505
        %507 = vdwg.mxu0
        %508 = vmatpush.bf16.msra.mxu0 %v446
        %509 = vmatpush.bf16.msra.mxu0 %v445
        %510 = vmatpush.bf16.msra.mxu0 %v444
        %511 = vmatpush.bf16.msra.mxu0 %v443
        %512 = vmatpush.bf16.msra.mxu0 %v442
        %513 = vmatpush.bf16.msra.mxu0 %v441
        %514 = vmatpush.bf16.msra.mxu0 %v440
        %515 = vmatpush.bf16.msra.mxu0 %v439
        %516 = vmatmul.bf16.gmra.mxu0 %v312
        %v517 = vpop.f32.mrf.mxu0
        %v518 = vadd.f32 %v489, %v517
        %v519 = vpop.f32.mrf.mxu0
        %v520 = vadd.f32 %v491, %v519
        %521 = vmatmul.bf16.gmra.mxu0 %v315
        %v522 = vpop.f32.mrf.mxu0
        %v523 = vadd.f32 %v494, %v522
        %v524 = vpop.f32.mrf.mxu0
        %v525 = vadd.f32 %v496, %v524
        %526 = vmatmul.bf16.gmra.mxu0 %v318
        %v527 = vpop.f32.mrf.mxu0
        %v528 = vadd.f32 %v499, %v527
        %v529 = vpop.f32.mrf.mxu0
        %v530 = vadd.f32 %v501, %v529
        %531 = vmatmul.bf16.gmra.mxu0 %v321
        %v532 = vpop.f32.mrf.mxu0
        %v533 = vadd.f32 %v504, %v532
        %v534 = vpop.f32.mrf.mxu0
        %v535 = vadd.f32 %v506, %v534
        %536 = vdwg.mxu0
        %537 = vmatpush.bf16.msra.mxu0 %v454
        %538 = vmatpush.bf16.msra.mxu0 %v453
        %539 = vmatpush.bf16.msra.mxu0 %v452
        %540 = vmatpush.bf16.msra.mxu0 %v451
        %541 = vmatpush.bf16.msra.mxu0 %v450
        %542 = vmatpush.bf16.msra.mxu0 %v449
        %543 = vmatpush.bf16.msra.mxu0 %v448
        %544 = vmatpush.bf16.msra.mxu0 %v447
        %545 = vmatmul.bf16.gmra.mxu0 %v313
        %v546 = vpop.f32.mrf.mxu0
        %v547 = vadd.f32 %v518, %v546
        %v548 = vpop.f32.mrf.mxu0
        %v549 = vadd.f32 %v520, %v548
        %550 = vmatmul.bf16.gmra.mxu0 %v316
        %v551 = vpop.f32.mrf.mxu0
        %v552 = vadd.f32 %v523, %v551
        %v553 = vpop.f32.mrf.mxu0
        %v554 = vadd.f32 %v525, %v553
        %555 = vmatmul.bf16.gmra.mxu0 %v319
        %v556 = vpop.f32.mrf.mxu0
        %v557 = vadd.f32 %v528, %v556
        %v558 = vpop.f32.mrf.mxu0
        %v559 = vadd.f32 %v530, %v558
        %560 = vmatmul.bf16.gmra.mxu0 %v322
        %v561 = vpop.f32.mrf.mxu0
        %v562 = vadd.f32 %v533, %v561
        %v563 = vpop.f32.mrf.mxu0
        %v564 = vadd.f32 %v535, %v563
        %565 = vdwg.mxu0
        %v566 = vadd.f32 %v547, %v549
        %v567 = vadd.f32 %v566, %v552
        %v568 = vadd.f32 %v567, %v554
        %v569 = vadd.f32 %v568, %v557
        %v570 = vadd.f32 %v569, %v559
        %v571 = vadd.f32 %v570, %v562
        %v572 = vadd.f32 %v571, %v564
        %v573 = vrot.slane %v572, 4
        %v574 = vadd.f32 %v572, %v573
        %v575 = vrot.slane %v574, 2
        %v576 = vadd.f32 %v574, %v575
        %v577 = vrot.slane %v576, 1
        %v578 = vadd.f32 %v576, %v577
        %v579 = vmul.f32 %v547, %v547
        %v580 = vmul.f32 %v549, %v549
        %v581 = vmul.f32 %v552, %v552
        %v582 = vmul.f32 %v554, %v554
        %v583 = vmul.f32 %v557, %v557
        %v584 = vmul.f32 %v559, %v559
        %v585 = vmul.f32 %v562, %v562
        %v586 = vmul.f32 %v564, %v564
        %v587 = vadd.f32 %v579, %v580
        %v588 = vadd.f32 %v587, %v581
        %v589 = vadd.f32 %v588, %v582
        %v590 = vadd.f32 %v589, %v583
        %v591 = vadd.f32 %v590, %v584
        %v592 = vadd.f32 %v591, %v585
        %v593 = vadd.f32 %v592, %v586
        %v594 = vrot.slane %v593, 4
        %v595 = vadd.f32 %v593, %v594
        %v596 = vrot.slane %v595, 2
        %v597 = vadd.f32 %v595, %v596
        %v598 = vrot.slane %v597, 1
        %v599 = vadd.f32 %v597, %v598
        %v600 = vmul.f32 %v578, 0.015625
        %v601 = vmul.f32 %v599, 0.015625
        %v602 = vmul.f32 %v600, %v600
        %v603 = vsub.f32 %v601, %v602
        %v604 = vmax.f32 %v603, 0.0
        %v605 = vsub.f32 %v547, %v600
        %v606 = vsub.f32 %v549, %v600
        %v607 = vsub.f32 %v552, %v600
        %v608 = vsub.f32 %v554, %v600
        %v609 = vsub.f32 %v557, %v600
        %v610 = vsub.f32 %v559, %v600
        %v611 = vsub.f32 %v562, %v600
        %v612 = vsub.f32 %v564, %v600
        %v613 = vadd.f32 %v604, 1e-05
        %v614 = vrsqrt.pop %v613
        %v615 = vmul.f32 %v614, %v613
        %v616 = vmul.f32 %v615, %v614
        %v617 = vmul.f32 0.5, %v616
        %v618 = vsub.f32 1.5, %v617
        %v619 = vmul.f32 %v614, %v618
        %vm620 = vweird.f32 %v613
        %vm621 = vweird.f32 %v614
        %vm622 = vmor %vm620, %vm621
        %v623 = vsel %vm622, %v614, %v619
        %v624 = vmul.f32 %v605, %v623
        %v625 = vmul.f32 %v606, %v623
        %v626 = vmul.f32 %v607, %v623
        %v627 = vmul.f32 %v608, %v623
        %v628 = vmul.f32 %v609, %v623
        %v629 = vmul.f32 %v610, %v623
        %v630 = vmul.f32 %v611, %v623
        %v631 = vmul.f32 %v612, %v623
        %v632 = vmax.f32 %v624, 0.0
        %v633 = vmax.f32 %v625, 0.0
        %v634 = vmax.f32 %v626, 0.0
        %v635 = vmax.f32 %v627, 0.0
        %v636 = vmax.f32 %v628, 0.0
        %v637 = vmax.f32 %v629, 0.0
        %v638 = vmax.f32 %v630, 0.0
        %v639 = vmax.f32 %v631, 0.0
        %640 = vst [vmem:[%s202] sm:$0xff] %v632
        %641 = vst [vmem:[%s202 + $0x8] sm:$0xff] %v633
        %642 = vst [vmem:[%s202 + $0x10] sm:$0xff] %v634
        %643 = vst [vmem:[%s202 + $0x18] sm:$0xff] %v635
        %644 = vst [vmem:[%s202 + $0x20] sm:$0xff] %v636
        %645 = vst [vmem:[%s202 + $0x28] sm:$0xff] %v637
        %646 = vst [vmem:[%s202 + $0x30] sm:$0xff] %v638
        %647 = vst [vmem:[%s202 + $0x38] sm:$0xff] %v639
        %p648 = scmp.lt.s32.totalorder %s16, 1
        %s649 = scalar_select %p648, %s16, 1
        %s650 = smul.addr %s649, 8
        %s651 = smul.addr %s650, 8
        %s652 = scalar_lea.vmem %s3, %s651
        // Predicated region
        $region41: #{generator_forward.11} parent=31 // pred_check
          %p653 = pneg %p102
        $region42: #{generator_forward.11} parent=31 // pred_check_branch
          %655 = sbr.rel (%p653) target = $region44
        $region43: #{generator_forward.11} parent=31 // pred_region
          _
        $region44: #{generator_forward.11} parent=31 // pred_fallthru
          _
      $region32: #{generator_forward.11} parent=5 // pred_fallthru
        _
      %p656 = scmp.le.s32.totalorder 2, %s11
      // Predicated region
      $region45: #{generator_forward.11} parent=5 // pred_check
        %p657 = pneg %p656
      $region46: #{generator_forward.11} parent=5 // pred_check_branch
        %659 = sbr.rel (%p657) target = $region48
      $region47: #{generator_forward.11} parent=5 // pred_region
        %s660 = ssub.s32 %s11, 2
        // Predicated region
        $region49: #{generator_forward.11} parent=47 // pred_check
          %p661 = pneg %p108
        $region50: #{generator_forward.11} parent=47 // pred_check_branch
          %663 = sbr.rel (%p661) target = $region52
        $region51: #{generator_forward.11} parent=47 // pred_region
          %p664 = scmp.lt.s32.totalorder %s17, 1
          %s665 = scalar_select %p664, %s17, 1
          %s666 = smul.addr %s665, 8
          %s667 = smul.addr %s666, 8
          %s668 = scalar_lea.vmem %s3, %s667
        $region52: #{generator_forward.11} parent=47 // pred_fallthru
          _
      $region48: #{generator_forward.11} parent=5 // pred_fallthru
        _
    $region6: #{generator_forward.11} parent=1 // loop_footer
      %s15 = sadd.s32 1, %s11
    $region7: #{generator_forward.11} parent=1 // loop_footer_branch
      %10 = sbr.rel target = $region3
    $region8: #{generator_forward.11} parent=1 // loop_exit
      _
    %669 = vsyncpa [#allocation3], 1
    %s670 = scalar_lea.sflag [#allocation3], 1
    %671 = vsyncpa %s670, 1
    %672 = vsyncpa [#allocation5], 1

// kernel: generator_forward.12
$region0: #{generator_forward.12}
  #allocation0 [shape = 'u32[]', space=smem, size = 0x4, offset = 0x4, fixed_abs, tag = 'smem constant byte address 0x4 - core index']
  #allocation1 [shape = 'u32[72,128]{1,0:T(1,128)}', space=vmem, size = 0x9000, scoped, tag = 'internal scratch']
  %s0 = inlined_call_operand.vmem [shape: bf16[2,64,640], index: 0, kind: input, shape index: {}]
  %s1 = inlined_call_operand.vmem [shape: bf16[640,128], index: 1, kind: input, shape index: {}]
  %s2 = inlined_call_operand.vmem [shape: f32[1,128], index: 2, kind: input, shape index: {}]
  %s3 = inlined_call_operand.vmem [shape: f32[2,64,128], index: 3, kind: output, shape index: {}]
  %s4 = sld [smem:[#allocation0]]
  $region45: #{generator_forward.12} parent=0
    _
  %s6 = ssub.s32 1, %s4
  %s7 = scalar_select 0, %s6, %s4
  loop: start=0, step=1, limit=4
  $region2: #{generator_forward.12} parent=0 // loop_pre_header
    _
  $region3: #{generator_forward.12} parent=0 // loop_header
    %s9 = sphi 0, %s13
    %p10 = scmp.ge.s32.totalorder %s9, 4
    %s19 = sphi 0, %s21
    %s22 = sphi 0, %s19
    %s23 = sphi 0, %s22
    %s39 = sphi 0, %s23
    %s43 = sphi 0, %s43
    %s45 = sphi 0, %s43
    %s46 = sphi 0, %s45
    %s60 = sphi 0, %s46
    %s64 = sphi 0, %s64
    %s66 = sphi 0, %s64
    %s67 = sphi 0, %s66
    %s81 = sphi 0, %s67
    %s87 = sphi 0, %s89
    %s90 = sphi 0, %s87
    %s91 = sphi 0, %s90
    %s107 = sphi 0, %s91
  $region4: #{generator_forward.12} parent=0 // loop_header_branch
    %12 = sbr.rel (%p10) target = $region8
  $region5: #{generator_forward.12} parent=0 // loop_body
    %s14 = ssub.s32 %s9, 1
    %s15 = ssub.s32 %s9, 2
    %s16 = sadd.s32 %s9, 1
    %s17 = ssub.s32 %s9, %s16
    %p18 = scmp.eq.s32.totalorder %s17, 0
    %s20 = sadd.s32 %s19, 1
    %s21 = scalar_select %p18, %s19, %s20
    %p24 = pneg %p18
    %p25 = scmp.eq.s32.totalorder %s9, 1
    %p26 = por %p24, %p25
    %p27 = scmp.ne.s32.totalorder %s19, %s22
    %p28 = scmp.eq.s32.totalorder %s9, 0
    %p29 = por %p27, %p28
    %p30 = scmp.ne.s32.totalorder %s19, %s22
    %p31 = scmp.eq.s32.totalorder %s14, 1
    %p32 = por %p30, %p31
    %p33 = scmp.ne.s32.totalorder %s22, %s23
    %p34 = scmp.eq.s32.totalorder %s14, 0
    %p35 = por %p33, %p34
    %p36 = scmp.ne.s32.totalorder %s22, %s23
    %p37 = scmp.eq.s32.totalorder %s15, 1
    %p38 = por %p36, %p37
    %p40 = scmp.ne.s32.totalorder %s23, %s39
    %p41 = scmp.eq.s32.totalorder %s15, 0
    %p42 = por %p40, %p41
    %s44 = sadd.s32 %s43, 1
    %p47 = scmp.eq.s32.totalorder %s9, 1
    %p48 = scmp.ne.s32.totalorder %s43, %s45
    %p49 = scmp.eq.s32.totalorder %s9, 0
    %p50 = por %p48, %p49
    %p51 = scmp.ne.s32.totalorder %s43, %s45
    %p52 = scmp.eq.s32.totalorder %s14, 1
    %p53 = por %p51, %p52
    %p54 = scmp.ne.s32.totalorder %s45, %s46
    %p55 = scmp.eq.s32.totalorder %s14, 0
    %p56 = por %p54, %p55
    %p57 = scmp.ne.s32.totalorder %s45, %s46
    %p58 = scmp.eq.s32.totalorder %s15, 1
    %p59 = por %p57, %p58
    %p61 = scmp.ne.s32.totalorder %s46, %s60
    %p62 = scmp.eq.s32.totalorder %s15, 0
    %p63 = por %p61, %p62
    %s65 = sadd.s32 %s64, 1
    %p68 = scmp.eq.s32.totalorder %s9, 1
    %p69 = scmp.ne.s32.totalorder %s64, %s66
    %p70 = scmp.eq.s32.totalorder %s9, 0
    %p71 = por %p69, %p70
    %p72 = scmp.ne.s32.totalorder %s64, %s66
    %p73 = scmp.eq.s32.totalorder %s14, 1
    %p74 = por %p72, %p73
    %p75 = scmp.ne.s32.totalorder %s66, %s67
    %p76 = scmp.eq.s32.totalorder %s14, 0
    %p77 = por %p75, %p76
    %p78 = scmp.ne.s32.totalorder %s66, %s67
    %p79 = scmp.eq.s32.totalorder %s15, 1
    %p80 = por %p78, %p79
    %p82 = scmp.ne.s32.totalorder %s67, %s81
    %p83 = scmp.eq.s32.totalorder %s15, 0
    %p84 = por %p82, %p83
    %s85 = ssub.s32 %s9, %s16
    %p86 = scmp.eq.s32.totalorder %s85, 0
    %s88 = sadd.s32 %s87, 1
    %s89 = scalar_select %p86, %s87, %s88
    %p92 = pneg %p86
    %p93 = scmp.eq.s32.totalorder %s9, 1
    %p94 = por %p92, %p93
    %p95 = scmp.ne.s32.totalorder %s87, %s90
    %p96 = scmp.eq.s32.totalorder %s9, 0
    %p97 = por %p95, %p96
    %p98 = scmp.ne.s32.totalorder %s87, %s90
    %p99 = scmp.eq.s32.totalorder %s14, 1
    %p100 = por %p98, %p99
    %p101 = scmp.ne.s32.totalorder %s90, %s91
    %p102 = scmp.eq.s32.totalorder %s14, 0
    %p103 = por %p101, %p102
    %p104 = scmp.ne.s32.totalorder %s90, %s91
    %p105 = scmp.eq.s32.totalorder %s15, 1
    %p106 = por %p104, %p105
    %p108 = scmp.ne.s32.totalorder %s91, %s107
    %p109 = scmp.eq.s32.totalorder %s15, 0
    %p110 = por %p108, %p109
    %p111 = scmp.le.s32.totalorder 1, %s9
    %p112 = scmp.lt.s32.totalorder %s9, 3
    %p113 = pnand %p111, %p112
    %p114 = pneg %p113
    // Predicated region
    $region9: #{generator_forward.12} parent=5 // pred_check
      _
    $region10: #{generator_forward.12} parent=5 // pred_check_branch
      %116 = sbr.rel (%p113) target = $region12
    $region11: #{generator_forward.12} parent=5 // pred_region
      %s117 = ssub.s32 %s9, 1
      // Predicated region
      $region13: #{generator_forward.12} parent=11 // pred_check
        %p118 = pneg %p56
      $region14: #{generator_forward.12} parent=11 // pred_check_branch
        %120 = sbr.rel (%p118) target = $region16
      $region15: #{generator_forward.12} parent=11 // pred_region
        _
      $region16: #{generator_forward.12} parent=11 // pred_fallthru
        _
      // Predicated region
      $region17: #{generator_forward.12} parent=11 // pred_check
        %p121 = pneg %p77
      $region18: #{generator_forward.12} parent=11 // pred_check_branch
        %123 = sbr.rel (%p121) target = $region20
      $region19: #{generator_forward.12} parent=11 // pred_region
        _
      $region20: #{generator_forward.12} parent=11 // pred_fallthru
        _
    $region12: #{generator_forward.12} parent=5 // pred_fallthru
      _
    %p124 = scmp.lt.s32.totalorder %s9, 2
    // Predicated region
    $region21: #{generator_forward.12} parent=5 // pred_check
      %p125 = pneg %p124
    $region22: #{generator_forward.12} parent=5 // pred_check_branch
      %127 = sbr.rel (%p125) target = $region24
    $region23: #{generator_forward.12} parent=5 // pred_region
      // Predicated region
      $region25: #{generator_forward.12} parent=23 // pred_check
        %p128 = pneg %p29
      $region26: #{generator_forward.12} parent=23 // pred_check_branch
        %130 = sbr.rel (%p128) target = $region28
      $region27: #{generator_forward.12} parent=23 // pred_region
        %p131 = scmp.lt.s32.totalorder %s9, 1
        %s132 = scalar_select %p131, %s9, 1
        %s133 = smul.addr %s132, 40
        %s134 = smul.addr %s133, 4
        %s135 = scalar_lea.vmem %s0, %s134
      $region28: #{generator_forward.12} parent=23 // pred_fallthru
        _
    $region24: #{generator_forward.12} parent=5 // pred_fallthru
      _
    %p136 = scmp.le.s32.totalorder 1, %s9
    %p137 = scmp.lt.s32.totalorder %s9, 3
    %p138 = pnand %p136, %p137
    %p139 = pneg %p138
    // Predicated region
    $region29: #{generator_forward.12} parent=5 // pred_check
      _
    $region30: #{generator_forward.12} parent=5 // pred_check_branch
      %141 = sbr.rel (%p138) target = $region32
    $region31: #{generator_forward.12} parent=5 // pred_region
      %s142 = ssub.s32 %s9, 1
      %p143 = scmp.lt.s32.totalorder %s14, 1
      %s144 = scalar_select %p143, %s14, 1
      %s145 = smul.addr %s144, 40
      %s146 = smul.addr %s145, 4
      %s147 = scalar_lea.vmem %s0, %s146
      %p148 = pneg %p35
      %p149 = pneg %p32
      %p150 = pneg %p56
      %p151 = pneg %p53
      %p152 = pneg %p77
      %p153 = pneg %p74
      %p154 = pneg %p103
      %p155 = pneg %p100
      %p156 = scmp.lt.s32.totalorder %s14, 1
      %s157 = scalar_select %p156, %s14, 1
      %s158 = smul.addr %s157, 8
      %s159 = smul.addr %s158, 8
      %s160 = scalar_lea.vmem %s3, %s159
      %p161 = scmp.lt.s32.totalorder %s14, 1
      %s162 = scalar_select %p161, %s14, 1
      %s163 = smul.addr %s162, 40
      %s164 = smul.addr %s163, 4
      %s165 = scalar_lea.vmem %s0, %s164
      %p166 = scmp.lt.s32.totalorder %s14, 1
      %s167 = scalar_select %p166, %s14, 1
      %s168 = smul.addr %s167, 8
      %s169 = smul.addr %s168, 8
      %s170 = scalar_lea.vmem %s3, %s169
      %v171 = vld [vmem:[%s165] sm:$0xff]
      %v172 = vld [vmem:[%s165 + $0x8] sm:$0xff]
      %v173 = vld [vmem:[%s165 + $0x10] sm:$0xf]
      %v174 = vld [vmem:[%s165 + $0x14] sm:$0xff]
      %v175 = vld [vmem:[%s165 + $0x1c] sm:$0xff]
      %v176 = vld [vmem:[%s165 + $0x24] sm:$0xf]
      %v177 = vld [vmem:[%s165 + $0x28] sm:$0xff]
      %v178 = vld [vmem:[%s165 + $0x30] sm:$0xff]
      %v179 = vld [vmem:[%s165 + $0x38] sm:$0xf]
      %v180 = vld [vmem:[%s165 + $0x3c] sm:$0xff]
      %v181 = vld [vmem:[%s165 + $0x44] sm:$0xff]
      %v182 = vld [vmem:[%s165 + $0x4c] sm:$0xf]
      %v183 = vld [vmem:[%s165 + $0x50] sm:$0xff]
      %v184 = vld [vmem:[%s165 + $0x58] sm:$0xff]
      %v185 = vld [vmem:[%s165 + $0x60] sm:$0xf]
      %v186 = vld [vmem:[%s165 + $0x64] sm:$0xff]
      %v187 = vld [vmem:[%s165 + $0x6c] sm:$0xff]
      %v188 = vld [vmem:[%s165 + $0x74] sm:$0xf]
      %v189 = vld [vmem:[%s165 + $0x78] sm:$0xff]
      %v190 = vld [vmem:[%s165 + $0x80] sm:$0xff]
      %v191 = vld [vmem:[%s165 + $0x88] sm:$0xf]
      %v192 = vld [vmem:[%s165 + $0x8c] sm:$0xff]
      %v193 = vld [vmem:[%s165 + $0x94] sm:$0xff]
      %v194 = vld [vmem:[%s165 + $0x9c] sm:$0xf]
      %v195 = vld [vmem:[%s1] sm:$0xf]
      %v196 = vld [vmem:[%s1 + $0x4] sm:$0xf]
      %v197 = vld [vmem:[%s1 + $0x8] sm:$0xf]
      %v198 = vld [vmem:[%s1 + $0xc] sm:$0xf]
      %v199 = vld [vmem:[%s1 + $0x10] sm:$0xf]
      %v200 = vld [vmem:[%s1 + $0x14] sm:$0xf]
      %v201 = vld [vmem:[%s1 + $0x18] sm:$0xf]
      %v202 = vld [vmem:[%s1 + $0x1c] sm:$0xf]
      %v203 = vld [vmem:[%s1 + $0x20] sm:$0xf]
      %v204 = vld [vmem:[%s1 + $0x24] sm:$0xf]
      %v205 = vld [vmem:[%s1 + $0x28] sm:$0xf]
      %v206 = vld [vmem:[%s1 + $0x2c] sm:$0xf]
      %v207 = vld [vmem:[%s1 + $0x30] sm:$0xf]
      %v208 = vld [vmem:[%s1 + $0x34] sm:$0xf]
      %v209 = vld [vmem:[%s1 + $0x38] sm:$0xf]
      %v210 = vld [vmem:[%s1 + $0x3c] sm:$0xf]
      %v211 = vld [vmem:[%s1 + $0x40] sm:$0xf]
      %v212 = vld [vmem:[%s1 + $0x44] sm:$0xf]
      %v213 = vld [vmem:[%s1 + $0x48] sm:$0xf]
      %v214 = vld [vmem:[%s1 + $0x4c] sm:$0xf]
      %v215 = vld [vmem:[%s1 + $0x50] sm:$0xf]
      %v216 = vld [vmem:[%s1 + $0x54] sm:$0xf]
      %v217 = vld [vmem:[%s1 + $0x58] sm:$0xf]
      %v218 = vld [vmem:[%s1 + $0x5c] sm:$0xf]
      %v219 = vld [vmem:[%s1 + $0x60] sm:$0xf]
      %v220 = vld [vmem:[%s1 + $0x64] sm:$0xf]
      %v221 = vld [vmem:[%s1 + $0x68] sm:$0xf]
      %v222 = vld [vmem:[%s1 + $0x6c] sm:$0xf]
      %v223 = vld [vmem:[%s1 + $0x70] sm:$0xf]
      %v224 = vld [vmem:[%s1 + $0x74] sm:$0xf]
      %v225 = vld [vmem:[%s1 + $0x78] sm:$0xf]
      %v226 = vld [vmem:[%s1 + $0x7c] sm:$0xf]
      %v227 = vld [vmem:[%s1 + $0x80] sm:$0xf]
      %v228 = vld [vmem:[%s1 + $0x84] sm:$0xf]
      %v229 = vld [vmem:[%s1 + $0x88] sm:$0xf]
      %v230 = vld [vmem:[%s1 + $0x8c] sm:$0xf]
      %v231 = vld [vmem:[%s1 + $0x90] sm:$0xf]
      %v232 = vld [vmem:[%s1 + $0x94] sm:$0xf]
      %v233 = vld [vmem:[%s1 + $0x98] sm:$0xf]
      %v234 = vld [vmem:[%s1 + $0x9c] sm:$0xf]
      %v235 = vld [vmem:[%s1 + $0xa0] sm:$0xf]
      %v236 = vld [vmem:[%s1 + $0xa4] sm:$0xf]
      %v237 = vld [vmem:[%s1 + $0xa8] sm:$0xf]
      %v238 = vld [vmem:[%s1 + $0xac] sm:$0xf]
      %v239 = vld [vmem:[%s1 + $0xb0] sm:$0xf]
      %v240 = vld [vmem:[%s1 + $0xb4] sm:$0xf]
      %v241 = vld [vmem:[%s1 + $0xb8] sm:$0xf]
      %v242 = vld [vmem:[%s1 + $0xbc] sm:$0xf]
      %v243 = vld [vmem:[%s1 + $0xc0] sm:$0xf]
      %v244 = vld [vmem:[%s1 + $0xc4] sm:$0xf]
      %v245 = vld [vmem:[%s1 + $0xc8] sm:$0xf]
      %v246 = vld [vmem:[%s1 + $0xcc] sm:$0xf]
      %v247 = vld [vmem:[%s1 + $0xd0] sm:$0xf]
      %v248 = vld [vmem:[%s1 + $0xd4] sm:$0xf]
      %v249 = vld [vmem:[%s1 + $0xd8] sm:$0xf]
      %v250 = vld [vmem:[%s1 + $0xdc] sm:$0xf]
      %v251 = vld [vmem:[%s1 + $0xe0] sm:$0xf]
      %v252 = vld [vmem:[%s1 + $0xe4] sm:$0xf]
      %v253 = vld [vmem:[%s1 + $0xe8] sm:$0xf]
      %v254 = vld [vmem:[%s1 + $0xec] sm:$0xf]
      %v255 = vld [vmem:[%s1 + $0xf0] sm:$0xf]
      %v256 = vld [vmem:[%s1 + $0xf4] sm:$0xf]
      %v257 = vld [vmem:[%s1 + $0xf8] sm:$0xf]
      %v258 = vld [vmem:[%s1 + $0xfc] sm:$0xf]
      %v259 = vld [vmem:[%s1 + $0x100] sm:$0xf]
      %v260 = vld [vmem:[%s1 + $0x104] sm:$0xf]
      %v261 = vld [vmem:[%s1 + $0x108] sm:$0xf]
      %v262 = vld [vmem:[%s1 + $0x10c] sm:$0xf]
      %v263 = vld [vmem:[%s1 + $0x110] sm:$0xf]
      %v264 = vld [vmem:[%s1 + $0x114] sm:$0xf]
      %v265 = vld [vmem:[%s1 + $0x118] sm:$0xf]
      %v266 = vld [vmem:[%s1 + $0x11c] sm:$0xf]
      %v267 = vld [vmem:[%s1 + $0x120] sm:$0xf]
      %v268 = vld [vmem:[%s1 + $0x124] sm:$0xf]
      %v269 = vld [vmem:[%s1 + $0x128] sm:$0xf]
      %v270 = vld [vmem:[%s1 + $0x12c] sm:$0xf]
      %v271 = vld [vmem:[%s1 + $0x130] sm:$0xf]
      %v272 = vld [vmem:[%s1 + $0x134] sm:$0xf]
      %v273 = vld [vmem:[%s1 + $0x138] sm:$0xf]
      %v274 = vld [vmem:[%s1 + $0x13c] sm:$0xf]
      %v275 = vld [vmem:[%s2] sm:$0x1]
      %v277 = vperm.slane %v275, 0
      %v303 = vunpack.c.l.b16 %v171
      %v304 = vunpack.c.h.b16 %v171
      %v305 = vunpack.c.l.b16 %v172
      %v306 = vunpack.c.h.b16 %v172
      %v307 = vunpack.c.l.b16 %v173
      %v308 = vunpack.c.l.b16 %v174
      %v309 = vunpack.c.h.b16 %v174
      %v310 = vunpack.c.l.b16 %v175
      %v311 = vunpack.c.h.b16 %v175
      %v312 = vunpack.c.l.b16 %v176
      %v313 = vunpack.c.l.b16 %v177
      %v314 = vunpack.c.h.b16 %v177
      %v315 = vunpack.c.l.b16 %v178
      %v316 = vunpack.c.h.b16 %v178
      %v317 = vunpack.c.l.b16 %v179
      %v318 = vunpack.c.l.b16 %v180
      %v319 = vunpack.c.h.b16 %v180
      %v320 = vunpack.c.l.b16 %v181
      %v321 = vunpack.c.h.b16 %v181
      %v322 = vunpack.c.l.b16 %v182
      %v323 = vunpack.c.l.b16 %v183
      %v324 = vunpack.c.h.b16 %v183
      %v325 = vunpack.c.l.b16 %v184
      %v326 = vunpack.c.h.b16 %v184
      %v327 = vunpack.c.l.b16 %v185
      %v328 = vunpack.c.l.b16 %v186
      %v329 = vunpack.c.h.b16 %v186
      %v330 = vunpack.c.l.b16 %v187
      %v331 = vunpack.c.h.b16 %v187
      %v332 = vunpack.c.l.b16 %v188
      %v333 = vunpack.c.l.b16 %v189
      %v334 = vunpack.c.h.b16 %v189
      %v335 = vunpack.c.l.b16 %v190
      %v336 = vunpack.c.h.b16 %v190
      %v337 = vunpack.c.l.b16 %v191
      %v338 = vunpack.c.l.b16 %v192
      %v339 = vunpack.c.h.b16 %v192
      %v340 = vunpack.c.l.b16 %v193
      %v341 = vunpack.c.h.b16 %v193
      %v342 = vunpack.c.l.b16 %v194
      %v343 = vpack.c.b16 %v308, %v303
      %v344 = vpack.c.b16 %v309, %v304
      %v345 = vpack.c.b16 %v310, %v305
      %v346 = vpack.c.b16 %v311, %v306
      %v347 = vpack.c.b16 %v312, %v307
      %v348 = vpack.c.b16 %v318, %v313
      %v349 = vpack.c.b16 %v319, %v314
      %v350 = vpack.c.b16 %v320, %v315
      %v351 = vpack.c.b16 %v321, %v316
      %v352 = vpack.c.b16 %v322, %v317
      %v353 = vpack.c.b16 %v328, %v323
      %v354 = vpack.c.b16 %v329, %v324
      %v355 = vpack.c.b16 %v330, %v325
      %v356 = vpack.c.b16 %v331, %v326
      %v357 = vpack.c.b16 %v332, %v327
      %v358 = vpack.c.b16 %v338, %v333
      %v359 = vpack.c.b16 %v339, %v334
      %v360 = vpack.c.b16 %v340, %v335
      %v361 = vpack.c.b16 %v341, %v336
      %v362 = vpack.c.b16 %v342, %v337
      %v463 = vunpack.c.l.b16 %v195
      %v464 = vunpack.c.l.b16 %v196
      %v465 = vunpack.c.l.b16 %v197
      %v466 = vunpack.c.l.b16 %v198
      %v467 = vunpack.c.l.b16 %v199
      %v468 = vunpack.c.l.b16 %v200
      %v469 = vunpack.c.l.b16 %v201
      %v470 = vunpack.c.l.b16 %v202
      %v471 = vunpack.c.l.b16 %v203
      %v472 = vunpack.c.l.b16 %v204
      %v473 = vunpack.c.l.b16 %v205
      %v474 = vunpack.c.l.b16 %v206
      %v475 = vunpack.c.l.b16 %v207
      %v476 = vunpack.c.l.b16 %v208
      %v477 = vunpack.c.l.b16 %v209
      %v478 = vunpack.c.l.b16 %v210
      %v479 = vunpack.c.l.b16 %v211
      %v480 = vunpack.c.l.b16 %v212
      %v481 = vunpack.c.l.b16 %v213
      %v482 = vunpack.c.l.b16 %v214
      %v483 = vunpack.c.l.b16 %v215
      %v484 = vunpack.c.l.b16 %v216
      %v485 = vunpack.c.l.b16 %v217
      %v486 = vunpack.c.l.b16 %v218
      %v487 = vunpack.c.l.b16 %v219
      %v488 = vunpack.c.l.b16 %v220
      %v489 = vunpack.c.l.b16 %v221
      %v490 = vunpack.c.l.b16 %v222
      %v491 = vunpack.c.l.b16 %v223
      %v492 = vunpack.c.l.b16 %v224
      %v493 = vunpack.c.l.b16 %v225
      %v494 = vunpack.c.l.b16 %v226
      %v495 = vunpack.c.l.b16 %v227
      %v496 = vunpack.c.l.b16 %v228
      %v497 = vunpack.c.l.b16 %v229
      %v498 = vunpack.c.l.b16 %v230
      %v499 = vunpack.c.l.b16 %v231
      %v500 = vunpack.c.l.b16 %v232
      %v501 = vunpack.c.l.b16 %v233
      %v502 = vunpack.c.l.b16 %v234
      %v503 = vunpack.c.l.b16 %v235
      %v504 = vunpack.c.l.b16 %v236
      %v505 = vunpack.c.l.b16 %v237
      %v506 = vunpack.c.l.b16 %v238
      %v507 = vunpack.c.l.b16 %v239
      %v508 = vunpack.c.l.b16 %v240
      %v509 = vunpack.c.l.b16 %v241
      %v510 = vunpack.c.l.b16 %v242
      %v511 = vunpack.c.l.b16 %v243
      %v512 = vunpack.c.l.b16 %v244
      %v513 = vunpack.c.l.b16 %v245
      %v514 = vunpack.c.l.b16 %v246
      %v515 = vunpack.c.l.b16 %v247
      %v516 = vunpack.c.l.b16 %v248
      %v517 = vunpack.c.l.b16 %v249
      %v518 = vunpack.c.l.b16 %v250
      %v519 = vunpack.c.l.b16 %v251
      %v520 = vunpack.c.l.b16 %v252
      %v521 = vunpack.c.l.b16 %v253
      %v522 = vunpack.c.l.b16 %v254
      %v523 = vunpack.c.l.b16 %v255
      %v524 = vunpack.c.l.b16 %v256
      %v525 = vunpack.c.l.b16 %v257
      %v526 = vunpack.c.l.b16 %v258
      %v527 = vunpack.c.l.b16 %v259
      %v528 = vunpack.c.l.b16 %v260
      %v529 = vunpack.c.l.b16 %v261
      %v530 = vunpack.c.l.b16 %v262
      %v531 = vunpack.c.l.b16 %v263
      %v532 = vunpack.c.l.b16 %v264
      %v533 = vunpack.c.l.b16 %v265
      %v534 = vunpack.c.l.b16 %v266
      %v535 = vunpack.c.l.b16 %v267
      %v536 = vunpack.c.l.b16 %v268
      %v537 = vunpack.c.l.b16 %v269
      %v538 = vunpack.c.l.b16 %v270
      %v539 = vunpack.c.l.b16 %v271
      %v540 = vunpack.c.l.b16 %v272
      %v541 = vunpack.c.l.b16 %v273
      %v542 = vunpack.c.l.b16 %v274
      %v543 = vpack.c.b16 %v464, %v463
      %v544 = vpack.c.b16 %v466, %v465
      %v545 = vpack.c.b16 %v468, %v467
      %v546 = vpack.c.b16 %v470, %v469
      %v547 = vpack.c.b16 %v472, %v471
      %v548 = vpack.c.b16 %v474, %v473
      %v549 = vpack.c.b16 %v476, %v475
      %v550 = vpack.c.b16 %v478, %v477
      %v551 = vpack.c.b16 %v480, %v479
      %v552 = vpack.c.b16 %v482, %v481
      %v553 = vpack.c.b16 %v484, %v483
      %v554 = vpack.c.b16 %v486, %v485
      %v555 = vpack.c.b16 %v488, %v487
      %v556 = vpack.c.b16 %v490, %v489
      %v557 = vpack.c.b16 %v492, %v491
      %v558 = vpack.c.b16 %v494, %v493
      %v559 = vpack.c.b16 %v496, %v495
      %v560 = vpack.c.b16 %v498, %v497
      %v561 = vpack.c.b16 %v500, %v499
      %v562 = vpack.c.b16 %v502, %v501
      %v563 = vpack.c.b16 %v504, %v503
      %v564 = vpack.c.b16 %v506, %v505
      %v565 = vpack.c.b16 %v508, %v507
      %v566 = vpack.c.b16 %v510, %v509
      %v567 = vpack.c.b16 %v512, %v511
      %v568 = vpack.c.b16 %v514, %v513
      %v569 = vpack.c.b16 %v516, %v515
      %v570 = vpack.c.b16 %v518, %v517
      %v571 = vpack.c.b16 %v520, %v519
      %v572 = vpack.c.b16 %v522, %v521
      %v573 = vpack.c.b16 %v524, %v523
      %v574 = vpack.c.b16 %v526, %v525
      %v575 = vpack.c.b16 %v528, %v527
      %v576 = vpack.c.b16 %v530, %v529
      %v577 = vpack.c.b16 %v532, %v531
      %v578 = vpack.c.b16 %v534, %v533
      %v579 = vpack.c.b16 %v536, %v535
      %v580 = vpack.c.b16 %v538, %v537
      %v581 = vpack.c.b16 %v540, %v539
      %v582 = vpack.c.b16 %v542, %v541
      %623 = vmatpush.bf16.msra.mxu0 %v550
      %624 = vmatpush.bf16.msra.mxu0 %v549
      %625 = vmatpush.bf16.msra.mxu0 %v548
      %626 = vmatpush.bf16.msra.mxu0 %v547
      %627 = vmatpush.bf16.msra.mxu0 %v546
      %628 = vmatpush.bf16.msra.mxu0 %v545
      %629 = vmatpush.bf16.msra.mxu0 %v544
      %630 = vmatpush.bf16.msra.mxu0 %v543
      %631 = vmatmul.bf16.gmra.mxu0 %v343
      %v632 = vpop.f32.mrf.mxu0
      %v633 = vadd.f32 %v277, %v632
      %v634 = vpop.f32.mrf.mxu0
      %v635 = vadd.f32 %v277, %v634
      %636 = vmatmul.bf16.gmra.mxu0 %v348
      %v637 = vpop.f32.mrf.mxu0
      %v638 = vadd.f32 %v277, %v637
      %v639 = vpop.f32.mrf.mxu0
      %v640 = vadd.f32 %v277, %v639
      %641 = vmatmul.bf16.gmra.mxu0 %v353
      %v642 = vpop.f32.mrf.mxu0
      %v643 = vadd.f32 %v277, %v642
      %v644 = vpop.f32.mrf.mxu0
      %v645 = vadd.f32 %v277, %v644
      %646 = vmatmul.bf16.gmra.mxu0 %v358
      %v647 = vpop.f32.mrf.mxu0
      %v648 = vadd.f32 %v277, %v647
      %v649 = vpop.f32.mrf.mxu0
      %v650 = vadd.f32 %v277, %v649
      %651 = vdwg.mxu0
      %652 = vmatpush.bf16.msra.mxu0 %v558
      %653 = vmatpush.bf16.msra.mxu0 %v557
      %654 = vmatpush.bf16.msra.mxu0 %v556
      %655 = vmatpush.bf16.msra.mxu0 %v555
      %656 = vmatpush.bf16.msra.mxu0 %v554
      %657 = vmatpush.bf16.msra.mxu0 %v553
      %658 = vmatpush.bf16.msra.mxu0 %v552
      %659 = vmatpush.bf16.msra.mxu0 %v551
      %660 = vmatmul.bf16.gmra.mxu0 %v344
      %v661 = vpop.f32.mrf.mxu0
      %v662 = vadd.f32 %v633, %v661
      %v663 = vpop.f32.mrf.mxu0
      %v664 = vadd.f32 %v635, %v663
      %665 = vmatmul.bf16.gmra.mxu0 %v349
      %v666 = vpop.f32.mrf.mxu0
      %v667 = vadd.f32 %v638, %v666
      %v668 = vpop.f32.mrf.mxu0
      %v669 = vadd.f32 %v640, %v668
      %670 = vmatmul.bf16.gmra.mxu0 %v354
      %v671 = vpop.f32.mrf.mxu0
      %v672 = vadd.f32 %v643, %v671
      %v673 = vpop.f32.mrf.mxu0
      %v674 = vadd.f32 %v645, %v673
      %675 = vmatmul.bf16.gmra.mxu0 %v359
      %v676 = vpop.f32.mrf.mxu0
      %v677 = vadd.f32 %v648, %v676
      %v678 = vpop.f32.mrf.mxu0
      %v679 = vadd.f32 %v650, %v678
      %680 = vdwg.mxu0
      %681 = vmatpush.bf16.msra.mxu0 %v566
      %682 = vmatpush.bf16.msra.mxu0 %v565
      %683 = vmatpush.bf16.msra.mxu0 %v564
      %684 = vmatpush.bf16.msra.mxu0 %v563
      %685 = vmatpush.bf16.msra.mxu0 %v562
      %686 = vmatpush.bf16.msra.mxu0 %v561
      %687 = vmatpush.bf16.msra.mxu0 %v560
      %688 = vmatpush.bf16.msra.mxu0 %v559
      %689 = vmatmul.bf16.gmra.mxu0 %v345
      %v690 = vpop.f32.mrf.mxu0
      %v691 = vadd.f32 %v662, %v690
      %v692 = vpop.f32.mrf.mxu0
      %v693 = vadd.f32 %v664, %v692
      %694 = vmatmul.bf16.gmra.mxu0 %v350
      %v695 = vpop.f32.mrf.mxu0
      %v696 = vadd.f32 %v667, %v695
      %v697 = vpop.f32.mrf.mxu0
      %v698 = vadd.f32 %v669, %v697
      %699 = vmatmul.bf16.gmra.mxu0 %v355
      %v700 = vpop.f32.mrf.mxu0
      %v701 = vadd.f32 %v672, %v700
      %v702 = vpop.f32.mrf.mxu0
      %v703 = vadd.f32 %v674, %v702
      %704 = vmatmul.bf16.gmra.mxu0 %v360
      %v705 = vpop.f32.mrf.mxu0
      %v706 = vadd.f32 %v677, %v705
      %v707 = vpop.f32.mrf.mxu0
      %v708 = vadd.f32 %v679, %v707
      %709 = vdwg.mxu0
      %710 = vmatpush.bf16.msra.mxu0 %v574
      %711 = vmatpush.bf16.msra.mxu0 %v573
      %712 = vmatpush.bf16.msra.mxu0 %v572
      %713 = vmatpush.bf16.msra.mxu0 %v571
      %714 = vmatpush.bf16.msra.mxu0 %v570
      %715 = vmatpush.bf16.msra.mxu0 %v569
      %716 = vmatpush.bf16.msra.mxu0 %v568
      %717 = vmatpush.bf16.msra.mxu0 %v567
      %718 = vmatmul.bf16.gmra.mxu0 %v346
      %v719 = vpop.f32.mrf.mxu0
      %v720 = vadd.f32 %v691, %v719
      %v721 = vpop.f32.mrf.mxu0
      %v722 = vadd.f32 %v693, %v721
      %723 = vmatmul.bf16.gmra.mxu0 %v351
      %v724 = vpop.f32.mrf.mxu0
      %v725 = vadd.f32 %v696, %v724
      %v726 = vpop.f32.mrf.mxu0
      %v727 = vadd.f32 %v698, %v726
      %728 = vmatmul.bf16.gmra.mxu0 %v356
      %v729 = vpop.f32.mrf.mxu0
      %v730 = vadd.f32 %v701, %v729
      %v731 = vpop.f32.mrf.mxu0
      %v732 = vadd.f32 %v703, %v731
      %733 = vmatmul.bf16.gmra.mxu0 %v361
      %v734 = vpop.f32.mrf.mxu0
      %v735 = vadd.f32 %v706, %v734
      %v736 = vpop.f32.mrf.mxu0
      %v737 = vadd.f32 %v708, %v736
      %738 = vdwg.mxu0
      %739 = vmatpush.bf16.msra.mxu0 %v582
      %740 = vmatpush.bf16.msra.mxu0 %v581
      %741 = vmatpush.bf16.msra.mxu0 %v580
      %742 = vmatpush.bf16.msra.mxu0 %v579
      %743 = vmatpush.bf16.msra.mxu0 %v578
      %744 = vmatpush.bf16.msra.mxu0 %v577
      %745 = vmatpush.bf16.msra.mxu0 %v576
      %746 = vmatpush.bf16.msra.mxu0 %v575
      %747 = vmatmul.bf16.gmra.mxu0 %v347
      %v748 = vpop.f32.mrf.mxu0
      %v749 = vadd.f32 %v720, %v748
      %v750 = vpop.f32.mrf.mxu0
      %v751 = vadd.f32 %v722, %v750
      %752 = vmatmul.bf16.gmra.mxu0 %v352
      %v753 = vpop.f32.mrf.mxu0
      %v754 = vadd.f32 %v725, %v753
      %v755 = vpop.f32.mrf.mxu0
      %v756 = vadd.f32 %v727, %v755
      %757 = vmatmul.bf16.gmra.mxu0 %v357
      %v758 = vpop.f32.mrf.mxu0
      %v759 = vadd.f32 %v730, %v758
      %v760 = vpop.f32.mrf.mxu0
      %v761 = vadd.f32 %v732, %v760
      %762 = vmatmul.bf16.gmra.mxu0 %v362
      %v763 = vpop.f32.mrf.mxu0
      %v764 = vadd.f32 %v735, %v763
      %v765 = vpop.f32.mrf.mxu0
      %v766 = vadd.f32 %v737, %v765
      %767 = vdwg.mxu0
      %v768 = vadd.f32 %v749, %v751
      %v769 = vadd.f32 %v768, %v754
      %v770 = vadd.f32 %v769, %v756
      %v771 = vadd.f32 %v770, %v759
      %v772 = vadd.f32 %v771, %v761
      %v773 = vadd.f32 %v772, %v764
      %v774 = vadd.f32 %v773, %v766
      %v775 = vrot.slane %v774, 4
      %v776 = vadd.f32 %v774, %v775
      %v777 = vrot.slane %v776, 2
      %v778 = vadd.f32 %v776, %v777
      %v779 = vrot.slane %v778, 1
      %v780 = vadd.f32 %v778, %v779
      %v781 = vmul.f32 %v749, %v749
      %v782 = vmul.f32 %v751, %v751
      %v783 = vmul.f32 %v754, %v754
      %v784 = vmul.f32 %v756, %v756
      %v785 = vmul.f32 %v759, %v759
      %v786 = vmul.f32 %v761, %v761
      %v787 = vmul.f32 %v764, %v764
      %v788 = vmul.f32 %v766, %v766
      %v789 = vadd.f32 %v781, %v782
      %v790 = vadd.f32 %v789, %v783
      %v791 = vadd.f32 %v790, %v784
      %v792 = vadd.f32 %v791, %v785
      %v793 = vadd.f32 %v792, %v786
      %v794 = vadd.f32 %v793, %v787
      %v795 = vadd.f32 %v794, %v788
      %v796 = vrot.slane %v795, 4
      %v797 = vadd.f32 %v795, %v796
      %v798 = vrot.slane %v797, 2
      %v799 = vadd.f32 %v797, %v798
      %v800 = vrot.slane %v799, 1
      %v801 = vadd.f32 %v799, %v800
      %v802 = vmul.f32 %v780, 0.015625
      %v803 = vmul.f32 %v801, 0.015625
      %v804 = vmul.f32 %v802, %v802
      %v805 = vsub.f32 %v803, %v804
      %v806 = vmax.f32 %v805, 0.0
      %v807 = vsub.f32 %v749, %v802
      %v808 = vsub.f32 %v751, %v802
      %v809 = vsub.f32 %v754, %v802
      %v810 = vsub.f32 %v756, %v802
      %v811 = vsub.f32 %v759, %v802
      %v812 = vsub.f32 %v761, %v802
      %v813 = vsub.f32 %v764, %v802
      %v814 = vsub.f32 %v766, %v802
      %v815 = vadd.f32 %v806, 1e-05
      %v816 = vrsqrt.pop %v815
      %v817 = vmul.f32 %v816, %v815
      %v818 = vmul.f32 %v817, %v816
      %v819 = vmul.f32 0.5, %v818
      %v820 = vsub.f32 1.5, %v819
      %v821 = vmul.f32 %v816, %v820
      %vm822 = vweird.f32 %v815
      %vm823 = vweird.f32 %v816
      %vm824 = vmor %vm822, %vm823
      %v825 = vsel %vm824, %v816, %v821
      %v826 = vmul.f32 %v807, %v825
      %v827 = vmul.f32 %v808, %v825
      %v828 = vmul.f32 %v809, %v825
      %v829 = vmul.f32 %v810, %v825
      %v830 = vmul.f32 %v811, %v825
      %v831 = vmul.f32 %v812, %v825
      %v832 = vmul.f32 %v813, %v825
      %v833 = vmul.f32 %v814, %v825
      %v834 = vmax.f32 %v826, 0.0
      %v835 = vmax.f32 %v827, 0.0
      %v836 = vmax.f32 %v828, 0.0
      %v837 = vmax.f32 %v829, 0.0
      %v838 = vmax.f32 %v830, 0.0
      %v839 = vmax.f32 %v831, 0.0
      %v840 = vmax.f32 %v832, 0.0
      %v841 = vmax.f32 %v833, 0.0
      %842 = vst [vmem:[%s170] sm:$0xff] %v834
      %843 = vst [vmem:[%s170 + $0x8] sm:$0xff] %v835
      %844 = vst [vmem:[%s170 + $0x10] sm:$0xff] %v836
      %845 = vst [vmem:[%s170 + $0x18] sm:$0xff] %v837
      %846 = vst [vmem:[%s170 + $0x20] sm:$0xff] %v838
      %847 = vst [vmem:[%s170 + $0x28] sm:$0xff] %v839
      %848 = vst [vmem:[%s170 + $0x30] sm:$0xff] %v840
      %849 = vst [vmem:[%s170 + $0x38] sm:$0xff] %v841
      %p850 = scmp.lt.s32.totalorder %s14, 1
      %s851 = scalar_select %p850, %s14, 1
      %s852 = smul.addr %s851, 8
      %s853 = smul.addr %s852, 8
      %s854 = scalar_lea.vmem %s3, %s853
      // Predicated region
      $region33: #{generator_forward.12} parent=31 // pred_check
        %p855 = pneg %p100
      $region34: #{generator_forward.12} parent=31 // pred_check_branch
        %857 = sbr.rel (%p855) target = $region36
      $region35: #{generator_forward.12} parent=31 // pred_region
        _
      $region36: #{generator_forward.12} parent=31 // pred_fallthru
        _
    $region32: #{generator_forward.12} parent=5 // pred_fallthru
      _
    %p858 = scmp.le.s32.totalorder 2, %s9
    // Predicated region
    $region37: #{generator_forward.12} parent=5 // pred_check
      %p859 = pneg %p858
    $region38: #{generator_forward.12} parent=5 // pred_check_branch
      %861 = sbr.rel (%p859) target = $region40
    $region39: #{generator_forward.12} parent=5 // pred_region
      %s862 = ssub.s32 %s9, 2
      // Predicated region
      $region41: #{generator_forward.12} parent=39 // pred_check
        %p863 = pneg %p106
      $region42: #{generator_forward.12} parent=39 // pred_check_branch
        %865 = sbr.rel (%p863) target = $region44
      $region43: #{generator_forward.12} parent=39 // pred_region
        %p866 = scmp.lt.s32.totalorder %s15, 1
        %s867 = scalar_select %p866, %s15, 1
        %s868 = smul.addr %s867, 8
        %s869 = smul.addr %s868, 8
        %s870 = scalar_lea.vmem %s3, %s869
      $region44: #{generator_forward.12} parent=39 // pred_fallthru
        _
    $region40: #{generator_forward.12} parent=5 // pred_fallthru
      _
  $region6: #{generator_forward.12} parent=0 // loop_footer
    %s13 = sadd.s32 1, %s9
  $region7: #{generator_forward.12} parent=0 // loop_footer_branch
    %8 = sbr.rel target = $region3
  $region8: #{generator_forward.12} parent=0 // loop_exit
    _

// kernel: generator_forward.13
$region0: #{generator_forward.13}
  #allocation0 [shape = 'u32[]', space=smem, size = 0x4, offset = 0x4, fixed_abs, tag = 'smem constant byte address 0x4 - core index']
  #allocation1 [shape = 'u32[72,128]{1,0:T(1,128)}', space=vmem, size = 0x9000, scoped, tag = 'internal scratch']
  %s0 = inlined_call_operand.vmem [shape: bf16[2,64,640], index: 0, kind: input, shape index: {}]
  %s1 = inlined_call_operand.vmem [shape: bf16[640,128], index: 1, kind: input, shape index: {}]
  %s2 = inlined_call_operand.vmem [shape: f32[1,128], index: 2, kind: input, shape index: {}]
  %s3 = inlined_call_operand.vmem [shape: f32[2,64,128], index: 3, kind: input, shape index: {}]
  %s4 = inlined_call_operand.vmem [shape: f32[2,64,128], index: 4, kind: output, shape index: {}]
  %s5 = sld [smem:[#allocation0]]
  $region49: #{generator_forward.13} parent=0
    _
  %s7 = ssub.s32 1, %s5
  %s8 = scalar_select 0, %s7, %s5
  loop: start=0, step=1, limit=4
  $region2: #{generator_forward.13} parent=0 // loop_pre_header
    _
  $region3: #{generator_forward.13} parent=0 // loop_header
    %s10 = sphi 0, %s14
    %p11 = scmp.ge.s32.totalorder %s10, 4
    %s20 = sphi 0, %s22
    %s23 = sphi 0, %s20
    %s24 = sphi 0, %s23
    %s40 = sphi 0, %s24
    %s44 = sphi 0, %s44
    %s46 = sphi 0, %s44
    %s47 = sphi 0, %s46
    %s61 = sphi 0, %s47
    %s65 = sphi 0, %s65
    %s67 = sphi 0, %s65
    %s68 = sphi 0, %s67
    %s82 = sphi 0, %s68
    %s88 = sphi 0, %s90
    %s91 = sphi 0, %s88
    %s92 = sphi 0, %s91
    %s108 = sphi 0, %s92
    %s114 = sphi 0, %s116
    %s117 = sphi 0, %s114
    %s118 = sphi 0, %s117
    %s134 = sphi 0, %s118
  $region4: #{generator_forward.13} parent=0 // loop_header_branch
    %13 = sbr.rel (%p11) target = $region8
  $region5: #{generator_forward.13} parent=0 // loop_body
    %s15 = ssub.s32 %s10, 1
    %s16 = ssub.s32 %s10, 2
    %s17 = sadd.s32 %s10, 1
    %s18 = ssub.s32 %s10, %s17
    %p19 = scmp.eq.s32.totalorder %s18, 0
    %s21 = sadd.s32 %s20, 1
    %s22 = scalar_select %p19, %s20, %s21
    %p25 = pneg %p19
    %p26 = scmp.eq.s32.totalorder %s10, 1
    %p27 = por %p25, %p26
    %p28 = scmp.ne.s32.totalorder %s20, %s23
    %p29 = scmp.eq.s32.totalorder %s10, 0
    %p30 = por %p28, %p29
    %p31 = scmp.ne.s32.totalorder %s20, %s23
    %p32 = scmp.eq.s32.totalorder %s15, 1
    %p33 = por %p31, %p32
    %p34 = scmp.ne.s32.totalorder %s23, %s24
    %p35 = scmp.eq.s32.totalorder %s15, 0
    %p36 = por %p34, %p35
    %p37 = scmp.ne.s32.totalorder %s23, %s24
    %p38 = scmp.eq.s32.totalorder %s16, 1
    %p39 = por %p37, %p38
    %p41 = scmp.ne.s32.totalorder %s24, %s40
    %p42 = scmp.eq.s32.totalorder %s16, 0
    %p43 = por %p41, %p42
    %s45 = sadd.s32 %s44, 1
    %p48 = scmp.eq.s32.totalorder %s10, 1
    %p49 = scmp.ne.s32.totalorder %s44, %s46
    %p50 = scmp.eq.s32.totalorder %s10, 0
    %p51 = por %p49, %p50
    %p52 = scmp.ne.s32.totalorder %s44, %s46
    %p53 = scmp.eq.s32.totalorder %s15, 1
    %p54 = por %p52, %p53
    %p55 = scmp.ne.s32.totalorder %s46, %s47
    %p56 = scmp.eq.s32.totalorder %s15, 0
    %p57 = por %p55, %p56
    %p58 = scmp.ne.s32.totalorder %s46, %s47
    %p59 = scmp.eq.s32.totalorder %s16, 1
    %p60 = por %p58, %p59
    %p62 = scmp.ne.s32.totalorder %s47, %s61
    %p63 = scmp.eq.s32.totalorder %s16, 0
    %p64 = por %p62, %p63
    %s66 = sadd.s32 %s65, 1
    %p69 = scmp.eq.s32.totalorder %s10, 1
    %p70 = scmp.ne.s32.totalorder %s65, %s67
    %p71 = scmp.eq.s32.totalorder %s10, 0
    %p72 = por %p70, %p71
    %p73 = scmp.ne.s32.totalorder %s65, %s67
    %p74 = scmp.eq.s32.totalorder %s15, 1
    %p75 = por %p73, %p74
    %p76 = scmp.ne.s32.totalorder %s67, %s68
    %p77 = scmp.eq.s32.totalorder %s15, 0
    %p78 = por %p76, %p77
    %p79 = scmp.ne.s32.totalorder %s67, %s68
    %p80 = scmp.eq.s32.totalorder %s16, 1
    %p81 = por %p79, %p80
    %p83 = scmp.ne.s32.totalorder %s68, %s82
    %p84 = scmp.eq.s32.totalorder %s16, 0
    %p85 = por %p83, %p84
    %s86 = ssub.s32 %s10, %s17
    %p87 = scmp.eq.s32.totalorder %s86, 0
    %s89 = sadd.s32 %s88, 1
    %s90 = scalar_select %p87, %s88, %s89
    %p93 = pneg %p87
    %p94 = scmp.eq.s32.totalorder %s10, 1
    %p95 = por %p93, %p94
    %p96 = scmp.ne.s32.totalorder %s88, %s91
    %p97 = scmp.eq.s32.totalorder %s10, 0
    %p98 = por %p96, %p97
    %p99 = scmp.ne.s32.totalorder %s88, %s91
    %p100 = scmp.eq.s32.totalorder %s15, 1
    %p101 = por %p99, %p100
    %p102 = scmp.ne.s32.totalorder %s91, %s92
    %p103 = scmp.eq.s32.totalorder %s15, 0
    %p104 = por %p102, %p103
    %p105 = scmp.ne.s32.totalorder %s91, %s92
    %p106 = scmp.eq.s32.totalorder %s16, 1
    %p107 = por %p105, %p106
    %p109 = scmp.ne.s32.totalorder %s92, %s108
    %p110 = scmp.eq.s32.totalorder %s16, 0
    %p111 = por %p109, %p110
    %s112 = ssub.s32 %s10, %s17
    %p113 = scmp.eq.s32.totalorder %s112, 0
    %s115 = sadd.s32 %s114, 1
    %s116 = scalar_select %p113, %s114, %s115
    %p119 = pneg %p113
    %p120 = scmp.eq.s32.totalorder %s10, 1
    %p121 = por %p119, %p120
    %p122 = scmp.ne.s32.totalorder %s114, %s117
    %p123 = scmp.eq.s32.totalorder %s10, 0
    %p124 = por %p122, %p123
    %p125 = scmp.ne.s32.totalorder %s114, %s117
    %p126 = scmp.eq.s32.totalorder %s15, 1
    %p127 = por %p125, %p126
    %p128 = scmp.ne.s32.totalorder %s117, %s118
    %p129 = scmp.eq.s32.totalorder %s15, 0
    %p130 = por %p128, %p129
    %p131 = scmp.ne.s32.totalorder %s117, %s118
    %p132 = scmp.eq.s32.totalorder %s16, 1
    %p133 = por %p131, %p132
    %p135 = scmp.ne.s32.totalorder %s118, %s134
    %p136 = scmp.eq.s32.totalorder %s16, 0
    %p137 = por %p135, %p136
    %p138 = scmp.le.s32.totalorder 1, %s10
    %p139 = scmp.lt.s32.totalorder %s10, 3
    %p140 = pnand %p138, %p139
    %p141 = pneg %p140
    // Predicated region
    $region9: #{generator_forward.13} parent=5 // pred_check
      _
    $region10: #{generator_forward.13} parent=5 // pred_check_branch
      %143 = sbr.rel (%p140) target = $region12
    $region11: #{generator_forward.13} parent=5 // pred_region
      %s144 = ssub.s32 %s10, 1
      // Predicated region
      $region13: #{generator_forward.13} parent=11 // pred_check
        %p145 = pneg %p57
      $region14: #{generator_forward.13} parent=11 // pred_check_branch
        %147 = sbr.rel (%p145) target = $region16
      $region15: #{generator_forward.13} parent=11 // pred_region
        _
      $region16: #{generator_forward.13} parent=11 // pred_fallthru
        _
      // Predicated region
      $region17: #{generator_forward.13} parent=11 // pred_check
        %p148 = pneg %p78
      $region18: #{generator_forward.13} parent=11 // pred_check_branch
        %150 = sbr.rel (%p148) target = $region20
      $region19: #{generator_forward.13} parent=11 // pred_region
        _
      $region20: #{generator_forward.13} parent=11 // pred_fallthru
        _
    $region12: #{generator_forward.13} parent=5 // pred_fallthru
      _
    %p151 = scmp.lt.s32.totalorder %s10, 2
    // Predicated region
    $region21: #{generator_forward.13} parent=5 // pred_check
      %p152 = pneg %p151
    $region22: #{generator_forward.13} parent=5 // pred_check_branch
      %154 = sbr.rel (%p152) target = $region24
    $region23: #{generator_forward.13} parent=5 // pred_region
      // Predicated region
      $region25: #{generator_forward.13} parent=23 // pred_check
        %p155 = pneg %p30
      $region26: #{generator_forward.13} parent=23 // pred_check_branch
        %157 = sbr.rel (%p155) target = $region28
      $region27: #{generator_forward.13} parent=23 // pred_region
        %p158 = scmp.lt.s32.totalorder %s10, 1
        %s159 = scalar_select %p158, %s10, 1
        %s160 = smul.addr %s159, 40
        %s161 = smul.addr %s160, 4
        %s162 = scalar_lea.vmem %s0, %s161
      $region28: #{generator_forward.13} parent=23 // pred_fallthru
        _
      // Predicated region
      $region29: #{generator_forward.13} parent=23 // pred_check
        %p163 = pneg %p98
      $region30: #{generator_forward.13} parent=23 // pred_check_branch
        %165 = sbr.rel (%p163) target = $region32
      $region31: #{generator_forward.13} parent=23 // pred_region
        %p166 = scmp.lt.s32.totalorder %s10, 1
        %s167 = scalar_select %p166, %s10, 1
        %s168 = smul.addr %s167, 8
        %s169 = smul.addr %s168, 8
        %s170 = scalar_lea.vmem %s3, %s169
      $region32: #{generator_forward.13} parent=23 // pred_fallthru
        _
    $region24: #{generator_forward.13} parent=5 // pred_fallthru
      _
    %p171 = scmp.le.s32.totalorder 1, %s10
    %p172 = scmp.lt.s32.totalorder %s10, 3
    %p173 = pnand %p171, %p172
    %p174 = pneg %p173
    // Predicated region
    $region33: #{generator_forward.13} parent=5 // pred_check
      _
    $region34: #{generator_forward.13} parent=5 // pred_check_branch
      %176 = sbr.rel (%p173) target = $region36
    $region35: #{generator_forward.13} parent=5 // pred_region
      %s177 = ssub.s32 %s10, 1
      %p178 = scmp.lt.s32.totalorder %s15, 1
      %s179 = scalar_select %p178, %s15, 1
      %s180 = smul.addr %s179, 40
      %s181 = smul.addr %s180, 4
      %s182 = scalar_lea.vmem %s0, %s181
      %p183 = pneg %p36
      %p184 = pneg %p33
      %p185 = pneg %p57
      %p186 = pneg %p54
      %p187 = pneg %p78
      %p188 = pneg %p75
      %p189 = scmp.lt.s32.totalorder %s15, 1
      %s190 = scalar_select %p189, %s15, 1
      %s191 = smul.addr %s190, 8
      %s192 = smul.addr %s191, 8
      %s193 = scalar_lea.vmem %s3, %s192
      %p194 = pneg %p104
      %p195 = pneg %p101
      %p196 = pneg %p130
      %p197 = pneg %p127
      %p198 = scmp.lt.s32.totalorder %s15, 1
      %s199 = scalar_select %p198, %s15, 1
      %s200 = smul.addr %s199, 8
      %s201 = smul.addr %s200, 8
      %s202 = scalar_lea.vmem %s4, %s201
      %p203 = scmp.lt.s32.totalorder %s15, 1
      %s204 = scalar_select %p203, %s15, 1
      %s205 = smul.addr %s204, 40
      %s206 = smul.addr %s205, 4
      %s207 = scalar_lea.vmem %s0, %s206
      %p208 = scmp.lt.s32.totalorder %s15, 1
      %s209 = scalar_select %p208, %s15, 1
      %s210 = smul.addr %s209, 8
      %s211 = smul.addr %s210, 8
      %s212 = scalar_lea.vmem %s3, %s211
      %p213 = scmp.lt.s32.totalorder %s15, 1
      %s214 = scalar_select %p213, %s15, 1
      %s215 = smul.addr %s214, 8
      %s216 = smul.addr %s215, 8
      %s217 = scalar_lea.vmem %s4, %s216
      %v218 = vld [vmem:[%s207] sm:$0xff]
      %v219 = vld [vmem:[%s207 + $0x8] sm:$0xff]
      %v220 = vld [vmem:[%s207 + $0x10] sm:$0xf]
      %v221 = vld [vmem:[%s207 + $0x14] sm:$0xff]
      %v222 = vld [vmem:[%s207 + $0x1c] sm:$0xff]
      %v223 = vld [vmem:[%s207 + $0x24] sm:$0xf]
      %v224 = vld [vmem:[%s207 + $0x28] sm:$0xff]
      %v225 = vld [vmem:[%s207 + $0x30] sm:$0xff]
      %v226 = vld [vmem:[%s207 + $0x38] sm:$0xf]
      %v227 = vld [vmem:[%s207 + $0x3c] sm:$0xff]
      %v228 = vld [vmem:[%s207 + $0x44] sm:$0xff]
      %v229 = vld [vmem:[%s207 + $0x4c] sm:$0xf]
      %v230 = vld [vmem:[%s207 + $0x50] sm:$0xff]
      %v231 = vld [vmem:[%s207 + $0x58] sm:$0xff]
      %v232 = vld [vmem:[%s207 + $0x60] sm:$0xf]
      %v233 = vld [vmem:[%s207 + $0x64] sm:$0xff]
      %v234 = vld [vmem:[%s207 + $0x6c] sm:$0xff]
      %v235 = vld [vmem:[%s207 + $0x74] sm:$0xf]
      %v236 = vld [vmem:[%s207 + $0x78] sm:$0xff]
      %v237 = vld [vmem:[%s207 + $0x80] sm:$0xff]
      %v238 = vld [vmem:[%s207 + $0x88] sm:$0xf]
      %v239 = vld [vmem:[%s207 + $0x8c] sm:$0xff]
      %v240 = vld [vmem:[%s207 + $0x94] sm:$0xff]
      %v241 = vld [vmem:[%s207 + $0x9c] sm:$0xf]
      %v242 = vld [vmem:[%s1] sm:$0xf]
      %v243 = vld [vmem:[%s1 + $0x4] sm:$0xf]
      %v244 = vld [vmem:[%s1 + $0x8] sm:$0xf]
      %v245 = vld [vmem:[%s1 + $0xc] sm:$0xf]
      %v246 = vld [vmem:[%s1 + $0x10] sm:$0xf]
      %v247 = vld [vmem:[%s1 + $0x14] sm:$0xf]
      %v248 = vld [vmem:[%s1 + $0x18] sm:$0xf]
      %v249 = vld [vmem:[%s1 + $0x1c] sm:$0xf]
      %v250 = vld [vmem:[%s1 + $0x20] sm:$0xf]
      %v251 = vld [vmem:[%s1 + $0x24] sm:$0xf]
      %v252 = vld [vmem:[%s1 + $0x28] sm:$0xf]
      %v253 = vld [vmem:[%s1 + $0x2c] sm:$0xf]
      %v254 = vld [vmem:[%s1 + $0x30] sm:$0xf]
      %v255 = vld [vmem:[%s1 + $0x34] sm:$0xf]
      %v256 = vld [vmem:[%s1 + $0x38] sm:$0xf]
      %v257 = vld [vmem:[%s1 + $0x3c] sm:$0xf]
      %v258 = vld [vmem:[%s1 + $0x40] sm:$0xf]
      %v259 = vld [vmem:[%s1 + $0x44] sm:$0xf]
      %v260 = vld [vmem:[%s1 + $0x48] sm:$0xf]
      %v261 = vld [vmem:[%s1 + $0x4c] sm:$0xf]
      %v262 = vld [vmem:[%s1 + $0x50] sm:$0xf]
      %v263 = vld [vmem:[%s1 + $0x54] sm:$0xf]
      %v264 = vld [vmem:[%s1 + $0x58] sm:$0xf]
      %v265 = vld [vmem:[%s1 + $0x5c] sm:$0xf]
      %v266 = vld [vmem:[%s1 + $0x60] sm:$0xf]
      %v267 = vld [vmem:[%s1 + $0x64] sm:$0xf]
      %v268 = vld [vmem:[%s1 + $0x68] sm:$0xf]
      %v269 = vld [vmem:[%s1 + $0x6c] sm:$0xf]
      %v270 = vld [vmem:[%s1 + $0x70] sm:$0xf]
      %v271 = vld [vmem:[%s1 + $0x74] sm:$0xf]
      %v272 = vld [vmem:[%s1 + $0x78] sm:$0xf]
      %v273 = vld [vmem:[%s1 + $0x7c] sm:$0xf]
      %v274 = vld [vmem:[%s1 + $0x80] sm:$0xf]
      %v275 = vld [vmem:[%s1 + $0x84] sm:$0xf]
      %v276 = vld [vmem:[%s1 + $0x88] sm:$0xf]
      %v277 = vld [vmem:[%s1 + $0x8c] sm:$0xf]
      %v278 = vld [vmem:[%s1 + $0x90] sm:$0xf]
      %v279 = vld [vmem:[%s1 + $0x94] sm:$0xf]
      %v280 = vld [vmem:[%s1 + $0x98] sm:$0xf]
      %v281 = vld [vmem:[%s1 + $0x9c] sm:$0xf]
      %v282 = vld [vmem:[%s1 + $0xa0] sm:$0xf]
      %v283 = vld [vmem:[%s1 + $0xa4] sm:$0xf]
      %v284 = vld [vmem:[%s1 + $0xa8] sm:$0xf]
      %v285 = vld [vmem:[%s1 + $0xac] sm:$0xf]
      %v286 = vld [vmem:[%s1 + $0xb0] sm:$0xf]
      %v287 = vld [vmem:[%s1 + $0xb4] sm:$0xf]
      %v288 = vld [vmem:[%s1 + $0xb8] sm:$0xf]
      %v289 = vld [vmem:[%s1 + $0xbc] sm:$0xf]
      %v290 = vld [vmem:[%s1 + $0xc0] sm:$0xf]
      %v291 = vld [vmem:[%s1 + $0xc4] sm:$0xf]
      %v292 = vld [vmem:[%s1 + $0xc8] sm:$0xf]
      %v293 = vld [vmem:[%s1 + $0xcc] sm:$0xf]
      %v294 = vld [vmem:[%s1 + $0xd0] sm:$0xf]
      %v295 = vld [vmem:[%s1 + $0xd4] sm:$0xf]
      %v296 = vld [vmem:[%s1 + $0xd8] sm:$0xf]
      %v297 = vld [vmem:[%s1 + $0xdc] sm:$0xf]
      %v298 = vld [vmem:[%s1 + $0xe0] sm:$0xf]
      %v299 = vld [vmem:[%s1 + $0xe4] sm:$0xf]
      %v300 = vld [vmem:[%s1 + $0xe8] sm:$0xf]
      %v301 = vld [vmem:[%s1 + $0xec] sm:$0xf]
      %v302 = vld [vmem:[%s1 + $0xf0] sm:$0xf]
      %v303 = vld [vmem:[%s1 + $0xf4] sm:$0xf]
      %v304 = vld [vmem:[%s1 + $0xf8] sm:$0xf]
      %v305 = vld [vmem:[%s1 + $0xfc] sm:$0xf]
      %v306 = vld [vmem:[%s1 + $0x100] sm:$0xf]
      %v307 = vld [vmem:[%s1 + $0x104] sm:$0xf]
      %v308 = vld [vmem:[%s1 + $0x108] sm:$0xf]
      %v309 = vld [vmem:[%s1 + $0x10c] sm:$0xf]
      %v310 = vld [vmem:[%s1 + $0x110] sm:$0xf]
      %v311 = vld [vmem:[%s1 + $0x114] sm:$0xf]
      %v312 = vld [vmem:[%s1 + $0x118] sm:$0xf]
      %v313 = vld [vmem:[%s1 + $0x11c] sm:$0xf]
      %v314 = vld [vmem:[%s1 + $0x120] sm:$0xf]
      %v315 = vld [vmem:[%s1 + $0x124] sm:$0xf]
      %v316 = vld [vmem:[%s1 + $0x128] sm:$0xf]
      %v317 = vld [vmem:[%s1 + $0x12c] sm:$0xf]
      %v318 = vld [vmem:[%s1 + $0x130] sm:$0xf]
      %v319 = vld [vmem:[%s1 + $0x134] sm:$0xf]
      %v320 = vld [vmem:[%s1 + $0x138] sm:$0xf]
      %v321 = vld [vmem:[%s1 + $0x13c] sm:$0xf]
      %v322 = vld [vmem:[%s2] sm:$0x1]
      %v324 = vperm.slane %v322, 0
      %v350 = vunpack.c.l.b16 %v218
      %v351 = vunpack.c.h.b16 %v218
      %v352 = vunpack.c.l.b16 %v219
      %v353 = vunpack.c.h.b16 %v219
      %v354 = vunpack.c.l.b16 %v220
      %v355 = vunpack.c.l.b16 %v221
      %v356 = vunpack.c.h.b16 %v221
      %v357 = vunpack.c.l.b16 %v222
      %v358 = vunpack.c.h.b16 %v222
      %v359 = vunpack.c.l.b16 %v223
      %v360 = vunpack.c.l.b16 %v224
      %v361 = vunpack.c.h.b16 %v224
      %v362 = vunpack.c.l.b16 %v225
      %v363 = vunpack.c.h.b16 %v225
      %v364 = vunpack.c.l.b16 %v226
      %v365 = vunpack.c.l.b16 %v227
      %v366 = vunpack.c.h.b16 %v227
      %v367 = vunpack.c.l.b16 %v228
      %v368 = vunpack.c.h.b16 %v228
      %v369 = vunpack.c.l.b16 %v229
      %v370 = vunpack.c.l.b16 %v230
      %v371 = vunpack.c.h.b16 %v230
      %v372 = vunpack.c.l.b16 %v231
      %v373 = vunpack.c.h.b16 %v231
      %v374 = vunpack.c.l.b16 %v232
      %v375 = vunpack.c.l.b16 %v233
      %v376 = vunpack.c.h.b16 %v233
      %v377 = vunpack.c.l.b16 %v234
      %v378 = vunpack.c.h.b16 %v234
      %v379 = vunpack.c.l.b16 %v235
      %v380 = vunpack.c.l.b16 %v236
      %v381 = vunpack.c.h.b16 %v236
      %v382 = vunpack.c.l.b16 %v237
      %v383 = vunpack.c.h.b16 %v237
      %v384 = vunpack.c.l.b16 %v238
      %v385 = vunpack.c.l.b16 %v239
      %v386 = vunpack.c.h.b16 %v239
      %v387 = vunpack.c.l.b16 %v240
      %v388 = vunpack.c.h.b16 %v240
      %v389 = vunpack.c.l.b16 %v241
      %v390 = vpack.c.b16 %v355, %v350
      %v391 = vpack.c.b16 %v356, %v351
      %v392 = vpack.c.b16 %v357, %v352
      %v393 = vpack.c.b16 %v358, %v353
      %v394 = vpack.c.b16 %v359, %v354
      %v395 = vpack.c.b16 %v365, %v360
      %v396 = vpack.c.b16 %v366, %v361
      %v397 = vpack.c.b16 %v367, %v362
      %v398 = vpack.c.b16 %v368, %v363
      %v399 = vpack.c.b16 %v369, %v364
      %v400 = vpack.c.b16 %v375, %v370
      %v401 = vpack.c.b16 %v376, %v371
      %v402 = vpack.c.b16 %v377, %v372
      %v403 = vpack.c.b16 %v378, %v373
      %v404 = vpack.c.b16 %v379, %v374
      %v405 = vpack.c.b16 %v385, %v380
      %v406 = vpack.c.b16 %v386, %v381
      %v407 = vpack.c.b16 %v387, %v382
      %v408 = vpack.c.b16 %v388, %v383
      %v409 = vpack.c.b16 %v389, %v384
      %v510 = vunpack.c.l.b16 %v242
      %v511 = vunpack.c.l.b16 %v243
      %v512 = vunpack.c.l.b16 %v244
      %v513 = vunpack.c.l.b16 %v245
      %v514 = vunpack.c.l.b16 %v246
      %v515 = vunpack.c.l.b16 %v247
      %v516 = vunpack.c.l.b16 %v248
      %v517 = vunpack.c.l.b16 %v249
      %v518 = vunpack.c.l.b16 %v250
      %v519 = vunpack.c.l.b16 %v251
      %v520 = vunpack.c.l.b16 %v252
      %v521 = vunpack.c.l.b16 %v253
      %v522 = vunpack.c.l.b16 %v254
      %v523 = vunpack.c.l.b16 %v255
      %v524 = vunpack.c.l.b16 %v256
      %v525 = vunpack.c.l.b16 %v257
      %v526 = vunpack.c.l.b16 %v258
      %v527 = vunpack.c.l.b16 %v259
      %v528 = vunpack.c.l.b16 %v260
      %v529 = vunpack.c.l.b16 %v261
      %v530 = vunpack.c.l.b16 %v262
      %v531 = vunpack.c.l.b16 %v263
      %v532 = vunpack.c.l.b16 %v264
      %v533 = vunpack.c.l.b16 %v265
      %v534 = vunpack.c.l.b16 %v266
      %v535 = vunpack.c.l.b16 %v267
      %v536 = vunpack.c.l.b16 %v268
      %v537 = vunpack.c.l.b16 %v269
      %v538 = vunpack.c.l.b16 %v270
      %v539 = vunpack.c.l.b16 %v271
      %v540 = vunpack.c.l.b16 %v272
      %v541 = vunpack.c.l.b16 %v273
      %v542 = vunpack.c.l.b16 %v274
      %v543 = vunpack.c.l.b16 %v275
      %v544 = vunpack.c.l.b16 %v276
      %v545 = vunpack.c.l.b16 %v277
      %v546 = vunpack.c.l.b16 %v278
      %v547 = vunpack.c.l.b16 %v279
      %v548 = vunpack.c.l.b16 %v280
      %v549 = vunpack.c.l.b16 %v281
      %v550 = vunpack.c.l.b16 %v282
      %v551 = vunpack.c.l.b16 %v283
      %v552 = vunpack.c.l.b16 %v284
      %v553 = vunpack.c.l.b16 %v285
      %v554 = vunpack.c.l.b16 %v286
      %v555 = vunpack.c.l.b16 %v287
      %v556 = vunpack.c.l.b16 %v288
      %v557 = vunpack.c.l.b16 %v289
      %v558 = vunpack.c.l.b16 %v290
      %v559 = vunpack.c.l.b16 %v291
      %v560 = vunpack.c.l.b16 %v292
      %v561 = vunpack.c.l.b16 %v293
      %v562 = vunpack.c.l.b16 %v294
      %v563 = vunpack.c.l.b16 %v295
      %v564 = vunpack.c.l.b16 %v296
      %v565 = vunpack.c.l.b16 %v297
      %v566 = vunpack.c.l.b16 %v298
      %v567 = vunpack.c.l.b16 %v299
      %v568 = vunpack.c.l.b16 %v300
      %v569 = vunpack.c.l.b16 %v301
      %v570 = vunpack.c.l.b16 %v302
      %v571 = vunpack.c.l.b16 %v303
      %v572 = vunpack.c.l.b16 %v304
      %v573 = vunpack.c.l.b16 %v305
      %v574 = vunpack.c.l.b16 %v306
      %v575 = vunpack.c.l.b16 %v307
      %v576 = vunpack.c.l.b16 %v308
      %v577 = vunpack.c.l.b16 %v309
      %v578 = vunpack.c.l.b16 %v310
      %v579 = vunpack.c.l.b16 %v311
      %v580 = vunpack.c.l.b16 %v312
      %v581 = vunpack.c.l.b16 %v313
      %v582 = vunpack.c.l.b16 %v314
      %v583 = vunpack.c.l.b16 %v315
      %v584 = vunpack.c.l.b16 %v316
      %v585 = vunpack.c.l.b16 %v317
      %v586 = vunpack.c.l.b16 %v318
      %v587 = vunpack.c.l.b16 %v319
      %v588 = vunpack.c.l.b16 %v320
      %v589 = vunpack.c.l.b16 %v321
      %v590 = vpack.c.b16 %v511, %v510
      %v591 = vpack.c.b16 %v513, %v512
      %v592 = vpack.c.b16 %v515, %v514
      %v593 = vpack.c.b16 %v517, %v516
      %v594 = vpack.c.b16 %v519, %v518
      %v595 = vpack.c.b16 %v521, %v520
      %v596 = vpack.c.b16 %v523, %v522
      %v597 = vpack.c.b16 %v525, %v524
      %v598 = vpack.c.b16 %v527, %v526
      %v599 = vpack.c.b16 %v529, %v528
      %v600 = vpack.c.b16 %v531, %v530
      %v601 = vpack.c.b16 %v533, %v532
      %v602 = vpack.c.b16 %v535, %v534
      %v603 = vpack.c.b16 %v537, %v536
      %v604 = vpack.c.b16 %v539, %v538
      %v605 = vpack.c.b16 %v541, %v540
      %v606 = vpack.c.b16 %v543, %v542
      %v607 = vpack.c.b16 %v545, %v544
      %v608 = vpack.c.b16 %v547, %v546
      %v609 = vpack.c.b16 %v549, %v548
      %v610 = vpack.c.b16 %v551, %v550
      %v611 = vpack.c.b16 %v553, %v552
      %v612 = vpack.c.b16 %v555, %v554
      %v613 = vpack.c.b16 %v557, %v556
      %v614 = vpack.c.b16 %v559, %v558
      %v615 = vpack.c.b16 %v561, %v560
      %v616 = vpack.c.b16 %v563, %v562
      %v617 = vpack.c.b16 %v565, %v564
      %v618 = vpack.c.b16 %v567, %v566
      %v619 = vpack.c.b16 %v569, %v568
      %v620 = vpack.c.b16 %v571, %v570
      %v621 = vpack.c.b16 %v573, %v572
      %v622 = vpack.c.b16 %v575, %v574
      %v623 = vpack.c.b16 %v577, %v576
      %v624 = vpack.c.b16 %v579, %v578
      %v625 = vpack.c.b16 %v581, %v580
      %v626 = vpack.c.b16 %v583, %v582
      %v627 = vpack.c.b16 %v585, %v584
      %v628 = vpack.c.b16 %v587, %v586
      %v629 = vpack.c.b16 %v589, %v588
      %670 = vmatpush.bf16.msra.mxu0 %v597
      %671 = vmatpush.bf16.msra.mxu0 %v596
      %672 = vmatpush.bf16.msra.mxu0 %v595
      %673 = vmatpush.bf16.msra.mxu0 %v594
      %674 = vmatpush.bf16.msra.mxu0 %v593
      %675 = vmatpush.bf16.msra.mxu0 %v592
      %676 = vmatpush.bf16.msra.mxu0 %v591
      %677 = vmatpush.bf16.msra.mxu0 %v590
      %678 = vmatmul.bf16.gmra.mxu0 %v390
      %v679 = vpop.f32.mrf.mxu0
      %v680 = vadd.f32 %v324, %v679
      %v681 = vpop.f32.mrf.mxu0
      %v682 = vadd.f32 %v324, %v681
      %683 = vmatmul.bf16.gmra.mxu0 %v395
      %v684 = vpop.f32.mrf.mxu0
      %v685 = vadd.f32 %v324, %v684
      %v686 = vpop.f32.mrf.mxu0
      %v687 = vadd.f32 %v324, %v686
      %688 = vmatmul.bf16.gmra.mxu0 %v400
      %v689 = vpop.f32.mrf.mxu0
      %v690 = vadd.f32 %v324, %v689
      %v691 = vpop.f32.mrf.mxu0
      %v692 = vadd.f32 %v324, %v691
      %693 = vmatmul.bf16.gmra.mxu0 %v405
      %v694 = vpop.f32.mrf.mxu0
      %v695 = vadd.f32 %v324, %v694
      %v696 = vpop.f32.mrf.mxu0
      %v697 = vadd.f32 %v324, %v696
      %698 = vdwg.mxu0
      %699 = vmatpush.bf16.msra.mxu0 %v605
      %700 = vmatpush.bf16.msra.mxu0 %v604
      %701 = vmatpush.bf16.msra.mxu0 %v603
      %702 = vmatpush.bf16.msra.mxu0 %v602
      %703 = vmatpush.bf16.msra.mxu0 %v601
      %704 = vmatpush.bf16.msra.mxu0 %v600
      %705 = vmatpush.bf16.msra.mxu0 %v599
      %706 = vmatpush.bf16.msra.mxu0 %v598
      %707 = vmatmul.bf16.gmra.mxu0 %v391
      %v708 = vpop.f32.mrf.mxu0
      %v709 = vadd.f32 %v680, %v708
      %v710 = vpop.f32.mrf.mxu0
      %v711 = vadd.f32 %v682, %v710
      %712 = vmatmul.bf16.gmra.mxu0 %v396
      %v713 = vpop.f32.mrf.mxu0
      %v714 = vadd.f32 %v685, %v713
      %v715 = vpop.f32.mrf.mxu0
      %v716 = vadd.f32 %v687, %v715
      %717 = vmatmul.bf16.gmra.mxu0 %v401
      %v718 = vpop.f32.mrf.mxu0
      %v719 = vadd.f32 %v690, %v718
      %v720 = vpop.f32.mrf.mxu0
      %v721 = vadd.f32 %v692, %v720
      %722 = vmatmul.bf16.gmra.mxu0 %v406
      %v723 = vpop.f32.mrf.mxu0
      %v724 = vadd.f32 %v695, %v723
      %v725 = vpop.f32.mrf.mxu0
      %v726 = vadd.f32 %v697, %v725
      %727 = vdwg.mxu0
      %728 = vmatpush.bf16.msra.mxu0 %v613
      %729 = vmatpush.bf16.msra.mxu0 %v612
      %730 = vmatpush.bf16.msra.mxu0 %v611
      %731 = vmatpush.bf16.msra.mxu0 %v610
      %732 = vmatpush.bf16.msra.mxu0 %v609
      %733 = vmatpush.bf16.msra.mxu0 %v608
      %734 = vmatpush.bf16.msra.mxu0 %v607
      %735 = vmatpush.bf16.msra.mxu0 %v606
      %736 = vmatmul.bf16.gmra.mxu0 %v392
      %v737 = vpop.f32.mrf.mxu0
      %v738 = vadd.f32 %v709, %v737
      %v739 = vpop.f32.mrf.mxu0
      %v740 = vadd.f32 %v711, %v739
      %741 = vmatmul.bf16.gmra.mxu0 %v397
      %v742 = vpop.f32.mrf.mxu0
      %v743 = vadd.f32 %v714, %v742
      %v744 = vpop.f32.mrf.mxu0
      %v745 = vadd.f32 %v716, %v744
      %746 = vmatmul.bf16.gmra.mxu0 %v402
      %v747 = vpop.f32.mrf.mxu0
      %v748 = vadd.f32 %v719, %v747
      %v749 = vpop.f32.mrf.mxu0
      %v750 = vadd.f32 %v721, %v749
      %751 = vmatmul.bf16.gmra.mxu0 %v407
      %v752 = vpop.f32.mrf.mxu0
      %v753 = vadd.f32 %v724, %v752
      %v754 = vpop.f32.mrf.mxu0
      %v755 = vadd.f32 %v726, %v754
      %756 = vdwg.mxu0
      %757 = vmatpush.bf16.msra.mxu0 %v621
      %758 = vmatpush.bf16.msra.mxu0 %v620
      %759 = vmatpush.bf16.msra.mxu0 %v619
      %760 = vmatpush.bf16.msra.mxu0 %v618
      %761 = vmatpush.bf16.msra.mxu0 %v617
      %762 = vmatpush.bf16.msra.mxu0 %v616
      %763 = vmatpush.bf16.msra.mxu0 %v615
      %764 = vmatpush.bf16.msra.mxu0 %v614
      %765 = vmatmul.bf16.gmra.mxu0 %v393
      %v766 = vpop.f32.mrf.mxu0
      %v767 = vadd.f32 %v738, %v766
      %v768 = vpop.f32.mrf.mxu0
      %v769 = vadd.f32 %v740, %v768
      %770 = vmatmul.bf16.gmra.mxu0 %v398
      %v771 = vpop.f32.mrf.mxu0
      %v772 = vadd.f32 %v743, %v771
      %v773 = vpop.f32.mrf.mxu0
      %v774 = vadd.f32 %v745, %v773
      %775 = vmatmul.bf16.gmra.mxu0 %v403
      %v776 = vpop.f32.mrf.mxu0
      %v777 = vadd.f32 %v748, %v776
      %v778 = vpop.f32.mrf.mxu0
      %v779 = vadd.f32 %v750, %v778
      %780 = vmatmul.bf16.gmra.mxu0 %v408
      %v781 = vpop.f32.mrf.mxu0
      %v782 = vadd.f32 %v753, %v781
      %v783 = vpop.f32.mrf.mxu0
      %v784 = vadd.f32 %v755, %v783
      %785 = vdwg.mxu0
      %786 = vmatpush.bf16.msra.mxu0 %v629
      %787 = vmatpush.bf16.msra.mxu0 %v628
      %788 = vmatpush.bf16.msra.mxu0 %v627
      %789 = vmatpush.bf16.msra.mxu0 %v626
      %790 = vmatpush.bf16.msra.mxu0 %v625
      %791 = vmatpush.bf16.msra.mxu0 %v624
      %792 = vmatpush.bf16.msra.mxu0 %v623
      %793 = vmatpush.bf16.msra.mxu0 %v622
      %794 = vmatmul.bf16.gmra.mxu0 %v394
      %v795 = vpop.f32.mrf.mxu0
      %v796 = vadd.f32 %v767, %v795
      %v797 = vpop.f32.mrf.mxu0
      %v798 = vadd.f32 %v769, %v797
      %799 = vmatmul.bf16.gmra.mxu0 %v399
      %v800 = vpop.f32.mrf.mxu0
      %v801 = vadd.f32 %v772, %v800
      %v802 = vpop.f32.mrf.mxu0
      %v803 = vadd.f32 %v774, %v802
      %804 = vmatmul.bf16.gmra.mxu0 %v404
      %v805 = vpop.f32.mrf.mxu0
      %v806 = vadd.f32 %v777, %v805
      %v807 = vpop.f32.mrf.mxu0
      %v808 = vadd.f32 %v779, %v807
      %809 = vmatmul.bf16.gmra.mxu0 %v409
      %v810 = vpop.f32.mrf.mxu0
      %v811 = vadd.f32 %v782, %v810
      %v812 = vpop.f32.mrf.mxu0
      %v813 = vadd.f32 %v784, %v812
      %814 = vdwg.mxu0
      %v815 = vadd.f32 %v796, %v798
      %v816 = vadd.f32 %v815, %v801
      %v817 = vadd.f32 %v816, %v803
      %v818 = vadd.f32 %v817, %v806
      %v819 = vadd.f32 %v818, %v808
      %v820 = vadd.f32 %v819, %v811
      %v821 = vadd.f32 %v820, %v813
      %v822 = vrot.slane %v821, 4
      %v823 = vadd.f32 %v821, %v822
      %v824 = vrot.slane %v823, 2
      %v825 = vadd.f32 %v823, %v824
      %v826 = vrot.slane %v825, 1
      %v827 = vadd.f32 %v825, %v826
      %v828 = vmul.f32 %v796, %v796
      %v829 = vmul.f32 %v798, %v798
      %v830 = vmul.f32 %v801, %v801
      %v831 = vmul.f32 %v803, %v803
      %v832 = vmul.f32 %v806, %v806
      %v833 = vmul.f32 %v808, %v808
      %v834 = vmul.f32 %v811, %v811
      %v835 = vmul.f32 %v813, %v813
      %v836 = vadd.f32 %v828, %v829
      %v837 = vadd.f32 %v836, %v830
      %v838 = vadd.f32 %v837, %v831
      %v839 = vadd.f32 %v838, %v832
      %v840 = vadd.f32 %v839, %v833
      %v841 = vadd.f32 %v840, %v834
      %v842 = vadd.f32 %v841, %v835
      %v843 = vrot.slane %v842, 4
      %v844 = vadd.f32 %v842, %v843
      %v845 = vrot.slane %v844, 2
      %v846 = vadd.f32 %v844, %v845
      %v847 = vrot.slane %v846, 1
      %v848 = vadd.f32 %v846, %v847
      %v849 = vmul.f32 %v827, 0.015625
      %v850 = vmul.f32 %v848, 0.015625
      %v851 = vmul.f32 %v849, %v849
      %v852 = vsub.f32 %v850, %v851
      %v853 = vmax.f32 %v852, 0.0
      %v854 = vsub.f32 %v796, %v849
      %v855 = vsub.f32 %v798, %v849
      %v856 = vsub.f32 %v801, %v849
      %v857 = vsub.f32 %v803, %v849
      %v858 = vsub.f32 %v806, %v849
      %v859 = vsub.f32 %v808, %v849
      %v860 = vsub.f32 %v811, %v849
      %v861 = vsub.f32 %v813, %v849
      %v862 = vadd.f32 %v853, 1e-05
      %v863 = vrsqrt.pop %v862
      %v864 = vmul.f32 %v863, %v862
      %v865 = vmul.f32 %v864, %v863
      %v866 = vmul.f32 0.5, %v865
      %v867 = vsub.f32 1.5, %v866
      %v868 = vmul.f32 %v863, %v867
      %vm869 = vweird.f32 %v862
      %vm870 = vweird.f32 %v863
      %vm871 = vmor %vm869, %vm870
      %v872 = vsel %vm871, %v863, %v868
      %v873 = vmul.f32 %v854, %v872
      %v874 = vmul.f32 %v855, %v872
      %v875 = vmul.f32 %v856, %v872
      %v876 = vmul.f32 %v857, %v872
      %v877 = vmul.f32 %v858, %v872
      %v878 = vmul.f32 %v859, %v872
      %v879 = vmul.f32 %v860, %v872
      %v880 = vmul.f32 %v861, %v872
      %v881 = vld [vmem:[%s212] sm:$0xff]
      %v882 = vld [vmem:[%s212 + $0x8] sm:$0xff]
      %v883 = vld [vmem:[%s212 + $0x10] sm:$0xff]
      %v884 = vld [vmem:[%s212 + $0x18] sm:$0xff]
      %v885 = vld [vmem:[%s212 + $0x20] sm:$0xff]
      %v886 = vld [vmem:[%s212 + $0x28] sm:$0xff]
      %v887 = vld [vmem:[%s212 + $0x30] sm:$0xff]
      %v888 = vld [vmem:[%s212 + $0x38] sm:$0xff]
      %v889 = vadd.f32 %v881, %v873
      %v890 = vadd.f32 %v882, %v874
      %v891 = vadd.f32 %v883, %v875
      %v892 = vadd.f32 %v884, %v876
      %v893 = vadd.f32 %v885, %v877
      %v894 = vadd.f32 %v886, %v878
      %v895 = vadd.f32 %v887, %v879
      %v896 = vadd.f32 %v888, %v880
      %897 = vst [vmem:[%s217] sm:$0xff] %v889
      %898 = vst [vmem:[%s217 + $0x8] sm:$0xff] %v890
      %899 = vst [vmem:[%s217 + $0x10] sm:$0xff] %v891
      %900 = vst [vmem:[%s217 + $0x18] sm:$0xff] %v892
      %901 = vst [vmem:[%s217 + $0x20] sm:$0xff] %v893
      %902 = vst [vmem:[%s217 + $0x28] sm:$0xff] %v894
      %903 = vst [vmem:[%s217 + $0x30] sm:$0xff] %v895
      %904 = vst [vmem:[%s217 + $0x38] sm:$0xff] %v896
      %p905 = scmp.lt.s32.totalorder %s15, 1
      %s906 = scalar_select %p905, %s15, 1
      %s907 = smul.addr %s906, 8
      %s908 = smul.addr %s907, 8
      %s909 = scalar_lea.vmem %s4, %s908
      // Predicated region
      $region37: #{generator_forward.13} parent=35 // pred_check
        %p910 = pneg %p127
      $region38: #{generator_forward.13} parent=35 // pred_check_branch
        %912 = sbr.rel (%p910) target = $region40
      $region39: #{generator_forward.13} parent=35 // pred_region
        _
      $region40: #{generator_forward.13} parent=35 // pred_fallthru
        _
    $region36: #{generator_forward.13} parent=5 // pred_fallthru
      _
    %p913 = scmp.le.s32.totalorder 2, %s10
    // Predicated region
    $region41: #{generator_forward.13} parent=5 // pred_check
      %p914 = pneg %p913
    $region42: #{generator_forward.13} parent=5 // pred_check_branch
      %916 = sbr.rel (%p914) target = $region44
    $region43: #{generator_forward.13} parent=5 // pred_region
      %s917 = ssub.s32 %s10, 2
      // Predicated region
      $region45: #{generator_forward.13} parent=43 // pred_check
        %p918 = pneg %p133
      $region46: #{generator_forward.13} parent=43 // pred_check_branch
        %920 = sbr.rel (%p918) target = $region48
      $region47: #{generator_forward.13} parent=43 // pred_region
        %p921 = scmp.lt.s32.totalorder %s16, 1
        %s922 = scalar_select %p921, %s16, 1
        %s923 = smul.addr %s922, 8
        %s924 = smul.addr %s923, 8
        %s925 = scalar_lea.vmem %s4, %s924
      $region48: #{generator_forward.13} parent=43 // pred_fallthru
        _
    $region44: #{generator_forward.13} parent=5 // pred_fallthru
      _
  $region6: #{generator_forward.13} parent=0 // loop_footer
    %s14 = sadd.s32 1, %s10
  $region7: #{generator_forward.13} parent=0 // loop_footer_branch
    %9 = sbr.rel target = $region3
  $region8: #{generator_forward.13} parent=0 // loop_exit
    _

// kernel: generator_forward.18
$region0: #{generator_forward.18}
  #allocation0 [shape = 'u32[]', space=smem, size = 0x4, offset = 0x4, fixed_abs, tag = 'smem constant byte address 0x4 - core index']
  #allocation1 [shape = 'u32[72,128]{1,0:T(1,128)}', space=vmem, size = 0x9000, scoped, tag = 'internal scratch']
  %s0 = inlined_call_operand.vmem [shape: bf16[2,64,256], index: 0, kind: input, shape index: {}]
  %s1 = inlined_call_operand.vmem [shape: bf16[4,256,128], index: 1, kind: input, shape index: {}]
  %s2 = inlined_call_operand.vmem [shape: f32[1,128], index: 2, kind: input, shape index: {}]
  %s3 = inlined_call_operand.vmem [shape: f32[2,4,64,128], index: 3, kind: output, shape index: {}]
  %s4 = sld [smem:[#allocation0]]
  $region45: #{generator_forward.18} parent=0
    _
  %s6 = ssub.s32 1, %s4
  %s7 = scalar_select 0, %s6, %s4
  loop: start=0, step=1, limit=4
  $region2: #{generator_forward.18} parent=0 // loop_pre_header
    _
  $region3: #{generator_forward.18} parent=0 // loop_header
    %s9 = sphi 0, %s13
    %p10 = scmp.ge.s32.totalorder %s9, 4
    %s19 = sphi 0, %s21
    %s22 = sphi 0, %s19
    %s23 = sphi 0, %s22
    %s39 = sphi 0, %s23
    %s43 = sphi 0, %s43
    %s45 = sphi 0, %s43
    %s46 = sphi 0, %s45
    %s60 = sphi 0, %s46
    %s64 = sphi 0, %s64
    %s66 = sphi 0, %s64
    %s67 = sphi 0, %s66
    %s81 = sphi 0, %s67
    %s87 = sphi 0, %s89
    %s90 = sphi 0, %s87
    %s91 = sphi 0, %s90
    %s107 = sphi 0, %s91
  $region4: #{generator_forward.18} parent=0 // loop_header_branch
    %12 = sbr.rel (%p10) target = $region8
  $region5: #{generator_forward.18} parent=0 // loop_body
    %s14 = ssub.s32 %s9, 1
    %s15 = ssub.s32 %s9, 2
    %s16 = sadd.s32 %s9, 1
    %s17 = ssub.s32 %s9, %s16
    %p18 = scmp.eq.s32.totalorder %s17, 0
    %s20 = sadd.s32 %s19, 1
    %s21 = scalar_select %p18, %s19, %s20
    %p24 = pneg %p18
    %p25 = scmp.eq.s32.totalorder %s9, 1
    %p26 = por %p24, %p25
    %p27 = scmp.ne.s32.totalorder %s19, %s22
    %p28 = scmp.eq.s32.totalorder %s9, 0
    %p29 = por %p27, %p28
    %p30 = scmp.ne.s32.totalorder %s19, %s22
    %p31 = scmp.eq.s32.totalorder %s14, 1
    %p32 = por %p30, %p31
    %p33 = scmp.ne.s32.totalorder %s22, %s23
    %p34 = scmp.eq.s32.totalorder %s14, 0
    %p35 = por %p33, %p34
    %p36 = scmp.ne.s32.totalorder %s22, %s23
    %p37 = scmp.eq.s32.totalorder %s15, 1
    %p38 = por %p36, %p37
    %p40 = scmp.ne.s32.totalorder %s23, %s39
    %p41 = scmp.eq.s32.totalorder %s15, 0
    %p42 = por %p40, %p41
    %s44 = sadd.s32 %s43, 1
    %p47 = scmp.eq.s32.totalorder %s9, 1
    %p48 = scmp.ne.s32.totalorder %s43, %s45
    %p49 = scmp.eq.s32.totalorder %s9, 0
    %p50 = por %p48, %p49
    %p51 = scmp.ne.s32.totalorder %s43, %s45
    %p52 = scmp.eq.s32.totalorder %s14, 1
    %p53 = por %p51, %p52
    %p54 = scmp.ne.s32.totalorder %s45, %s46
    %p55 = scmp.eq.s32.totalorder %s14, 0
    %p56 = por %p54, %p55
    %p57 = scmp.ne.s32.totalorder %s45, %s46
    %p58 = scmp.eq.s32.totalorder %s15, 1
    %p59 = por %p57, %p58
    %p61 = scmp.ne.s32.totalorder %s46, %s60
    %p62 = scmp.eq.s32.totalorder %s15, 0
    %p63 = por %p61, %p62
    %s65 = sadd.s32 %s64, 1
    %p68 = scmp.eq.s32.totalorder %s9, 1
    %p69 = scmp.ne.s32.totalorder %s64, %s66
    %p70 = scmp.eq.s32.totalorder %s9, 0
    %p71 = por %p69, %p70
    %p72 = scmp.ne.s32.totalorder %s64, %s66
    %p73 = scmp.eq.s32.totalorder %s14, 1
    %p74 = por %p72, %p73
    %p75 = scmp.ne.s32.totalorder %s66, %s67
    %p76 = scmp.eq.s32.totalorder %s14, 0
    %p77 = por %p75, %p76
    %p78 = scmp.ne.s32.totalorder %s66, %s67
    %p79 = scmp.eq.s32.totalorder %s15, 1
    %p80 = por %p78, %p79
    %p82 = scmp.ne.s32.totalorder %s67, %s81
    %p83 = scmp.eq.s32.totalorder %s15, 0
    %p84 = por %p82, %p83
    %s85 = ssub.s32 %s9, %s16
    %p86 = scmp.eq.s32.totalorder %s85, 0
    %s88 = sadd.s32 %s87, 1
    %s89 = scalar_select %p86, %s87, %s88
    %p92 = pneg %p86
    %p93 = scmp.eq.s32.totalorder %s9, 1
    %p94 = por %p92, %p93
    %p95 = scmp.ne.s32.totalorder %s87, %s90
    %p96 = scmp.eq.s32.totalorder %s9, 0
    %p97 = por %p95, %p96
    %p98 = scmp.ne.s32.totalorder %s87, %s90
    %p99 = scmp.eq.s32.totalorder %s14, 1
    %p100 = por %p98, %p99
    %p101 = scmp.ne.s32.totalorder %s90, %s91
    %p102 = scmp.eq.s32.totalorder %s14, 0
    %p103 = por %p101, %p102
    %p104 = scmp.ne.s32.totalorder %s90, %s91
    %p105 = scmp.eq.s32.totalorder %s15, 1
    %p106 = por %p104, %p105
    %p108 = scmp.ne.s32.totalorder %s91, %s107
    %p109 = scmp.eq.s32.totalorder %s15, 0
    %p110 = por %p108, %p109
    %p111 = scmp.le.s32.totalorder 1, %s9
    %p112 = scmp.lt.s32.totalorder %s9, 3
    %p113 = pnand %p111, %p112
    %p114 = pneg %p113
    // Predicated region
    $region9: #{generator_forward.18} parent=5 // pred_check
      _
    $region10: #{generator_forward.18} parent=5 // pred_check_branch
      %116 = sbr.rel (%p113) target = $region12
    $region11: #{generator_forward.18} parent=5 // pred_region
      %s117 = ssub.s32 %s9, 1
      // Predicated region
      $region13: #{generator_forward.18} parent=11 // pred_check
        %p118 = pneg %p56
      $region14: #{generator_forward.18} parent=11 // pred_check_branch
        %120 = sbr.rel (%p118) target = $region16
      $region15: #{generator_forward.18} parent=11 // pred_region
        _
      $region16: #{generator_forward.18} parent=11 // pred_fallthru
        _
      // Predicated region
      $region17: #{generator_forward.18} parent=11 // pred_check
        %p121 = pneg %p77
      $region18: #{generator_forward.18} parent=11 // pred_check_branch
        %123 = sbr.rel (%p121) target = $region20
      $region19: #{generator_forward.18} parent=11 // pred_region
        _
      $region20: #{generator_forward.18} parent=11 // pred_fallthru
        _
    $region12: #{generator_forward.18} parent=5 // pred_fallthru
      _
    %p124 = scmp.lt.s32.totalorder %s9, 2
    // Predicated region
    $region21: #{generator_forward.18} parent=5 // pred_check
      %p125 = pneg %p124
    $region22: #{generator_forward.18} parent=5 // pred_check_branch
      %127 = sbr.rel (%p125) target = $region24
    $region23: #{generator_forward.18} parent=5 // pred_region
      // Predicated region
      $region25: #{generator_forward.18} parent=23 // pred_check
        %p128 = pneg %p29
      $region26: #{generator_forward.18} parent=23 // pred_check_branch
        %130 = sbr.rel (%p128) target = $region28
      $region27: #{generator_forward.18} parent=23 // pred_region
        %p131 = scmp.lt.s32.totalorder %s9, 1
        %s132 = scalar_select %p131, %s9, 1
        %s133 = smul.addr %s132, 16
        %s134 = smul.addr %s133, 4
        %s135 = scalar_lea.vmem %s0, %s134
      $region28: #{generator_forward.18} parent=23 // pred_fallthru
        _
    $region24: #{generator_forward.18} parent=5 // pred_fallthru
      _
    %p136 = scmp.le.s32.totalorder 1, %s9
    %p137 = scmp.lt.s32.totalorder %s9, 3
    %p138 = pnand %p136, %p137
    %p139 = pneg %p138
    // Predicated region
    $region29: #{generator_forward.18} parent=5 // pred_check
      _
    $region30: #{generator_forward.18} parent=5 // pred_check_branch
      %141 = sbr.rel (%p138) target = $region32
    $region31: #{generator_forward.18} parent=5 // pred_region
      %s142 = ssub.s32 %s9, 1
      %p143 = scmp.lt.s32.totalorder %s14, 1
      %s144 = scalar_select %p143, %s14, 1
      %s145 = smul.addr %s144, 16
      %s146 = smul.addr %s145, 4
      %s147 = scalar_lea.vmem %s0, %s146
      %p148 = pneg %p35
      %p149 = pneg %p32
      %p150 = pneg %p56
      %p151 = pneg %p53
      %p152 = pneg %p77
      %p153 = pneg %p74
      %p154 = pneg %p103
      %p155 = pneg %p100
      %p156 = scmp.lt.s32.totalorder %s14, 1
      %s157 = scalar_select %p156, %s14, 1
      %s158 = smul.addr %s157, 32
      %s159 = smul.addr %s158, 8
      %s160 = scalar_lea.vmem %s3, %s159
      %p161 = scmp.lt.s32.totalorder %s14, 1
      %s162 = scalar_select %p161, %s14, 1
      %s163 = smul.addr %s162, 16
      %s164 = smul.addr %s163, 4
      %s165 = scalar_lea.vmem %s0, %s164
      %p166 = scmp.lt.s32.totalorder %s14, 1
      %s167 = scalar_select %p166, %s14, 1
      %s168 = smul.addr %s167, 32
      %s169 = smul.addr %s168, 8
      %s170 = scalar_lea.vmem %s3, %s169
      %v171 = vld [vmem:[%s165] sm:$0xff]
      %v172 = vld [vmem:[%s165 + $0x8] sm:$0xff]
      %v173 = vld [vmem:[%s165 + $0x10] sm:$0xff]
      %v174 = vld [vmem:[%s165 + $0x18] sm:$0xff]
      %v175 = vld [vmem:[%s165 + $0x20] sm:$0xff]
      %v176 = vld [vmem:[%s165 + $0x28] sm:$0xff]
      %v177 = vld [vmem:[%s165 + $0x30] sm:$0xff]
      %v178 = vld [vmem:[%s165 + $0x38] sm:$0xff]
      %v179 = vld [vmem:[%s2] sm:$0x1]
      %v180 = vld [vmem:[%s1] sm:$0xf]
      %v181 = vld [vmem:[%s1 + $0x4] sm:$0xf]
      %v182 = vld [vmem:[%s1 + $0x8] sm:$0xf]
      %v183 = vld [vmem:[%s1 + $0xc] sm:$0xf]
      %v184 = vld [vmem:[%s1 + $0x10] sm:$0xf]
      %v185 = vld [vmem:[%s1 + $0x14] sm:$0xf]
      %v186 = vld [vmem:[%s1 + $0x18] sm:$0xf]
      %v187 = vld [vmem:[%s1 + $0x1c] sm:$0xf]
      %v188 = vld [vmem:[%s1 + $0x20] sm:$0xf]
      %v189 = vld [vmem:[%s1 + $0x24] sm:$0xf]
      %v190 = vld [vmem:[%s1 + $0x28] sm:$0xf]
      %v191 = vld [vmem:[%s1 + $0x2c] sm:$0xf]
      %v192 = vld [vmem:[%s1 + $0x30] sm:$0xf]
      %v193 = vld [vmem:[%s1 + $0x34] sm:$0xf]
      %v194 = vld [vmem:[%s1 + $0x38] sm:$0xf]
      %v195 = vld [vmem:[%s1 + $0x3c] sm:$0xf]
      %v196 = vld [vmem:[%s1 + $0x40] sm:$0xf]
      %v197 = vld [vmem:[%s1 + $0x44] sm:$0xf]
      %v198 = vld [vmem:[%s1 + $0x48] sm:$0xf]
      %v199 = vld [vmem:[%s1 + $0x4c] sm:$0xf]
      %v200 = vld [vmem:[%s1 + $0x50] sm:$0xf]
      %v201 = vld [vmem:[%s1 + $0x54] sm:$0xf]
      %v202 = vld [vmem:[%s1 + $0x58] sm:$0xf]
      %v203 = vld [vmem:[%s1 + $0x5c] sm:$0xf]
      %v204 = vld [vmem:[%s1 + $0x60] sm:$0xf]
      %v205 = vld [vmem:[%s1 + $0x64] sm:$0xf]
      %v206 = vld [vmem:[%s1 + $0x68] sm:$0xf]
      %v207 = vld [vmem:[%s1 + $0x6c] sm:$0xf]
      %v208 = vld [vmem:[%s1 + $0x70] sm:$0xf]
      %v209 = vld [vmem:[%s1 + $0x74] sm:$0xf]
      %v210 = vld [vmem:[%s1 + $0x78] sm:$0xf]
      %v211 = vld [vmem:[%s1 + $0x7c] sm:$0xf]
      %v213 = vperm.slane %v179, 0
      %v223 = vunpack.c.l.b16 %v171
      %v224 = vunpack.c.h.b16 %v171
      %v225 = vunpack.c.l.b16 %v172
      %v226 = vunpack.c.h.b16 %v172
      %v227 = vunpack.c.l.b16 %v173
      %v228 = vunpack.c.h.b16 %v173
      %v229 = vunpack.c.l.b16 %v174
      %v230 = vunpack.c.h.b16 %v174
      %v231 = vunpack.c.l.b16 %v175
      %v232 = vunpack.c.h.b16 %v175
      %v233 = vunpack.c.l.b16 %v176
      %v234 = vunpack.c.h.b16 %v176
      %v235 = vunpack.c.l.b16 %v177
      %v236 = vunpack.c.h.b16 %v177
      %v237 = vunpack.c.l.b16 %v178
      %v238 = vunpack.c.h.b16 %v178
      %v239 = vpack.c.b16 %v225, %v223
      %v240 = vpack.c.b16 %v226, %v224
      %v241 = vpack.c.b16 %v229, %v227
      %v242 = vpack.c.b16 %v230, %v228
      %v243 = vpack.c.b16 %v233, %v231
      %v244 = vpack.c.b16 %v234, %v232
      %v245 = vpack.c.b16 %v237, %v235
      %v246 = vpack.c.b16 %v238, %v236
      %v287 = vunpack.c.l.b16 %v180
      %v288 = vunpack.c.l.b16 %v181
      %v289 = vunpack.c.l.b16 %v182
      %v290 = vunpack.c.l.b16 %v183
      %v291 = vunpack.c.l.b16 %v184
      %v292 = vunpack.c.l.b16 %v185
      %v293 = vunpack.c.l.b16 %v186
      %v294 = vunpack.c.l.b16 %v187
      %v295 = vunpack.c.l.b16 %v188
      %v296 = vunpack.c.l.b16 %v189
      %v297 = vunpack.c.l.b16 %v190
      %v298 = vunpack.c.l.b16 %v191
      %v299 = vunpack.c.l.b16 %v192
      %v300 = vunpack.c.l.b16 %v193
      %v301 = vunpack.c.l.b16 %v194
      %v302 = vunpack.c.l.b16 %v195
      %v303 = vunpack.c.l.b16 %v196
      %v304 = vunpack.c.l.b16 %v197
      %v305 = vunpack.c.l.b16 %v198
      %v306 = vunpack.c.l.b16 %v199
      %v307 = vunpack.c.l.b16 %v200
      %v308 = vunpack.c.l.b16 %v201
      %v309 = vunpack.c.l.b16 %v202
      %v310 = vunpack.c.l.b16 %v203
      %v311 = vunpack.c.l.b16 %v204
      %v312 = vunpack.c.l.b16 %v205
      %v313 = vunpack.c.l.b16 %v206
      %v314 = vunpack.c.l.b16 %v207
      %v315 = vunpack.c.l.b16 %v208
      %v316 = vunpack.c.l.b16 %v209
      %v317 = vunpack.c.l.b16 %v210
      %v318 = vunpack.c.l.b16 %v211
      %v319 = vpack.c.b16 %v288, %v287
      %v320 = vpack.c.b16 %v290, %v289
      %v321 = vpack.c.b16 %v292, %v291
      %v322 = vpack.c.b16 %v294, %v293
      %v323 = vpack.c.b16 %v296, %v295
      %v324 = vpack.c.b16 %v298, %v297
      %v325 = vpack.c.b16 %v300, %v299
      %v326 = vpack.c.b16 %v302, %v301
      %v327 = vpack.c.b16 %v304, %v303
      %v328 = vpack.c.b16 %v306, %v305
      %v329 = vpack.c.b16 %v308, %v307
      %v330 = vpack.c.b16 %v310, %v309
      %v331 = vpack.c.b16 %v312, %v311
      %v332 = vpack.c.b16 %v314, %v313
      %v333 = vpack.c.b16 %v316, %v315
      %v334 = vpack.c.b16 %v318, %v317
      %351 = vmatpush.bf16.msra.mxu0 %v326
      %352 = vmatpush.bf16.msra.mxu0 %v325
      %353 = vmatpush.bf16.msra.mxu0 %v324
      %354 = vmatpush.bf16.msra.mxu0 %v323
      %355 = vmatpush.bf16.msra.mxu0 %v322
      %356 = vmatpush.bf16.msra.mxu0 %v321
      %357 = vmatpush.bf16.msra.mxu0 %v320
      %358 = vmatpush.bf16.msra.mxu0 %v319
      %359 = vmatmul.bf16.gmra.mxu0 %v239
      %v360 = vpop.f32.mrf.mxu0
      %v361 = vadd.f32 %v213, %v360
      %v362 = vpop.f32.mrf.mxu0
      %v363 = vadd.f32 %v213, %v362
      %364 = vmatmul.bf16.gmra.mxu0 %v241
      %v365 = vpop.f32.mrf.mxu0
      %v366 = vadd.f32 %v213, %v365
      %v367 = vpop.f32.mrf.mxu0
      %v368 = vadd.f32 %v213, %v367
      %369 = vmatmul.bf16.gmra.mxu0 %v243
      %v370 = vpop.f32.mrf.mxu0
      %v371 = vadd.f32 %v213, %v370
      %v372 = vpop.f32.mrf.mxu0
      %v373 = vadd.f32 %v213, %v372
      %374 = vmatmul.bf16.gmra.mxu0 %v245
      %v375 = vpop.f32.mrf.mxu0
      %v376 = vadd.f32 %v213, %v375
      %v377 = vpop.f32.mrf.mxu0
      %v378 = vadd.f32 %v213, %v377
      %379 = vdwg.mxu0
      %380 = vmatpush.bf16.msra.mxu0 %v334
      %381 = vmatpush.bf16.msra.mxu0 %v333
      %382 = vmatpush.bf16.msra.mxu0 %v332
      %383 = vmatpush.bf16.msra.mxu0 %v331
      %384 = vmatpush.bf16.msra.mxu0 %v330
      %385 = vmatpush.bf16.msra.mxu0 %v329
      %386 = vmatpush.bf16.msra.mxu0 %v328
      %387 = vmatpush.bf16.msra.mxu0 %v327
      %388 = vmatmul.bf16.gmra.mxu0 %v240
      %v389 = vpop.f32.mrf.mxu0
      %v390 = vadd.f32 %v361, %v389
      %v391 = vpop.f32.mrf.mxu0
      %v392 = vadd.f32 %v363, %v391
      %393 = vmatmul.bf16.gmra.mxu0 %v242
      %v394 = vpop.f32.mrf.mxu0
      %v395 = vadd.f32 %v366, %v394
      %v396 = vpop.f32.mrf.mxu0
      %v397 = vadd.f32 %v368, %v396
      %398 = vmatmul.bf16.gmra.mxu0 %v244
      %v399 = vpop.f32.mrf.mxu0
      %v400 = vadd.f32 %v371, %v399
      %v401 = vpop.f32.mrf.mxu0
      %v402 = vadd.f32 %v373, %v401
      %403 = vmatmul.bf16.gmra.mxu0 %v246
      %v404 = vpop.f32.mrf.mxu0
      %v405 = vadd.f32 %v376, %v404
      %v406 = vpop.f32.mrf.mxu0
      %v407 = vadd.f32 %v378, %v406
      %408 = vdwg.mxu0
      %409 = vst [vmem:[%s170] sm:$0xff] %v390
      %410 = vst [vmem:[%s170 + $0x8] sm:$0xff] %v392
      %411 = vst [vmem:[%s170 + $0x10] sm:$0xff] %v395
      %412 = vst [vmem:[%s170 + $0x18] sm:$0xff] %v397
      %413 = vst [vmem:[%s170 + $0x20] sm:$0xff] %v400
      %414 = vst [vmem:[%s170 + $0x28] sm:$0xff] %v402
      %415 = vst [vmem:[%s170 + $0x30] sm:$0xff] %v405
      %416 = vst [vmem:[%s170 + $0x38] sm:$0xff] %v407
      %v417 = vadd.f32 %v390, %v392
      %v418 = vadd.f32 %v417, %v395
      %v419 = vadd.f32 %v418, %v397
      %v420 = vadd.f32 %v419, %v400
      %v421 = vadd.f32 %v420, %v402
      %v422 = vadd.f32 %v421, %v405
      %v423 = vadd.f32 %v422, %v407
      %v424 = vrot.slane %v423, 4
      %v425 = vadd.f32 %v423, %v424
      %v426 = vrot.slane %v425, 2
      %v427 = vadd.f32 %v425, %v426
      %v428 = vrot.slane %v427, 1
      %v429 = vadd.f32 %v427, %v428
      %v430 = vadd.f32 %v429, 0.0
      %v431 = vmul.f32 %v390, %v390
      %v432 = vmul.f32 %v392, %v392
      %v433 = vmul.f32 %v395, %v395
      %v434 = vmul.f32 %v397, %v397
      %v435 = vmul.f32 %v400, %v400
      %v436 = vmul.f32 %v402, %v402
      %v437 = vmul.f32 %v405, %v405
      %v438 = vmul.f32 %v407, %v407
      %v439 = vadd.f32 %v431, %v432
      %v440 = vadd.f32 %v439, %v433
      %v441 = vadd.f32 %v440, %v434
      %v442 = vadd.f32 %v441, %v435
      %v443 = vadd.f32 %v442, %v436
      %v444 = vadd.f32 %v443, %v437
      %v445 = vadd.f32 %v444, %v438
      %v446 = vrot.slane %v445, 4
      %v447 = vadd.f32 %v445, %v446
      %v448 = vrot.slane %v447, 2
      %v449 = vadd.f32 %v447, %v448
      %v450 = vrot.slane %v449, 1
      %v451 = vadd.f32 %v449, %v450
      %v452 = vadd.f32 %v451, 0.0
      %s453 = scalar_lea.vmem %s1, 128
      %v454 = vld [vmem:[%s453] sm:$0xf]
      %v455 = vld [vmem:[%s453 + $0x4] sm:$0xf]
      %v456 = vld [vmem:[%s453 + $0x8] sm:$0xf]
      %v457 = vld [vmem:[%s453 + $0xc] sm:$0xf]
      %v458 = vld [vmem:[%s453 + $0x10] sm:$0xf]
      %v459 = vld [vmem:[%s453 + $0x14] sm:$0xf]
      %v460 = vld [vmem:[%s453 + $0x18] sm:$0xf]
      %v461 = vld [vmem:[%s453 + $0x1c] sm:$0xf]
      %v462 = vld [vmem:[%s453 + $0x20] sm:$0xf]
      %v463 = vld [vmem:[%s453 + $0x24] sm:$0xf]
      %v464 = vld [vmem:[%s453 + $0x28] sm:$0xf]
      %v465 = vld [vmem:[%s453 + $0x2c] sm:$0xf]
      %v466 = vld [vmem:[%s453 + $0x30] sm:$0xf]
      %v467 = vld [vmem:[%s453 + $0x34] sm:$0xf]
      %v468 = vld [vmem:[%s453 + $0x38] sm:$0xf]
      %v469 = vld [vmem:[%s453 + $0x3c] sm:$0xf]
      %v470 = vld [vmem:[%s453 + $0x40] sm:$0xf]
      %v471 = vld [vmem:[%s453 + $0x44] sm:$0xf]
      %v472 = vld [vmem:[%s453 + $0x48] sm:$0xf]
      %v473 = vld [vmem:[%s453 + $0x4c] sm:$0xf]
      %v474 = vld [vmem:[%s453 + $0x50] sm:$0xf]
      %v475 = vld [vmem:[%s453 + $0x54] sm:$0xf]
      %v476 = vld [vmem:[%s453 + $0x58] sm:$0xf]
      %v477 = vld [vmem:[%s453 + $0x5c] sm:$0xf]
      %v478 = vld [vmem:[%s453 + $0x60] sm:$0xf]
      %v479 = vld [vmem:[%s453 + $0x64] sm:$0xf]
      %v480 = vld [vmem:[%s453 + $0x68] sm:$0xf]
      %v481 = vld [vmem:[%s453 + $0x6c] sm:$0xf]
      %v482 = vld [vmem:[%s453 + $0x70] sm:$0xf]
      %v483 = vld [vmem:[%s453 + $0x74] sm:$0xf]
      %v484 = vld [vmem:[%s453 + $0x78] sm:$0xf]
      %v485 = vld [vmem:[%s453 + $0x7c] sm:$0xf]
      %v518 = vunpack.c.l.b16 %v454
      %v519 = vunpack.c.l.b16 %v455
      %v520 = vunpack.c.l.b16 %v456
      %v521 = vunpack.c.l.b16 %v457
      %v522 = vunpack.c.l.b16 %v458
      %v523 = vunpack.c.l.b16 %v459
      %v524 = vunpack.c.l.b16 %v460
      %v525 = vunpack.c.l.b16 %v461
      %v526 = vunpack.c.l.b16 %v462
      %v527 = vunpack.c.l.b16 %v463
      %v528 = vunpack.c.l.b16 %v464
      %v529 = vunpack.c.l.b16 %v465
      %v530 = vunpack.c.l.b16 %v466
      %v531 = vunpack.c.l.b16 %v467
      %v532 = vunpack.c.l.b16 %v468
      %v533 = vunpack.c.l.b16 %v469
      %v534 = vunpack.c.l.b16 %v470
      %v535 = vunpack.c.l.b16 %v471
      %v536 = vunpack.c.l.b16 %v472
      %v537 = vunpack.c.l.b16 %v473
      %v538 = vunpack.c.l.b16 %v474
      %v539 = vunpack.c.l.b16 %v475
      %v540 = vunpack.c.l.b16 %v476
      %v541 = vunpack.c.l.b16 %v477
      %v542 = vunpack.c.l.b16 %v478
      %v543 = vunpack.c.l.b16 %v479
      %v544 = vunpack.c.l.b16 %v480
      %v545 = vunpack.c.l.b16 %v481
      %v546 = vunpack.c.l.b16 %v482
      %v547 = vunpack.c.l.b16 %v483
      %v548 = vunpack.c.l.b16 %v484
      %v549 = vunpack.c.l.b16 %v485
      %v550 = vpack.c.b16 %v519, %v518
      %v551 = vpack.c.b16 %v521, %v520
      %v552 = vpack.c.b16 %v523, %v522
      %v553 = vpack.c.b16 %v525, %v524
      %v554 = vpack.c.b16 %v527, %v526
      %v555 = vpack.c.b16 %v529, %v528
      %v556 = vpack.c.b16 %v531, %v530
      %v557 = vpack.c.b16 %v533, %v532
      %v558 = vpack.c.b16 %v535, %v534
      %v559 = vpack.c.b16 %v537, %v536
      %v560 = vpack.c.b16 %v539, %v538
      %v561 = vpack.c.b16 %v541, %v540
      %v562 = vpack.c.b16 %v543, %v542
      %v563 = vpack.c.b16 %v545, %v544
      %v564 = vpack.c.b16 %v547, %v546
      %v565 = vpack.c.b16 %v549, %v548
      %582 = vmatpush.bf16.msra.mxu0 %v557
      %583 = vmatpush.bf16.msra.mxu0 %v556
      %584 = vmatpush.bf16.msra.mxu0 %v555
      %585 = vmatpush.bf16.msra.mxu0 %v554
      %586 = vmatpush.bf16.msra.mxu0 %v553
      %587 = vmatpush.bf16.msra.mxu0 %v552
      %588 = vmatpush.bf16.msra.mxu0 %v551
      %589 = vmatpush.bf16.msra.mxu0 %v550
      %590 = vmatmul.bf16.gmra.mxu0 %v239
      %v591 = vpop.f32.mrf.mxu0
      %v592 = vadd.f32 %v213, %v591
      %v593 = vpop.f32.mrf.mxu0
      %v594 = vadd.f32 %v213, %v593
      %595 = vmatmul.bf16.gmra.mxu0 %v241
      %v596 = vpop.f32.mrf.mxu0
      %v597 = vadd.f32 %v213, %v596
      %v598 = vpop.f32.mrf.mxu0
      %v599 = vadd.f32 %v213, %v598
      %600 = vmatmul.bf16.gmra.mxu0 %v243
      %v601 = vpop.f32.mrf.mxu0
      %v602 = vadd.f32 %v213, %v601
      %v603 = vpop.f32.mrf.mxu0
      %v604 = vadd.f32 %v213, %v603
      %605 = vmatmul.bf16.gmra.mxu0 %v245
      %v606 = vpop.f32.mrf.mxu0
      %v607 = vadd.f32 %v213, %v606
      %v608 = vpop.f32.mrf.mxu0
      %v609 = vadd.f32 %v213, %v608
      %610 = vdwg.mxu0
      %611 = vmatpush.bf16.msra.mxu0 %v565
      %612 = vmatpush.bf16.msra.mxu0 %v564
      %613 = vmatpush.bf16.msra.mxu0 %v563
      %614 = vmatpush.bf16.msra.mxu0 %v562
      %615 = vmatpush.bf16.msra.mxu0 %v561
      %616 = vmatpush.bf16.msra.mxu0 %v560
      %617 = vmatpush.bf16.msra.mxu0 %v559
      %618 = vmatpush.bf16.msra.mxu0 %v558
      %619 = vmatmul.bf16.gmra.mxu0 %v240
      %v620 = vpop.f32.mrf.mxu0
      %v621 = vadd.f32 %v592, %v620
      %v622 = vpop.f32.mrf.mxu0
      %v623 = vadd.f32 %v594, %v622
      %624 = vmatmul.bf16.gmra.mxu0 %v242
      %v625 = vpop.f32.mrf.mxu0
      %v626 = vadd.f32 %v597, %v625
      %v627 = vpop.f32.mrf.mxu0
      %v628 = vadd.f32 %v599, %v627
      %629 = vmatmul.bf16.gmra.mxu0 %v244
      %v630 = vpop.f32.mrf.mxu0
      %v631 = vadd.f32 %v602, %v630
      %v632 = vpop.f32.mrf.mxu0
      %v633 = vadd.f32 %v604, %v632
      %634 = vmatmul.bf16.gmra.mxu0 %v246
      %v635 = vpop.f32.mrf.mxu0
      %v636 = vadd.f32 %v607, %v635
      %v637 = vpop.f32.mrf.mxu0
      %v638 = vadd.f32 %v609, %v637
      %639 = vdwg.mxu0
      %s640 = scalar_lea.vmem %s170, 64
      %641 = vst [vmem:[%s640] sm:$0xff] %v621
      %642 = vst [vmem:[%s640 + $0x8] sm:$0xff] %v623
      %643 = vst [vmem:[%s640 + $0x10] sm:$0xff] %v626
      %644 = vst [vmem:[%s640 + $0x18] sm:$0xff] %v628
      %645 = vst [vmem:[%s640 + $0x20] sm:$0xff] %v631
      %646 = vst [vmem:[%s640 + $0x28] sm:$0xff] %v633
      %647 = vst [vmem:[%s640 + $0x30] sm:$0xff] %v636
      %648 = vst [vmem:[%s640 + $0x38] sm:$0xff] %v638
      %v649 = vadd.f32 %v621, %v623
      %v650 = vadd.f32 %v649, %v626
      %v651 = vadd.f32 %v650, %v628
      %v652 = vadd.f32 %v651, %v631
      %v653 = vadd.f32 %v652, %v633
      %v654 = vadd.f32 %v653, %v636
      %v655 = vadd.f32 %v654, %v638
      %v656 = vrot.slane %v655, 4
      %v657 = vadd.f32 %v655, %v656
      %v658 = vrot.slane %v657, 2
      %v659 = vadd.f32 %v657, %v658
      %v660 = vrot.slane %v659, 1
      %v661 = vadd.f32 %v659, %v660
      %v662 = vadd.f32 %v430, %v661
      %v663 = vmul.f32 %v621, %v621
      %v664 = vmul.f32 %v623, %v623
      %v665 = vmul.f32 %v626, %v626
      %v666 = vmul.f32 %v628, %v628
      %v667 = vmul.f32 %v631, %v631
      %v668 = vmul.f32 %v633, %v633
      %v669 = vmul.f32 %v636, %v636
      %v670 = vmul.f32 %v638, %v638
      %v671 = vadd.f32 %v663, %v664
      %v672 = vadd.f32 %v671, %v665
      %v673 = vadd.f32 %v672, %v666
      %v674 = vadd.f32 %v673, %v667
      %v675 = vadd.f32 %v674, %v668
      %v676 = vadd.f32 %v675, %v669
      %v677 = vadd.f32 %v676, %v670
      %v678 = vrot.slane %v677, 4
      %v679 = vadd.f32 %v677, %v678
      %v680 = vrot.slane %v679, 2
      %v681 = vadd.f32 %v679, %v680
      %v682 = vrot.slane %v681, 1
      %v683 = vadd.f32 %v681, %v682
      %v684 = vadd.f32 %v452, %v683
      %s685 = scalar_lea.vmem %s1, 256
      %v686 = vld [vmem:[%s685] sm:$0xf]
      %v687 = vld [vmem:[%s685 + $0x4] sm:$0xf]
      %v688 = vld [vmem:[%s685 + $0x8] sm:$0xf]
      %v689 = vld [vmem:[%s685 + $0xc] sm:$0xf]
      %v690 = vld [vmem:[%s685 + $0x10] sm:$0xf]
      %v691 = vld [vmem:[%s685 + $0x14] sm:$0xf]
      %v692 = vld [vmem:[%s685 + $0x18] sm:$0xf]
      %v693 = vld [vmem:[%s685 + $0x1c] sm:$0xf]
      %v694 = vld [vmem:[%s685 + $0x20] sm:$0xf]
      %v695 = vld [vmem:[%s685 + $0x24] sm:$0xf]
      %v696 = vld [vmem:[%s685 + $0x28] sm:$0xf]
      %v697 = vld [vmem:[%s685 + $0x2c] sm:$0xf]
      %v698 = vld [vmem:[%s685 + $0x30] sm:$0xf]
      %v699 = vld [vmem:[%s685 + $0x34] sm:$0xf]
      %v700 = vld [vmem:[%s685 + $0x38] sm:$0xf]
      %v701 = vld [vmem:[%s685 + $0x3c] sm:$0xf]
      %v702 = vld [vmem:[%s685 + $0x40] sm:$0xf]
      %v703 = vld [vmem:[%s685 + $0x44] sm:$0xf]
      %v704 = vld [vmem:[%s685 + $0x48] sm:$0xf]
      %v705 = vld [vmem:[%s685 + $0x4c] sm:$0xf]
      %v706 = vld [vmem:[%s685 + $0x50] sm:$0xf]
      %v707 = vld [vmem:[%s685 + $0x54] sm:$0xf]
      %v708 = vld [vmem:[%s685 + $0x58] sm:$0xf]
      %v709 = vld [vmem:[%s685 + $0x5c] sm:$0xf]
      %v710 = vld [vmem:[%s685 + $0x60] sm:$0xf]
      %v711 = vld [vmem:[%s685 + $0x64] sm:$0xf]
      %v712 = vld [vmem:[%s685 + $0x68] sm:$0xf]
      %v713 = vld [vmem:[%s685 + $0x6c] sm:$0xf]
      %v714 = vld [vmem:[%s685 + $0x70] sm:$0xf]
      %v715 = vld [vmem:[%s685 + $0x74] sm:$0xf]
      %v716 = vld [vmem:[%s685 + $0x78] sm:$0xf]
      %v717 = vld [vmem:[%s685 + $0x7c] sm:$0xf]
      %v750 = vunpack.c.l.b16 %v686
      %v751 = vunpack.c.l.b16 %v687
      %v752 = vunpack.c.l.b16 %v688
      %v753 = vunpack.c.l.b16 %v689
      %v754 = vunpack.c.l.b16 %v690
      %v755 = vunpack.c.l.b16 %v691
      %v756 = vunpack.c.l.b16 %v692
      %v757 = vunpack.c.l.b16 %v693
      %v758 = vunpack.c.l.b16 %v694
      %v759 = vunpack.c.l.b16 %v695
      %v760 = vunpack.c.l.b16 %v696
      %v761 = vunpack.c.l.b16 %v697
      %v762 = vunpack.c.l.b16 %v698
      %v763 = vunpack.c.l.b16 %v699
      %v764 = vunpack.c.l.b16 %v700
      %v765 = vunpack.c.l.b16 %v701
      %v766 = vunpack.c.l.b16 %v702
      %v767 = vunpack.c.l.b16 %v703
      %v768 = vunpack.c.l.b16 %v704
      %v769 = vunpack.c.l.b16 %v705
      %v770 = vunpack.c.l.b16 %v706
      %v771 = vunpack.c.l.b16 %v707
      %v772 = vunpack.c.l.b16 %v708
      %v773 = vunpack.c.l.b16 %v709
      %v774 = vunpack.c.l.b16 %v710
      %v775 = vunpack.c.l.b16 %v711
      %v776 = vunpack.c.l.b16 %v712
      %v777 = vunpack.c.l.b16 %v713
      %v778 = vunpack.c.l.b16 %v714
      %v779 = vunpack.c.l.b16 %v715
      %v780 = vunpack.c.l.b16 %v716
      %v781 = vunpack.c.l.b16 %v717
      %v782 = vpack.c.b16 %v751, %v750
      %v783 = vpack.c.b16 %v753, %v752
      %v784 = vpack.c.b16 %v755, %v754
      %v785 = vpack.c.b16 %v757, %v756
      %v786 = vpack.c.b16 %v759, %v758
      %v787 = vpack.c.b16 %v761, %v760
      %v788 = vpack.c.b16 %v763, %v762
      %v789 = vpack.c.b16 %v765, %v764
      %v790 = vpack.c.b16 %v767, %v766
      %v791 = vpack.c.b16 %v769, %v768
      %v792 = vpack.c.b16 %v771, %v770
      %v793 = vpack.c.b16 %v773, %v772
      %v794 = vpack.c.b16 %v775, %v774
      %v795 = vpack.c.b16 %v777, %v776
      %v796 = vpack.c.b16 %v779, %v778
      %v797 = vpack.c.b16 %v781, %v780
      %814 = vmatpush.bf16.msra.mxu0 %v789
      %815 = vmatpush.bf16.msra.mxu0 %v788
      %816 = vmatpush.bf16.msra.mxu0 %v787
      %817 = vmatpush.bf16.msra.mxu0 %v786
      %818 = vmatpush.bf16.msra.mxu0 %v785
      %819 = vmatpush.bf16.msra.mxu0 %v784
      %820 = vmatpush.bf16.msra.mxu0 %v783
      %821 = vmatpush.bf16.msra.mxu0 %v782
      %822 = vmatmul.bf16.gmra.mxu0 %v239
      %v823 = vpop.f32.mrf.mxu0
      %v824 = vadd.f32 %v213, %v823
      %v825 = vpop.f32.mrf.mxu0
      %v826 = vadd.f32 %v213, %v825
      %827 = vmatmul.bf16.gmra.mxu0 %v241
      %v828 = vpop.f32.mrf.mxu0
      %v829 = vadd.f32 %v213, %v828
      %v830 = vpop.f32.mrf.mxu0
      %v831 = vadd.f32 %v213, %v830
      %832 = vmatmul.bf16.gmra.mxu0 %v243
      %v833 = vpop.f32.mrf.mxu0
      %v834 = vadd.f32 %v213, %v833
      %v835 = vpop.f32.mrf.mxu0
      %v836 = vadd.f32 %v213, %v835
      %837 = vmatmul.bf16.gmra.mxu0 %v245
      %v838 = vpop.f32.mrf.mxu0
      %v839 = vadd.f32 %v213, %v838
      %v840 = vpop.f32.mrf.mxu0
      %v841 = vadd.f32 %v213, %v840
      %842 = vdwg.mxu0
      %843 = vmatpush.bf16.msra.mxu0 %v797
      %844 = vmatpush.bf16.msra.mxu0 %v796
      %845 = vmatpush.bf16.msra.mxu0 %v795
      %846 = vmatpush.bf16.msra.mxu0 %v794
      %847 = vmatpush.bf16.msra.mxu0 %v793
      %848 = vmatpush.bf16.msra.mxu0 %v792
      %849 = vmatpush.bf16.msra.mxu0 %v791
      %850 = vmatpush.bf16.msra.mxu0 %v790
      %851 = vmatmul.bf16.gmra.mxu0 %v240
      %v852 = vpop.f32.mrf.mxu0
      %v853 = vadd.f32 %v824, %v852
      %v854 = vpop.f32.mrf.mxu0
      %v855 = vadd.f32 %v826, %v854
      %856 = vmatmul.bf16.gmra.mxu0 %v242
      %v857 = vpop.f32.mrf.mxu0
      %v858 = vadd.f32 %v829, %v857
      %v859 = vpop.f32.mrf.mxu0
      %v860 = vadd.f32 %v831, %v859
      %861 = vmatmul.bf16.gmra.mxu0 %v244
      %v862 = vpop.f32.mrf.mxu0
      %v863 = vadd.f32 %v834, %v862
      %v864 = vpop.f32.mrf.mxu0
      %v865 = vadd.f32 %v836, %v864
      %866 = vmatmul.bf16.gmra.mxu0 %v246
      %v867 = vpop.f32.mrf.mxu0
      %v868 = vadd.f32 %v839, %v867
      %v869 = vpop.f32.mrf.mxu0
      %v870 = vadd.f32 %v841, %v869
      %871 = vdwg.mxu0
      %s872 = scalar_lea.vmem %s170, 128
      %873 = vst [vmem:[%s872] sm:$0xff] %v853
      %874 = vst [vmem:[%s872 + $0x8] sm:$0xff] %v855
      %875 = vst [vmem:[%s872 + $0x10] sm:$0xff] %v858
      %876 = vst [vmem:[%s872 + $0x18] sm:$0xff] %v860
      %877 = vst [vmem:[%s872 + $0x20] sm:$0xff] %v863
      %878 = vst [vmem:[%s872 + $0x28] sm:$0xff] %v865
      %879 = vst [vmem:[%s872 + $0x30] sm:$0xff] %v868
      %880 = vst [vmem:[%s872 + $0x38] sm:$0xff] %v870
      %v881 = vadd.f32 %v853, %v855
      %v882 = vadd.f32 %v881, %v858
      %v883 = vadd.f32 %v882, %v860
      %v884 = vadd.f32 %v883, %v863
      %v885 = vadd.f32 %v884, %v865
      %v886 = vadd.f32 %v885, %v868
      %v887 = vadd.f32 %v886, %v870
      %v888 = vrot.slane %v887, 4
      %v889 = vadd.f32 %v887, %v888
      %v890 = vrot.slane %v889, 2
      %v891 = vadd.f32 %v889, %v890
      %v892 = vrot.slane %v891, 1
      %v893 = vadd.f32 %v891, %v892
      %v894 = vadd.f32 %v662, %v893
      %v895 = vmul.f32 %v853, %v853
      %v896 = vmul.f32 %v855, %v855
      %v897 = vmul.f32 %v858, %v858
      %v898 = vmul.f32 %v860, %v860
      %v899 = vmul.f32 %v863, %v863
      %v900 = vmul.f32 %v865, %v865
      %v901 = vmul.f32 %v868, %v868
      %v902 = vmul.f32 %v870, %v870
      %v903 = vadd.f32 %v895, %v896
      %v904 = vadd.f32 %v903, %v897
      %v905 = vadd.f32 %v904, %v898
      %v906 = vadd.f32 %v905, %v899
      %v907 = vadd.f32 %v906, %v900
      %v908 = vadd.f32 %v907, %v901
      %v909 = vadd.f32 %v908, %v902
      %v910 = vrot.slane %v909, 4
      %v911 = vadd.f32 %v909, %v910
      %v912 = vrot.slane %v911, 2
      %v913 = vadd.f32 %v911, %v912
      %v914 = vrot.slane %v913, 1
      %v915 = vadd.f32 %v913, %v914
      %v916 = vadd.f32 %v684, %v915
      %s917 = scalar_lea.vmem %s1, 384
      %v918 = vld [vmem:[%s917] sm:$0xf]
      %v919 = vld [vmem:[%s917 + $0x4] sm:$0xf]
      %v920 = vld [vmem:[%s917 + $0x8] sm:$0xf]
      %v921 = vld [vmem:[%s917 + $0xc] sm:$0xf]
      %v922 = vld [vmem:[%s917 + $0x10] sm:$0xf]
      %v923 = vld [vmem:[%s917 + $0x14] sm:$0xf]
      %v924 = vld [vmem:[%s917 + $0x18] sm:$0xf]
      %v925 = vld [vmem:[%s917 + $0x1c] sm:$0xf]
      %v926 = vld [vmem:[%s917 + $0x20] sm:$0xf]
      %v927 = vld [vmem:[%s917 + $0x24] sm:$0xf]
      %v928 = vld [vmem:[%s917 + $0x28] sm:$0xf]
      %v929 = vld [vmem:[%s917 + $0x2c] sm:$0xf]
      %v930 = vld [vmem:[%s917 + $0x30] sm:$0xf]
      %v931 = vld [vmem:[%s917 + $0x34] sm:$0xf]
      %v932 = vld [vmem:[%s917 + $0x38] sm:$0xf]
      %v933 = vld [vmem:[%s917 + $0x3c] sm:$0xf]
      %v934 = vld [vmem:[%s917 + $0x40] sm:$0xf]
      %v935 = vld [vmem:[%s917 + $0x44] sm:$0xf]
      %v936 = vld [vmem:[%s917 + $0x48] sm:$0xf]
      %v937 = vld [vmem:[%s917 + $0x4c] sm:$0xf]
      %v938 = vld [vmem:[%s917 + $0x50] sm:$0xf]
      %v939 = vld [vmem:[%s917 + $0x54] sm:$0xf]
      %v940 = vld [vmem:[%s917 + $0x58] sm:$0xf]
      %v941 = vld [vmem:[%s917 + $0x5c] sm:$0xf]
      %v942 = vld [vmem:[%s917 + $0x60] sm:$0xf]
      %v943 = vld [vmem:[%s917 + $0x64] sm:$0xf]
      %v944 = vld [vmem:[%s917 + $0x68] sm:$0xf]
      %v945 = vld [vmem:[%s917 + $0x6c] sm:$0xf]
      %v946 = vld [vmem:[%s917 + $0x70] sm:$0xf]
      %v947 = vld [vmem:[%s917 + $0x74] sm:$0xf]
      %v948 = vld [vmem:[%s917 + $0x78] sm:$0xf]
      %v949 = vld [vmem:[%s917 + $0x7c] sm:$0xf]
      %v982 = vunpack.c.l.b16 %v918
      %v983 = vunpack.c.l.b16 %v919
      %v984 = vunpack.c.l.b16 %v920
      %v985 = vunpack.c.l.b16 %v921
      %v986 = vunpack.c.l.b16 %v922
      %v987 = vunpack.c.l.b16 %v923
      %v988 = vunpack.c.l.b16 %v924
      %v989 = vunpack.c.l.b16 %v925
      %v990 = vunpack.c.l.b16 %v926
      %v991 = vunpack.c.l.b16 %v927
      %v992 = vunpack.c.l.b16 %v928
      %v993 = vunpack.c.l.b16 %v929
      %v994 = vunpack.c.l.b16 %v930
      %v995 = vunpack.c.l.b16 %v931
      %v996 = vunpack.c.l.b16 %v932
      %v997 = vunpack.c.l.b16 %v933
      %v998 = vunpack.c.l.b16 %v934
      %v999 = vunpack.c.l.b16 %v935
      %v1000 = vunpack.c.l.b16 %v936
      %v1001 = vunpack.c.l.b16 %v937
      %v1002 = vunpack.c.l.b16 %v938
      %v1003 = vunpack.c.l.b16 %v939
      %v1004 = vunpack.c.l.b16 %v940
      %v1005 = vunpack.c.l.b16 %v941
      %v1006 = vunpack.c.l.b16 %v942
      %v1007 = vunpack.c.l.b16 %v943
      %v1008 = vunpack.c.l.b16 %v944
      %v1009 = vunpack.c.l.b16 %v945
      %v1010 = vunpack.c.l.b16 %v946
      %v1011 = vunpack.c.l.b16 %v947
      %v1012 = vunpack.c.l.b16 %v948
      %v1013 = vunpack.c.l.b16 %v949
      %v1014 = vpack.c.b16 %v983, %v982
      %v1015 = vpack.c.b16 %v985, %v984
      %v1016 = vpack.c.b16 %v987, %v986
      %v1017 = vpack.c.b16 %v989, %v988
      %v1018 = vpack.c.b16 %v991, %v990
      %v1019 = vpack.c.b16 %v993, %v992
      %v1020 = vpack.c.b16 %v995, %v994
      %v1021 = vpack.c.b16 %v997, %v996
      %v1022 = vpack.c.b16 %v999, %v998
      %v1023 = vpack.c.b16 %v1001, %v1000
      %v1024 = vpack.c.b16 %v1003, %v1002
      %v1025 = vpack.c.b16 %v1005, %v1004
      %v1026 = vpack.c.b16 %v1007, %v1006
      %v1027 = vpack.c.b16 %v1009, %v1008
      %v1028 = vpack.c.b16 %v1011, %v1010
      %v1029 = vpack.c.b16 %v1013, %v1012
      %1046 = vmatpush.bf16.msra.mxu0 %v1021
      %1047 = vmatpush.bf16.msra.mxu0 %v1020
      %1048 = vmatpush.bf16.msra.mxu0 %v1019
      %1049 = vmatpush.bf16.msra.mxu0 %v1018
      %1050 = vmatpush.bf16.msra.mxu0 %v1017
      %1051 = vmatpush.bf16.msra.mxu0 %v1016
      %1052 = vmatpush.bf16.msra.mxu0 %v1015
      %1053 = vmatpush.bf16.msra.mxu0 %v1014
      %1054 = vmatmul.bf16.gmra.mxu0 %v239
      %v1055 = vpop.f32.mrf.mxu0
      %v1056 = vadd.f32 %v213, %v1055
      %v1057 = vpop.f32.mrf.mxu0
      %v1058 = vadd.f32 %v213, %v1057
      %1059 = vmatmul.bf16.gmra.mxu0 %v241
      %v1060 = vpop.f32.mrf.mxu0
      %v1061 = vadd.f32 %v213, %v1060
      %v1062 = vpop.f32.mrf.mxu0
      %v1063 = vadd.f32 %v213, %v1062
      %1064 = vmatmul.bf16.gmra.mxu0 %v243
      %v1065 = vpop.f32.mrf.mxu0
      %v1066 = vadd.f32 %v213, %v1065
      %v1067 = vpop.f32.mrf.mxu0
      %v1068 = vadd.f32 %v213, %v1067
      %1069 = vmatmul.bf16.gmra.mxu0 %v245
      %v1070 = vpop.f32.mrf.mxu0
      %v1071 = vadd.f32 %v213, %v1070
      %v1072 = vpop.f32.mrf.mxu0
      %v1073 = vadd.f32 %v213, %v1072
      %1074 = vdwg.mxu0
      %1075 = vmatpush.bf16.msra.mxu0 %v1029
      %1076 = vmatpush.bf16.msra.mxu0 %v1028
      %1077 = vmatpush.bf16.msra.mxu0 %v1027
      %1078 = vmatpush.bf16.msra.mxu0 %v1026
      %1079 = vmatpush.bf16.msra.mxu0 %v1025
      %1080 = vmatpush.bf16.msra.mxu0 %v1024
      %1081 = vmatpush.bf16.msra.mxu0 %v1023
      %1082 = vmatpush.bf16.msra.mxu0 %v1022
      %1083 = vmatmul.bf16.gmra.mxu0 %v240
      %v1084 = vpop.f32.mrf.mxu0
      %v1085 = vadd.f32 %v1056, %v1084
      %v1086 = vpop.f32.mrf.mxu0
      %v1087 = vadd.f32 %v1058, %v1086
      %1088 = vmatmul.bf16.gmra.mxu0 %v242
      %v1089 = vpop.f32.mrf.mxu0
      %v1090 = vadd.f32 %v1061, %v1089
      %v1091 = vpop.f32.mrf.mxu0
      %v1092 = vadd.f32 %v1063, %v1091
      %1093 = vmatmul.bf16.gmra.mxu0 %v244
      %v1094 = vpop.f32.mrf.mxu0
      %v1095 = vadd.f32 %v1066, %v1094
      %v1096 = vpop.f32.mrf.mxu0
      %v1097 = vadd.f32 %v1068, %v1096
      %1098 = vmatmul.bf16.gmra.mxu0 %v246
      %v1099 = vpop.f32.mrf.mxu0
      %v1100 = vadd.f32 %v1071, %v1099
      %v1101 = vpop.f32.mrf.mxu0
      %v1102 = vadd.f32 %v1073, %v1101
      %1103 = vdwg.mxu0
      %s1104 = scalar_lea.vmem %s170, 192
      %1105 = vst [vmem:[%s1104] sm:$0xff] %v1085
      %1106 = vst [vmem:[%s1104 + $0x8] sm:$0xff] %v1087
      %1107 = vst [vmem:[%s1104 + $0x10] sm:$0xff] %v1090
      %1108 = vst [vmem:[%s1104 + $0x18] sm:$0xff] %v1092
      %1109 = vst [vmem:[%s1104 + $0x20] sm:$0xff] %v1095
      %1110 = vst [vmem:[%s1104 + $0x28] sm:$0xff] %v1097
      %1111 = vst [vmem:[%s1104 + $0x30] sm:$0xff] %v1100
      %1112 = vst [vmem:[%s1104 + $0x38] sm:$0xff] %v1102
      %v1113 = vadd.f32 %v1085, %v1087
      %v1114 = vadd.f32 %v1113, %v1090
      %v1115 = vadd.f32 %v1114, %v1092
      %v1116 = vadd.f32 %v1115, %v1095
      %v1117 = vadd.f32 %v1116, %v1097
      %v1118 = vadd.f32 %v1117, %v1100
      %v1119 = vadd.f32 %v1118, %v1102
      %v1120 = vrot.slane %v1119, 4
      %v1121 = vadd.f32 %v1119, %v1120
      %v1122 = vrot.slane %v1121, 2
      %v1123 = vadd.f32 %v1121, %v1122
      %v1124 = vrot.slane %v1123, 1
      %v1125 = vadd.f32 %v1123, %v1124
      %v1126 = vadd.f32 %v894, %v1125
      %v1127 = vmul.f32 %v1085, %v1085
      %v1128 = vmul.f32 %v1087, %v1087
      %v1129 = vmul.f32 %v1090, %v1090
      %v1130 = vmul.f32 %v1092, %v1092
      %v1131 = vmul.f32 %v1095, %v1095
      %v1132 = vmul.f32 %v1097, %v1097
      %v1133 = vmul.f32 %v1100, %v1100
      %v1134 = vmul.f32 %v1102, %v1102
      %v1135 = vadd.f32 %v1127, %v1128
      %v1136 = vadd.f32 %v1135, %v1129
      %v1137 = vadd.f32 %v1136, %v1130
      %v1138 = vadd.f32 %v1137, %v1131
      %v1139 = vadd.f32 %v1138, %v1132
      %v1140 = vadd.f32 %v1139, %v1133
      %v1141 = vadd.f32 %v1140, %v1134
      %v1142 = vrot.slane %v1141, 4
      %v1143 = vadd.f32 %v1141, %v1142
      %v1144 = vrot.slane %v1143, 2
      %v1145 = vadd.f32 %v1143, %v1144
      %v1146 = vrot.slane %v1145, 1
      %v1147 = vadd.f32 %v1145, %v1146
      %v1148 = vadd.f32 %v916, %v1147
      %v1149 = vmul.f32 %v1126, 0.00390625
      %v1150 = vmul.f32 %v1148, 0.00390625
      %v1151 = vmul.f32 %v1149, %v1149
      %v1152 = vsub.f32 %v1150, %v1151
      %v1153 = vmax.f32 %v1152, 0.0
      %v1154 = vadd.f32 %v1153, 1e-05
      %v1155 = vrsqrt.pop %v1154
      %v1156 = vmul.f32 %v1155, %v1154
      %v1157 = vmul.f32 %v1156, %v1155
      %v1158 = vmul.f32 0.5, %v1157
      %v1159 = vsub.f32 1.5, %v1158
      %v1160 = vmul.f32 %v1155, %v1159
      %vm1161 = vweird.f32 %v1154
      %vm1162 = vweird.f32 %v1155
      %vm1163 = vmor %vm1161, %vm1162
      %v1164 = vsel %vm1163, %v1155, %v1160
      %v1165 = vld [vmem:[%s170] sm:$0xff]
      %v1166 = vld [vmem:[%s170 + $0x8] sm:$0xff]
      %v1167 = vld [vmem:[%s170 + $0x10] sm:$0xff]
      %v1168 = vld [vmem:[%s170 + $0x18] sm:$0xff]
      %v1169 = vld [vmem:[%s170 + $0x20] sm:$0xff]
      %v1170 = vld [vmem:[%s170 + $0x28] sm:$0xff]
      %v1171 = vld [vmem:[%s170 + $0x30] sm:$0xff]
      %v1172 = vld [vmem:[%s170 + $0x38] sm:$0xff]
      %v1173 = vsub.f32 %v1165, %v1149
      %v1174 = vsub.f32 %v1166, %v1149
      %v1175 = vsub.f32 %v1167, %v1149
      %v1176 = vsub.f32 %v1168, %v1149
      %v1177 = vsub.f32 %v1169, %v1149
      %v1178 = vsub.f32 %v1170, %v1149
      %v1179 = vsub.f32 %v1171, %v1149
      %v1180 = vsub.f32 %v1172, %v1149
      %v1181 = vmul.f32 %v1173, %v1164
      %v1182 = vmul.f32 %v1174, %v1164
      %v1183 = vmul.f32 %v1175, %v1164
      %v1184 = vmul.f32 %v1176, %v1164
      %v1185 = vmul.f32 %v1177, %v1164
      %v1186 = vmul.f32 %v1178, %v1164
      %v1187 = vmul.f32 %v1179, %v1164
      %v1188 = vmul.f32 %v1180, %v1164
      %v1189 = vmax.f32 %v1181, 0.0
      %v1190 = vmax.f32 %v1182, 0.0
      %v1191 = vmax.f32 %v1183, 0.0
      %v1192 = vmax.f32 %v1184, 0.0
      %v1193 = vmax.f32 %v1185, 0.0
      %v1194 = vmax.f32 %v1186, 0.0
      %v1195 = vmax.f32 %v1187, 0.0
      %v1196 = vmax.f32 %v1188, 0.0
      %1197 = vst [vmem:[%s170] sm:$0xff] %v1189
      %1198 = vst [vmem:[%s170 + $0x8] sm:$0xff] %v1190
      %1199 = vst [vmem:[%s170 + $0x10] sm:$0xff] %v1191
      %1200 = vst [vmem:[%s170 + $0x18] sm:$0xff] %v1192
      %1201 = vst [vmem:[%s170 + $0x20] sm:$0xff] %v1193
      %1202 = vst [vmem:[%s170 + $0x28] sm:$0xff] %v1194
      %1203 = vst [vmem:[%s170 + $0x30] sm:$0xff] %v1195
      %1204 = vst [vmem:[%s170 + $0x38] sm:$0xff] %v1196
      %v1205 = vld [vmem:[%s640] sm:$0xff]
      %v1206 = vld [vmem:[%s640 + $0x8] sm:$0xff]
      %v1207 = vld [vmem:[%s640 + $0x10] sm:$0xff]
      %v1208 = vld [vmem:[%s640 + $0x18] sm:$0xff]
      %v1209 = vld [vmem:[%s640 + $0x20] sm:$0xff]
      %v1210 = vld [vmem:[%s640 + $0x28] sm:$0xff]
      %v1211 = vld [vmem:[%s640 + $0x30] sm:$0xff]
      %v1212 = vld [vmem:[%s640 + $0x38] sm:$0xff]
      %v1213 = vsub.f32 %v1205, %v1149
      %v1214 = vsub.f32 %v1206, %v1149
      %v1215 = vsub.f32 %v1207, %v1149
      %v1216 = vsub.f32 %v1208, %v1149
      %v1217 = vsub.f32 %v1209, %v1149
      %v1218 = vsub.f32 %v1210, %v1149
      %v1219 = vsub.f32 %v1211, %v1149
      %v1220 = vsub.f32 %v1212, %v1149
      %v1221 = vmul.f32 %v1213, %v1164
      %v1222 = vmul.f32 %v1214, %v1164
      %v1223 = vmul.f32 %v1215, %v1164
      %v1224 = vmul.f32 %v1216, %v1164
      %v1225 = vmul.f32 %v1217, %v1164
      %v1226 = vmul.f32 %v1218, %v1164
      %v1227 = vmul.f32 %v1219, %v1164
      %v1228 = vmul.f32 %v1220, %v1164
      %v1229 = vmax.f32 %v1221, 0.0
      %v1230 = vmax.f32 %v1222, 0.0
      %v1231 = vmax.f32 %v1223, 0.0
      %v1232 = vmax.f32 %v1224, 0.0
      %v1233 = vmax.f32 %v1225, 0.0
      %v1234 = vmax.f32 %v1226, 0.0
      %v1235 = vmax.f32 %v1227, 0.0
      %v1236 = vmax.f32 %v1228, 0.0
      %1237 = vst [vmem:[%s640] sm:$0xff] %v1229
      %1238 = vst [vmem:[%s640 + $0x8] sm:$0xff] %v1230
      %1239 = vst [vmem:[%s640 + $0x10] sm:$0xff] %v1231
      %1240 = vst [vmem:[%s640 + $0x18] sm:$0xff] %v1232
      %1241 = vst [vmem:[%s640 + $0x20] sm:$0xff] %v1233
      %1242 = vst [vmem:[%s640 + $0x28] sm:$0xff] %v1234
      %1243 = vst [vmem:[%s640 + $0x30] sm:$0xff] %v1235
      %1244 = vst [vmem:[%s640 + $0x38] sm:$0xff] %v1236
      %v1245 = vld [vmem:[%s872] sm:$0xff]
      %v1246 = vld [vmem:[%s872 + $0x8] sm:$0xff]
      %v1247 = vld [vmem:[%s872 + $0x10] sm:$0xff]
      %v1248 = vld [vmem:[%s872 + $0x18] sm:$0xff]
      %v1249 = vld [vmem:[%s872 + $0x20] sm:$0xff]
      %v1250 = vld [vmem:[%s872 + $0x28] sm:$0xff]
      %v1251 = vld [vmem:[%s872 + $0x30] sm:$0xff]
      %v1252 = vld [vmem:[%s872 + $0x38] sm:$0xff]
      %v1253 = vsub.f32 %v1245, %v1149
      %v1254 = vsub.f32 %v1246, %v1149
      %v1255 = vsub.f32 %v1247, %v1149
      %v1256 = vsub.f32 %v1248, %v1149
      %v1257 = vsub.f32 %v1249, %v1149
      %v1258 = vsub.f32 %v1250, %v1149
      %v1259 = vsub.f32 %v1251, %v1149
      %v1260 = vsub.f32 %v1252, %v1149
      %v1261 = vmul.f32 %v1253, %v1164
      %v1262 = vmul.f32 %v1254, %v1164
      %v1263 = vmul.f32 %v1255, %v1164
      %v1264 = vmul.f32 %v1256, %v1164
      %v1265 = vmul.f32 %v1257, %v1164
      %v1266 = vmul.f32 %v1258, %v1164
      %v1267 = vmul.f32 %v1259, %v1164
      %v1268 = vmul.f32 %v1260, %v1164
      %v1269 = vmax.f32 %v1261, 0.0
      %v1270 = vmax.f32 %v1262, 0.0
      %v1271 = vmax.f32 %v1263, 0.0
      %v1272 = vmax.f32 %v1264, 0.0
      %v1273 = vmax.f32 %v1265, 0.0
      %v1274 = vmax.f32 %v1266, 0.0
      %v1275 = vmax.f32 %v1267, 0.0
      %v1276 = vmax.f32 %v1268, 0.0
      %1277 = vst [vmem:[%s872] sm:$0xff] %v1269
      %1278 = vst [vmem:[%s872 + $0x8] sm:$0xff] %v1270
      %1279 = vst [vmem:[%s872 + $0x10] sm:$0xff] %v1271
      %1280 = vst [vmem:[%s872 + $0x18] sm:$0xff] %v1272
      %1281 = vst [vmem:[%s872 + $0x20] sm:$0xff] %v1273
      %1282 = vst [vmem:[%s872 + $0x28] sm:$0xff] %v1274
      %1283 = vst [vmem:[%s872 + $0x30] sm:$0xff] %v1275
      %1284 = vst [vmem:[%s872 + $0x38] sm:$0xff] %v1276
      %v1285 = vld [vmem:[%s1104] sm:$0xff]
      %v1286 = vld [vmem:[%s1104 + $0x8] sm:$0xff]
      %v1287 = vld [vmem:[%s1104 + $0x10] sm:$0xff]
      %v1288 = vld [vmem:[%s1104 + $0x18] sm:$0xff]
      %v1289 = vld [vmem:[%s1104 + $0x20] sm:$0xff]
      %v1290 = vld [vmem:[%s1104 + $0x28] sm:$0xff]
      %v1291 = vld [vmem:[%s1104 + $0x30] sm:$0xff]
      %v1292 = vld [vmem:[%s1104 + $0x38] sm:$0xff]
      %v1293 = vsub.f32 %v1285, %v1149
      %v1294 = vsub.f32 %v1286, %v1149
      %v1295 = vsub.f32 %v1287, %v1149
      %v1296 = vsub.f32 %v1288, %v1149
      %v1297 = vsub.f32 %v1289, %v1149
      %v1298 = vsub.f32 %v1290, %v1149
      %v1299 = vsub.f32 %v1291, %v1149
      %v1300 = vsub.f32 %v1292, %v1149
      %v1301 = vmul.f32 %v1293, %v1164
      %v1302 = vmul.f32 %v1294, %v1164
      %v1303 = vmul.f32 %v1295, %v1164
      %v1304 = vmul.f32 %v1296, %v1164
      %v1305 = vmul.f32 %v1297, %v1164
      %v1306 = vmul.f32 %v1298, %v1164
      %v1307 = vmul.f32 %v1299, %v1164
      %v1308 = vmul.f32 %v1300, %v1164
      %v1309 = vmax.f32 %v1301, 0.0
      %v1310 = vmax.f32 %v1302, 0.0
      %v1311 = vmax.f32 %v1303, 0.0
      %v1312 = vmax.f32 %v1304, 0.0
      %v1313 = vmax.f32 %v1305, 0.0
      %v1314 = vmax.f32 %v1306, 0.0
      %v1315 = vmax.f32 %v1307, 0.0
      %v1316 = vmax.f32 %v1308, 0.0
      %1317 = vst [vmem:[%s1104] sm:$0xff] %v1309
      %1318 = vst [vmem:[%s1104 + $0x8] sm:$0xff] %v1310
      %1319 = vst [vmem:[%s1104 + $0x10] sm:$0xff] %v1311
      %1320 = vst [vmem:[%s1104 + $0x18] sm:$0xff] %v1312
      %1321 = vst [vmem:[%s1104 + $0x20] sm:$0xff] %v1313
      %1322 = vst [vmem:[%s1104 + $0x28] sm:$0xff] %v1314
      %1323 = vst [vmem:[%s1104 + $0x30] sm:$0xff] %v1315
      %1324 = vst [vmem:[%s1104 + $0x38] sm:$0xff] %v1316
      %p1325 = scmp.lt.s32.totalorder %s14, 1
      %s1326 = scalar_select %p1325, %s14, 1
      %s1327 = smul.addr %s1326, 32
      %s1328 = smul.addr %s1327, 8
      %s1329 = scalar_lea.vmem %s3, %s1328
      // Predicated region
      $region33: #{generator_forward.18} parent=31 // pred_check
        %p1330 = pneg %p100
      $region34: #{generator_forward.18} parent=31 // pred_check_branch
        %1332 = sbr.rel (%p1330) target = $region36
      $region35: #{generator_forward.18} parent=31 // pred_region
        _
      $region36: #{generator_forward.18} parent=31 // pred_fallthru
        _
    $region32: #{generator_forward.18} parent=5 // pred_fallthru
      _
    %p1333 = scmp.le.s32.totalorder 2, %s9
    // Predicated region
    $region37: #{generator_forward.18} parent=5 // pred_check
      %p1334 = pneg %p1333
    $region38: #{generator_forward.18} parent=5 // pred_check_branch
      %1336 = sbr.rel (%p1334) target = $region40
    $region39: #{generator_forward.18} parent=5 // pred_region
      %s1337 = ssub.s32 %s9, 2
      // Predicated region
      $region41: #{generator_forward.18} parent=39 // pred_check
        %p1338 = pneg %p106
      $region42: #{generator_forward.18} parent=39 // pred_check_branch
        %1340 = sbr.rel (%p1338) target = $region44
      $region43: #{generator_forward.18} parent=39 // pred_region
        %p1341 = scmp.lt.s32.totalorder %s15, 1
        %s1342 = scalar_select %p1341, %s15, 1
        %s1343 = smul.addr %s1342, 32
        %s1344 = smul.addr %s1343, 8
        %s1345 = scalar_lea.vmem %s3, %s1344
      $region44: #{generator_forward.18} parent=39 // pred_fallthru
        _
    $region40: #{generator_forward.18} parent=5 // pred_fallthru
      _
  $region6: #{generator_forward.18} parent=0 // loop_footer
    %s13 = sadd.s32 1, %s9
  $region7: #{generator_forward.18} parent=0 // loop_footer_branch
    %8 = sbr.rel target = $region3
  $region8: #{generator_forward.18} parent=0 // loop_exit
    _

// kernel: generator_forward.19
$region0: #{generator_forward.19}
  #allocation0 [shape = 'u32[]', space=smem, size = 0x4, offset = 0x4, fixed_abs, tag = 'smem constant byte address 0x4 - core index']
  #allocation1 [shape = 'u32[72,128]{1,0:T(1,128)}', space=vmem, size = 0x9000, scoped, tag = 'internal scratch']
  %s0 = inlined_call_operand.vmem [shape: bf16[2,256,1664], index: 0, kind: input, shape index: {}]
  %s1 = inlined_call_operand.vmem [shape: bf16[1664,128], index: 1, kind: input, shape index: {}]
  %s2 = inlined_call_operand.vmem [shape: f32[1,128], index: 2, kind: input, shape index: {}]
  %s3 = inlined_call_operand.vmem [shape: f32[2,256,128], index: 3, kind: output, shape index: {}]
  %s4 = sld [smem:[#allocation0]]
  $region45: #{generator_forward.19} parent=0
    _
  %s6 = ssub.s32 1, %s4
  %s7 = scalar_select 0, %s6, %s4
  loop: start=0, step=1, limit=4
  $region2: #{generator_forward.19} parent=0 // loop_pre_header
    _
  $region3: #{generator_forward.19} parent=0 // loop_header
    %s9 = sphi 0, %s13
    %p10 = scmp.ge.s32.totalorder %s9, 4
    %s19 = sphi 0, %s21
    %s22 = sphi 0, %s19
    %s23 = sphi 0, %s22
    %s39 = sphi 0, %s23
    %s43 = sphi 0, %s43
    %s45 = sphi 0, %s43
    %s46 = sphi 0, %s45
    %s60 = sphi 0, %s46
    %s64 = sphi 0, %s64
    %s66 = sphi 0, %s64
    %s67 = sphi 0, %s66
    %s81 = sphi 0, %s67
    %s87 = sphi 0, %s89
    %s90 = sphi 0, %s87
    %s91 = sphi 0, %s90
    %s107 = sphi 0, %s91
  $region4: #{generator_forward.19} parent=0 // loop_header_branch
    %12 = sbr.rel (%p10) target = $region8
  $region5: #{generator_forward.19} parent=0 // loop_body
    %s14 = ssub.s32 %s9, 1
    %s15 = ssub.s32 %s9, 2
    %s16 = sadd.s32 %s9, 1
    %s17 = ssub.s32 %s9, %s16
    %p18 = scmp.eq.s32.totalorder %s17, 0
    %s20 = sadd.s32 %s19, 1
    %s21 = scalar_select %p18, %s19, %s20
    %p24 = pneg %p18
    %p25 = scmp.eq.s32.totalorder %s9, 1
    %p26 = por %p24, %p25
    %p27 = scmp.ne.s32.totalorder %s19, %s22
    %p28 = scmp.eq.s32.totalorder %s9, 0
    %p29 = por %p27, %p28
    %p30 = scmp.ne.s32.totalorder %s19, %s22
    %p31 = scmp.eq.s32.totalorder %s14, 1
    %p32 = por %p30, %p31
    %p33 = scmp.ne.s32.totalorder %s22, %s23
    %p34 = scmp.eq.s32.totalorder %s14, 0
    %p35 = por %p33, %p34
    %p36 = scmp.ne.s32.totalorder %s22, %s23
    %p37 = scmp.eq.s32.totalorder %s15, 1
    %p38 = por %p36, %p37
    %p40 = scmp.ne.s32.totalorder %s23, %s39
    %p41 = scmp.eq.s32.totalorder %s15, 0
    %p42 = por %p40, %p41
    %s44 = sadd.s32 %s43, 1
    %p47 = scmp.eq.s32.totalorder %s9, 1
    %p48 = scmp.ne.s32.totalorder %s43, %s45
    %p49 = scmp.eq.s32.totalorder %s9, 0
    %p50 = por %p48, %p49
    %p51 = scmp.ne.s32.totalorder %s43, %s45
    %p52 = scmp.eq.s32.totalorder %s14, 1
    %p53 = por %p51, %p52
    %p54 = scmp.ne.s32.totalorder %s45, %s46
    %p55 = scmp.eq.s32.totalorder %s14, 0
    %p56 = por %p54, %p55
    %p57 = scmp.ne.s32.totalorder %s45, %s46
    %p58 = scmp.eq.s32.totalorder %s15, 1
    %p59 = por %p57, %p58
    %p61 = scmp.ne.s32.totalorder %s46, %s60
    %p62 = scmp.eq.s32.totalorder %s15, 0
    %p63 = por %p61, %p62
    %s65 = sadd.s32 %s64, 1
    %p68 = scmp.eq.s32.totalorder %s9, 1
    %p69 = scmp.ne.s32.totalorder %s64, %s66
    %p70 = scmp.eq.s32.totalorder %s9, 0
    %p71 = por %p69, %p70
    %p72 = scmp.ne.s32.totalorder %s64, %s66
    %p73 = scmp.eq.s32.totalorder %s14, 1
    %p74 = por %p72, %p73
    %p75 = scmp.ne.s32.totalorder %s66, %s67
    %p76 = scmp.eq.s32.totalorder %s14, 0
    %p77 = por %p75, %p76
    %p78 = scmp.ne.s32.totalorder %s66, %s67
    %p79 = scmp.eq.s32.totalorder %s15, 1
    %p80 = por %p78, %p79
    %p82 = scmp.ne.s32.totalorder %s67, %s81
    %p83 = scmp.eq.s32.totalorder %s15, 0
    %p84 = por %p82, %p83
    %s85 = ssub.s32 %s9, %s16
    %p86 = scmp.eq.s32.totalorder %s85, 0
    %s88 = sadd.s32 %s87, 1
    %s89 = scalar_select %p86, %s87, %s88
    %p92 = pneg %p86
    %p93 = scmp.eq.s32.totalorder %s9, 1
    %p94 = por %p92, %p93
    %p95 = scmp.ne.s32.totalorder %s87, %s90
    %p96 = scmp.eq.s32.totalorder %s9, 0
    %p97 = por %p95, %p96
    %p98 = scmp.ne.s32.totalorder %s87, %s90
    %p99 = scmp.eq.s32.totalorder %s14, 1
    %p100 = por %p98, %p99
    %p101 = scmp.ne.s32.totalorder %s90, %s91
    %p102 = scmp.eq.s32.totalorder %s14, 0
    %p103 = por %p101, %p102
    %p104 = scmp.ne.s32.totalorder %s90, %s91
    %p105 = scmp.eq.s32.totalorder %s15, 1
    %p106 = por %p104, %p105
    %p108 = scmp.ne.s32.totalorder %s91, %s107
    %p109 = scmp.eq.s32.totalorder %s15, 0
    %p110 = por %p108, %p109
    %p111 = scmp.le.s32.totalorder 1, %s9
    %p112 = scmp.lt.s32.totalorder %s9, 3
    %p113 = pnand %p111, %p112
    %p114 = pneg %p113
    // Predicated region
    $region9: #{generator_forward.19} parent=5 // pred_check
      _
    $region10: #{generator_forward.19} parent=5 // pred_check_branch
      %116 = sbr.rel (%p113) target = $region12
    $region11: #{generator_forward.19} parent=5 // pred_region
      %s117 = ssub.s32 %s9, 1
      // Predicated region
      $region13: #{generator_forward.19} parent=11 // pred_check
        %p118 = pneg %p56
      $region14: #{generator_forward.19} parent=11 // pred_check_branch
        %120 = sbr.rel (%p118) target = $region16
      $region15: #{generator_forward.19} parent=11 // pred_region
        _
      $region16: #{generator_forward.19} parent=11 // pred_fallthru
        _
      // Predicated region
      $region17: #{generator_forward.19} parent=11 // pred_check
        %p121 = pneg %p77
      $region18: #{generator_forward.19} parent=11 // pred_check_branch
        %123 = sbr.rel (%p121) target = $region20
      $region19: #{generator_forward.19} parent=11 // pred_region
        _
      $region20: #{generator_forward.19} parent=11 // pred_fallthru
        _
    $region12: #{generator_forward.19} parent=5 // pred_fallthru
      _
    %p124 = scmp.lt.s32.totalorder %s9, 2
    // Predicated region
    $region21: #{generator_forward.19} parent=5 // pred_check
      %p125 = pneg %p124
    $region22: #{generator_forward.19} parent=5 // pred_check_branch
      %127 = sbr.rel (%p125) target = $region24
    $region23: #{generator_forward.19} parent=5 // pred_region
      // Predicated region
      $region25: #{generator_forward.19} parent=23 // pred_check
        %p128 = pneg %p29
      $region26: #{generator_forward.19} parent=23 // pred_check_branch
        %130 = sbr.rel (%p128) target = $region28
      $region27: #{generator_forward.19} parent=23 // pred_region
        %p131 = scmp.lt.s32.totalorder %s9, 1
        %s132 = scalar_select %p131, %s9, 1
        %s133 = smul.addr %s132, 416
        %s134 = smul.addr %s133, 4
        %s135 = scalar_lea.vmem %s0, %s134
      $region28: #{generator_forward.19} parent=23 // pred_fallthru
        _
    $region24: #{generator_forward.19} parent=5 // pred_fallthru
      _
    %p136 = scmp.le.s32.totalorder 1, %s9
    %p137 = scmp.lt.s32.totalorder %s9, 3
    %p138 = pnand %p136, %p137
    %p139 = pneg %p138
    // Predicated region
    $region29: #{generator_forward.19} parent=5 // pred_check
      _
    $region30: #{generator_forward.19} parent=5 // pred_check_branch
      %141 = sbr.rel (%p138) target = $region32
    $region31: #{generator_forward.19} parent=5 // pred_region
      %s142 = ssub.s32 %s9, 1
      %p143 = scmp.lt.s32.totalorder %s14, 1
      %s144 = scalar_select %p143, %s14, 1
      %s145 = smul.addr %s144, 416
      %s146 = smul.addr %s145, 4
      %s147 = scalar_lea.vmem %s0, %s146
      %p148 = pneg %p35
      %p149 = pneg %p32
      %p150 = pneg %p56
      %p151 = pneg %p53
      %p152 = pneg %p77
      %p153 = pneg %p74
      %p154 = pneg %p103
      %p155 = pneg %p100
      %p156 = scmp.lt.s32.totalorder %s14, 1
      %s157 = scalar_select %p156, %s14, 1
      %s158 = smul.addr %s157, 32
      %s159 = smul.addr %s158, 8
      %s160 = scalar_lea.vmem %s3, %s159
      %p161 = scmp.lt.s32.totalorder %s14, 1
      %s162 = scalar_select %p161, %s14, 1
      %s163 = smul.addr %s162, 416
      %s164 = smul.addr %s163, 4
      %s165 = scalar_lea.vmem %s0, %s164
      %p166 = scmp.lt.s32.totalorder %s14, 1
      %s167 = scalar_select %p166, %s14, 1
      %s168 = smul.addr %s167, 32
      %s169 = smul.addr %s168, 8
      %s170 = scalar_lea.vmem %s3, %s169
      %v171 = vld [vmem:[%s165] sm:$0xff]
      %v172 = vld [vmem:[%s165 + $0x8] sm:$0xff]
      %v173 = vld [vmem:[%s165 + $0x10] sm:$0xff]
      %v174 = vld [vmem:[%s165 + $0x18] sm:$0xff]
      %v175 = vld [vmem:[%s165 + $0x20] sm:$0xff]
      %v176 = vld [vmem:[%s165 + $0x28] sm:$0xff]
      %v177 = vld [vmem:[%s165 + $0x30] sm:$0xf]
      %v178 = vld [vmem:[%s165 + $0x34] sm:$0xff]
      %v179 = vld [vmem:[%s165 + $0x3c] sm:$0xff]
      %v180 = vld [vmem:[%s165 + $0x44] sm:$0xff]
      %v181 = vld [vmem:[%s165 + $0x4c] sm:$0xff]
      %v182 = vld [vmem:[%s165 + $0x54] sm:$0xff]
      %v183 = vld [vmem:[%s165 + $0x5c] sm:$0xff]
      %v184 = vld [vmem:[%s165 + $0x64] sm:$0xf]
      %v185 = vld [vmem:[%s165 + $0x68] sm:$0xff]
      %v186 = vld [vmem:[%s165 + $0x70] sm:$0xff]
      %v187 = vld [vmem:[%s165 + $0x78] sm:$0xff]
      %v188 = vld [vmem:[%s165 + $0x80] sm:$0xff]
      %v189 = vld [vmem:[%s165 + $0x88] sm:$0xff]
      %v190 = vld [vmem:[%s165 + $0x90] sm:$0xff]
      %v191 = vld [vmem:[%s165 + $0x98] sm:$0xf]
      %v192 = vld [vmem:[%s165 + $0x9c] sm:$0xff]
      %v193 = vld [vmem:[%s165 + $0xa4] sm:$0xff]
      %v194 = vld [vmem:[%s165 + $0xac] sm:$0xff]
      %v195 = vld [vmem:[%s165 + $0xb4] sm:$0xff]
      %v196 = vld [vmem:[%s165 + $0xbc] sm:$0xff]
      %v197 = vld [vmem:[%s165 + $0xc4] sm:$0xff]
      %v198 = vld [vmem:[%s165 + $0xcc] sm:$0xf]
      %v199 = vld [vmem:[%s165 + $0xd0] sm:$0xff]
      %v200 = vld [vmem:[%s165 + $0xd8] sm:$0xff]
      %v201 = vld [vmem:[%s165 + $0xe0] sm:$0xff]
      %v202 = vld [vmem:[%s165 + $0xe8] sm:$0xff]
      %v203 = vld [vmem:[%s165 + $0xf0] sm:$0xff]
      %v204 = vld [vmem:[%s165 + $0xf8] sm:$0xff]
      %v205 = vld [vmem:[%s165 + $0x100] sm:$0xf]
      %v206 = vld [vmem:[%s165 + $0x104] sm:$0xff]
      %v207 = vld [vmem:[%s165 + $0x10c] sm:$0xff]
      %v208 = vld [vmem:[%s165 + $0x114] sm:$0xff]
      %v209 = vld [vmem:[%s165 + $0x11c] sm:$0xff]
      %v210 = vld [vmem:[%s165 + $0x124] sm:$0xff]
      %v211 = vld [vmem:[%s165 + $0x12c] sm:$0xff]
      %v212 = vld [vmem:[%s165 + $0x134] sm:$0xf]
      %v213 = vld [vmem:[%s165 + $0x138] sm:$0xff]
      %v214 = vld [vmem:[%s165 + $0x140] sm:$0xff]
      %v215 = vld [vmem:[%s165 + $0x148] sm:$0xff]
      %v216 = vld [vmem:[%s165 + $0x150] sm:$0xff]
      %v217 = vld [vmem:[%s165 + $0x158] sm:$0xff]
      %v218 = vld [vmem:[%s165 + $0x160] sm:$0xff]
      %v219 = vld [vmem:[%s165 + $0x168] sm:$0xf]
      %v220 = vld [vmem:[%s165 + $0x16c] sm:$0xff]
      %v221 = vld [vmem:[%s165 + $0x174] sm:$0xff]
      %v222 = vld [vmem:[%s165 + $0x17c] sm:$0xff]
      %v223 = vld [vmem:[%s165 + $0x184] sm:$0xff]
      %v224 = vld [vmem:[%s165 + $0x18c] sm:$0xff]
      %v225 = vld [vmem:[%s165 + $0x194] sm:$0xff]
      %v226 = vld [vmem:[%s165 + $0x19c] sm:$0xf]
      %v227 = vld [vmem:[%s165 + $0x1a0] sm:$0xff]
      %v228 = vld [vmem:[%s165 + $0x1a8] sm:$0xff]
      %v229 = vld [vmem:[%s165 + $0x1b0] sm:$0xff]
      %v230 = vld [vmem:[%s165 + $0x1b8] sm:$0xff]
      %v231 = vld [vmem:[%s165 + $0x1c0] sm:$0xff]
      %v232 = vld [vmem:[%s165 + $0x1c8] sm:$0xff]
      %v233 = vld [vmem:[%s165 + $0x1d0] sm:$0xf]
      %v234 = vld [vmem:[%s165 + $0x1d4] sm:$0xff]
      %v235 = vld [vmem:[%s165 + $0x1dc] sm:$0xff]
      %v236 = vld [vmem:[%s165 + $0x1e4] sm:$0xff]
      %v237 = vld [vmem:[%s165 + $0x1ec] sm:$0xff]
      %v238 = vld [vmem:[%s165 + $0x1f4] sm:$0xff]
      %v239 = vld [vmem:[%s165 + $0x1fc] sm:$0xff]
      %v240 = vld [vmem:[%s165 + $0x204] sm:$0xf]
      %v241 = vld [vmem:[%s165 + $0x208] sm:$0xff]
      %v242 = vld [vmem:[%s165 + $0x210] sm:$0xff]
      %v243 = vld [vmem:[%s165 + $0x218] sm:$0xff]
      %v244 = vld [vmem:[%s165 + $0x220] sm:$0xff]
      %v245 = vld [vmem:[%s165 + $0x228] sm:$0xff]
      %v246 = vld [vmem:[%s165 + $0x230] sm:$0xff]
      %v247 = vld [vmem:[%s165 + $0x238] sm:$0xf]
      %v248 = vld [vmem:[%s165 + $0x23c] sm:$0xff]
      %v249 = vld [vmem:[%s165 + $0x244] sm:$0xff]
      %v250 = vld [vmem:[%s165 + $0x24c] sm:$0xff]
      %v251 = vld [vmem:[%s165 + $0x254] sm:$0xff]
      %v252 = vld [vmem:[%s165 + $0x25c] sm:$0xff]
      %v253 = vld [vmem:[%s165 + $0x264] sm:$0xff]
      %v254 = vld [vmem:[%s165 + $0x26c] sm:$0xf]
      %v255 = vld [vmem:[%s165 + $0x270] sm:$0xff]
      %v256 = vld [vmem:[%s165 + $0x278] sm:$0xff]
      %v257 = vld [vmem:[%s165 + $0x280] sm:$0xff]
      %v258 = vld [vmem:[%s165 + $0x288] sm:$0xff]
      %v259 = vld [vmem:[%s165 + $0x290] sm:$0xff]
      %v260 = vld [vmem:[%s165 + $0x298] sm:$0xff]
      %v261 = vld [vmem:[%s165 + $0x2a0] sm:$0xf]
      %v262 = vld [vmem:[%s165 + $0x2a4] sm:$0xff]
      %v263 = vld [vmem:[%s165 + $0x2ac] sm:$0xff]
      %v264 = vld [vmem:[%s165 + $0x2b4] sm:$0xff]
      %v265 = vld [vmem:[%s165 + $0x2bc] sm:$0xff]
      %v266 = vld [vmem:[%s165 + $0x2c4] sm:$0xff]
      %v267 = vld [vmem:[%s165 + $0x2cc] sm:$0xff]
      %v268 = vld [vmem:[%s165 + $0x2d4] sm:$0xf]
      %v269 = vld [vmem:[%s165 + $0x2d8] sm:$0xff]
      %v270 = vld [vmem:[%s165 + $0x2e0] sm:$0xff]
      %v271 = vld [vmem:[%s165 + $0x2e8] sm:$0xff]
      %v272 = vld [vmem:[%s165 + $0x2f0] sm:$0xff]
      %v273 = vld [vmem:[%s165 + $0x2f8] sm:$0xff]
      %v274 = vld [vmem:[%s165 + $0x300] sm:$0xff]
      %v275 = vld [vmem:[%s165 + $0x308] sm:$0xf]
      %v276 = vld [vmem:[%s165 + $0x30c] sm:$0xff]
      %v277 = vld [vmem:[%s165 + $0x314] sm:$0xff]
      %v278 = vld [vmem:[%s165 + $0x31c] sm:$0xff]
      %v279 = vld [vmem:[%s165 + $0x324] sm:$0xff]
      %v280 = vld [vmem:[%s165 + $0x32c] sm:$0xff]
      %v281 = vld [vmem:[%s165 + $0x334] sm:$0xff]
      %v282 = vld [vmem:[%s165 + $0x33c] sm:$0xf]
      %v283 = vld [vmem:[%s165 + $0x340] sm:$0xff]
      %v284 = vld [vmem:[%s165 + $0x348] sm:$0xff]
      %v285 = vld [vmem:[%s165 + $0x350] sm:$0xff]
      %v286 = vld [vmem:[%s165 + $0x358] sm:$0xff]
      %v287 = vld [vmem:[%s165 + $0x360] sm:$0xff]
      %v288 = vld [vmem:[%s165 + $0x368] sm:$0xff]
      %v289 = vld [vmem:[%s165 + $0x370] sm:$0xf]
      %v290 = vld [vmem:[%s165 + $0x374] sm:$0xff]
      %v291 = vld [vmem:[%s165 + $0x37c] sm:$0xff]
      %v292 = vld [vmem:[%s165 + $0x384] sm:$0xff]
      %v293 = vld [vmem:[%s165 + $0x38c] sm:$0xff]
      %v294 = vld [vmem:[%s165 + $0x394] sm:$0xff]
      %v295 = vld [vmem:[%s165 + $0x39c] sm:$0xff]
      %v296 = vld [vmem:[%s165 + $0x3a4] sm:$0xf]
      %v297 = vld [vmem:[%s165 + $0x3a8] sm:$0xff]
      %v298 = vld [vmem:[%s165 + $0x3b0] sm:$0xff]
      %v299 = vld [vmem:[%s165 + $0x3b8] sm:$0xff]
      %v300 = vld [vmem:[%s165 + $0x3c0] sm:$0xff]
      %v301 = vld [vmem:[%s165 + $0x3c8] sm:$0xff]
      %v302 = vld [vmem:[%s165 + $0x3d0] sm:$0xff]
      %v303 = vld [vmem:[%s165 + $0x3d8] sm:$0xf]
      %v304 = vld [vmem:[%s165 + $0x3dc] sm:$0xff]
      %v305 = vld [vmem:[%s165 + $0x3e4] sm:$0xff]
      %v306 = vld [vmem:[%s165 + $0x3ec] sm:$0xff]
      %v307 = vld [vmem:[%s165 + $0x3f4] sm:$0xff]
      %v308 = vld [vmem:[%s165 + $0x3fc] sm:$0xff]
      %v309 = vld [vmem:[%s165 + $0x404] sm:$0xff]
      %v310 = vld [vmem:[%s165 + $0x40c] sm:$0xf]
      %v311 = vld [vmem:[%s165 + $0x410] sm:$0xff]
      %v312 = vld [vmem:[%s165 + $0x418] sm:$0xff]
      %v313 = vld [vmem:[%s165 + $0x420] sm:$0xff]
      %v314 = vld [vmem:[%s165 + $0x428] sm:$0xff]
      %v315 = vld [vmem:[%s165 + $0x430] sm:$0xff]
      %v316 = vld [vmem:[%s165 + $0x438] sm:$0xff]
      %v317 = vld [vmem:[%s165 + $0x440] sm:$0xf]
      %v318 = vld [vmem:[%s165 + $0x444] sm:$0xff]
      %v319 = vld [vmem:[%s165 + $0x44c] sm:$0xff]
      %v320 = vld [vmem:[%s165 + $0x454] sm:$0xff]
      %v321 = vld [vmem:[%s165 + $0x45c] sm:$0xff]
      %v322 = vld [vmem:[%s165 + $0x464] sm:$0xff]
      %v323 = vld [vmem:[%s165 + $0x46c] sm:$0xff]
      %v324 = vld [vmem:[%s165 + $0x474] sm:$0xf]
      %v325 = vld [vmem:[%s165 + $0x478] sm:$0xff]
      %v326 = vld [vmem:[%s165 + $0x480] sm:$0xff]
      %v327 = vld [vmem:[%s165 + $0x488] sm:$0xff]
      %v328 = vld [vmem:[%s165 + $0x490] sm:$0xff]
      %v329 = vld [vmem:[%s165 + $0x498] sm:$0xff]
      %v330 = vld [vmem:[%s165 + $0x4a0] sm:$0xff]
      %v331 = vld [vmem:[%s165 + $0x4a8] sm:$0xf]
      %v332 = vld [vmem:[%s165 + $0x4ac] sm:$0xff]
      %v333 = vld [vmem:[%s165 + $0x4b4] sm:$0xff]
      %v334 = vld [vmem:[%s165 + $0x4bc] sm:$0xff]
      %v335 = vld [vmem:[%s165 + $0x4c4] sm:$0xff]
      %v336 = vld [vmem:[%s165 + $0x4cc] sm:$0xff]
      %v337 = vld [vmem:[%s165 + $0x4d4] sm:$0xff]
      %v338 = vld [vmem:[%s165 + $0x4dc] sm:$0xf]
      %v339 = vld [vmem:[%s165 + $0x4e0] sm:$0xff]
      %v340 = vld [vmem:[%s165 + $0x4e8] sm:$0xff]
      %v341 = vld [vmem:[%s165 + $0x4f0] sm:$0xff]
      %v342 = vld [vmem:[%s165 + $0x4f8] sm:$0xff]
      %v343 = vld [vmem:[%s165 + $0x500] sm:$0xff]
      %v344 = vld [vmem:[%s165 + $0x508] sm:$0xff]
      %v345 = vld [vmem:[%s165 + $0x510] sm:$0xf]
      %v346 = vld [vmem:[%s165 + $0x514] sm:$0xff]
      %v347 = vld [vmem:[%s165 + $0x51c] sm:$0xff]
      %v348 = vld [vmem:[%s165 + $0x524] sm:$0xff]
      %v349 = vld [vmem:[%s165 + $0x52c] sm:$0xff]
      %v350 = vld [vmem:[%s165 + $0x534] sm:$0xff]
      %v351 = vld [vmem:[%s165 + $0x53c] sm:$0xff]
      %v352 = vld [vmem:[%s165 + $0x544] sm:$0xf]
      %v353 = vld [vmem:[%s165 + $0x548] sm:$0xff]
      %v354 = vld [vmem:[%s165 + $0x550] sm:$0xff]
      %v355 = vld [vmem:[%s165 + $0x558] sm:$0xff]
      %v356 = vld [vmem:[%s165 + $0x560] sm:$0xff]
      %v357 = vld [vmem:[%s165 + $0x568] sm:$0xff]
      %v358 = vld [vmem:[%s165 + $0x570] sm:$0xff]
      %v359 = vld [vmem:[%s165 + $0x578] sm:$0xf]
      %v360 = vld [vmem:[%s165 + $0x57c] sm:$0xff]
      %v361 = vld [vmem:[%s165 + $0x584] sm:$0xff]
      %v362 = vld [vmem:[%s165 + $0x58c] sm:$0xff]
      %v363 = vld [vmem:[%s165 + $0x594] sm:$0xff]
      %v364 = vld [vmem:[%s165 + $0x59c] sm:$0xff]
      %v365 = vld [vmem:[%s165 + $0x5a4] sm:$0xff]
      %v366 = vld [vmem:[%s165 + $0x5ac] sm:$0xf]
      %v367 = vld [vmem:[%s165 + $0x5b0] sm:$0xff]
      %v368 = vld [vmem:[%s165 + $0x5b8] sm:$0xff]
      %v369 = vld [vmem:[%s165 + $0x5c0] sm:$0xff]
      %v370 = vld [vmem:[%s165 + $0x5c8] sm:$0xff]
      %v371 = vld [vmem:[%s165 + $0x5d0] sm:$0xff]
      %v372 = vld [vmem:[%s165 + $0x5d8] sm:$0xff]
      %v373 = vld [vmem:[%s165 + $0x5e0] sm:$0xf]
      %v374 = vld [vmem:[%s165 + $0x5e4] sm:$0xff]
      %v375 = vld [vmem:[%s165 + $0x5ec] sm:$0xff]
      %v376 = vld [vmem:[%s165 + $0x5f4] sm:$0xff]
      %v377 = vld [vmem:[%s165 + $0x5fc] sm:$0xff]
      %v378 = vld [vmem:[%s165 + $0x604] sm:$0xff]
      %v379 = vld [vmem:[%s165 + $0x60c] sm:$0xff]
      %v380 = vld [vmem:[%s165 + $0x614] sm:$0xf]
      %v381 = vld [vmem:[%s165 + $0x618] sm:$0xff]
      %v382 = vld [vmem:[%s165 + $0x620] sm:$0xff]
      %v383 = vld [vmem:[%s165 + $0x628] sm:$0xff]
      %v384 = vld [vmem:[%s165 + $0x630] sm:$0xff]
      %v385 = vld [vmem:[%s165 + $0x638] sm:$0xff]
      %v386 = vld [vmem:[%s165 + $0x640] sm:$0xff]
      %v387 = vld [vmem:[%s165 + $0x648] sm:$0xf]
      %v388 = vld [vmem:[%s165 + $0x64c] sm:$0xff]
      %v389 = vld [vmem:[%s165 + $0x654] sm:$0xff]
      %v390 = vld [vmem:[%s165 + $0x65c] sm:$0xff]
      %v391 = vld [vmem:[%s165 + $0x664] sm:$0xff]
      %v392 = vld [vmem:[%s165 + $0x66c] sm:$0xff]
      %v393 = vld [vmem:[%s165 + $0x674] sm:$0xff]
      %v394 = vld [vmem:[%s165 + $0x67c] sm:$0xf]
      %v395 = vld [vmem:[%s1] sm:$0xf]
      %v396 = vld [vmem:[%s1 + $0x4] sm:$0xf]
      %v397 = vld [vmem:[%s1 + $0x8] sm:$0xf]
      %v398 = vld [vmem:[%s1 + $0xc] sm:$0xf]
      %v399 = vld [vmem:[%s1 + $0x10] sm:$0xf]
      %v400 = vld [vmem:[%s1 + $0x14] sm:$0xf]
      %v401 = vld [vmem:[%s1 + $0x18] sm:$0xf]
      %v402 = vld [vmem:[%s1 + $0x1c] sm:$0xf]
      %v403 = vld [vmem:[%s1 + $0x20] sm:$0xf]
      %v404 = vld [vmem:[%s1 + $0x24] sm:$0xf]
      %v405 = vld [vmem:[%s1 + $0x28] sm:$0xf]
      %v406 = vld [vmem:[%s1 + $0x2c] sm:$0xf]
      %v407 = vld [vmem:[%s1 + $0x30] sm:$0xf]
      %v408 = vld [vmem:[%s1 + $0x34] sm:$0xf]
      %v409 = vld [vmem:[%s1 + $0x38] sm:$0xf]
      %v410 = vld [vmem:[%s1 + $0x3c] sm:$0xf]
      %v411 = vld [vmem:[%s1 + $0x40] sm:$0xf]
      %v412 = vld [vmem:[%s1 + $0x44] sm:$0xf]
      %v413 = vld [vmem:[%s1 + $0x48] sm:$0xf]
      %v414 = vld [vmem:[%s1 + $0x4c] sm:$0xf]
      %v415 = vld [vmem:[%s1 + $0x50] sm:$0xf]
      %v416 = vld [vmem:[%s1 + $0x54] sm:$0xf]
      %v417 = vld [vmem:[%s1 + $0x58] sm:$0xf]
      %v418 = vld [vmem:[%s1 + $0x5c] sm:$0xf]
      %v419 = vld [vmem:[%s1 + $0x60] sm:$0xf]
      %v420 = vld [vmem:[%s1 + $0x64] sm:$0xf]
      %v421 = vld [vmem:[%s1 + $0x68] sm:$0xf]
      %v422 = vld [vmem:[%s1 + $0x6c] sm:$0xf]
      %v423 = vld [vmem:[%s1 + $0x70] sm:$0xf]
      %v424 = vld [vmem:[%s1 + $0x74] sm:$0xf]
      %v425 = vld [vmem:[%s1 + $0x78] sm:$0xf]
      %v426 = vld [vmem:[%s1 + $0x7c] sm:$0xf]
      %v427 = vld [vmem:[%s1 + $0x80] sm:$0xf]
      %v428 = vld [vmem:[%s1 + $0x84] sm:$0xf]
      %v429 = vld [vmem:[%s1 + $0x88] sm:$0xf]
      %v430 = vld [vmem:[%s1 + $0x8c] sm:$0xf]
      %v431 = vld [vmem:[%s1 + $0x90] sm:$0xf]
      %v432 = vld [vmem:[%s1 + $0x94] sm:$0xf]
      %v433 = vld [vmem:[%s1 + $0x98] sm:$0xf]
      %v434 = vld [vmem:[%s1 + $0x9c] sm:$0xf]
      %v435 = vld [vmem:[%s1 + $0xa0] sm:$0xf]
      %v436 = vld [vmem:[%s1 + $0xa4] sm:$0xf]
      %v437 = vld [vmem:[%s1 + $0xa8] sm:$0xf]
      %v438 = vld [vmem:[%s1 + $0xac] sm:$0xf]
      %v439 = vld [vmem:[%s1 + $0xb0] sm:$0xf]
      %v440 = vld [vmem:[%s1 + $0xb4] sm:$0xf]
      %v441 = vld [vmem:[%s1 + $0xb8] sm:$0xf]
      %v442 = vld [vmem:[%s1 + $0xbc] sm:$0xf]
      %v443 = vld [vmem:[%s1 + $0xc0] sm:$0xf]
      %v444 = vld [vmem:[%s1 + $0xc4] sm:$0xf]
      %v445 = vld [vmem:[%s1 + $0xc8] sm:$0xf]
      %v446 = vld [vmem:[%s1 + $0xcc] sm:$0xf]
      %v447 = vld [vmem:[%s1 + $0xd0] sm:$0xf]
      %v448 = vld [vmem:[%s1 + $0xd4] sm:$0xf]
      %v449 = vld [vmem:[%s1 + $0xd8] sm:$0xf]
      %v450 = vld [vmem:[%s1 + $0xdc] sm:$0xf]
      %v451 = vld [vmem:[%s1 + $0xe0] sm:$0xf]
      %v452 = vld [vmem:[%s1 + $0xe4] sm:$0xf]
      %v453 = vld [vmem:[%s1 + $0xe8] sm:$0xf]
      %v454 = vld [vmem:[%s1 + $0xec] sm:$0xf]
      %v455 = vld [vmem:[%s1 + $0xf0] sm:$0xf]
      %v456 = vld [vmem:[%s1 + $0xf4] sm:$0xf]
      %v457 = vld [vmem:[%s1 + $0xf8] sm:$0xf]
      %v458 = vld [vmem:[%s1 + $0xfc] sm:$0xf]
      %v459 = vld [vmem:[%s1 + $0x100] sm:$0xf]
      %v460 = vld [vmem:[%s1 + $0x104] sm:$0xf]
      %v461 = vld [vmem:[%s1 + $0x108] sm:$0xf]
      %v462 = vld [vmem:[%s1 + $0x10c] sm:$0xf]
      %v463 = vld [vmem:[%s1 + $0x110] sm:$0xf]
      %v464 = vld [vmem:[%s1 + $0x114] sm:$0xf]
      %v465 = vld [vmem:[%s1 + $0x118] sm:$0xf]
      %v466 = vld [vmem:[%s1 + $0x11c] sm:$0xf]
      %v467 = vld [vmem:[%s1 + $0x120] sm:$0xf]
      %v468 = vld [vmem:[%s1 + $0x124] sm:$0xf]
      %v469 = vld [vmem:[%s1 + $0x128] sm:$0xf]
      %v470 = vld [vmem:[%s1 + $0x12c] sm:$0xf]
      %v471 = vld [vmem:[%s1 + $0x130] sm:$0xf]
      %v472 = vld [vmem:[%s1 + $0x134] sm:$0xf]
      %v473 = vld [vmem:[%s1 + $0x138] sm:$0xf]
      %v474 = vld [vmem:[%s1 + $0x13c] sm:$0xf]
      %v475 = vld [vmem:[%s1 + $0x140] sm:$0xf]
      %v476 = vld [vmem:[%s1 + $0x144] sm:$0xf]
      %v477 = vld [vmem:[%s1 + $0x148] sm:$0xf]
      %v478 = vld [vmem:[%s1 + $0x14c] sm:$0xf]
      %v479 = vld [vmem:[%s1 + $0x150] sm:$0xf]
      %v480 = vld [vmem:[%s1 + $0x154] sm:$0xf]
      %v481 = vld [vmem:[%s1 + $0x158] sm:$0xf]
      %v482 = vld [vmem:[%s1 + $0x15c] sm:$0xf]
      %v483 = vld [vmem:[%s1 + $0x160] sm:$0xf]
      %v484 = vld [vmem:[%s1 + $0x164] sm:$0xf]
      %v485 = vld [vmem:[%s1 + $0x168] sm:$0xf]
      %v486 = vld [vmem:[%s1 + $0x16c] sm:$0xf]
      %v487 = vld [vmem:[%s1 + $0x170] sm:$0xf]
      %v488 = vld [vmem:[%s1 + $0x174] sm:$0xf]
      %v489 = vld [vmem:[%s1 + $0x178] sm:$0xf]
      %v490 = vld [vmem:[%s1 + $0x17c] sm:$0xf]
      %v491 = vld [vmem:[%s1 + $0x180] sm:$0xf]
      %v492 = vld [vmem:[%s1 + $0x184] sm:$0xf]
      %v493 = vld [vmem:[%s1 + $0x188] sm:$0xf]
      %v494 = vld [vmem:[%s1 + $0x18c] sm:$0xf]
      %v495 = vld [vmem:[%s1 + $0x190] sm:$0xf]
      %v496 = vld [vmem:[%s1 + $0x194] sm:$0xf]
      %v497 = vld [vmem:[%s1 + $0x198] sm:$0xf]
      %v498 = vld [vmem:[%s1 + $0x19c] sm:$0xf]
      %v499 = vld [vmem:[%s1 + $0x1a0] sm:$0xf]
      %v500 = vld [vmem:[%s1 + $0x1a4] sm:$0xf]
      %v501 = vld [vmem:[%s1 + $0x1a8] sm:$0xf]
      %v502 = vld [vmem:[%s1 + $0x1ac] sm:$0xf]
      %v503 = vld [vmem:[%s1 + $0x1b0] sm:$0xf]
      %v504 = vld [vmem:[%s1 + $0x1b4] sm:$0xf]
      %v505 = vld [vmem:[%s1 + $0x1b8] sm:$0xf]
      %v506 = vld [vmem:[%s1 + $0x1bc] sm:$0xf]
      %v507 = vld [vmem:[%s1 + $0x1c0] sm:$0xf]
      %v508 = vld [vmem:[%s1 + $0x1c4] sm:$0xf]
      %v509 = vld [vmem:[%s1 + $0x1c8] sm:$0xf]
      %v510 = vld [vmem:[%s1 + $0x1cc] sm:$0xf]
      %v511 = vld [vmem:[%s1 + $0x1d0] sm:$0xf]
      %v512 = vld [vmem:[%s1 + $0x1d4] sm:$0xf]
      %v513 = vld [vmem:[%s1 + $0x1d8] sm:$0xf]
      %v514 = vld [vmem:[%s1 + $0x1dc] sm:$0xf]
      %v515 = vld [vmem:[%s1 + $0x1e0] sm:$0xf]
      %v516 = vld [vmem:[%s1 + $0x1e4] sm:$0xf]
      %v517 = vld [vmem:[%s1 + $0x1e8] sm:$0xf]
      %v518 = vld [vmem:[%s1 + $0x1ec] sm:$0xf]
      %v519 = vld [vmem:[%s1 + $0x1f0] sm:$0xf]
      %v520 = vld [vmem:[%s1 + $0x1f4] sm:$0xf]
      %v521 = vld [vmem:[%s1 + $0x1f8] sm:$0xf]
      %v522 = vld [vmem:[%s1 + $0x1fc] sm:$0xf]
      %v523 = vld [vmem:[%s1 + $0x200] sm:$0xf]
      %v524 = vld [vmem:[%s1 + $0x204] sm:$0xf]
      %v525 = vld [vmem:[%s1 + $0x208] sm:$0xf]
      %v526 = vld [vmem:[%s1 + $0x20c] sm:$0xf]
      %v527 = vld [vmem:[%s1 + $0x210] sm:$0xf]
      %v528 = vld [vmem:[%s1 + $0x214] sm:$0xf]
      %v529 = vld [vmem:[%s1 + $0x218] sm:$0xf]
      %v530 = vld [vmem:[%s1 + $0x21c] sm:$0xf]
      %v531 = vld [vmem:[%s1 + $0x220] sm:$0xf]
      %v532 = vld [vmem:[%s1 + $0x224] sm:$0xf]
      %v533 = vld [vmem:[%s1 + $0x228] sm:$0xf]
      %v534 = vld [vmem:[%s1 + $0x22c] sm:$0xf]
      %v535 = vld [vmem:[%s1 + $0x230] sm:$0xf]
      %v536 = vld [vmem:[%s1 + $0x234] sm:$0xf]
      %v537 = vld [vmem:[%s1 + $0x238] sm:$0xf]
      %v538 = vld [vmem:[%s1 + $0x23c] sm:$0xf]
      %v539 = vld [vmem:[%s1 + $0x240] sm:$0xf]
      %v540 = vld [vmem:[%s1 + $0x244] sm:$0xf]
      %v541 = vld [vmem:[%s1 + $0x248] sm:$0xf]
      %v542 = vld [vmem:[%s1 + $0x24c] sm:$0xf]
      %v543 = vld [vmem:[%s1 + $0x250] sm:$0xf]
      %v544 = vld [vmem:[%s1 + $0x254] sm:$0xf]
      %v545 = vld [vmem:[%s1 + $0x258] sm:$0xf]
      %v546 = vld [vmem:[%s1 + $0x25c] sm:$0xf]
      %v547 = vld [vmem:[%s1 + $0x260] sm:$0xf]
      %v548 = vld [vmem:[%s1 + $0x264] sm:$0xf]
      %v549 = vld [vmem:[%s1 + $0x268] sm:$0xf]
      %v550 = vld [vmem:[%s1 + $0x26c] sm:$0xf]
      %v551 = vld [vmem:[%s1 + $0x270] sm:$0xf]
      %v552 = vld [vmem:[%s1 + $0x274] sm:$0xf]
      %v553 = vld [vmem:[%s1 + $0x278] sm:$0xf]
      %v554 = vld [vmem:[%s1 + $0x27c] sm:$0xf]
      %v555 = vld [vmem:[%s1 + $0x280] sm:$0xf]
      %v556 = vld [vmem:[%s1 + $0x284] sm:$0xf]
      %v557 = vld [vmem:[%s1 + $0x288] sm:$0xf]
      %v558 = vld [vmem:[%s1 + $0x28c] sm:$0xf]
      %v559 = vld [vmem:[%s1 + $0x290] sm:$0xf]
      %v560 = vld [vmem:[%s1 + $0x294] sm:$0xf]
      %v561 = vld [vmem:[%s1 + $0x298] sm:$0xf]
      %v562 = vld [vmem:[%s1 + $0x29c] sm:$0xf]
      %v563 = vld [vmem:[%s1 + $0x2a0] sm:$0xf]
      %v564 = vld [vmem:[%s1 + $0x2a4] sm:$0xf]
      %v565 = vld [vmem:[%s1 + $0x2a8] sm:$0xf]
      %v566 = vld [vmem:[%s1 + $0x2ac] sm:$0xf]
      %v567 = vld [vmem:[%s1 + $0x2b0] sm:$0xf]
      %v568 = vld [vmem:[%s1 + $0x2b4] sm:$0xf]
      %v569 = vld [vmem:[%s1 + $0x2b8] sm:$0xf]
      %v570 = vld [vmem:[%s1 + $0x2bc] sm:$0xf]
      %v571 = vld [vmem:[%s1 + $0x2c0] sm:$0xf]
      %v572 = vld [vmem:[%s1 + $0x2c4] sm:$0xf]
      %v573 = vld [vmem:[%s1 + $0x2c8] sm:$0xf]
      %v574 = vld [vmem:[%s1 + $0x2cc] sm:$0xf]
      %v575 = vld [vmem:[%s1 + $0x2d0] sm:$0xf]
      %v576 = vld [vmem:[%s1 + $0x2d4] sm:$0xf]
      %v577 = vld [vmem:[%s1 + $0x2d8] sm:$0xf]
      %v578 = vld [vmem:[%s1 + $0x2dc] sm:$0xf]
      %v579 = vld [vmem:[%s1 + $0x2e0] sm:$0xf]
      %v580 = vld [vmem:[%s1 + $0x2e4] sm:$0xf]
      %v581 = vld [vmem:[%s1 + $0x2e8] sm:$0xf]
      %v582 = vld [vmem:[%s1 + $0x2ec] sm:$0xf]
      %v583 = vld [vmem:[%s1 + $0x2f0] sm:$0xf]
      %v584 = vld [vmem:[%s1 + $0x2f4] sm:$0xf]
      %v585 = vld [vmem:[%s1 + $0x2f8] sm:$0xf]
      %v586 = vld [vmem:[%s1 + $0x2fc] sm:$0xf]
      %v587 = vld [vmem:[%s1 + $0x300] sm:$0xf]
      %v588 = vld [vmem:[%s1 + $0x304] sm:$0xf]
      %v589 = vld [vmem:[%s1 + $0x308] sm:$0xf]
      %v590 = vld [vmem:[%s1 + $0x30c] sm:$0xf]
      %v591 = vld [vmem:[%s1 + $0x310] sm:$0xf]
      %v592 = vld [vmem:[%s1 + $0x314] sm:$0xf]
      %v593 = vld [vmem:[%s1 + $0x318] sm:$0xf]
      %v594 = vld [vmem:[%s1 + $0x31c] sm:$0xf]
      %v595 = vld [vmem:[%s1 + $0x320] sm:$0xf]
      %v596 = vld [vmem:[%s1 + $0x324] sm:$0xf]
      %v597 = vld [vmem:[%s1 + $0x328] sm:$0xf]
      %v598 = vld [vmem:[%s1 + $0x32c] sm:$0xf]
      %v599 = vld [vmem:[%s1 + $0x330] sm:$0xf]
      %v600 = vld [vmem:[%s1 + $0x334] sm:$0xf]
      %v601 = vld [vmem:[%s1 + $0x338] sm:$0xf]
      %v602 = vld [vmem:[%s1 + $0x33c] sm:$0xf]
      %v603 = vld [vmem:[%s2] sm:$0x1]
      %v605 = vperm.slane %v603, 0
      %v831 = vunpack.c.l.b16 %v171
      %v832 = vunpack.c.h.b16 %v171
      %v833 = vunpack.c.l.b16 %v172
      %v834 = vunpack.c.h.b16 %v172
      %v835 = vunpack.c.l.b16 %v173
      %v836 = vunpack.c.h.b16 %v173
      %v837 = vunpack.c.l.b16 %v174
      %v838 = vunpack.c.h.b16 %v174
      %v839 = vunpack.c.l.b16 %v175
      %v840 = vunpack.c.h.b16 %v175
      %v841 = vunpack.c.l.b16 %v176
      %v842 = vunpack.c.h.b16 %v176
      %v843 = vunpack.c.l.b16 %v177
      %v844 = vunpack.c.l.b16 %v178
      %v845 = vunpack.c.h.b16 %v178
      %v846 = vunpack.c.l.b16 %v179
      %v847 = vunpack.c.h.b16 %v179
      %v848 = vunpack.c.l.b16 %v180
      %v849 = vunpack.c.h.b16 %v180
      %v850 = vunpack.c.l.b16 %v181
      %v851 = vunpack.c.h.b16 %v181
      %v852 = vunpack.c.l.b16 %v182
      %v853 = vunpack.c.h.b16 %v182
      %v854 = vunpack.c.l.b16 %v183
      %v855 = vunpack.c.h.b16 %v183
      %v856 = vunpack.c.l.b16 %v184
      %v857 = vunpack.c.l.b16 %v185
      %v858 = vunpack.c.h.b16 %v185
      %v859 = vunpack.c.l.b16 %v186
      %v860 = vunpack.c.h.b16 %v186
      %v861 = vunpack.c.l.b16 %v187
      %v862 = vunpack.c.h.b16 %v187
      %v863 = vunpack.c.l.b16 %v188
      %v864 = vunpack.c.h.b16 %v188
      %v865 = vunpack.c.l.b16 %v189
      %v866 = vunpack.c.h.b16 %v189
      %v867 = vunpack.c.l.b16 %v190
      %v868 = vunpack.c.h.b16 %v190
      %v869 = vunpack.c.l.b16 %v191
      %v870 = vunpack.c.l.b16 %v192
      %v871 = vunpack.c.h.b16 %v192
      %v872 = vunpack.c.l.b16 %v193
      %v873 = vunpack.c.h.b16 %v193
      %v874 = vunpack.c.l.b16 %v194
      %v875 = vunpack.c.h.b16 %v194
      %v876 = vunpack.c.l.b16 %v195
      %v877 = vunpack.c.h.b16 %v195
      %v878 = vunpack.c.l.b16 %v196
      %v879 = vunpack.c.h.b16 %v196
      %v880 = vunpack.c.l.b16 %v197
      %v881 = vunpack.c.h.b16 %v197
      %v882 = vunpack.c.l.b16 %v198
      %v883 = vunpack.c.l.b16 %v199
      %v884 = vunpack.c.h.b16 %v199
      %v885 = vunpack.c.l.b16 %v200
      %v886 = vunpack.c.h.b16 %v200
      %v887 = vunpack.c.l.b16 %v201
      %v888 = vunpack.c.h.b16 %v201
      %v889 = vunpack.c.l.b16 %v202
      %v890 = vunpack.c.h.b16 %v202
      %v891 = vunpack.c.l.b16 %v203
      %v892 = vunpack.c.h.b16 %v203
      %v893 = vunpack.c.l.b16 %v204
      %v894 = vunpack.c.h.b16 %v204
      %v895 = vunpack.c.l.b16 %v205
      %v896 = vunpack.c.l.b16 %v206
      %v897 = vunpack.c.h.b16 %v206
      %v898 = vunpack.c.l.b16 %v207
      %v899 = vunpack.c.h.b16 %v207
      %v900 = vunpack.c.l.b16 %v208
      %v901 = vunpack.c.h.b16 %v208
      %v902 = vunpack.c.l.b16 %v209
      %v903 = vunpack.c.h.b16 %v209
      %v904 = vunpack.c.l.b16 %v210
      %v905 = vunpack.c.h.b16 %v210
      %v906 = vunpack.c.l.b16 %v211
      %v907 = vunpack.c.h.b16 %v211
      %v908 = vunpack.c.l.b16 %v212
      %v909 = vunpack.c.l.b16 %v213
      %v910 = vunpack.c.h.b16 %v213
      %v911 = vunpack.c.l.b16 %v214
      %v912 = vunpack.c.h.b16 %v214
      %v913 = vunpack.c.l.b16 %v215
      %v914 = vunpack.c.h.b16 %v215
      %v915 = vunpack.c.l.b16 %v216
      %v916 = vunpack.c.h.b16 %v216
      %v917 = vunpack.c.l.b16 %v217
      %v918 = vunpack.c.h.b16 %v217
      %v919 = vunpack.c.l.b16 %v218
      %v920 = vunpack.c.h.b16 %v218
      %v921 = vunpack.c.l.b16 %v219
      %v922 = vunpack.c.l.b16 %v220
      %v923 = vunpack.c.h.b16 %v220
      %v924 = vunpack.c.l.b16 %v221
      %v925 = vunpack.c.h.b16 %v221
      %v926 = vunpack.c.l.b16 %v222
      %v927 = vunpack.c.h.b16 %v222
      %v928 = vunpack.c.l.b16 %v223
      %v929 = vunpack.c.h.b16 %v223
      %v930 = vunpack.c.l.b16 %v224
      %v931 = vunpack.c.h.b16 %v224
      %v932 = vunpack.c.l.b16 %v225
      %v933 = vunpack.c.h.b16 %v225
      %v934 = vunpack.c.l.b16 %v226
      %v935 = vunpack.c.l.b16 %v227
      %v936 = vunpack.c.h.b16 %v227
      %v937 = vunpack.c.l.b16 %v228
      %v938 = vunpack.c.h.b16 %v228
      %v939 = vunpack.c.l.b16 %v229
      %v940 = vunpack.c.h.b16 %v229
      %v941 = vunpack.c.l.b16 %v230
      %v942 = vunpack.c.h.b16 %v230
      %v943 = vunpack.c.l.b16 %v231
      %v944 = vunpack.c.h.b16 %v231
      %v945 = vunpack.c.l.b16 %v232
      %v946 = vunpack.c.h.b16 %v232
      %v947 = vunpack.c.l.b16 %v233
      %v948 = vunpack.c.l.b16 %v234
      %v949 = vunpack.c.h.b16 %v234
      %v950 = vunpack.c.l.b16 %v235
      %v951 = vunpack.c.h.b16 %v235
      %v952 = vunpack.c.l.b16 %v236
      %v953 = vunpack.c.h.b16 %v236
      %v954 = vunpack.c.l.b16 %v237
      %v955 = vunpack.c.h.b16 %v237
      %v956 = vunpack.c.l.b16 %v238
      %v957 = vunpack.c.h.b16 %v238
      %v958 = vunpack.c.l.b16 %v239
      %v959 = vunpack.c.h.b16 %v239
      %v960 = vunpack.c.l.b16 %v240
      %v961 = vunpack.c.l.b16 %v241
      %v962 = vunpack.c.h.b16 %v241
      %v963 = vunpack.c.l.b16 %v242
      %v964 = vunpack.c.h.b16 %v242
      %v965 = vunpack.c.l.b16 %v243
      %v966 = vunpack.c.h.b16 %v243
      %v967 = vunpack.c.l.b16 %v244
      %v968 = vunpack.c.h.b16 %v244
      %v969 = vunpack.c.l.b16 %v245
      %v970 = vunpack.c.h.b16 %v245
      %v971 = vunpack.c.l.b16 %v246
      %v972 = vunpack.c.h.b16 %v246
      %v973 = vunpack.c.l.b16 %v247
      %v974 = vunpack.c.l.b16 %v248
      %v975 = vunpack.c.h.b16 %v248
      %v976 = vunpack.c.l.b16 %v249
      %v977 = vunpack.c.h.b16 %v249
      %v978 = vunpack.c.l.b16 %v250
      %v979 = vunpack.c.h.b16 %v250
      %v980 = vunpack.c.l.b16 %v251
      %v981 = vunpack.c.h.b16 %v251
      %v982 = vunpack.c.l.b16 %v252
      %v983 = vunpack.c.h.b16 %v252
      %v984 = vunpack.c.l.b16 %v253
      %v985 = vunpack.c.h.b16 %v253
      %v986 = vunpack.c.l.b16 %v254
      %v987 = vunpack.c.l.b16 %v255
      %v988 = vunpack.c.h.b16 %v255
      %v989 = vunpack.c.l.b16 %v256
      %v990 = vunpack.c.h.b16 %v256
      %v991 = vunpack.c.l.b16 %v257
      %v992 = vunpack.c.h.b16 %v257
      %v993 = vunpack.c.l.b16 %v258
      %v994 = vunpack.c.h.b16 %v258
      %v995 = vunpack.c.l.b16 %v259
      %v996 = vunpack.c.h.b16 %v259
      %v997 = vunpack.c.l.b16 %v260
      %v998 = vunpack.c.h.b16 %v260
      %v999 = vunpack.c.l.b16 %v261
      %v1000 = vunpack.c.l.b16 %v262
      %v1001 = vunpack.c.h.b16 %v262
      %v1002 = vunpack.c.l.b16 %v263
      %v1003 = vunpack.c.h.b16 %v263
      %v1004 = vunpack.c.l.b16 %v264
      %v1005 = vunpack.c.h.b16 %v264
      %v1006 = vunpack.c.l.b16 %v265
      %v1007 = vunpack.c.h.b16 %v265
      %v1008 = vunpack.c.l.b16 %v266
      %v1009 = vunpack.c.h.b16 %v266
      %v1010 = vunpack.c.l.b16 %v267
      %v1011 = vunpack.c.h.b16 %v267
      %v1012 = vunpack.c.l.b16 %v268
      %v1013 = vunpack.c.l.b16 %v269
      %v1014 = vunpack.c.h.b16 %v269
      %v1015 = vunpack.c.l.b16 %v270
      %v1016 = vunpack.c.h.b16 %v270
      %v1017 = vunpack.c.l.b16 %v271
      %v1018 = vunpack.c.h.b16 %v271
      %v1019 = vunpack.c.l.b16 %v272
      %v1020 = vunpack.c.h.b16 %v272
      %v1021 = vunpack.c.l.b16 %v273
      %v1022 = vunpack.c.h.b16 %v273
      %v1023 = vunpack.c.l.b16 %v274
      %v1024 = vunpack.c.h.b16 %v274
      %v1025 = vunpack.c.l.b16 %v275
      %v1026 = vunpack.c.l.b16 %v276
      %v1027 = vunpack.c.h.b16 %v276
      %v1028 = vunpack.c.l.b16 %v277
      %v1029 = vunpack.c.h.b16 %v277
      %v1030 = vunpack.c.l.b16 %v278
      %v1031 = vunpack.c.h.b16 %v278
      %v1032 = vunpack.c.l.b16 %v279
      %v1033 = vunpack.c.h.b16 %v279
      %v1034 = vunpack.c.l.b16 %v280
      %v1035 = vunpack.c.h.b16 %v280
      %v1036 = vunpack.c.l.b16 %v281
      %v1037 = vunpack.c.h.b16 %v281
      %v1038 = vunpack.c.l.b16 %v282
      %v1039 = vunpack.c.l.b16 %v283
      %v1040 = vunpack.c.h.b16 %v283
      %v1041 = vunpack.c.l.b16 %v284
      %v1042 = vunpack.c.h.b16 %v284
      %v1043 = vunpack.c.l.b16 %v285
      %v1044 = vunpack.c.h.b16 %v285
      %v1045 = vunpack.c.l.b16 %v286
      %v1046 = vunpack.c.h.b16 %v286
      %v1047 = vunpack.c.l.b16 %v287
      %v1048 = vunpack.c.h.b16 %v287
      %v1049 = vunpack.c.l.b16 %v288
      %v1050 = vunpack.c.h.b16 %v288
      %v1051 = vunpack.c.l.b16 %v289
      %v1052 = vunpack.c.l.b16 %v290
      %v1053 = vunpack.c.h.b16 %v290
      %v1054 = vunpack.c.l.b16 %v291
      %v1055 = vunpack.c.h.b16 %v291
      %v1056 = vunpack.c.l.b16 %v292
      %v1057 = vunpack.c.h.b16 %v292
      %v1058 = vunpack.c.l.b16 %v293
      %v1059 = vunpack.c.h.b16 %v293
      %v1060 = vunpack.c.l.b16 %v294
      %v1061 = vunpack.c.h.b16 %v294
      %v1062 = vunpack.c.l.b16 %v295
      %v1063 = vunpack.c.h.b16 %v295
      %v1064 = vunpack.c.l.b16 %v296
      %v1065 = vunpack.c.l.b16 %v297
      %v1066 = vunpack.c.h.b16 %v297
      %v1067 = vunpack.c.l.b16 %v298
      %v1068 = vunpack.c.h.b16 %v298
      %v1069 = vunpack.c.l.b16 %v299
      %v1070 = vunpack.c.h.b16 %v299
      %v1071 = vunpack.c.l.b16 %v300
      %v1072 = vunpack.c.h.b16 %v300
      %v1073 = vunpack.c.l.b16 %v301
      %v1074 = vunpack.c.h.b16 %v301
      %v1075 = vunpack.c.l.b16 %v302
      %v1076 = vunpack.c.h.b16 %v302
      %v1077 = vunpack.c.l.b16 %v303
      %v1078 = vunpack.c.l.b16 %v304
      %v1079 = vunpack.c.h.b16 %v304
      %v1080 = vunpack.c.l.b16 %v305
      %v1081 = vunpack.c.h.b16 %v305
      %v1082 = vunpack.c.l.b16 %v306
      %v1083 = vunpack.c.h.b16 %v306
      %v1084 = vunpack.c.l.b16 %v307
      %v1085 = vunpack.c.h.b16 %v307
      %v1086 = vunpack.c.l.b16 %v308
      %v1087 = vunpack.c.h.b16 %v308
      %v1088 = vunpack.c.l.b16 %v309
      %v1089 = vunpack.c.h.b16 %v309
      %v1090 = vunpack.c.l.b16 %v310
      %v1091 = vunpack.c.l.b16 %v311
      %v1092 = vunpack.c.h.b16 %v311
      %v1093 = vunpack.c.l.b16 %v312
      %v1094 = vunpack.c.h.b16 %v312
      %v1095 = vunpack.c.l.b16 %v313
      %v1096 = vunpack.c.h.b16 %v313
      %v1097 = vunpack.c.l.b16 %v314
      %v1098 = vunpack.c.h.b16 %v314
      %v1099 = vunpack.c.l.b16 %v315
      %v1100 = vunpack.c.h.b16 %v315
      %v1101 = vunpack.c.l.b16 %v316
      %v1102 = vunpack.c.h.b16 %v316
      %v1103 = vunpack.c.l.b16 %v317
      %v1104 = vunpack.c.l.b16 %v318
      %v1105 = vunpack.c.h.b16 %v318
      %v1106 = vunpack.c.l.b16 %v319
      %v1107 = vunpack.c.h.b16 %v319
      %v1108 = vunpack.c.l.b16 %v320
      %v1109 = vunpack.c.h.b16 %v320
      %v1110 = vunpack.c.l.b16 %v321
      %v1111 = vunpack.c.h.b16 %v321
      %v1112 = vunpack.c.l.b16 %v322
      %v1113 = vunpack.c.h.b16 %v322
      %v1114 = vunpack.c.l.b16 %v323
      %v1115 = vunpack.c.h.b16 %v323
      %v1116 = vunpack.c.l.b16 %v324
      %v1117 = vunpack.c.l.b16 %v325
      %v1118 = vunpack.c.h.b16 %v325
      %v1119 = vunpack.c.l.b16 %v326
      %v1120 = vunpack.c.h.b16 %v326
      %v1121 = vunpack.c.l.b16 %v327
      %v1122 = vunpack.c.h.b16 %v327
      %v1123 = vunpack.c.l.b16 %v328
      %v1124 = vunpack.c.h.b16 %v328
      %v1125 = vunpack.c.l.b16 %v329
      %v1126 = vunpack.c.h.b16 %v329
      %v1127 = vunpack.c.l.b16 %v330
      %v1128 = vunpack.c.h.b16 %v330
      %v1129 = vunpack.c.l.b16 %v331
      %v1130 = vunpack.c.l.b16 %v332
      %v1131 = vunpack.c.h.b16 %v332
      %v1132 = vunpack.c.l.b16 %v333
      %v1133 = vunpack.c.h.b16 %v333
      %v1134 = vunpack.c.l.b16 %v334
      %v1135 = vunpack.c.h.b16 %v334
      %v1136 = vunpack.c.l.b16 %v335
      %v1137 = vunpack.c.h.b16 %v335
      %v1138 = vunpack.c.l.b16 %v336
      %v1139 = vunpack.c.h.b16 %v336
      %v1140 = vunpack.c.l.b16 %v337
      %v1141 = vunpack.c.h.b16 %v337
      %v1142 = vunpack.c.l.b16 %v338
      %v1143 = vunpack.c.l.b16 %v339
      %v1144 = vunpack.c.h.b16 %v339
      %v1145 = vunpack.c.l.b16 %v340
      %v1146 = vunpack.c.h.b16 %v340
      %v1147 = vunpack.c.l.b16 %v341
      %v1148 = vunpack.c.h.b16 %v341
      %v1149 = vunpack.c.l.b16 %v342
      %v1150 = vunpack.c.h.b16 %v342
      %v1151 = vunpack.c.l.b16 %v343
      %v1152 = vunpack.c.h.b16 %v343
      %v1153 = vunpack.c.l.b16 %v344
      %v1154 = vunpack.c.h.b16 %v344
      %v1155 = vunpack.c.l.b16 %v345
      %v1156 = vunpack.c.l.b16 %v346
      %v1157 = vunpack.c.h.b16 %v346
      %v1158 = vunpack.c.l.b16 %v347
      %v1159 = vunpack.c.h.b16 %v347
      %v1160 = vunpack.c.l.b16 %v348
      %v1161 = vunpack.c.h.b16 %v348
      %v1162 = vunpack.c.l.b16 %v349
      %v1163 = vunpack.c.h.b16 %v349
      %v1164 = vunpack.c.l.b16 %v350
      %v1165 = vunpack.c.h.b16 %v350
      %v1166 = vunpack.c.l.b16 %v351
      %v1167 = vunpack.c.h.b16 %v351
      %v1168 = vunpack.c.l.b16 %v352
      %v1169 = vunpack.c.l.b16 %v353
      %v1170 = vunpack.c.h.b16 %v353
      %v1171 = vunpack.c.l.b16 %v354
      %v1172 = vunpack.c.h.b16 %v354
      %v1173 = vunpack.c.l.b16 %v355
      %v1174 = vunpack.c.h.b16 %v355
      %v1175 = vunpack.c.l.b16 %v356
      %v1176 = vunpack.c.h.b16 %v356
      %v1177 = vunpack.c.l.b16 %v357
      %v1178 = vunpack.c.h.b16 %v357
      %v1179 = vunpack.c.l.b16 %v358
      %v1180 = vunpack.c.h.b16 %v358
      %v1181 = vunpack.c.l.b16 %v359
      %v1182 = vunpack.c.l.b16 %v360
      %v1183 = vunpack.c.h.b16 %v360
      %v1184 = vunpack.c.l.b16 %v361
      %v1185 = vunpack.c.h.b16 %v361
      %v1186 = vunpack.c.l.b16 %v362
      %v1187 = vunpack.c.h.b16 %v362
      %v1188 = vunpack.c.l.b16 %v363
      %v1189 = vunpack.c.h.b16 %v363
      %v1190 = vunpack.c.l.b16 %v364
      %v1191 = vunpack.c.h.b16 %v364
      %v1192 = vunpack.c.l.b16 %v365
      %v1193 = vunpack.c.h.b16 %v365
      %v1194 = vunpack.c.l.b16 %v366
      %v1195 = vunpack.c.l.b16 %v367
      %v1196 = vunpack.c.h.b16 %v367
      %v1197 = vunpack.c.l.b16 %v368
      %v1198 = vunpack.c.h.b16 %v368
      %v1199 = vunpack.c.l.b16 %v369
      %v1200 = vunpack.c.h.b16 %v369
      %v1201 = vunpack.c.l.b16 %v370
      %v1202 = vunpack.c.h.b16 %v370
      %v1203 = vunpack.c.l.b16 %v371
      %v1204 = vunpack.c.h.b16 %v371
      %v1205 = vunpack.c.l.b16 %v372
      %v1206 = vunpack.c.h.b16 %v372
      %v1207 = vunpack.c.l.b16 %v373
      %v1208 = vunpack.c.l.b16 %v374
      %v1209 = vunpack.c.h.b16 %v374
      %v1210 = vunpack.c.l.b16 %v375
      %v1211 = vunpack.c.h.b16 %v375
      %v1212 = vunpack.c.l.b16 %v376
      %v1213 = vunpack.c.h.b16 %v376
      %v1214 = vunpack.c.l.b16 %v377
      %v1215 = vunpack.c.h.b16 %v377
      %v1216 = vunpack.c.l.b16 %v378
      %v1217 = vunpack.c.h.b16 %v378
      %v1218 = vunpack.c.l.b16 %v379
      %v1219 = vunpack.c.h.b16 %v379
      %v1220 = vunpack.c.l.b16 %v380
      %v1221 = vunpack.c.l.b16 %v381
      %v1222 = vunpack.c.h.b16 %v381
      %v1223 = vunpack.c.l.b16 %v382
      %v1224 = vunpack.c.h.b16 %v382
      %v1225 = vunpack.c.l.b16 %v383
      %v1226 = vunpack.c.h.b16 %v383
      %v1227 = vunpack.c.l.b16 %v384
      %v1228 = vunpack.c.h.b16 %v384
      %v1229 = vunpack.c.l.b16 %v385
      %v1230 = vunpack.c.h.b16 %v385
      %v1231 = vunpack.c.l.b16 %v386
      %v1232 = vunpack.c.h.b16 %v386
      %v1233 = vunpack.c.l.b16 %v387
      %v1234 = vunpack.c.l.b16 %v388
      %v1235 = vunpack.c.h.b16 %v388
      %v1236 = vunpack.c.l.b16 %v389
      %v1237 = vunpack.c.h.b16 %v389
      %v1238 = vunpack.c.l.b16 %v390
      %v1239 = vunpack.c.h.b16 %v390
      %v1240 = vunpack.c.l.b16 %v391
      %v1241 = vunpack.c.h.b16 %v391
      %v1242 = vunpack.c.l.b16 %v392
      %v1243 = vunpack.c.h.b16 %v392
      %v1244 = vunpack.c.l.b16 %v393
      %v1245 = vunpack.c.h.b16 %v393
      %v1246 = vunpack.c.l.b16 %v394
      %v1247 = vpack.c.b16 %v844, %v831
      %v1248 = vpack.c.b16 %v845, %v832
      %v1249 = vpack.c.b16 %v846, %v833
      %v1250 = vpack.c.b16 %v847, %v834
      %v1251 = vpack.c.b16 %v848, %v835
      %v1252 = vpack.c.b16 %v849, %v836
      %v1253 = vpack.c.b16 %v850, %v837
      %v1254 = vpack.c.b16 %v851, %v838
      %v1255 = vpack.c.b16 %v852, %v839
      %v1256 = vpack.c.b16 %v853, %v840
      %v1257 = vpack.c.b16 %v854, %v841
      %v1258 = vpack.c.b16 %v855, %v842
      %v1259 = vpack.c.b16 %v856, %v843
      %v1260 = vpack.c.b16 %v870, %v857
      %v1261 = vpack.c.b16 %v871, %v858
      %v1262 = vpack.c.b16 %v872, %v859
      %v1263 = vpack.c.b16 %v873, %v860
      %v1264 = vpack.c.b16 %v874, %v861
      %v1265 = vpack.c.b16 %v875, %v862
      %v1266 = vpack.c.b16 %v876, %v863
      %v1267 = vpack.c.b16 %v877, %v864
      %v1268 = vpack.c.b16 %v878, %v865
      %v1269 = vpack.c.b16 %v879, %v866
      %v1270 = vpack.c.b16 %v880, %v867
      %v1271 = vpack.c.b16 %v881, %v868
      %v1272 = vpack.c.b16 %v882, %v869
      %v1273 = vpack.c.b16 %v896, %v883
      %v1274 = vpack.c.b16 %v897, %v884
      %v1275 = vpack.c.b16 %v898, %v885
      %v1276 = vpack.c.b16 %v899, %v886
      %v1277 = vpack.c.b16 %v900, %v887
      %v1278 = vpack.c.b16 %v901, %v888
      %v1279 = vpack.c.b16 %v902, %v889
      %v1280 = vpack.c.b16 %v903, %v890
      %v1281 = vpack.c.b16 %v904, %v891
      %v1282 = vpack.c.b16 %v905, %v892
      %v1283 = vpack.c.b16 %v906, %v893
      %v1284 = vpack.c.b16 %v907, %v894
      %v1285 = vpack.c.b16 %v908, %v895
      %v1286 = vpack.c.b16 %v922, %v909
      %v1287 = vpack.c.b16 %v923, %v910
      %v1288 = vpack.c.b16 %v924, %v911
      %v1289 = vpack.c.b16 %v925, %v912
      %v1290 = vpack.c.b16 %v926, %v913
      %v1291 = vpack.c.b16 %v927, %v914
      %v1292 = vpack.c.b16 %v928, %v915
      %v1293 = vpack.c.b16 %v929, %v916
      %v1294 = vpack.c.b16 %v930, %v917
      %v1295 = vpack.c.b16 %v931, %v918
      %v1296 = vpack.c.b16 %v932, %v919
      %v1297 = vpack.c.b16 %v933, %v920
      %v1298 = vpack.c.b16 %v934, %v921
      %v1299 = vpack.c.b16 %v948, %v935
      %v1300 = vpack.c.b16 %v949, %v936
      %v1301 = vpack.c.b16 %v950, %v937
      %v1302 = vpack.c.b16 %v951, %v938
      %v1303 = vpack.c.b16 %v952, %v939
      %v1304 = vpack.c.b16 %v953, %v940
      %v1305 = vpack.c.b16 %v954, %v941
      %v1306 = vpack.c.b16 %v955, %v942
      %v1307 = vpack.c.b16 %v956, %v943
      %v1308 = vpack.c.b16 %v957, %v944
      %v1309 = vpack.c.b16 %v958, %v945
      %v1310 = vpack.c.b16 %v959, %v946
      %v1311 = vpack.c.b16 %v960, %v947
      %v1312 = vpack.c.b16 %v974, %v961
      %v1313 = vpack.c.b16 %v975, %v962
      %v1314 = vpack.c.b16 %v976, %v963
      %v1315 = vpack.c.b16 %v977, %v964
      %v1316 = vpack.c.b16 %v978, %v965
      %v1317 = vpack.c.b16 %v979, %v966
      %v1318 = vpack.c.b16 %v980, %v967
      %v1319 = vpack.c.b16 %v981, %v968
      %v1320 = vpack.c.b16 %v982, %v969
      %v1321 = vpack.c.b16 %v983, %v970
      %v1322 = vpack.c.b16 %v984, %v971
      %v1323 = vpack.c.b16 %v985, %v972
      %v1324 = vpack.c.b16 %v986, %v973
      %v1325 = vpack.c.b16 %v1000, %v987
      %v1326 = vpack.c.b16 %v1001, %v988
      %v1327 = vpack.c.b16 %v1002, %v989
      %v1328 = vpack.c.b16 %v1003, %v990
      %v1329 = vpack.c.b16 %v1004, %v991
      %v1330 = vpack.c.b16 %v1005, %v992
      %v1331 = vpack.c.b16 %v1006, %v993
      %v1332 = vpack.c.b16 %v1007, %v994
      %v1333 = vpack.c.b16 %v1008, %v995
      %v1334 = vpack.c.b16 %v1009, %v996
      %v1335 = vpack.c.b16 %v1010, %v997
      %v1336 = vpack.c.b16 %v1011, %v998
      %v1337 = vpack.c.b16 %v1012, %v999
      %v1338 = vpack.c.b16 %v1026, %v1013
      %v1339 = vpack.c.b16 %v1027, %v1014
      %v1340 = vpack.c.b16 %v1028, %v1015
      %v1341 = vpack.c.b16 %v1029, %v1016
      %v1342 = vpack.c.b16 %v1030, %v1017
      %v1343 = vpack.c.b16 %v1031, %v1018
      %v1344 = vpack.c.b16 %v1032, %v1019
      %v1345 = vpack.c.b16 %v1033, %v1020
      %v1346 = vpack.c.b16 %v1034, %v1021
      %v1347 = vpack.c.b16 %v1035, %v1022
      %v1348 = vpack.c.b16 %v1036, %v1023
      %v1349 = vpack.c.b16 %v1037, %v1024
      %v1350 = vpack.c.b16 %v1038, %v1025
      %v1351 = vpack.c.b16 %v1052, %v1039
      %v1352 = vpack.c.b16 %v1053, %v1040
      %v1353 = vpack.c.b16 %v1054, %v1041
      %v1354 = vpack.c.b16 %v1055, %v1042
      %v1355 = vpack.c.b16 %v1056, %v1043
      %v1356 = vpack.c.b16 %v1057, %v1044
      %v1357 = vpack.c.b16 %v1058, %v1045
      %v1358 = vpack.c.b16 %v1059, %v1046
      %v1359 = vpack.c.b16 %v1060, %v1047
      %v1360 = vpack.c.b16 %v1061, %v1048
      %v1361 = vpack.c.b16 %v1062, %v1049
      %v1362 = vpack.c.b16 %v1063, %v1050
      %v1363 = vpack.c.b16 %v1064, %v1051
      %v1364 = vpack.c.b16 %v1078, %v1065
      %v1365 = vpack.c.b16 %v1079, %v1066
      %v1366 = vpack.c.b16 %v1080, %v1067
      %v1367 = vpack.c.b16 %v1081, %v1068
      %v1368 = vpack.c.b16 %v1082, %v1069
      %v1369 = vpack.c.b16 %v1083, %v1070
      %v1370 = vpack.c.b16 %v1084, %v1071
      %v1371 = vpack.c.b16 %v1085, %v1072
      %v1372 = vpack.c.b16 %v1086, %v1073
      %v1373 = vpack.c.b16 %v1087, %v1074
      %v1374 = vpack.c.b16 %v1088, %v1075
      %v1375 = vpack.c.b16 %v1089, %v1076
      %v1376 = vpack.c.b16 %v1090, %v1077
      %v1377 = vpack.c.b16 %v1104, %v1091
      %v1378 = vpack.c.b16 %v1105, %v1092
      %v1379 = vpack.c.b16 %v1106, %v1093
      %v1380 = vpack.c.b16 %v1107, %v1094
      %v1381 = vpack.c.b16 %v1108, %v1095
      %v1382 = vpack.c.b16 %v1109, %v1096
      %v1383 = vpack.c.b16 %v1110, %v1097
      %v1384 = vpack.c.b16 %v1111, %v1098
      %v1385 = vpack.c.b16 %v1112, %v1099
      %v1386 = vpack.c.b16 %v1113, %v1100
      %v1387 = vpack.c.b16 %v1114, %v1101
      %v1388 = vpack.c.b16 %v1115, %v1102
      %v1389 = vpack.c.b16 %v1116, %v1103
      %v1390 = vpack.c.b16 %v1130, %v1117
      %v1391 = vpack.c.b16 %v1131, %v1118
      %v1392 = vpack.c.b16 %v1132, %v1119
      %v1393 = vpack.c.b16 %v1133, %v1120
      %v1394 = vpack.c.b16 %v1134, %v1121
      %v1395 = vpack.c.b16 %v1135, %v1122
      %v1396 = vpack.c.b16 %v1136, %v1123
      %v1397 = vpack.c.b16 %v1137, %v1124
      %v1398 = vpack.c.b16 %v1138, %v1125
      %v1399 = vpack.c.b16 %v1139, %v1126
      %v1400 = vpack.c.b16 %v1140, %v1127
      %v1401 = vpack.c.b16 %v1141, %v1128
      %v1402 = vpack.c.b16 %v1142, %v1129
      %v1403 = vpack.c.b16 %v1156, %v1143
      %v1404 = vpack.c.b16 %v1157, %v1144
      %v1405 = vpack.c.b16 %v1158, %v1145
      %v1406 = vpack.c.b16 %v1159, %v1146
      %v1407 = vpack.c.b16 %v1160, %v1147
      %v1408 = vpack.c.b16 %v1161, %v1148
      %v1409 = vpack.c.b16 %v1162, %v1149
      %v1410 = vpack.c.b16 %v1163, %v1150
      %v1411 = vpack.c.b16 %v1164, %v1151
      %v1412 = vpack.c.b16 %v1165, %v1152
      %v1413 = vpack.c.b16 %v1166, %v1153
      %v1414 = vpack.c.b16 %v1167, %v1154
      %v1415 = vpack.c.b16 %v1168, %v1155
      %v1416 = vpack.c.b16 %v1182, %v1169
      %v1417 = vpack.c.b16 %v1183, %v1170
      %v1418 = vpack.c.b16 %v1184, %v1171
      %v1419 = vpack.c.b16 %v1185, %v1172
      %v1420 = vpack.c.b16 %v1186, %v1173
      %v1421 = vpack.c.b16 %v1187, %v1174
      %v1422 = vpack.c.b16 %v1188, %v1175
      %v1423 = vpack.c.b16 %v1189, %v1176
      %v1424 = vpack.c.b16 %v1190, %v1177
      %v1425 = vpack.c.b16 %v1191, %v1178
      %v1426 = vpack.c.b16 %v1192, %v1179
      %v1427 = vpack.c.b16 %v1193, %v1180
      %v1428 = vpack.c.b16 %v1194, %v1181
      %v1429 = vpack.c.b16 %v1208, %v1195
      %v1430 = vpack.c.b16 %v1209, %v1196
      %v1431 = vpack.c.b16 %v1210, %v1197
      %v1432 = vpack.c.b16 %v1211, %v1198
      %v1433 = vpack.c.b16 %v1212, %v1199
      %v1434 = vpack.c.b16 %v1213, %v1200
      %v1435 = vpack.c.b16 %v1214, %v1201
      %v1436 = vpack.c.b16 %v1215, %v1202
      %v1437 = vpack.c.b16 %v1216, %v1203
      %v1438 = vpack.c.b16 %v1217, %v1204
      %v1439 = vpack.c.b16 %v1218, %v1205
      %v1440 = vpack.c.b16 %v1219, %v1206
      %v1441 = vpack.c.b16 %v1220, %v1207
      %v1442 = vpack.c.b16 %v1234, %v1221
      %v1443 = vpack.c.b16 %v1235, %v1222
      %v1444 = vpack.c.b16 %v1236, %v1223
      %v1445 = vpack.c.b16 %v1237, %v1224
      %v1446 = vpack.c.b16 %v1238, %v1225
      %v1447 = vpack.c.b16 %v1239, %v1226
      %v1448 = vpack.c.b16 %v1240, %v1227
      %v1449 = vpack.c.b16 %v1241, %v1228
      %v1450 = vpack.c.b16 %v1242, %v1229
      %v1451 = vpack.c.b16 %v1243, %v1230
      %v1452 = vpack.c.b16 %v1244, %v1231
      %v1453 = vpack.c.b16 %v1245, %v1232
      %v1454 = vpack.c.b16 %v1246, %v1233
      %v1871 = vunpack.c.l.b16 %v395
      %v1872 = vunpack.c.l.b16 %v396
      %v1873 = vunpack.c.l.b16 %v397
      %v1874 = vunpack.c.l.b16 %v398
      %v1875 = vunpack.c.l.b16 %v399
      %v1876 = vunpack.c.l.b16 %v400
      %v1877 = vunpack.c.l.b16 %v401
      %v1878 = vunpack.c.l.b16 %v402
      %v1879 = vunpack.c.l.b16 %v403
      %v1880 = vunpack.c.l.b16 %v404
      %v1881 = vunpack.c.l.b16 %v405
      %v1882 = vunpack.c.l.b16 %v406
      %v1883 = vunpack.c.l.b16 %v407
      %v1884 = vunpack.c.l.b16 %v408
      %v1885 = vunpack.c.l.b16 %v409
      %v1886 = vunpack.c.l.b16 %v410
      %v1887 = vunpack.c.l.b16 %v411
      %v1888 = vunpack.c.l.b16 %v412
      %v1889 = vunpack.c.l.b16 %v413
      %v1890 = vunpack.c.l.b16 %v414
      %v1891 = vunpack.c.l.b16 %v415
      %v1892 = vunpack.c.l.b16 %v416
      %v1893 = vunpack.c.l.b16 %v417
      %v1894 = vunpack.c.l.b16 %v418
      %v1895 = vunpack.c.l.b16 %v419
      %v1896 = vunpack.c.l.b16 %v420
      %v1897 = vunpack.c.l.b16 %v421
      %v1898 = vunpack.c.l.b16 %v422
      %v1899 = vunpack.c.l.b16 %v423
      %v1900 = vunpack.c.l.b16 %v424
      %v1901 = vunpack.c.l.b16 %v425
      %v1902 = vunpack.c.l.b16 %v426
      %v1903 = vunpack.c.l.b16 %v427
      %v1904 = vunpack.c.l.b16 %v428
      %v1905 = vunpack.c.l.b16 %v429
      %v1906 = vunpack.c.l.b16 %v430
      %v1907 = vunpack.c.l.b16 %v431
      %v1908 = vunpack.c.l.b16 %v432
      %v1909 = vunpack.c.l.b16 %v433
      %v1910 = vunpack.c.l.b16 %v434
      %v1911 = vunpack.c.l.b16 %v435
      %v1912 = vunpack.c.l.b16 %v436
      %v1913 = vunpack.c.l.b16 %v437
      %v1914 = vunpack.c.l.b16 %v438
      %v1915 = vunpack.c.l.b16 %v439
      %v1916 = vunpack.c.l.b16 %v440
      %v1917 = vunpack.c.l.b16 %v441
      %v1918 = vunpack.c.l.b16 %v442
      %v1919 = vunpack.c.l.b16 %v443
      %v1920 = vunpack.c.l.b16 %v444
      %v1921 = vunpack.c.l.b16 %v445
      %v1922 = vunpack.c.l.b16 %v446
      %v1923 = vunpack.c.l.b16 %v447
      %v1924 = vunpack.c.l.b16 %v448
      %v1925 = vunpack.c.l.b16 %v449
      %v1926 = vunpack.c.l.b16 %v450
      %v1927 = vunpack.c.l.b16 %v451
      %v1928 = vunpack.c.l.b16 %v452
      %v1929 = vunpack.c.l.b16 %v453
      %v1930 = vunpack.c.l.b16 %v454
      %v1931 = vunpack.c.l.b16 %v455
      %v1932 = vunpack.c.l.b16 %v456
      %v1933 = vunpack.c.l.b16 %v457
      %v1934 = vunpack.c.l.b16 %v458
      %v1935 = vunpack.c.l.b16 %v459
      %v1936 = vunpack.c.l.b16 %v460
      %v1937 = vunpack.c.l.b16 %v461
      %v1938 = vunpack.c.l.b16 %v462
      %v1939 = vunpack.c.l.b16 %v463
      %v1940 = vunpack.c.l.b16 %v464
      %v1941 = vunpack.c.l.b16 %v465
      %v1942 = vunpack.c.l.b16 %v466
      %v1943 = vunpack.c.l.b16 %v467
      %v1944 = vunpack.c.l.b16 %v468
      %v1945 = vunpack.c.l.b16 %v469
      %v1946 = vunpack.c.l.b16 %v470
      %v1947 = vunpack.c.l.b16 %v471
      %v1948 = vunpack.c.l.b16 %v472
      %v1949 = vunpack.c.l.b16 %v473
      %v1950 = vunpack.c.l.b16 %v474
      %v1951 = vunpack.c.l.b16 %v475
      %v1952 = vunpack.c.l.b16 %v476
      %v1953 = vunpack.c.l.b16 %v477
      %v1954 = vunpack.c.l.b16 %v478
      %v1955 = vunpack.c.l.b16 %v479
      %v1956 = vunpack.c.l.b16 %v480
      %v1957 = vunpack.c.l.b16 %v481
      %v1958 = vunpack.c.l.b16 %v482
      %v1959 = vunpack.c.l.b16 %v483
      %v1960 = vunpack.c.l.b16 %v484
      %v1961 = vunpack.c.l.b16 %v485
      %v1962 = vunpack.c.l.b16 %v486
      %v1963 = vunpack.c.l.b16 %v487
      %v1964 = vunpack.c.l.b16 %v488
      %v1965 = vunpack.c.l.b16 %v489
      %v1966 = vunpack.c.l.b16 %v490
      %v1967 = vunpack.c.l.b16 %v491
      %v1968 = vunpack.c.l.b16 %v492
      %v1969 = vunpack.c.l.b16 %v493
      %v1970 = vunpack.c.l.b16 %v494
      %v1971 = vunpack.c.l.b16 %v495
      %v1972 = vunpack.c.l.b16 %v496
      %v1973 = vunpack.c.l.b16 %v497
      %v1974 = vunpack.c.l.b16 %v498
      %v1975 = vunpack.c.l.b16 %v499
      %v1976 = vunpack.c.l.b16 %v500
      %v1977 = vunpack.c.l.b16 %v501
      %v1978 = vunpack.c.l.b16 %v502
      %v1979 = vunpack.c.l.b16 %v503
      %v1980 = vunpack.c.l.b16 %v504
      %v1981 = vunpack.c.l.b16 %v505
      %v1982 = vunpack.c.l.b16 %v506
      %v1983 = vunpack.c.l.b16 %v507
      %v1984 = vunpack.c.l.b16 %v508
      %v1985 = vunpack.c.l.b16 %v509
      %v1986 = vunpack.c.l.b16 %v510
      %v1987 = vunpack.c.l.b16 %v511
      %v1988 = vunpack.c.l.b16 %v512
      %v1989 = vunpack.c.l.b16 %v513
      %v1990 = vunpack.c.l.b16 %v514
      %v1991 = vunpack.c.l.b16 %v515
      %v1992 = vunpack.c.l.b16 %v516
      %v1993 = vunpack.c.l.b16 %v517
      %v1994 = vunpack.c.l.b16 %v518
      %v1995 = vunpack.c.l.b16 %v519
      %v1996 = vunpack.c.l.b16 %v520
      %v1997 = vunpack.c.l.b16 %v521
      %v1998 = vunpack.c.l.b16 %v522
      %v1999 = vunpack.c.l.b16 %v523
      %v2000 = vunpack.c.l.b16 %v524
      %v2001 = vunpack.c.l.b16 %v525
      %v2002 = vunpack.c.l.b16 %v526
      %v2003 = vunpack.c.l.b16 %v527
      %v2004 = vunpack.c.l.b16 %v528
      %v2005 = vunpack.c.l.b16 %v529
      %v2006 = vunpack.c.l.b16 %v530
      %v2007 = vunpack.c.l.b16 %v531
      %v2008 = vunpack.c.l.b16 %v532
      %v2009 = vunpack.c.l.b16 %v533
      %v2010 = vunpack.c.l.b16 %v534
      %v2011 = vunpack.c.l.b16 %v535
      %v2012 = vunpack.c.l.b16 %v536
      %v2013 = vunpack.c.l.b16 %v537
      %v2014 = vunpack.c.l.b16 %v538
      %v2015 = vunpack.c.l.b16 %v539
      %v2016 = vunpack.c.l.b16 %v540
      %v2017 = vunpack.c.l.b16 %v541
      %v2018 = vunpack.c.l.b16 %v542
      %v2019 = vunpack.c.l.b16 %v543
      %v2020 = vunpack.c.l.b16 %v544
      %v2021 = vunpack.c.l.b16 %v545
      %v2022 = vunpack.c.l.b16 %v546
      %v2023 = vunpack.c.l.b16 %v547
      %v2024 = vunpack.c.l.b16 %v548
      %v2025 = vunpack.c.l.b16 %v549
      %v2026 = vunpack.c.l.b16 %v550
      %v2027 = vunpack.c.l.b16 %v551
      %v2028 = vunpack.c.l.b16 %v552
      %v2029 = vunpack.c.l.b16 %v553
      %v2030 = vunpack.c.l.b16 %v554
      %v2031 = vunpack.c.l.b16 %v555
      %v2032 = vunpack.c.l.b16 %v556
      %v2033 = vunpack.c.l.b16 %v557
      %v2034 = vunpack.c.l.b16 %v558
      %v2035 = vunpack.c.l.b16 %v559
      %v2036 = vunpack.c.l.b16 %v560
      %v2037 = vunpack.c.l.b16 %v561
      %v2038 = vunpack.c.l.b16 %v562
      %v2039 = vunpack.c.l.b16 %v563
      %v2040 = vunpack.c.l.b16 %v564
      %v2041 = vunpack.c.l.b16 %v565
      %v2042 = vunpack.c.l.b16 %v566
      %v2043 = vunpack.c.l.b16 %v567
      %v2044 = vunpack.c.l.b16 %v568
      %v2045 = vunpack.c.l.b16 %v569
      %v2046 = vunpack.c.l.b16 %v570
      %v2047 = vunpack.c.l.b16 %v571
      %v2048 = vunpack.c.l.b16 %v572
      %v2049 = vunpack.c.l.b16 %v573
      %v2050 = vunpack.c.l.b16 %v574
      %v2051 = vunpack.c.l.b16 %v575
      %v2052 = vunpack.c.l.b16 %v576
      %v2053 = vunpack.c.l.b16 %v577
      %v2054 = vunpack.c.l.b16 %v578
      %v2055 = vunpack.c.l.b16 %v579
      %v2056 = vunpack.c.l.b16 %v580
      %v2057 = vunpack.c.l.b16 %v581
      %v2058 = vunpack.c.l.b16 %v582
      %v2059 = vunpack.c.l.b16 %v583
      %v2060 = vunpack.c.l.b16 %v584
      %v2061 = vunpack.c.l.b16 %v585
      %v2062 = vunpack.c.l.b16 %v586
      %v2063 = vunpack.c.l.b16 %v587
      %v2064 = vunpack.c.l.b16 %v588
      %v2065 = vunpack.c.l.b16 %v589
      %v2066 = vunpack.c.l.b16 %v590
      %v2067 = vunpack.c.l.b16 %v591
      %v2068 = vunpack.c.l.b16 %v592
      %v2069 = vunpack.c.l.b16 %v593
      %v2070 = vunpack.c.l.b16 %v594
      %v2071 = vunpack.c.l.b16 %v595
      %v2072 = vunpack.c.l.b16 %v596
      %v2073 = vunpack.c.l.b16 %v597
      %v2074 = vunpack.c.l.b16 %v598
      %v2075 = vunpack.c.l.b16 %v599
      %v2076 = vunpack.c.l.b16 %v600
      %v2077 = vunpack.c.l.b16 %v601
      %v2078 = vunpack.c.l.b16 %v602
      %v2079 = vpack.c.b16 %v1872, %v1871
      %v2080 = vpack.c.b16 %v1874, %v1873
      %v2081 = vpack.c.b16 %v1876, %v1875
      %v2082 = vpack.c.b16 %v1878, %v1877
      %v2083 = vpack.c.b16 %v1880, %v1879
      %v2084 = vpack.c.b16 %v1882, %v1881
      %v2085 = vpack.c.b16 %v1884, %v1883
      %v2086 = vpack.c.b16 %v1886, %v1885
      %v2087 = vpack.c.b16 %v1888, %v1887
      %v2088 = vpack.c.b16 %v1890, %v1889
      %v2089 = vpack.c.b16 %v1892, %v1891
      %v2090 = vpack.c.b16 %v1894, %v1893
      %v2091 = vpack.c.b16 %v1896, %v1895
      %v2092 = vpack.c.b16 %v1898, %v1897
      %v2093 = vpack.c.b16 %v1900, %v1899
      %v2094 = vpack.c.b16 %v1902, %v1901
      %v2095 = vpack.c.b16 %v1904, %v1903
      %v2096 = vpack.c.b16 %v1906, %v1905
      %v2097 = vpack.c.b16 %v1908, %v1907
      %v2098 = vpack.c.b16 %v1910, %v1909
      %v2099 = vpack.c.b16 %v1912, %v1911
      %v2100 = vpack.c.b16 %v1914, %v1913
      %v2101 = vpack.c.b16 %v1916, %v1915
      %v2102 = vpack.c.b16 %v1918, %v1917
      %v2103 = vpack.c.b16 %v1920, %v1919
      %v2104 = vpack.c.b16 %v1922, %v1921
      %v2105 = vpack.c.b16 %v1924, %v1923
      %v2106 = vpack.c.b16 %v1926, %v1925
      %v2107 = vpack.c.b16 %v1928, %v1927
      %v2108 = vpack.c.b16 %v1930, %v1929
      %v2109 = vpack.c.b16 %v1932, %v1931
      %v2110 = vpack.c.b16 %v1934, %v1933
      %v2111 = vpack.c.b16 %v1936, %v1935
      %v2112 = vpack.c.b16 %v1938, %v1937
      %v2113 = vpack.c.b16 %v1940, %v1939
      %v2114 = vpack.c.b16 %v1942, %v1941
      %v2115 = vpack.c.b16 %v1944, %v1943
      %v2116 = vpack.c.b16 %v1946, %v1945
      %v2117 = vpack.c.b16 %v1948, %v1947
      %v2118 = vpack.c.b16 %v1950, %v1949
      %v2119 = vpack.c.b16 %v1952, %v1951
      %v2120 = vpack.c.b16 %v1954, %v1953
      %v2121 = vpack.c.b16 %v1956, %v1955
      %v2122 = vpack.c.b16 %v1958, %v1957
      %v2123 = vpack.c.b16 %v1960, %v1959
      %v2124 = vpack.c.b16 %v1962, %v1961
      %v2125 = vpack.c.b16 %v1964, %v1963
      %v2126 = vpack.c.b16 %v1966, %v1965
      %v2127 = vpack.c.b16 %v1968, %v1967
      %v2128 = vpack.c.b16 %v1970, %v1969
      %v2129 = vpack.c.b16 %v1972, %v1971
      %v2130 = vpack.c.b16 %v1974, %v1973
      %v2131 = vpack.c.b16 %v1976, %v1975
      %v2132 = vpack.c.b16 %v1978, %v1977
      %v2133 = vpack.c.b16 %v1980, %v1979
      %v2134 = vpack.c.b16 %v1982, %v1981
      %v2135 = vpack.c.b16 %v1984, %v1983
      %v2136 = vpack.c.b16 %v1986, %v1985
      %v2137 = vpack.c.b16 %v1988, %v1987
      %v2138 = vpack.c.b16 %v1990, %v1989
      %v2139 = vpack.c.b16 %v1992, %v1991
      %v2140 = vpack.c.b16 %v1994, %v1993
      %v2141 = vpack.c.b16 %v1996, %v1995
      %v2142 = vpack.c.b16 %v1998, %v1997
      %v2143 = vpack.c.b16 %v2000, %v1999
      %v2144 = vpack.c.b16 %v2002, %v2001
      %v2145 = vpack.c.b16 %v2004, %v2003
      %v2146 = vpack.c.b16 %v2006, %v2005
      %v2147 = vpack.c.b16 %v2008, %v2007
      %v2148 = vpack.c.b16 %v2010, %v2009
      %v2149 = vpack.c.b16 %v2012, %v2011
      %v2150 = vpack.c.b16 %v2014, %v2013
      %v2151 = vpack.c.b16 %v2016, %v2015
      %v2152 = vpack.c.b16 %v2018, %v2017
      %v2153 = vpack.c.b16 %v2020, %v2019
      %v2154 = vpack.c.b16 %v2022, %v2021
      %v2155 = vpack.c.b16 %v2024, %v2023
      %v2156 = vpack.c.b16 %v2026, %v2025
      %v2157 = vpack.c.b16 %v2028, %v2027
      %v2158 = vpack.c.b16 %v2030, %v2029
      %v2159 = vpack.c.b16 %v2032, %v2031
      %v2160 = vpack.c.b16 %v2034, %v2033
      %v2161 = vpack.c.b16 %v2036, %v2035
      %v2162 = vpack.c.b16 %v2038, %v2037
      %v2163 = vpack.c.b16 %v2040, %v2039
      %v2164 = vpack.c.b16 %v2042, %v2041
      %v2165 = vpack.c.b16 %v2044, %v2043
      %v2166 = vpack.c.b16 %v2046, %v2045
      %v2167 = vpack.c.b16 %v2048, %v2047
      %v2168 = vpack.c.b16 %v2050, %v2049
      %v2169 = vpack.c.b16 %v2052, %v2051
      %v2170 = vpack.c.b16 %v2054, %v2053
      %v2171 = vpack.c.b16 %v2056, %v2055
      %v2172 = vpack.c.b16 %v2058, %v2057
      %v2173 = vpack.c.b16 %v2060, %v2059
      %v2174 = vpack.c.b16 %v2062, %v2061
      %v2175 = vpack.c.b16 %v2064, %v2063
      %v2176 = vpack.c.b16 %v2066, %v2065
      %v2177 = vpack.c.b16 %v2068, %v2067
      %v2178 = vpack.c.b16 %v2070, %v2069
      %v2179 = vpack.c.b16 %v2072, %v2071
      %v2180 = vpack.c.b16 %v2074, %v2073
      %v2181 = vpack.c.b16 %v2076, %v2075
      %v2182 = vpack.c.b16 %v2078, %v2077
      %2287 = vmatpush.bf16.msra.mxu0 %v2086
      %2288 = vmatpush.bf16.msra.mxu0 %v2085
      %2289 = vmatpush.bf16.msra.mxu0 %v2084
      %2290 = vmatpush.bf16.msra.mxu0 %v2083
      %2291 = vmatpush.bf16.msra.mxu0 %v2082
      %2292 = vmatpush.bf16.msra.mxu0 %v2081
      %2293 = vmatpush.bf16.msra.mxu0 %v2080
      %2294 = vmatpush.bf16.msra.mxu0 %v2079
      %2295 = vmatmul.bf16.gmra.mxu0 %v1247
      %v2296 = vpop.f32.mrf.mxu0
      %v2297 = vadd.f32 %v605, %v2296
      %v2298 = vpop.f32.mrf.mxu0
      %v2299 = vadd.f32 %v605, %v2298
      %2300 = vmatmul.bf16.gmra.mxu0 %v1260
      %v2301 = vpop.f32.mrf.mxu0
      %v2302 = vadd.f32 %v605, %v2301
      %v2303 = vpop.f32.mrf.mxu0
      %v2304 = vadd.f32 %v605, %v2303
      %2305 = vmatmul.bf16.gmra.mxu0 %v1273
      %v2306 = vpop.f32.mrf.mxu0
      %v2307 = vadd.f32 %v605, %v2306
      %v2308 = vpop.f32.mrf.mxu0
      %v2309 = vadd.f32 %v605, %v2308
      %2310 = vmatmul.bf16.gmra.mxu0 %v1286
      %v2311 = vpop.f32.mrf.mxu0
      %v2312 = vadd.f32 %v605, %v2311
      %v2313 = vpop.f32.mrf.mxu0
      %v2314 = vadd.f32 %v605, %v2313
      %2315 = vmatmul.bf16.gmra.mxu0 %v1299
      %v2316 = vpop.f32.mrf.mxu0
      %v2317 = vadd.f32 %v605, %v2316
      %v2318 = vpop.f32.mrf.mxu0
      %v2319 = vadd.f32 %v605, %v2318
      %2320 = vmatmul.bf16.gmra.mxu0 %v1312
      %v2321 = vpop.f32.mrf.mxu0
      %v2322 = vadd.f32 %v605, %v2321
      %v2323 = vpop.f32.mrf.mxu0
      %v2324 = vadd.f32 %v605, %v2323
      %2325 = vmatmul.bf16.gmra.mxu0 %v1325
      %v2326 = vpop.f32.mrf.mxu0
      %v2327 = vadd.f32 %v605, %v2326
      %v2328 = vpop.f32.mrf.mxu0
      %v2329 = vadd.f32 %v605, %v2328
      %2330 = vmatmul.bf16.gmra.mxu0 %v1338
      %v2331 = vpop.f32.mrf.mxu0
      %v2332 = vadd.f32 %v605, %v2331
      %v2333 = vpop.f32.mrf.mxu0
      %v2334 = vadd.f32 %v605, %v2333
      %2335 = vmatmul.bf16.gmra.mxu0 %v1351
      %v2336 = vpop.f32.mrf.mxu0
      %v2337 = vadd.f32 %v605, %v2336
      %v2338 = vpop.f32.mrf.mxu0
      %v2339 = vadd.f32 %v605, %v2338
      %2340 = vmatmul.bf16.gmra.mxu0 %v1364
      %v2341 = vpop.f32.mrf.mxu0
      %v2342 = vadd.f32 %v605, %v2341
      %v2343 = vpop.f32.mrf.mxu0
      %v2344 = vadd.f32 %v605, %v2343
      %2345 = vmatmul.bf16.gmra.mxu0 %v1377
      %v2346 = vpop.f32.mrf.mxu0
      %v2347 = vadd.f32 %v605, %v2346
      %v2348 = vpop.f32.mrf.mxu0
      %v2349 = vadd.f32 %v605, %v2348
      %2350 = vmatmul.bf16.gmra.mxu0 %v1390
      %v2351 = vpop.f32.mrf.mxu0
      %v2352 = vadd.f32 %v605, %v2351
      %v2353 = vpop.f32.mrf.mxu0
      %v2354 = vadd.f32 %v605, %v2353
      %2355 = vmatmul.bf16.gmra.mxu0 %v1403
      %v2356 = vpop.f32.mrf.mxu0
      %v2357 = vadd.f32 %v605, %v2356
      %v2358 = vpop.f32.mrf.mxu0
      %v2359 = vadd.f32 %v605, %v2358
      %2360 = vmatmul.bf16.gmra.mxu0 %v1416
      %v2361 = vpop.f32.mrf.mxu0
      %v2362 = vadd.f32 %v605, %v2361
      %v2363 = vpop.f32.mrf.mxu0
      %v2364 = vadd.f32 %v605, %v2363
      %2365 = vmatmul.bf16.gmra.mxu0 %v1429
      %v2366 = vpop.f32.mrf.mxu0
      %v2367 = vadd.f32 %v605, %v2366
      %v2368 = vpop.f32.mrf.mxu0
      %v2369 = vadd.f32 %v605, %v2368
      %2370 = vmatmul.bf16.gmra.mxu0 %v1442
      %v2371 = vpop.f32.mrf.mxu0
      %v2372 = vadd.f32 %v605, %v2371
      %v2373 = vpop.f32.mrf.mxu0
      %v2374 = vadd.f32 %v605, %v2373
      %2375 = vdwg.mxu0
      %2376 = vmatpush.bf16.msra.mxu0 %v2094
      %2377 = vmatpush.bf16.msra.mxu0 %v2093
      %2378 = vmatpush.bf16.msra.mxu0 %v2092
      %2379 = vmatpush.bf16.msra.mxu0 %v2091
      %2380 = vmatpush.bf16.msra.mxu0 %v2090
      %2381 = vmatpush.bf16.msra.mxu0 %v2089
      %2382 = vmatpush.bf16.msra.mxu0 %v2088
      %2383 = vmatpush.bf16.msra.mxu0 %v2087
      %2384 = vmatmul.bf16.gmra.mxu0 %v1248
      %v2385 = vpop.f32.mrf.mxu0
      %v2386 = vadd.f32 %v2297, %v2385
      %v2387 = vpop.f32.mrf.mxu0
      %v2388 = vadd.f32 %v2299, %v2387
      %2389 = vmatmul.bf16.gmra.mxu0 %v1261
      %v2390 = vpop.f32.mrf.mxu0
      %v2391 = vadd.f32 %v2302, %v2390
      %v2392 = vpop.f32.mrf.mxu0
      %v2393 = vadd.f32 %v2304, %v2392
      %2394 = vmatmul.bf16.gmra.mxu0 %v1274
      %v2395 = vpop.f32.mrf.mxu0
      %v2396 = vadd.f32 %v2307, %v2395
      %v2397 = vpop.f32.mrf.mxu0
      %v2398 = vadd.f32 %v2309, %v2397
      %2399 = vmatmul.bf16.gmra.mxu0 %v1287
      %v2400 = vpop.f32.mrf.mxu0
      %v2401 = vadd.f32 %v2312, %v2400
      %v2402 = vpop.f32.mrf.mxu0
      %v2403 = vadd.f32 %v2314, %v2402
      %2404 = vmatmul.bf16.gmra.mxu0 %v1300
      %v2405 = vpop.f32.mrf.mxu0
      %v2406 = vadd.f32 %v2317, %v2405
      %v2407 = vpop.f32.mrf.mxu0
      %v2408 = vadd.f32 %v2319, %v2407
      %2409 = vmatmul.bf16.gmra.mxu0 %v1313
      %v2410 = vpop.f32.mrf.mxu0
      %v2411 = vadd.f32 %v2322, %v2410
      %v2412 = vpop.f32.mrf.mxu0
      %v2413 = vadd.f32 %v2324, %v2412
      %2414 = vmatmul.bf16.gmra.mxu0 %v1326
      %v2415 = vpop.f32.mrf.mxu0
      %v2416 = vadd.f32 %v2327, %v2415
      %v2417 = vpop.f32.mrf.mxu0
      %v2418 = vadd.f32 %v2329, %v2417
      %2419 = vmatmul.bf16.gmra.mxu0 %v1339
      %v2420 = vpop.f32.mrf.mxu0
      %v2421 = vadd.f32 %v2332, %v2420
      %v2422 = vpop.f32.mrf.mxu0
      %v2423 = vadd.f32 %v2334, %v2422
      %2424 = vmatmul.bf16.gmra.mxu0 %v1352
      %v2425 = vpop.f32.mrf.mxu0
      %v2426 = vadd.f32 %v2337, %v2425
      %v2427 = vpop.f32.mrf.mxu0
      %v2428 = vadd.f32 %v2339, %v2427
      %2429 = vmatmul.bf16.gmra.mxu0 %v1365
      %v2430 = vpop.f32.mrf.mxu0
      %v2431 = vadd.f32 %v2342, %v2430
      %v2432 = vpop.f32.mrf.mxu0
      %v2433 = vadd.f32 %v2344, %v2432
      %2434 = vmatmul.bf16.gmra.mxu0 %v1378
      %v2435 = vpop.f32.mrf.mxu0
      %v2436 = vadd.f32 %v2347, %v2435
      %v2437 = vpop.f32.mrf.mxu0
      %v2438 = vadd.f32 %v2349, %v2437
      %2439 = vmatmul.bf16.gmra.mxu0 %v1391
      %v2440 = vpop.f32.mrf.mxu0
      %v2441 = vadd.f32 %v2352, %v2440
      %v2442 = vpop.f32.mrf.mxu0
      %v2443 = vadd.f32 %v2354, %v2442
      %2444 = vmatmul.bf16.gmra.mxu0 %v1404
      %v2445 = vpop.f32.mrf.mxu0
      %v2446 = vadd.f32 %v2357, %v2445
      %v2447 = vpop.f32.mrf.mxu0
      %v2448 = vadd.f32 %v2359, %v2447
      %2449 = vmatmul.bf16.gmra.mxu0 %v1417
      %v2450 = vpop.f32.mrf.mxu0
      %v2451 = vadd.f32 %v2362, %v2450
      %v2452 = vpop.f32.mrf.mxu0
      %v2453 = vadd.f32 %v2364, %v2452
      %2454 = vmatmul.bf16.gmra.mxu0 %v1430
      %v2455 = vpop.f32.mrf.mxu0
      %v2456 = vadd.f32 %v2367, %v2455
      %v2457 = vpop.f32.mrf.mxu0
      %v2458 = vadd.f32 %v2369, %v2457
      %2459 = vmatmul.bf16.gmra.mxu0 %v1443
      %v2460 = vpop.f32.mrf.mxu0
      %v2461 = vadd.f32 %v2372, %v2460
      %v2462 = vpop.f32.mrf.mxu0
      %v2463 = vadd.f32 %v2374, %v2462
      %2464 = vdwg.mxu0
      %2465 = vmatpush.bf16.msra.mxu0 %v2102
      %2466 = vmatpush.bf16.msra.mxu0 %v2101
      %2467 = vmatpush.bf16.msra.mxu0 %v2100
      %2468 = vmatpush.bf16.msra.mxu0 %v2099
      %2469 = vmatpush.bf16.msra.mxu0 %v2098
      %2470 = vmatpush.bf16.msra.mxu0 %v2097
      %2471 = vmatpush.bf16.msra.mxu0 %v2096
      %2472 = vmatpush.bf16.msra.mxu0 %v2095
      %2473 = vmatmul.bf16.gmra.mxu0 %v1249
      %v2474 = vpop.f32.mrf.mxu0
      %v2475 = vadd.f32 %v2386, %v2474
      %v2476 = vpop.f32.mrf.mxu0
      %v2477 = vadd.f32 %v2388, %v2476
      %2478 = vmatmul.bf16.gmra.mxu0 %v1262
      %v2479 = vpop.f32.mrf.mxu0
      %v2480 = vadd.f32 %v2391, %v2479
      %v2481 = vpop.f32.mrf.mxu0
      %v2482 = vadd.f32 %v2393, %v2481
      %2483 = vmatmul.bf16.gmra.mxu0 %v1275
      %v2484 = vpop.f32.mrf.mxu0
      %v2485 = vadd.f32 %v2396, %v2484
      %v2486 = vpop.f32.mrf.mxu0
      %v2487 = vadd.f32 %v2398, %v2486
      %2488 = vmatmul.bf16.gmra.mxu0 %v1288
      %v2489 = vpop.f32.mrf.mxu0
      %v2490 = vadd.f32 %v2401, %v2489
      %v2491 = vpop.f32.mrf.mxu0
      %v2492 = vadd.f32 %v2403, %v2491
      %2493 = vmatmul.bf16.gmra.mxu0 %v1301
      %v2494 = vpop.f32.mrf.mxu0
      %v2495 = vadd.f32 %v2406, %v2494
      %v2496 = vpop.f32.mrf.mxu0
      %v2497 = vadd.f32 %v2408, %v2496
      %2498 = vmatmul.bf16.gmra.mxu0 %v1314
      %v2499 = vpop.f32.mrf.mxu0
      %v2500 = vadd.f32 %v2411, %v2499
      %v2501 = vpop.f32.mrf.mxu0
      %v2502 = vadd.f32 %v2413, %v2501
      %2503 = vmatmul.bf16.gmra.mxu0 %v1327
      %v2504 = vpop.f32.mrf.mxu0
      %v2505 = vadd.f32 %v2416, %v2504
      %v2506 = vpop.f32.mrf.mxu0
      %v2507 = vadd.f32 %v2418, %v2506
      %2508 = vmatmul.bf16.gmra.mxu0 %v1340
      %v2509 = vpop.f32.mrf.mxu0
      %v2510 = vadd.f32 %v2421, %v2509
      %v2511 = vpop.f32.mrf.mxu0
      %v2512 = vadd.f32 %v2423, %v2511
      %2513 = vmatmul.bf16.gmra.mxu0 %v1353
      %v2514 = vpop.f32.mrf.mxu0
      %v2515 = vadd.f32 %v2426, %v2514
      %v2516 = vpop.f32.mrf.mxu0
      %v2517 = vadd.f32 %v2428, %v2516
      %2518 = vmatmul.bf16.gmra.mxu0 %v1366
      %v2519 = vpop.f32.mrf.mxu0
      %v2520 = vadd.f32 %v2431, %v2519
      %v2521 = vpop.f32.mrf.mxu0
      %v2522 = vadd.f32 %v2433, %v2521
      %2523 = vmatmul.bf16.gmra.mxu0 %v1379
      %v2524 = vpop.f32.mrf.mxu0
      %v2525 = vadd.f32 %v2436, %v2524
      %v2526 = vpop.f32.mrf.mxu0
      %v2527 = vadd.f32 %v2438, %v2526
      %2528 = vmatmul.bf16.gmra.mxu0 %v1392
      %v2529 = vpop.f32.mrf.mxu0
      %v2530 = vadd.f32 %v2441, %v2529
      %v2531 = vpop.f32.mrf.mxu0
      %v2532 = vadd.f32 %v2443, %v2531
      %2533 = vmatmul.bf16.gmra.mxu0 %v1405
      %v2534 = vpop.f32.mrf.mxu0
      %v2535 = vadd.f32 %v2446, %v2534
      %v2536 = vpop.f32.mrf.mxu0
      %v2537 = vadd.f32 %v2448, %v2536
      %2538 = vmatmul.bf16.gmra.mxu0 %v1418
      %v2539 = vpop.f32.mrf.mxu0
      %v2540 = vadd.f32 %v2451, %v2539
      %v2541 = vpop.f32.mrf.mxu0
      %v2542 = vadd.f32 %v2453, %v2541
      %2543 = vmatmul.bf16.gmra.mxu0 %v1431
      %v2544 = vpop.f32.mrf.mxu0
      %v2545 = vadd.f32 %v2456, %v2544
      %v2546 = vpop.f32.mrf.mxu0
      %v2547 = vadd.f32 %v2458, %v2546
      %2548 = vmatmul.bf16.gmra.mxu0 %v1444
      %v2549 = vpop.f32.mrf.mxu0
      %v2550 = vadd.f32 %v2461, %v2549
      %v2551 = vpop.f32.mrf.mxu0
      %v2552 = vadd.f32 %v2463, %v2551
      %2553 = vdwg.mxu0
      %2554 = vmatpush.bf16.msra.mxu0 %v2110
      %2555 = vmatpush.bf16.msra.mxu0 %v2109
      %2556 = vmatpush.bf16.msra.mxu0 %v2108
      %2557 = vmatpush.bf16.msra.mxu0 %v2107
      %2558 = vmatpush.bf16.msra.mxu0 %v2106
      %2559 = vmatpush.bf16.msra.mxu0 %v2105
      %2560 = vmatpush.bf16.msra.mxu0 %v2104
      %2561 = vmatpush.bf16.msra.mxu0 %v2103
      %2562 = vmatmul.bf16.gmra.mxu0 %v1250
      %v2563 = vpop.f32.mrf.mxu0
      %v2564 = vadd.f32 %v2475, %v2563
      %v2565 = vpop.f32.mrf.mxu0
      %v2566 = vadd.f32 %v2477, %v2565
      %2567 = vmatmul.bf16.gmra.mxu0 %v1263
      %v2568 = vpop.f32.mrf.mxu0
      %v2569 = vadd.f32 %v2480, %v2568
      %v2570 = vpop.f32.mrf.mxu0
      %v2571 = vadd.f32 %v2482, %v2570
      %2572 = vmatmul.bf16.gmra.mxu0 %v1276
      %v2573 = vpop.f32.mrf.mxu0
      %v2574 = vadd.f32 %v2485, %v2573
      %v2575 = vpop.f32.mrf.mxu0
      %v2576 = vadd.f32 %v2487, %v2575
      %2577 = vmatmul.bf16.gmra.mxu0 %v1289
      %v2578 = vpop.f32.mrf.mxu0
      %v2579 = vadd.f32 %v2490, %v2578
      %v2580 = vpop.f32.mrf.mxu0
      %v2581 = vadd.f32 %v2492, %v2580
      %2582 = vmatmul.bf16.gmra.mxu0 %v1302
      %v2583 = vpop.f32.mrf.mxu0
      %v2584 = vadd.f32 %v2495, %v2583
      %v2585 = vpop.f32.mrf.mxu0
      %v2586 = vadd.f32 %v2497, %v2585
      %2587 = vmatmul.bf16.gmra.mxu0 %v1315
      %v2588 = vpop.f32.mrf.mxu0
      %v2589 = vadd.f32 %v2500, %v2588
      %v2590 = vpop.f32.mrf.mxu0
      %v2591 = vadd.f32 %v2502, %v2590
      %2592 = vmatmul.bf16.gmra.mxu0 %v1328
      %v2593 = vpop.f32.mrf.mxu0
      %v2594 = vadd.f32 %v2505, %v2593
      %v2595 = vpop.f32.mrf.mxu0
      %v2596 = vadd.f32 %v2507, %v2595
      %2597 = vmatmul.bf16.gmra.mxu0 %v1341
      %v2598 = vpop.f32.mrf.mxu0
      %v2599 = vadd.f32 %v2510, %v2598
      %v2600 = vpop.f32.mrf.mxu0
      %v2601 = vadd.f32 %v2512, %v2600
      %2602 = vmatmul.bf16.gmra.mxu0 %v1354
      %v2603 = vpop.f32.mrf.mxu0
      %v2604 = vadd.f32 %v2515, %v2603
      %v2605 = vpop.f32.mrf.mxu0
      %v2606 = vadd.f32 %v2517, %v2605
      %2607 = vmatmul.bf16.gmra.mxu0 %v1367
      %v2608 = vpop.f32.mrf.mxu0
      %v2609 = vadd.f32 %v2520, %v2608
      %v2610 = vpop.f32.mrf.mxu0
      %v2611 = vadd.f32 %v2522, %v2610
      %2612 = vmatmul.bf16.gmra.mxu0 %v1380
      %v2613 = vpop.f32.mrf.mxu0
      %v2614 = vadd.f32 %v2525, %v2613
      %v2615 = vpop.f32.mrf.mxu0
      %v2616 = vadd.f32 %v2527, %v2615
      %2617 = vmatmul.bf16.gmra.mxu0 %v1393
      %v2618 = vpop.f32.mrf.mxu0
      %v2619 = vadd.f32 %v2530, %v2618
      %v2620 = vpop.f32.mrf.mxu0
      %v2621 = vadd.f32 %v2532, %v2620
      %2622 = vmatmul.bf16.gmra.mxu0 %v1406
      %v2623 = vpop.f32.mrf.mxu0
      %v2624 = vadd.f32 %v2535, %v2623
      %v2625 = vpop.f32.mrf.mxu0
      %v2626 = vadd.f32 %v2537, %v2625
      %2627 = vmatmul.bf16.gmra.mxu0 %v1419
      %v2628 = vpop.f32.mrf.mxu0
      %v2629 = vadd.f32 %v2540, %v2628
      %v2630 = vpop.f32.mrf.mxu0
      %v2631 = vadd.f32 %v2542, %v2630
      %2632 = vmatmul.bf16.gmra.mxu0 %v1432
      %v2633 = vpop.f32.mrf.mxu0
      %v2634 = vadd.f32 %v2545, %v2633
      %v2635 = vpop.f32.mrf.mxu0
      %v2636 = vadd.f32 %v2547, %v2635
      %2637 = vmatmul.bf16.gmra.mxu0 %v1445
      %v2638 = vpop.f32.mrf.mxu0
      %v2639 = vadd.f32 %v2550, %v2638
      %v2640 = vpop.f32.mrf.mxu0
      %v2641 = vadd.f32 %v2552, %v2640
      %2642 = vdwg.mxu0
      %2643 = vmatpush.bf16.msra.mxu0 %v2118
      %2644 = vmatpush.bf16.msra.mxu0 %v2117
      %2645 = vmatpush.bf16.msra.mxu0 %v2116
      %2646 = vmatpush.bf16.msra.mxu0 %v2115
      %2647 = vmatpush.bf16.msra.mxu0 %v2114
      %2648 = vmatpush.bf16.msra.mxu0 %v2113
      %2649 = vmatpush.bf16.msra.mxu0 %v2112
      %2650 = vmatpush.bf16.msra.mxu0 %v2111
      %2651 = vmatmul.bf16.gmra.mxu0 %v1251
      %v2652 = vpop.f32.mrf.mxu0
      %v2653 = vadd.f32 %v2564, %v2652
      %v2654 = vpop.f32.mrf.mxu0
      %v2655 = vadd.f32 %v2566, %v2654
      %2656 = vmatmul.bf16.gmra.mxu0 %v1264
      %v2657 = vpop.f32.mrf.mxu0
      %v2658 = vadd.f32 %v2569, %v2657
      %v2659 = vpop.f32.mrf.mxu0
      %v2660 = vadd.f32 %v2571, %v2659
      %2661 = vmatmul.bf16.gmra.mxu0 %v1277
      %v2662 = vpop.f32.mrf.mxu0
      %v2663 = vadd.f32 %v2574, %v2662
      %v2664 = vpop.f32.mrf.mxu0
      %v2665 = vadd.f32 %v2576, %v2664
      %2666 = vmatmul.bf16.gmra.mxu0 %v1290
      %v2667 = vpop.f32.mrf.mxu0
      %v2668 = vadd.f32 %v2579, %v2667
      %v2669 = vpop.f32.mrf.mxu0
      %v2670 = vadd.f32 %v2581, %v2669
      %2671 = vmatmul.bf16.gmra.mxu0 %v1303
      %v2672 = vpop.f32.mrf.mxu0
      %v2673 = vadd.f32 %v2584, %v2672
      %v2674 = vpop.f32.mrf.mxu0
      %v2675 = vadd.f32 %v2586, %v2674
      %2676 = vmatmul.bf16.gmra.mxu0 %v1316
      %v2677 = vpop.f32.mrf.mxu0
      %v2678 = vadd.f32 %v2589, %v2677
      %v2679 = vpop.f32.mrf.mxu0
      %v2680 = vadd.f32 %v2591, %v2679
      %2681 = vmatmul.bf16.gmra.mxu0 %v1329
      %v2682 = vpop.f32.mrf.mxu0
      %v2683 = vadd.f32 %v2594, %v2682
      %v2684 = vpop.f32.mrf.mxu0
      %v2685 = vadd.f32 %v2596, %v2684
      %2686 = vmatmul.bf16.gmra.mxu0 %v1342
      %v2687 = vpop.f32.mrf.mxu0
      %v2688 = vadd.f32 %v2599, %v2687
      %v2689 = vpop.f32.mrf.mxu0
      %v2690 = vadd.f32 %v2601, %v2689
      %2691 = vmatmul.bf16.gmra.mxu0 %v1355
      %v2692 = vpop.f32.mrf.mxu0
      %v2693 = vadd.f32 %v2604, %v2692
      %v2694 = vpop.f32.mrf.mxu0
      %v2695 = vadd.f32 %v2606, %v2694
      %2696 = vmatmul.bf16.gmra.mxu0 %v1368
      %v2697 = vpop.f32.mrf.mxu0
      %v2698 = vadd.f32 %v2609, %v2697
      %v2699 = vpop.f32.mrf.mxu0
      %v2700 = vadd.f32 %v2611, %v2699
      %2701 = vmatmul.bf16.gmra.mxu0 %v1381
      %v2702 = vpop.f32.mrf.mxu0
      %v2703 = vadd.f32 %v2614, %v2702
      %v2704 = vpop.f32.mrf.mxu0
      %v2705 = vadd.f32 %v2616, %v2704
      %2706 = vmatmul.bf16.gmra.mxu0 %v1394
      %v2707 = vpop.f32.mrf.mxu0
      %v2708 = vadd.f32 %v2619, %v2707
      %v2709 = vpop.f32.mrf.mxu0
      %v2710 = vadd.f32 %v2621, %v2709
      %2711 = vmatmul.bf16.gmra.mxu0 %v1407
      %v2712 = vpop.f32.mrf.mxu0
      %v2713 = vadd.f32 %v2624, %v2712
      %v2714 = vpop.f32.mrf.mxu0
      %v2715 = vadd.f32 %v2626, %v2714
      %2716 = vmatmul.bf16.gmra.mxu0 %v1420
      %v2717 = vpop.f32.mrf.mxu0
      %v2718 = vadd.f32 %v2629, %v2717
      %v2719 = vpop.f32.mrf.mxu0
      %v2720 = vadd.f32 %v2631, %v2719
      %2721 = vmatmul.bf16.gmra.mxu0 %v1433
      %v2722 = vpop.f32.mrf.mxu0
      %v2723 = vadd.f32 %v2634, %v2722
      %v2724 = vpop.f32.mrf.mxu0
      %v2725 = vadd.f32 %v2636, %v2724
      %2726 = vmatmul.bf16.gmra.mxu0 %v1446
      %v2727 = vpop.f32.mrf.mxu0
      %v2728 = vadd.f32 %v2639, %v2727
      %v2729 = vpop.f32.mrf.mxu0
      %v2730 = vadd.f32 %v2641, %v2729
      %2731 = vdwg.mxu0
      %2732 = vmatpush.bf16.msra.mxu0 %v2126
      %2733 = vmatpush.bf16.msra.mxu0 %v2125
      %2734 = vmatpush.bf16.msra.mxu0 %v2124
      %2735 = vmatpush.bf16.msra.mxu0 %v2123
      %2736 = vmatpush.bf16.msra.mxu0 %v2122
      %2737 = vmatpush.bf16.msra.mxu0 %v2121
      %2738 = vmatpush.bf16.msra.mxu0 %v2120
      %2739 = vmatpush.bf16.msra.mxu0 %v2119
      %2740 = vmatmul.bf16.gmra.mxu0 %v1252
      %v2741 = vpop.f32.mrf.mxu0
      %v2742 = vadd.f32 %v2653, %v2741
      %v2743 = vpop.f32.mrf.mxu0
      %v2744 = vadd.f32 %v2655, %v2743
      %2745 = vmatmul.bf16.gmra.mxu0 %v1265
      %v2746 = vpop.f32.mrf.mxu0
      %v2747 = vadd.f32 %v2658, %v2746
      %v2748 = vpop.f32.mrf.mxu0
      %v2749 = vadd.f32 %v2660, %v2748
      %2750 = vmatmul.bf16.gmra.mxu0 %v1278
      %v2751 = vpop.f32.mrf.mxu0
      %v2752 = vadd.f32 %v2663, %v2751
      %v2753 = vpop.f32.mrf.mxu0
      %v2754 = vadd.f32 %v2665, %v2753
      %2755 = vmatmul.bf16.gmra.mxu0 %v1291
      %v2756 = vpop.f32.mrf.mxu0
      %v2757 = vadd.f32 %v2668, %v2756
      %v2758 = vpop.f32.mrf.mxu0
      %v2759 = vadd.f32 %v2670, %v2758
      %2760 = vmatmul.bf16.gmra.mxu0 %v1304
      %v2761 = vpop.f32.mrf.mxu0
      %v2762 = vadd.f32 %v2673, %v2761
      %v2763 = vpop.f32.mrf.mxu0
      %v2764 = vadd.f32 %v2675, %v2763
      %2765 = vmatmul.bf16.gmra.mxu0 %v1317
      %v2766 = vpop.f32.mrf.mxu0
      %v2767 = vadd.f32 %v2678, %v2766
      %v2768 = vpop.f32.mrf.mxu0
      %v2769 = vadd.f32 %v2680, %v2768
      %2770 = vmatmul.bf16.gmra.mxu0 %v1330
      %v2771 = vpop.f32.mrf.mxu0
      %v2772 = vadd.f32 %v2683, %v2771
      %v2773 = vpop.f32.mrf.mxu0
      %v2774 = vadd.f32 %v2685, %v2773
      %2775 = vmatmul.bf16.gmra.mxu0 %v1343
      %v2776 = vpop.f32.mrf.mxu0
      %v2777 = vadd.f32 %v2688, %v2776
      %v2778 = vpop.f32.mrf.mxu0
      %v2779 = vadd.f32 %v2690, %v2778
      %2780 = vmatmul.bf16.gmra.mxu0 %v1356
      %v2781 = vpop.f32.mrf.mxu0
      %v2782 = vadd.f32 %v2693, %v2781
      %v2783 = vpop.f32.mrf.mxu0
      %v2784 = vadd.f32 %v2695, %v2783
      %2785 = vmatmul.bf16.gmra.mxu0 %v1369
      %v2786 = vpop.f32.mrf.mxu0
      %v2787 = vadd.f32 %v2698, %v2786
      %v2788 = vpop.f32.mrf.mxu0
      %v2789 = vadd.f32 %v2700, %v2788
      %2790 = vmatmul.bf16.gmra.mxu0 %v1382
      %v2791 = vpop.f32.mrf.mxu0
      %v2792 = vadd.f32 %v2703, %v2791
      %v2793 = vpop.f32.mrf.mxu0
      %v2794 = vadd.f32 %v2705, %v2793
      %2795 = vmatmul.bf16.gmra.mxu0 %v1395
      %v2796 = vpop.f32.mrf.mxu0
      %v2797 = vadd.f32 %v2708, %v2796
      %v2798 = vpop.f32.mrf.mxu0
      %v2799 = vadd.f32 %v2710, %v2798
      %2800 = vmatmul.bf16.gmra.mxu0 %v1408
      %v2801 = vpop.f32.mrf.mxu0
      %v2802 = vadd.f32 %v2713, %v2801
      %v2803 = vpop.f32.mrf.mxu0
      %v2804 = vadd.f32 %v2715, %v2803
      %2805 = vmatmul.bf16.gmra.mxu0 %v1421
      %v2806 = vpop.f32.mrf.mxu0
      %v2807 = vadd.f32 %v2718, %v2806
      %v2808 = vpop.f32.mrf.mxu0
      %v2809 = vadd.f32 %v2720, %v2808
      %2810 = vmatmul.bf16.gmra.mxu0 %v1434
      %v2811 = vpop.f32.mrf.mxu0
      %v2812 = vadd.f32 %v2723, %v2811
      %v2813 = vpop.f32.mrf.mxu0
      %v2814 = vadd.f32 %v2725, %v2813
      %2815 = vmatmul.bf16.gmra.mxu0 %v1447
      %v2816 = vpop.f32.mrf.mxu0
      %v2817 = vadd.f32 %v2728, %v2816
      %v2818 = vpop.f32.mrf.mxu0
      %v2819 = vadd.f32 %v2730, %v2818
      %2820 = vdwg.mxu0
      %2821 = vmatpush.bf16.msra.mxu0 %v2134
      %2822 = vmatpush.bf16.msra.mxu0 %v2133
      %2823 = vmatpush.bf16.msra.mxu0 %v2132
      %2824 = vmatpush.bf16.msra.mxu0 %v2131
      %2825 = vmatpush.bf16.msra.mxu0 %v2130
      %2826 = vmatpush.bf16.msra.mxu0 %v2129
      %2827 = vmatpush.bf16.msra.mxu0 %v2128
      %2828 = vmatpush.bf16.msra.mxu0 %v2127
      %2829 = vmatmul.bf16.gmra.mxu0 %v1253
      %v2830 = vpop.f32.mrf.mxu0
      %v2831 = vadd.f32 %v2742, %v2830
      %v2832 = vpop.f32.mrf.mxu0
      %v2833 = vadd.f32 %v2744, %v2832
      %2834 = vmatmul.bf16.gmra.mxu0 %v1266
      %v2835 = vpop.f32.mrf.mxu0
      %v2836 = vadd.f32 %v2747, %v2835
      %v2837 = vpop.f32.mrf.mxu0
      %v2838 = vadd.f32 %v2749, %v2837
      %2839 = vmatmul.bf16.gmra.mxu0 %v1279
      %v2840 = vpop.f32.mrf.mxu0
      %v2841 = vadd.f32 %v2752, %v2840
      %v2842 = vpop.f32.mrf.mxu0
      %v2843 = vadd.f32 %v2754, %v2842
      %2844 = vmatmul.bf16.gmra.mxu0 %v1292
      %v2845 = vpop.f32.mrf.mxu0
      %v2846 = vadd.f32 %v2757, %v2845
      %v2847 = vpop.f32.mrf.mxu0
      %v2848 = vadd.f32 %v2759, %v2847
      %2849 = vmatmul.bf16.gmra.mxu0 %v1305
      %v2850 = vpop.f32.mrf.mxu0
      %v2851 = vadd.f32 %v2762, %v2850
      %v2852 = vpop.f32.mrf.mxu0
      %v2853 = vadd.f32 %v2764, %v2852
      %2854 = vmatmul.bf16.gmra.mxu0 %v1318
      %v2855 = vpop.f32.mrf.mxu0
      %v2856 = vadd.f32 %v2767, %v2855
      %v2857 = vpop.f32.mrf.mxu0
      %v2858 = vadd.f32 %v2769, %v2857
      %2859 = vmatmul.bf16.gmra.mxu0 %v1331
      %v2860 = vpop.f32.mrf.mxu0
      %v2861 = vadd.f32 %v2772, %v2860
      %v2862 = vpop.f32.mrf.mxu0
      %v2863 = vadd.f32 %v2774, %v2862
      %2864 = vmatmul.bf16.gmra.mxu0 %v1344
      %v2865 = vpop.f32.mrf.mxu0
      %v2866 = vadd.f32 %v2777, %v2865
      %v2867 = vpop.f32.mrf.mxu0
      %v2868 = vadd.f32 %v2779, %v2867
      %2869 = vmatmul.bf16.gmra.mxu0 %v1357
      %v2870 = vpop.f32.mrf.mxu0
      %v2871 = vadd.f32 %v2782, %v2870
      %v2872 = vpop.f32.mrf.mxu0
      %v2873 = vadd.f32 %v2784, %v2872
      %2874 = vmatmul.bf16.gmra.mxu0 %v1370
      %v2875 = vpop.f32.mrf.mxu0
      %v2876 = vadd.f32 %v2787, %v2875
      %v2877 = vpop.f32.mrf.mxu0
      %v2878 = vadd.f32 %v2789, %v2877
      %2879 = vmatmul.bf16.gmra.mxu0 %v1383
      %v2880 = vpop.f32.mrf.mxu0
      %v2881 = vadd.f32 %v2792, %v2880
      %v2882 = vpop.f32.mrf.mxu0
      %v2883 = vadd.f32 %v2794, %v2882
      %2884 = vmatmul.bf16.gmra.mxu0 %v1396
      %v2885 = vpop.f32.mrf.mxu0
      %v2886 = vadd.f32 %v2797, %v2885
      %v2887 = vpop.f32.mrf.mxu0
      %v2888 = vadd.f32 %v2799, %v2887
      %2889 = vmatmul.bf16.gmra.mxu0 %v1409
      %v2890 = vpop.f32.mrf.mxu0
      %v2891 = vadd.f32 %v2802, %v2890
      %v2892 = vpop.f32.mrf.mxu0
      %v2893 = vadd.f32 %v2804, %v2892
      %2894 = vmatmul.bf16.gmra.mxu0 %v1422
      %v2895 = vpop.f32.mrf.mxu0
      %v2896 = vadd.f32 %v2807, %v2895
      %v2897 = vpop.f32.mrf.mxu0
      %v2898 = vadd.f32 %v2809, %v2897
      %2899 = vmatmul.bf16.gmra.mxu0 %v1435
      %v2900 = vpop.f32.mrf.mxu0
      %v2901 = vadd.f32 %v2812, %v2900
      %v2902 = vpop.f32.mrf.mxu0
      %v2903 = vadd.f32 %v2814, %v2902
      %2904 = vmatmul.bf16.gmra.mxu0 %v1448
      %v2905 = vpop.f32.mrf.mxu0
      %v2906 = vadd.f32 %v2817, %v2905
      %v2907 = vpop.f32.mrf.mxu0
      %v2908 = vadd.f32 %v2819, %v2907
      %2909 = vdwg.mxu0
      %2910 = vmatpush.bf16.msra.mxu0 %v2142
      %2911 = vmatpush.bf16.msra.mxu0 %v2141
      %2912 = vmatpush.bf16.msra.mxu0 %v2140
      %2913 = vmatpush.bf16.msra.mxu0 %v2139
      %2914 = vmatpush.bf16.msra.mxu0 %v2138
      %2915 = vmatpush.bf16.msra.mxu0 %v2137
      %2916 = vmatpush.bf16.msra.mxu0 %v2136
      %2917 = vmatpush.bf16.msra.mxu0 %v2135
      %2918 = vmatmul.bf16.gmra.mxu0 %v1254
      %v2919 = vpop.f32.mrf.mxu0
      %v2920 = vadd.f32 %v2831, %v2919
      %v2921 = vpop.f32.mrf.mxu0
      %v2922 = vadd.f32 %v2833, %v2921
      %2923 = vmatmul.bf16.gmra.mxu0 %v1267
      %v2924 = vpop.f32.mrf.mxu0
      %v2925 = vadd.f32 %v2836, %v2924
      %v2926 = vpop.f32.mrf.mxu0
      %v2927 = vadd.f32 %v2838, %v2926
      %2928 = vmatmul.bf16.gmra.mxu0 %v1280
      %v2929 = vpop.f32.mrf.mxu0
      %v2930 = vadd.f32 %v2841, %v2929
      %v2931 = vpop.f32.mrf.mxu0
      %v2932 = vadd.f32 %v2843, %v2931
      %2933 = vmatmul.bf16.gmra.mxu0 %v1293
      %v2934 = vpop.f32.mrf.mxu0
      %v2935 = vadd.f32 %v2846, %v2934
      %v2936 = vpop.f32.mrf.mxu0
      %v2937 = vadd.f32 %v2848, %v2936
      %2938 = vmatmul.bf16.gmra.mxu0 %v1306
      %v2939 = vpop.f32.mrf.mxu0
      %v2940 = vadd.f32 %v2851, %v2939
      %v2941 = vpop.f32.mrf.mxu0
      %v2942 = vadd.f32 %v2853, %v2941
      %2943 = vmatmul.bf16.gmra.mxu0 %v1319
      %v2944 = vpop.f32.mrf.mxu0
      %v2945 = vadd.f32 %v2856, %v2944
      %v2946 = vpop.f32.mrf.mxu0
      %v2947 = vadd.f32 %v2858, %v2946
      %2948 = vmatmul.bf16.gmra.mxu0 %v1332
      %v2949 = vpop.f32.mrf.mxu0
      %v2950 = vadd.f32 %v2861, %v2949
      %v2951 = vpop.f32.mrf.mxu0
      %v2952 = vadd.f32 %v2863, %v2951
      %2953 = vmatmul.bf16.gmra.mxu0 %v1345
      %v2954 = vpop.f32.mrf.mxu0
      %v2955 = vadd.f32 %v2866, %v2954
      %v2956 = vpop.f32.mrf.mxu0
      %v2957 = vadd.f32 %v2868, %v2956
      %2958 = vmatmul.bf16.gmra.mxu0 %v1358
      %v2959 = vpop.f32.mrf.mxu0
      %v2960 = vadd.f32 %v2871, %v2959
      %v2961 = vpop.f32.mrf.mxu0
      %v2962 = vadd.f32 %v2873, %v2961
      %2963 = vmatmul.bf16.gmra.mxu0 %v1371
      %v2964 = vpop.f32.mrf.mxu0
      %v2965 = vadd.f32 %v2876, %v2964
      %v2966 = vpop.f32.mrf.mxu0
      %v2967 = vadd.f32 %v2878, %v2966
      %2968 = vmatmul.bf16.gmra.mxu0 %v1384
      %v2969 = vpop.f32.mrf.mxu0
      %v2970 = vadd.f32 %v2881, %v2969
      %v2971 = vpop.f32.mrf.mxu0
      %v2972 = vadd.f32 %v2883, %v2971
      %2973 = vmatmul.bf16.gmra.mxu0 %v1397
      %v2974 = vpop.f32.mrf.mxu0
      %v2975 = vadd.f32 %v2886, %v2974
      %v2976 = vpop.f32.mrf.mxu0
      %v2977 = vadd.f32 %v2888, %v2976
      %2978 = vmatmul.bf16.gmra.mxu0 %v1410
      %v2979 = vpop.f32.mrf.mxu0
      %v2980 = vadd.f32 %v2891, %v2979
      %v2981 = vpop.f32.mrf.mxu0
      %v2982 = vadd.f32 %v2893, %v2981
      %2983 = vmatmul.bf16.gmra.mxu0 %v1423
      %v2984 = vpop.f32.mrf.mxu0
      %v2985 = vadd.f32 %v2896, %v2984
      %v2986 = vpop.f32.mrf.mxu0
      %v2987 = vadd.f32 %v2898, %v2986
      %2988 = vmatmul.bf16.gmra.mxu0 %v1436
      %v2989 = vpop.f32.mrf.mxu0
      %v2990 = vadd.f32 %v2901, %v2989
      %v2991 = vpop.f32.mrf.mxu0
      %v2992 = vadd.f32 %v2903, %v2991
      %2993 = vmatmul.bf16.gmra.mxu0 %v1449
      %v2994 = vpop.f32.mrf.mxu0
      %v2995 = vadd.f32 %v2906, %v2994
      %v2996 = vpop.f32.mrf.mxu0
      %v2997 = vadd.f32 %v2908, %v2996
      %2998 = vdwg.mxu0
      %2999 = vmatpush.bf16.msra.mxu0 %v2150
      %3000 = vmatpush.bf16.msra.mxu0 %v2149
      %3001 = vmatpush.bf16.msra.mxu0 %v2148
      %3002 = vmatpush.bf16.msra.mxu0 %v2147
      %3003 = vmatpush.bf16.msra.mxu0 %v2146
      %3004 = vmatpush.bf16.msra.mxu0 %v2145
      %3005 = vmatpush.bf16.msra.mxu0 %v2144
      %3006 = vmatpush.bf16.msra.mxu0 %v2143
      %3007 = vmatmul.bf16.gmra.mxu0 %v1255
      %v3008 = vpop.f32.mrf.mxu0
      %v3009 = vadd.f32 %v2920, %v3008
      %v3010 = vpop.f32.mrf.mxu0
      %v3011 = vadd.f32 %v2922, %v3010
      %3012 = vmatmul.bf16.gmra.mxu0 %v1268
      %v3013 = vpop.f32.mrf.mxu0
      %v3014 = vadd.f32 %v2925, %v3013
      %v3015 = vpop.f32.mrf.mxu0
      %v3016 = vadd.f32 %v2927, %v3015
      %3017 = vmatmul.bf16.gmra.mxu0 %v1281
      %v3018 = vpop.f32.mrf.mxu0
      %v3019 = vadd.f32 %v2930, %v3018
      %v3020 = vpop.f32.mrf.mxu0
      %v3021 = vadd.f32 %v2932, %v3020
      %3022 = vmatmul.bf16.gmra.mxu0 %v1294
      %v3023 = vpop.f32.mrf.mxu0
      %v3024 = vadd.f32 %v2935, %v3023
      %v3025 = vpop.f32.mrf.mxu0
      %v3026 = vadd.f32 %v2937, %v3025
      %3027 = vmatmul.bf16.gmra.mxu0 %v1307
      %v3028 = vpop.f32.mrf.mxu0
      %v3029 = vadd.f32 %v2940, %v3028
      %v3030 = vpop.f32.mrf.mxu0
      %v3031 = vadd.f32 %v2942, %v3030
      %3032 = vmatmul.bf16.gmra.mxu0 %v1320
      %v3033 = vpop.f32.mrf.mxu0
      %v3034 = vadd.f32 %v2945, %v3033
      %v3035 = vpop.f32.mrf.mxu0
      %v3036 = vadd.f32 %v2947, %v3035
      %3037 = vmatmul.bf16.gmra.mxu0 %v1333
      %v3038 = vpop.f32.mrf.mxu0
      %v3039 = vadd.f32 %v2950, %v3038
      %v3040 = vpop.f32.mrf.mxu0
      %v3041 = vadd.f32 %v2952, %v3040
      %3042 = vmatmul.bf16.gmra.mxu0 %v1346
      %v3043 = vpop.f32.mrf.mxu0
      %v3044 = vadd.f32 %v2955, %v3043
      %v3045 = vpop.f32.mrf.mxu0
      %v3046 = vadd.f32 %v2957, %v3045
      %3047 = vmatmul.bf16.gmra.mxu0 %v1359
      %v3048 = vpop.f32.mrf.mxu0
      %v3049 = vadd.f32 %v2960, %v3048
      %v3050 = vpop.f32.mrf.mxu0
      %v3051 = vadd.f32 %v2962, %v3050
      %3052 = vmatmul.bf16.gmra.mxu0 %v1372
      %v3053 = vpop.f32.mrf.mxu0
      %v3054 = vadd.f32 %v2965, %v3053
      %v3055 = vpop.f32.mrf.mxu0
      %v3056 = vadd.f32 %v2967, %v3055
      %3057 = vmatmul.bf16.gmra.mxu0 %v1385
      %v3058 = vpop.f32.mrf.mxu0
      %v3059 = vadd.f32 %v2970, %v3058
      %v3060 = vpop.f32.mrf.mxu0
      %v3061 = vadd.f32 %v2972, %v3060
      %3062 = vmatmul.bf16.gmra.mxu0 %v1398
      %v3063 = vpop.f32.mrf.mxu0
      %v3064 = vadd.f32 %v2975, %v3063
      %v3065 = vpop.f32.mrf.mxu0
      %v3066 = vadd.f32 %v2977, %v3065
      %3067 = vmatmul.bf16.gmra.mxu0 %v1411
      %v3068 = vpop.f32.mrf.mxu0
      %v3069 = vadd.f32 %v2980, %v3068
      %v3070 = vpop.f32.mrf.mxu0
      %v3071 = vadd.f32 %v2982, %v3070
      %3072 = vmatmul.bf16.gmra.mxu0 %v1424
      %v3073 = vpop.f32.mrf.mxu0
      %v3074 = vadd.f32 %v2985, %v3073
      %v3075 = vpop.f32.mrf.mxu0
      %v3076 = vadd.f32 %v2987, %v3075
      %3077 = vmatmul.bf16.gmra.mxu0 %v1437
      %v3078 = vpop.f32.mrf.mxu0
      %v3079 = vadd.f32 %v2990, %v3078
      %v3080 = vpop.f32.mrf.mxu0
      %v3081 = vadd.f32 %v2992, %v3080
      %3082 = vmatmul.bf16.gmra.mxu0 %v1450
      %v3083 = vpop.f32.mrf.mxu0
      %v3084 = vadd.f32 %v2995, %v3083
      %v3085 = vpop.f32.mrf.mxu0
      %v3086 = vadd.f32 %v2997, %v3085
      %3087 = vdwg.mxu0
      %3088 = vmatpush.bf16.msra.mxu0 %v2158
      %3089 = vmatpush.bf16.msra.mxu0 %v2157
      %3090 = vmatpush.bf16.msra.mxu0 %v2156
      %3091 = vmatpush.bf16.msra.mxu0 %v2155
      %3092 = vmatpush.bf16.msra.mxu0 %v2154
      %3093 = vmatpush.bf16.msra.mxu0 %v2153
      %3094 = vmatpush.bf16.msra.mxu0 %v2152
      %3095 = vmatpush.bf16.msra.mxu0 %v2151
      %3096 = vmatmul.bf16.gmra.mxu0 %v1256
      %v3097 = vpop.f32.mrf.mxu0
      %v3098 = vadd.f32 %v3009, %v3097
      %v3099 = vpop.f32.mrf.mxu0
      %v3100 = vadd.f32 %v3011, %v3099
      %3101 = vmatmul.bf16.gmra.mxu0 %v1269
      %v3102 = vpop.f32.mrf.mxu0
      %v3103 = vadd.f32 %v3014, %v3102
      %v3104 = vpop.f32.mrf.mxu0
      %v3105 = vadd.f32 %v3016, %v3104
      %3106 = vmatmul.bf16.gmra.mxu0 %v1282
      %v3107 = vpop.f32.mrf.mxu0
      %v3108 = vadd.f32 %v3019, %v3107
      %v3109 = vpop.f32.mrf.mxu0
      %v3110 = vadd.f32 %v3021, %v3109
      %3111 = vmatmul.bf16.gmra.mxu0 %v1295
      %v3112 = vpop.f32.mrf.mxu0
      %v3113 = vadd.f32 %v3024, %v3112
      %v3114 = vpop.f32.mrf.mxu0
      %v3115 = vadd.f32 %v3026, %v3114
      %3116 = vmatmul.bf16.gmra.mxu0 %v1308
      %v3117 = vpop.f32.mrf.mxu0
      %v3118 = vadd.f32 %v3029, %v3117
      %v3119 = vpop.f32.mrf.mxu0
      %v3120 = vadd.f32 %v3031, %v3119
      %3121 = vmatmul.bf16.gmra.mxu0 %v1321
      %v3122 = vpop.f32.mrf.mxu0
      %v3123 = vadd.f32 %v3034, %v3122
      %v3124 = vpop.f32.mrf.mxu0
      %v3125 = vadd.f32 %v3036, %v3124
      %3126 = vmatmul.bf16.gmra.mxu0 %v1334
      %v3127 = vpop.f32.mrf.mxu0
      %v3128 = vadd.f32 %v3039, %v3127
      %v3129 = vpop.f32.mrf.mxu0
      %v3130 = vadd.f32 %v3041, %v3129
      %3131 = vmatmul.bf16.gmra.mxu0 %v1347
      %v3132 = vpop.f32.mrf.mxu0
      %v3133 = vadd.f32 %v3044, %v3132
      %v3134 = vpop.f32.mrf.mxu0
      %v3135 = vadd.f32 %v3046, %v3134
      %3136 = vmatmul.bf16.gmra.mxu0 %v1360
      %v3137 = vpop.f32.mrf.mxu0
      %v3138 = vadd.f32 %v3049, %v3137
      %v3139 = vpop.f32.mrf.mxu0
      %v3140 = vadd.f32 %v3051, %v3139
      %3141 = vmatmul.bf16.gmra.mxu0 %v1373
      %v3142 = vpop.f32.mrf.mxu0
      %v3143 = vadd.f32 %v3054, %v3142
      %v3144 = vpop.f32.mrf.mxu0
      %v3145 = vadd.f32 %v3056, %v3144
      %3146 = vmatmul.bf16.gmra.mxu0 %v1386
      %v3147 = vpop.f32.mrf.mxu0
      %v3148 = vadd.f32 %v3059, %v3147
      %v3149 = vpop.f32.mrf.mxu0
      %v3150 = vadd.f32 %v3061, %v3149
      %3151 = vmatmul.bf16.gmra.mxu0 %v1399
      %v3152 = vpop.f32.mrf.mxu0
      %v3153 = vadd.f32 %v3064, %v3152
      %v3154 = vpop.f32.mrf.mxu0
      %v3155 = vadd.f32 %v3066, %v3154
      %3156 = vmatmul.bf16.gmra.mxu0 %v1412
      %v3157 = vpop.f32.mrf.mxu0
      %v3158 = vadd.f32 %v3069, %v3157
      %v3159 = vpop.f32.mrf.mxu0
      %v3160 = vadd.f32 %v3071, %v3159
      %3161 = vmatmul.bf16.gmra.mxu0 %v1425
      %v3162 = vpop.f32.mrf.mxu0
      %v3163 = vadd.f32 %v3074, %v3162
      %v3164 = vpop.f32.mrf.mxu0
      %v3165 = vadd.f32 %v3076, %v3164
      %3166 = vmatmul.bf16.gmra.mxu0 %v1438
      %v3167 = vpop.f32.mrf.mxu0
      %v3168 = vadd.f32 %v3079, %v3167
      %v3169 = vpop.f32.mrf.mxu0
      %v3170 = vadd.f32 %v3081, %v3169
      %3171 = vmatmul.bf16.gmra.mxu0 %v1451
      %v3172 = vpop.f32.mrf.mxu0
      %v3173 = vadd.f32 %v3084, %v3172
      %v3174 = vpop.f32.mrf.mxu0
      %v3175 = vadd.f32 %v3086, %v3174
      %3176 = vdwg.mxu0
      %3177 = vmatpush.bf16.msra.mxu0 %v2166
      %3178 = vmatpush.bf16.msra.mxu0 %v2165
      %3179 = vmatpush.bf16.msra.mxu0 %v2164
      %3180 = vmatpush.bf16.msra.mxu0 %v2163
      %3181 = vmatpush.bf16.msra.mxu0 %v2162
      %3182 = vmatpush.bf16.msra.mxu0 %v2161
      %3183 = vmatpush.bf16.msra.mxu0 %v2160
      %3184 = vmatpush.bf16.msra.mxu0 %v2159
      %3185 = vmatmul.bf16.gmra.mxu0 %v1257
      %v3186 = vpop.f32.mrf.mxu0
      %v3187 = vadd.f32 %v3098, %v3186
      %v3188 = vpop.f32.mrf.mxu0
      %v3189 = vadd.f32 %v3100, %v3188
      %3190 = vmatmul.bf16.gmra.mxu0 %v1270
      %v3191 = vpop.f32.mrf.mxu0
      %v3192 = vadd.f32 %v3103, %v3191
      %v3193 = vpop.f32.mrf.mxu0
      %v3194 = vadd.f32 %v3105, %v3193
      %3195 = vmatmul.bf16.gmra.mxu0 %v1283
      %v3196 = vpop.f32.mrf.mxu0
      %v3197 = vadd.f32 %v3108, %v3196
      %v3198 = vpop.f32.mrf.mxu0
      %v3199 = vadd.f32 %v3110, %v3198
      %3200 = vmatmul.bf16.gmra.mxu0 %v1296
      %v3201 = vpop.f32.mrf.mxu0
      %v3202 = vadd.f32 %v3113, %v3201
      %v3203 = vpop.f32.mrf.mxu0
      %v3204 = vadd.f32 %v3115, %v3203
      %3205 = vmatmul.bf16.gmra.mxu0 %v1309
      %v3206 = vpop.f32.mrf.mxu0
      %v3207 = vadd.f32 %v3118, %v3206
      %v3208 = vpop.f32.mrf.mxu0
      %v3209 = vadd.f32 %v3120, %v3208
      %3210 = vmatmul.bf16.gmra.mxu0 %v1322
      %v3211 = vpop.f32.mrf.mxu0
      %v3212 = vadd.f32 %v3123, %v3211
      %v3213 = vpop.f32.mrf.mxu0
      %v3214 = vadd.f32 %v3125, %v3213
      %3215 = vmatmul.bf16.gmra.mxu0 %v1335
      %v3216 = vpop.f32.mrf.mxu0
      %v3217 = vadd.f32 %v3128, %v3216
      %v3218 = vpop.f32.mrf.mxu0
      %v3219 = vadd.f32 %v3130, %v3218
      %3220 = vmatmul.bf16.gmra.mxu0 %v1348
      %v3221 = vpop.f32.mrf.mxu0
      %v3222 = vadd.f32 %v3133, %v3221
      %v3223 = vpop.f32.mrf.mxu0
      %v3224 = vadd.f32 %v3135, %v3223
      %3225 = vmatmul.bf16.gmra.mxu0 %v1361
      %v3226 = vpop.f32.mrf.mxu0
      %v3227 = vadd.f32 %v3138, %v3226
      %v3228 = vpop.f32.mrf.mxu0
      %v3229 = vadd.f32 %v3140, %v3228
      %3230 = vmatmul.bf16.gmra.mxu0 %v1374
      %v3231 = vpop.f32.mrf.mxu0
      %v3232 = vadd.f32 %v3143, %v3231
      %v3233 = vpop.f32.mrf.mxu0
      %v3234 = vadd.f32 %v3145, %v3233
      %3235 = vmatmul.bf16.gmra.mxu0 %v1387
      %v3236 = vpop.f32.mrf.mxu0
      %v3237 = vadd.f32 %v3148, %v3236
      %v3238 = vpop.f32.mrf.mxu0
      %v3239 = vadd.f32 %v3150, %v3238
      %3240 = vmatmul.bf16.gmra.mxu0 %v1400
      %v3241 = vpop.f32.mrf.mxu0
      %v3242 = vadd.f32 %v3153, %v3241
      %v3243 = vpop.f32.mrf.mxu0
      %v3244 = vadd.f32 %v3155, %v3243
      %3245 = vmatmul.bf16.gmra.mxu0 %v1413
      %v3246 = vpop.f32.mrf.mxu0
      %v3247 = vadd.f32 %v3158, %v3246
      %v3248 = vpop.f32.mrf.mxu0
      %v3249 = vadd.f32 %v3160, %v3248
      %3250 = vmatmul.bf16.gmra.mxu0 %v1426
      %v3251 = vpop.f32.mrf.mxu0
      %v3252 = vadd.f32 %v3163, %v3251
      %v3253 = vpop.f32.mrf.mxu0
      %v3254 = vadd.f32 %v3165, %v3253
      %3255 = vmatmul.bf16.gmra.mxu0 %v1439
      %v3256 = vpop.f32.mrf.mxu0
      %v3257 = vadd.f32 %v3168, %v3256
      %v3258 = vpop.f32.mrf.mxu0
      %v3259 = vadd.f32 %v3170, %v3258
      %3260 = vmatmul.bf16.gmra.mxu0 %v1452
      %v3261 = vpop.f32.mrf.mxu0
      %v3262 = vadd.f32 %v3173, %v3261
      %v3263 = vpop.f32.mrf.mxu0
      %v3264 = vadd.f32 %v3175, %v3263
      %3265 = vdwg.mxu0
      %3266 = vmatpush.bf16.msra.mxu0 %v2174
      %3267 = vmatpush.bf16.msra.mxu0 %v2173
      %3268 = vmatpush.bf16.msra.mxu0 %v2172
      %3269 = vmatpush.bf16.msra.mxu0 %v2171
      %3270 = vmatpush.bf16.msra.mxu0 %v2170
      %3271 = vmatpush.bf16.msra.mxu0 %v2169
      %3272 = vmatpush.bf16.msra.mxu0 %v2168
      %3273 = vmatpush.bf16.msra.mxu0 %v2167
      %3274 = vmatmul.bf16.gmra.mxu0 %v1258
      %v3275 = vpop.f32.mrf.mxu0
      %v3276 = vadd.f32 %v3187, %v3275
      %v3277 = vpop.f32.mrf.mxu0
      %v3278 = vadd.f32 %v3189, %v3277
      %3279 = vmatmul.bf16.gmra.mxu0 %v1271
      %v3280 = vpop.f32.mrf.mxu0
      %v3281 = vadd.f32 %v3192, %v3280
      %v3282 = vpop.f32.mrf.mxu0
      %v3283 = vadd.f32 %v3194, %v3282
      %3284 = vmatmul.bf16.gmra.mxu0 %v1284
      %v3285 = vpop.f32.mrf.mxu0
      %v3286 = vadd.f32 %v3197, %v3285
      %v3287 = vpop.f32.mrf.mxu0
      %v3288 = vadd.f32 %v3199, %v3287
      %3289 = vmatmul.bf16.gmra.mxu0 %v1297
      %v3290 = vpop.f32.mrf.mxu0
      %v3291 = vadd.f32 %v3202, %v3290
      %v3292 = vpop.f32.mrf.mxu0
      %v3293 = vadd.f32 %v3204, %v3292
      %3294 = vmatmul.bf16.gmra.mxu0 %v1310
      %v3295 = vpop.f32.mrf.mxu0
      %v3296 = vadd.f32 %v3207, %v3295
      %v3297 = vpop.f32.mrf.mxu0
      %v3298 = vadd.f32 %v3209, %v3297
      %3299 = vmatmul.bf16.gmra.mxu0 %v1323
      %v3300 = vpop.f32.mrf.mxu0
      %v3301 = vadd.f32 %v3212, %v3300
      %v3302 = vpop.f32.mrf.mxu0
      %v3303 = vadd.f32 %v3214, %v3302
      %3304 = vmatmul.bf16.gmra.mxu0 %v1336
      %v3305 = vpop.f32.mrf.mxu0
      %v3306 = vadd.f32 %v3217, %v3305
      %v3307 = vpop.f32.mrf.mxu0
      %v3308 = vadd.f32 %v3219, %v3307
      %3309 = vmatmul.bf16.gmra.mxu0 %v1349
      %v3310 = vpop.f32.mrf.mxu0
      %v3311 = vadd.f32 %v3222, %v3310
      %v3312 = vpop.f32.mrf.mxu0
      %v3313 = vadd.f32 %v3224, %v3312
      %3314 = vmatmul.bf16.gmra.mxu0 %v1362
      %v3315 = vpop.f32.mrf.mxu0
      %v3316 = vadd.f32 %v3227, %v3315
      %v3317 = vpop.f32.mrf.mxu0
      %v3318 = vadd.f32 %v3229, %v3317
      %3319 = vmatmul.bf16.gmra.mxu0 %v1375
      %v3320 = vpop.f32.mrf.mxu0
      %v3321 = vadd.f32 %v3232, %v3320
      %v3322 = vpop.f32.mrf.mxu0
      %v3323 = vadd.f32 %v3234, %v3322
      %3324 = vmatmul.bf16.gmra.mxu0 %v1388
      %v3325 = vpop.f32.mrf.mxu0
      %v3326 = vadd.f32 %v3237, %v3325
      %v3327 = vpop.f32.mrf.mxu0
      %v3328 = vadd.f32 %v3239, %v3327
      %3329 = vmatmul.bf16.gmra.mxu0 %v1401
      %v3330 = vpop.f32.mrf.mxu0
      %v3331 = vadd.f32 %v3242, %v3330
      %v3332 = vpop.f32.mrf.mxu0
      %v3333 = vadd.f32 %v3244, %v3332
      %3334 = vmatmul.bf16.gmra.mxu0 %v1414
      %v3335 = vpop.f32.mrf.mxu0
      %v3336 = vadd.f32 %v3247, %v3335
      %v3337 = vpop.f32.mrf.mxu0
      %v3338 = vadd.f32 %v3249, %v3337
      %3339 = vmatmul.bf16.gmra.mxu0 %v1427
      %v3340 = vpop.f32.mrf.mxu0
      %v3341 = vadd.f32 %v3252, %v3340
      %v3342 = vpop.f32.mrf.mxu0
      %v3343 = vadd.f32 %v3254, %v3342
      %3344 = vmatmul.bf16.gmra.mxu0 %v1440
      %v3345 = vpop.f32.mrf.mxu0
      %v3346 = vadd.f32 %v3257, %v3345
      %v3347 = vpop.f32.mrf.mxu0
      %v3348 = vadd.f32 %v3259, %v3347
      %3349 = vmatmul.bf16.gmra.mxu0 %v1453
      %v3350 = vpop.f32.mrf.mxu0
      %v3351 = vadd.f32 %v3262, %v3350
      %v3352 = vpop.f32.mrf.mxu0
      %v3353 = vadd.f32 %v3264, %v3352
      %3354 = vdwg.mxu0
      %3355 = vmatpush.bf16.msra.mxu0 %v2182
      %3356 = vmatpush.bf16.msra.mxu0 %v2181
      %3357 = vmatpush.bf16.msra.mxu0 %v2180
      %3358 = vmatpush.bf16.msra.mxu0 %v2179
      %3359 = vmatpush.bf16.msra.mxu0 %v2178
      %3360 = vmatpush.bf16.msra.mxu0 %v2177
      %3361 = vmatpush.bf16.msra.mxu0 %v2176
      %3362 = vmatpush.bf16.msra.mxu0 %v2175
      %3363 = vmatmul.bf16.gmra.mxu0 %v1259
      %v3364 = vpop.f32.mrf.mxu0
      %v3365 = vadd.f32 %v3276, %v3364
      %v3366 = vpop.f32.mrf.mxu0
      %v3367 = vadd.f32 %v3278, %v3366
      %3368 = vmatmul.bf16.gmra.mxu0 %v1272
      %v3369 = vpop.f32.mrf.mxu0
      %v3370 = vadd.f32 %v3281, %v3369
      %v3371 = vpop.f32.mrf.mxu0
      %v3372 = vadd.f32 %v3283, %v3371
      %3373 = vmatmul.bf16.gmra.mxu0 %v1285
      %v3374 = vpop.f32.mrf.mxu0
      %v3375 = vadd.f32 %v3286, %v3374
      %v3376 = vpop.f32.mrf.mxu0
      %v3377 = vadd.f32 %v3288, %v3376
      %3378 = vmatmul.bf16.gmra.mxu0 %v1298
      %v3379 = vpop.f32.mrf.mxu0
      %v3380 = vadd.f32 %v3291, %v3379
      %v3381 = vpop.f32.mrf.mxu0
      %v3382 = vadd.f32 %v3293, %v3381
      %3383 = vmatmul.bf16.gmra.mxu0 %v1311
      %v3384 = vpop.f32.mrf.mxu0
      %v3385 = vadd.f32 %v3296, %v3384
      %v3386 = vpop.f32.mrf.mxu0
      %v3387 = vadd.f32 %v3298, %v3386
      %3388 = vmatmul.bf16.gmra.mxu0 %v1324
      %v3389 = vpop.f32.mrf.mxu0
      %v3390 = vadd.f32 %v3301, %v3389
      %v3391 = vpop.f32.mrf.mxu0
      %v3392 = vadd.f32 %v3303, %v3391
      %3393 = vmatmul.bf16.gmra.mxu0 %v1337
      %v3394 = vpop.f32.mrf.mxu0
      %v3395 = vadd.f32 %v3306, %v3394
      %v3396 = vpop.f32.mrf.mxu0
      %v3397 = vadd.f32 %v3308, %v3396
      %3398 = vmatmul.bf16.gmra.mxu0 %v1350
      %v3399 = vpop.f32.mrf.mxu0
      %v3400 = vadd.f32 %v3311, %v3399
      %v3401 = vpop.f32.mrf.mxu0
      %v3402 = vadd.f32 %v3313, %v3401
      %3403 = vmatmul.bf16.gmra.mxu0 %v1363
      %v3404 = vpop.f32.mrf.mxu0
      %v3405 = vadd.f32 %v3316, %v3404
      %v3406 = vpop.f32.mrf.mxu0
      %v3407 = vadd.f32 %v3318, %v3406
      %3408 = vmatmul.bf16.gmra.mxu0 %v1376
      %v3409 = vpop.f32.mrf.mxu0
      %v3410 = vadd.f32 %v3321, %v3409
      %v3411 = vpop.f32.mrf.mxu0
      %v3412 = vadd.f32 %v3323, %v3411
      %3413 = vmatmul.bf16.gmra.mxu0 %v1389
      %v3414 = vpop.f32.mrf.mxu0
      %v3415 = vadd.f32 %v3326, %v3414
      %v3416 = vpop.f32.mrf.mxu0
      %v3417 = vadd.f32 %v3328, %v3416
      %3418 = vmatmul.bf16.gmra.mxu0 %v1402
      %v3419 = vpop.f32.mrf.mxu0
      %v3420 = vadd.f32 %v3331, %v3419
      %v3421 = vpop.f32.mrf.mxu0
      %v3422 = vadd.f32 %v3333, %v3421
      %3423 = vmatmul.bf16.gmra.mxu0 %v1415
      %v3424 = vpop.f32.mrf.mxu0
      %v3425 = vadd.f32 %v3336, %v3424
      %v3426 = vpop.f32.mrf.mxu0
      %v3427 = vadd.f32 %v3338, %v3426
      %3428 = vmatmul.bf16.gmra.mxu0 %v1428
      %v3429 = vpop.f32.mrf.mxu0
      %v3430 = vadd.f32 %v3341, %v3429
      %v3431 = vpop.f32.mrf.mxu0
      %v3432 = vadd.f32 %v3343, %v3431
      %3433 = vmatmul.bf16.gmra.mxu0 %v1441
      %v3434 = vpop.f32.mrf.mxu0
      %v3435 = vadd.f32 %v3346, %v3434
      %v3436 = vpop.f32.mrf.mxu0
      %v3437 = vadd.f32 %v3348, %v3436
      %3438 = vmatmul.bf16.gmra.mxu0 %v1454
      %v3439 = vpop.f32.mrf.mxu0
      %v3440 = vadd.f32 %v3351, %v3439
      %v3441 = vpop.f32.mrf.mxu0
      %v3442 = vadd.f32 %v3353, %v3441
      %3443 = vdwg.mxu0
      %v3444 = vtanh.pop %v3365
      %v3445 = vtanh.pop %v3367
      %v3446 = vtanh.pop %v3370
      %v3447 = vtanh.pop %v3372
      %v3448 = vtanh.pop %v3375
      %v3449 = vtanh.pop %v3377
      %v3450 = vtanh.pop %v3380
      %v3451 = vtanh.pop %v3382
      %v3452 = vtanh.pop %v3385
      %v3453 = vtanh.pop %v3387
      %v3454 = vtanh.pop %v3390
      %v3455 = vtanh.pop %v3392
      %v3456 = vtanh.pop %v3395
      %v3457 = vtanh.pop %v3397
      %v3458 = vtanh.pop %v3400
      %v3459 = vtanh.pop %v3402
      %v3460 = vtanh.pop %v3405
      %v3461 = vtanh.pop %v3407
      %v3462 = vtanh.pop %v3410
      %v3463 = vtanh.pop %v3412
      %v3464 = vtanh.pop %v3415
      %v3465 = vtanh.pop %v3417
      %v3466 = vtanh.pop %v3420
      %v3467 = vtanh.pop %v3422
      %v3468 = vtanh.pop %v3425
      %v3469 = vtanh.pop %v3427
      %v3470 = vtanh.pop %v3430
      %v3471 = vtanh.pop %v3432
      %v3472 = vtanh.pop %v3435
      %v3473 = vtanh.pop %v3437
      %v3474 = vtanh.pop %v3440
      %v3475 = vtanh.pop %v3442
      %3476 = vst [vmem:[%s170] sm:$0xff] %v3444
      %3477 = vst [vmem:[%s170 + $0x8] sm:$0xff] %v3445
      %3478 = vst [vmem:[%s170 + $0x10] sm:$0xff] %v3446
      %3479 = vst [vmem:[%s170 + $0x18] sm:$0xff] %v3447
      %3480 = vst [vmem:[%s170 + $0x20] sm:$0xff] %v3448
      %3481 = vst [vmem:[%s170 + $0x28] sm:$0xff] %v3449
      %3482 = vst [vmem:[%s170 + $0x30] sm:$0xff] %v3450
      %3483 = vst [vmem:[%s170 + $0x38] sm:$0xff] %v3451
      %3484 = vst [vmem:[%s170 + $0x40] sm:$0xff] %v3452
      %3485 = vst [vmem:[%s170 + $0x48] sm:$0xff] %v3453
      %3486 = vst [vmem:[%s170 + $0x50] sm:$0xff] %v3454
      %3487 = vst [vmem:[%s170 + $0x58] sm:$0xff] %v3455
      %3488 = vst [vmem:[%s170 + $0x60] sm:$0xff] %v3456
      %3489 = vst [vmem:[%s170 + $0x68] sm:$0xff] %v3457
      %3490 = vst [vmem:[%s170 + $0x70] sm:$0xff] %v3458
      %3491 = vst [vmem:[%s170 + $0x78] sm:$0xff] %v3459
      %3492 = vst [vmem:[%s170 + $0x80] sm:$0xff] %v3460
      %3493 = vst [vmem:[%s170 + $0x88] sm:$0xff] %v3461
      %3494 = vst [vmem:[%s170 + $0x90] sm:$0xff] %v3462
      %3495 = vst [vmem:[%s170 + $0x98] sm:$0xff] %v3463
      %3496 = vst [vmem:[%s170 + $0xa0] sm:$0xff] %v3464
      %3497 = vst [vmem:[%s170 + $0xa8] sm:$0xff] %v3465
      %3498 = vst [vmem:[%s170 + $0xb0] sm:$0xff] %v3466
      %3499 = vst [vmem:[%s170 + $0xb8] sm:$0xff] %v3467
      %3500 = vst [vmem:[%s170 + $0xc0] sm:$0xff] %v3468
      %3501 = vst [vmem:[%s170 + $0xc8] sm:$0xff] %v3469
      %3502 = vst [vmem:[%s170 + $0xd0] sm:$0xff] %v3470
      %3503 = vst [vmem:[%s170 + $0xd8] sm:$0xff] %v3471
      %3504 = vst [vmem:[%s170 + $0xe0] sm:$0xff] %v3472
      %3505 = vst [vmem:[%s170 + $0xe8] sm:$0xff] %v3473
      %3506 = vst [vmem:[%s170 + $0xf0] sm:$0xff] %v3474
      %3507 = vst [vmem:[%s170 + $0xf8] sm:$0xff] %v3475
      %p3508 = scmp.lt.s32.totalorder %s14, 1
      %s3509 = scalar_select %p3508, %s14, 1
      %s3510 = smul.addr %s3509, 32
      %s3511 = smul.addr %s3510, 8
      %s3512 = scalar_lea.vmem %s3, %s3511
      // Predicated region
      $region33: #{generator_forward.19} parent=31 // pred_check
        %p3513 = pneg %p100
      $region34: #{generator_forward.19} parent=31 // pred_check_branch
        %3515 = sbr.rel (%p3513) target = $region36
      $region35: #{generator_forward.19} parent=31 // pred_region
        _
      $region36: #{generator_forward.19} parent=31 // pred_fallthru
        _
    $region32: #{generator_forward.19} parent=5 // pred_fallthru
      _
    %p3516 = scmp.le.s32.totalorder 2, %s9
    // Predicated region
    $region37: #{generator_forward.19} parent=5 // pred_check
      %p3517 = pneg %p3516
    $region38: #{generator_forward.19} parent=5 // pred_check_branch
      %3519 = sbr.rel (%p3517) target = $region40
    $region39: #{generator_forward.19} parent=5 // pred_region
      %s3520 = ssub.s32 %s9, 2
      // Predicated region
      $region41: #{generator_forward.19} parent=39 // pred_check
        %p3521 = pneg %p106
      $region42: #{generator_forward.19} parent=39 // pred_check_branch
        %3523 = sbr.rel (%p3521) target = $region44
      $region43: #{generator_forward.19} parent=39 // pred_region
        %p3524 = scmp.lt.s32.totalorder %s15, 1
        %s3525 = scalar_select %p3524, %s15, 1
        %s3526 = smul.addr %s3525, 32
        %s3527 = smul.addr %s3526, 8
        %s3528 = scalar_lea.vmem %s3, %s3527
      $region44: #{generator_forward.19} parent=39 // pred_fallthru
        _
    $region40: #{generator_forward.19} parent=5 // pred_fallthru
      _
  $region6: #{generator_forward.19} parent=0 // loop_footer
    %s13 = sadd.s32 1, %s9
  $region7: #{generator_forward.19} parent=0 // loop_footer_branch
    %8 = sbr.rel target = $region3
  $region8: #{generator_forward.19} parent=0 // loop_exit
    _

</llo_original>
